<compile_context>
chip_gen: v7x
topology: tpu7x:2x2x1
jax: 0.10.0
libtpu: 0.0.40
codegen_flags: <defaults>
</compile_context>

<pallas_src>
import math
import functools

import numpy as np
import jax
import jax.numpy as jnp
from jax.experimental import pallas as pl
from jax.experimental.pallas import tpu as pltpu


SUB = 8                       # sublane tile
LANE = 128                    # lane tile
PADT = 8                      # top halo rows per sample (>= 3 needed, rounded to sublane tile)
HALO = 3                      # 7-tap 'same' conv half-width
ACT_DTYPE = jnp.bfloat16      # MXU feed dtype for conv weights/activations (f32 accumulation)


def _round_up(x, m):
    return ((x + m - 1) // m) * m


def _padded_len(L):
    # per-sample slab rows: 8 zero rows on top, >= 3 zero rows at the bottom, multiple of 8
    return _round_up(PADT + L + HALO, SUB)


# ----------------------------------------------------------------------------
# Shared math (used by the Pallas kernels on loaded values and by the XLA
# reference on plain arrays -- guarantees the parity check tests the lowering).
# ----------------------------------------------------------------------------

def _prelu(x, a):
    # a: (1, 1) f32 shared PReLU slope (torch default 0.25)
    return jnp.where(x >= 0, x, a * x)


def _valid_mask(n_rows, row0, B, Lp, L):
    # rows [b*Lp + PADT, b*Lp + PADT + L) hold sample b's data; everything else is halo.
    rows = jax.lax.broadcasted_iota(jnp.int32, (n_rows, 1), 0) + row0
    m = (rows >= PADT) & (rows < PADT + L)
    for b in range(1, B):
        m = m | ((rows >= b * Lp + PADT) & (rows < b * Lp + PADT + L))
    return m


def _conv0_math(xv, w, b, a, B, L):
    # xv: (B*Lp0, KCpad) pool-folded im2col rows (zero halo rows); one matmul + PReLU + re-zero.
    Lp = xv.shape[0] // B
    acc = jnp.dot(xv, w, preferred_element_type=jnp.float32) + b
    mask = _valid_mask(xv.shape[0], 0, B, Lp, L)
    return jnp.where(mask, _prelu(acc, a), 0.0).astype(ACT_DTYPE)


def _resblock_math(xv, w1, b1, a1, w2, ws, b2, a2, pool, B, L):
    # xv: (B*Lp_in, Cin_pad) zero-haloed slab.  Returns the next slab (B*Lp_out, Cout_pad).
    n_in = xv.shape[0]
    Lp_in = n_in // B
    Cin = xv.shape[1]
    K = w1.shape[0] // Cin
    Cmid = w1.shape[1]
    Cout = w2.shape[1]
    M = n_in - 2 * HALO                                 # core rows = global rows [3, n_in-3)
    mask = _valid_mask(M, HALO, B, Lp_in, L)

    # conv1 (7-tap 'same', BN1 folded): ONE matmul over a concatenated contraction dim.
    x_taps = [xv[k:k + M, :] for k in range(K)]
    x_col = jnp.concatenate(x_taps, axis=1)             # (M, K*Cin) in-VMEM im2col
    y = jnp.dot(x_col, w1, preferred_element_type=jnp.float32) + b1
    y = jnp.where(mask, _prelu(y, a1), 0.0).astype(ACT_DTYPE)
    zpad_mid = jnp.zeros((HALO, Cmid), ACT_DTYPE)
    y_full = jnp.concatenate([zpad_mid, y, zpad_mid], axis=0)   # stays in VMEM, never in HBM

    # conv2 (7-tap, BN_out folded) + 1x1 skip (BN_out folded), f32 accumulation.
    y_taps = [y_full[k:k + M, :] for k in range(K)]
    y_col = jnp.concatenate(y_taps, axis=1)             # (M, K*Cmid)
    acc = jnp.dot(y_col, w2, preferred_element_type=jnp.float32)
    acc = acc + jnp.dot(x_taps[K // 2], ws, preferred_element_type=jnp.float32)
    z = _prelu(acc + b2, a2)                            # (M, Cout) f32

    zpad_out = jnp.zeros((HALO, Cout), ACT_DTYPE)
    if pool is not None:
        # fused AvgPool1d(2,2): per-sample (Lp_out, Lp_in) bf16 matrix on the MXU; its zero
        # rows/cols also re-zero the halo, so no extra mask is needed.
        z_full = jnp.concatenate([zpad_out, z.astype(ACT_DTYPE), zpad_out], axis=0)
        pieces = [jnp.dot(pool, z_full[b * Lp_in:(b + 1) * Lp_in, :],
                          preferred_element_type=jnp.float32) for b in range(B)]
        out = jnp.concatenate(pieces, axis=0)
    else:
        zm = jnp.where(mask, z, 0.0).astype(ACT_DTYPE)
        out = jnp.concatenate([zpad_out, zm, zpad_out], axis=0)
    return out.astype(ACT_DTYPE)


def _head_math(hv, w1, b1, a, w2, b2, B):
    # SumLayer + AdaptiveAvgPool(1) + Flatten + fc1(+BN) + PReLU + fc2 + quat normalize.
    # Halo rows and padded channels are exactly zero, so full-slab sums are the true sums;
    # the mean branch is folded into the fc1 weight columns at init.
    Lp = hv.shape[0] // B
    hf = hv.astype(jnp.float32)
    sums = [jnp.sum(hf[b * Lp:(b + 1) * Lp, :], axis=0, keepdims=True) for b in range(B)]
    s = jnp.concatenate(sums, axis=0)                   # (B, Cpad) channel sums (XLU reduce)
    t = _prelu(jnp.dot(s, w1, preferred_element_type=jnp.float32) + b1, a)
    pred = jnp.dot(t, w2, preferred_element_type=jnp.float32) + b2
    q = pred[:, 3:7]
    inv = 1.0 / jnp.maximum(jnp.sqrt(jnp.sum(q * q, axis=1, keepdims=True)), 1e-12)
    col = jax.lax.broadcasted_iota(jnp.int32, pred.shape, 1)
    return jnp.where(col >= 3, pred * inv, pred)        # [pos(3) | unit quat(4)]


# ----------------------------------------------------------------------------
# Pallas kernels (thin ref wrappers around the math above; one full-tile store)
# ----------------------------------------------------------------------------

def _conv0_kernel(x_ref, w_ref, b_ref, a_ref, o_ref, *, B, L):
    o_ref[...] = _conv0_math(x_ref[...], w_ref[...], b_ref[...], a_ref[...], B, L)


def _resblock_kernel(x_ref, w1_ref, b1_ref, a1_ref, w2_ref, ws_ref, b2_ref, a2_ref,
                     *rest, B, L, pooled):
    if pooled:
        p_ref, o_ref = rest
        pool = p_ref[...]
    else:
        (o_ref,) = rest
        pool = None
    o_ref[...] = _resblock_math(x_ref[...], w1_ref[...], b1_ref[...], a1_ref[...],
                                w2_ref[...], ws_ref[...], b2_ref[...], a2_ref[...],
                                pool, B, L)


def _head_kernel(h_ref, w1_ref, b1_ref, a_ref, w2_ref, b2_ref, o_ref, *, B):
    o_ref[...] = _head_math(h_ref[...], w1_ref[...], b1_ref[...], a_ref[...],
                            w2_ref[...], b2_ref[...], B)


# ----------------------------------------------------------------------------
# pallas_call wrappers (whole-array VMEM residency; grid=() -> one fused step)
# ----------------------------------------------------------------------------

def _vspec():
    return pl.BlockSpec(memory_space=pltpu.MemorySpace.VMEM)


def _cparams(args, out_shape):
    nbytes = sum(int(np.prod(a.shape)) * jnp.dtype(a.dtype).itemsize for a in args)
    nbytes += int(np.prod(out_shape.shape)) * jnp.dtype(out_shape.dtype).itemsize
    # headroom for the in-VMEM im2col intermediates; cap is v7x-safe (64 MiB physical).
    limit = int(min(48 * 1024 * 1024, max(8 * 1024 * 1024, 8 * nbytes)))
    return pltpu.CompilerParams(vmem_limit_bytes=limit)


def conv0_call(xcol, c0, *, B, L):
    Cp = c0["w"].shape[1]
    n = xcol.shape[0]
    args = (xcol, c0["w"], c0["b"], c0["a"])
    out_shape = jax.ShapeDtypeStruct((n, Cp), ACT_DTYPE)
    return pl.pallas_call(
        functools.partial(_conv0_kernel, B=B, L=L),
        out_shape=out_shape,
        in_specs=[_vspec()] * len(args),
        out_specs=_vspec(),
        compiler_params=_cparams(args, out_shape),
    )(*args)


def resblock_call(h, blk, *, B, L, L_out):
    pooled = "pool" in blk
    Cout_p = blk["w2"].shape[1]
    Lp_out = _padded_len(L_out)
    args = [h, blk["w1"], blk["b1"], blk["a1"], blk["w2"], blk["ws"], blk["b2"], blk["a2"]]
    if pooled:
        args.append(blk["pool"])
    out_shape = jax.ShapeDtypeStruct((B * Lp_out, Cout_p), ACT_DTYPE)
    return pl.pallas_call(
        functools.partial(_resblock_kernel, B=B, L=L, pooled=pooled),
        out_shape=out_shape,
        in_specs=[_vspec()] * len(args),
        out_specs=_vspec(),
        compiler_params=_cparams(args, out_shape),
    )(*args)


def head_call(h, hd, *, B):
    out_f = hd["w2"].shape[1]
    args = (h, hd["w1"], hd["b1"], hd["a"], hd["w2"], hd["b2"])
    out_shape = jax.ShapeDtypeStruct((B, out_f), jnp.float32)
    return pl.pallas_call(
        functools.partial(_head_kernel, B=B),
        out_shape=out_shape,
        in_specs=[_vspec()] * len(args),
        out_specs=_vspec(),
        compiler_params=_cparams(args, out_shape),
    )(*args)


# ----------------------------------------------------------------------------
# Static config, parameter init (BN / pool / mean folding + channel padding done once here)
# ----------------------------------------------------------------------------

def make_config(seq_len, input_size, n_base_filters, output_size):
    K0, DIL, STR = 3, 2, 3
    L0 = (seq_len - (DIL * (K0 - 1) + 1)) // STR + 1    # Conv1d(k=3, dilation=2, stride=3)
    L0p = L0 // 2                                       # AvgPool1d(2, 2)
    lengths = []
    L = L0p
    for i in range(5):                                  # ResBlocks; first 4 followed by AvgPool
        L_out = L // 2 if i < 4 else L
        lengths.append((L, L_out))
        L = L_out
    return dict(seq_len=seq_len, input_size=input_size, nbf=n_base_filters,
                output_size=output_size, K0=K0, DIL=DIL, STR=STR,
                L0=L0, L0p=L0p, lengths=lengths, L_last=L)


def _conv_init(key, cout, cin, k):
    kw, kb = jax.random.split(key)
    bound = 1.0 / math.sqrt(cin * k)
    w = jax.random.uniform(kw, (cout, cin, k), jnp.float32, -bound, bound)   # torch layout
    b = jax.random.uniform(kb, (cout,), jnp.float32, -bound, bound)
    return w, b


def _linear_init(key, fin, fout):
    kw, kb = jax.random.split(key)
    bound = 1.0 / math.sqrt(fin)
    w = jax.random.uniform(kw, (fout, fin), jnp.float32, -bound, bound)      # torch layout
    b = jax.random.uniform(kb, (fout,), jnp.float32, -bound, bound)
    return w, b


def _alpha():
    return jnp.full((1, 1), 0.25, jnp.float32)           # PReLU default slope


def _embed_conv_w(w_kio, cin_p, cout_p):
    # (K, cin, cout) -> zero-padded (K*cin_p, cout_p) bf16, row index k*cin_p + cin
    K, cin, cout = w_kio.shape
    out = jnp.zeros((K, cin_p, cout_p), jnp.float32).at[:, :cin, :cout].set(w_kio)
    return out.reshape(K * cin_p, cout_p).astype(ACT_DTYPE)


def _embed_vec(v, c_p):
    return jnp.zeros((1, c_p), jnp.float32).at[0, :v.shape[0]].set(v)


def _pool_matrix(L_in, L_out):
    # Per-sample AvgPool1d(2,2) in slab coordinates; zero rows/cols keep the halo at zero.
    Lp_in, Lp_out = _padded_len(L_in), _padded_len(L_out)
    P = np.zeros((Lp_out, Lp_in), np.float32)
    for j in range(L_out):
        P[PADT + j, PADT + 2 * j] = 0.5
        P[PADT + j, PADT + 2 * j + 1] = 0.5
    return jnp.asarray(P).astype(ACT_DTYPE)


def init_params(key, cfg):
    eps = 1e-5
    bn_scale = 1.0 / math.sqrt(1.0 + eps)   # eval-mode BN, default running stats (mean 0, var 1)
    bn_shift = 0.0
    nbf, Cin = cfg["nbf"], cfg["input_size"]
    keys = iter(jax.random.split(key, 32))
    p = {}

    # conv0: fold eval-BN and the following AvgPool(2,2) into one pool-expanded weight matrix.
    w, b = _conv_init(next(keys), nbf, Cin, 3)
    wmat = jnp.transpose(w, (2, 1, 0)).reshape(3 * Cin, nbf)                 # (K*Cin, C0)
    w0 = jnp.concatenate([wmat, wmat], axis=0) * (0.5 * bn_scale)            # pool + BN folded
    kc = 2 * 3 * Cin
    kc_p, c0_p = _round_up(kc, LANE), _round_up(nbf, LANE)
    w0p = jnp.zeros((kc_p, c0_p), jnp.float32).at[:kc, :nbf].set(w0).astype(ACT_DTYPE)
    p["conv0"] = {"w": w0p, "b": _embed_vec(b * bn_scale + bn_shift, c0_p), "a": _alpha()}

    blocks = []
    for i, (L_in, L_out) in enumerate(cfg["lengths"]):
        cin, cout = (i + 1) * nbf, (i + 2) * nbf
        cin_p, cout_p = _round_up(cin, LANE), _round_up(cout, LANE)
        w1, b1 = _conv_init(next(keys), cout, cin, 7)
        w2, b2 = _conv_init(next(keys), cout, cout, 7)
        ws, bs = _conv_init(next(keys), cout, cin, 1)
        W1 = jnp.transpose(w1, (2, 1, 0)) * bn_scale                          # BN1 folded
        W2 = jnp.transpose(w2, (2, 1, 0)) * bn_scale                          # BN_out folded
        Ws = jnp.transpose(ws, (2, 1, 0))[0] * bn_scale                       # BN_out folded
        blk = {
            "w1": _embed_conv_w(W1, cin_p, cout_p),
            "b1": _embed_vec(b1 * bn_scale + bn_shift, cout_p),
            "a1": _alpha(),
            "w2": _embed_conv_w(W2, cout_p, cout_p),
            "ws": jnp.zeros((cin_p, cout_p), jnp.float32).at[:cin, :cout].set(Ws).astype(ACT_DTYPE),
            "b2": _embed_vec((b2 + bs) * bn_scale + bn_shift, cout_p),        # combined bias
            "a2": _alpha(),
        }
        if L_out != L_in:
            blk["pool"] = _pool_matrix(L_in, L_out)
        blocks.append(blk)
    p["blocks"] = blocks

    # Dense head: fold BN(128) into fc1 and fold the [sum | mean] concat (mean = sum / L_last)
    # into the fc1 weight columns so the kernel only needs the channel sums.
    C = 6 * nbf
    C_p = _round_up(C, LANE)
    w1, b1 = _linear_init(next(keys), 2 * C, 128)
    w2, b2 = _linear_init(next(keys), 128, cfg["output_size"])
    W1 = jnp.transpose(w1) * bn_scale                                         # (2C, 128)
    W1_eff = W1[:C, :] + W1[C:, :] / float(cfg["L_last"])
    p["head"] = {"w1": jnp.zeros((C_p, 128), jnp.float32).at[:C, :].set(W1_eff),
                 "b1": (b1 * bn_scale + bn_shift)[None, :], "a": _alpha(),
                 "w2": jnp.transpose(w2), "b2": b2[None, :]}
    return p


# ----------------------------------------------------------------------------
# Forward (InertialModule.forward)
# ----------------------------------------------------------------------------

def _conv0_im2col(x, cfg):
    # Strided/dilated tap gather for conv0 stays in XLA glue (tiny (B,200,6) input, awkward
    # gather); the AvgPool(2,2) is folded into the tap layout, lanes padded to 128, and each
    # sample is placed into its zero-haloed slab so the kernel output is already slab-shaped.
    B, Cin = x.shape[0], x.shape[-1]
    K0, DIL, STR = cfg["K0"], cfg["DIL"], cfg["STR"]
    L0, L0p = cfg["L0"], cfg["L0p"]
    Lp0 = _padded_len(L0p)
    kc = 2 * K0 * Cin
    kc_p = _round_up(kc, LANE)
    cols = [x[:, k * DIL: k * DIL + (L0 - 1) * STR + 1: STR, :] for k in range(K0)]
    xcol = jnp.concatenate(cols, axis=-1)                                 # (B, L0, K0*Cin)
    xcol = xcol[:, :2 * L0p, :].reshape(B, L0p, kc)                       # AvgPool(2,2) pairs
    xcol = jnp.pad(xcol, ((0, 0), (PADT, Lp0 - PADT - L0p), (0, kc_p - kc)))
    return xcol.reshape(B * Lp0, kc_p).astype(ACT_DTYPE)


def inertial_forward(x, params, cfg):
    B = x.shape[0]
    xcol = _conv0_im2col(x, cfg)
    h = conv0_call(xcol, params["conv0"], B=B, L=cfg["L0p"])
    for blk, (L_in, L_out) in zip(params["blocks"], cfg["lengths"]):
        h = resblock_call(h, blk, B=B, L=L_in, L_out=L_out)
    return head_call(h, params["head"], B=B)


def reference_forward(x, params, cfg):
    # Same math, plain XLA (no Pallas) -- validates the Mosaic lowering numerically.
    B = x.shape[0]
    xcol = _conv0_im2col(x, cfg)
    c0 = params["conv0"]
    h = _conv0_math(xcol, c0["w"], c0["b"], c0["a"], B, cfg["L0p"])
    for blk, (L_in, L_out) in zip(params["blocks"], cfg["lengths"]):
        h = _resblock_math(h, blk["w1"], blk["b1"], blk["a1"], blk["w2"], blk["ws"],
                           blk["b2"], blk["a2"], blk.get("pool"), B, L_in)
    hd = params["head"]
    return _head_math(h, hd["w1"], hd["b1"], hd["a"], hd["w2"], hd["b2"], B)


if __name__ == "__main__":
    key = jax.random.PRNGKey(0)
    kx, kp = jax.random.split(key)

    # Small synthetic config consistent with the module's forward:
    #   input_size=6 (IMU channels), output_size=7 (pos + quat), seq_len=200 (training window),
    #   n_base_filters shrunk from 512 -> 8 for a small runnable test.
    B, seq_len, input_size = 2, 200, 6
    nbf, output_size = 8, 7

    cfg = make_config(seq_len, input_size, nbf, output_size)
    params = init_params(kp, cfg)
    x = jax.random.normal(kx, (B, seq_len, input_size), jnp.float32)

    fwd = jax.jit(lambda xx, pp: inertial_forward(xx, pp, cfg))
    out = jax.block_until_ready(fwd(x, params))

    assert out.shape == (B, output_size), out.shape
    assert bool(jnp.all(jnp.isfinite(out)))
    # quaternion part must be unit-norm (normalization done in f32 inside the head kernel)
    qn = jnp.linalg.norm(out[:, 3:7], axis=1)
    assert bool(jnp.all(jnp.abs(qn - 1.0) < 1e-3))
    # numerical parity vs. the identical math run through plain XLA
    ref = jax.block_until_ready(jax.jit(lambda xx, pp: reference_forward(xx, pp, cfg))(x, params))
    np.testing.assert_allclose(np.asarray(out), np.asarray(ref), rtol=2e-2, atol=2e-2)
    print("KERNEL_OK")
</pallas_src>

<mosaic_0001>
module attributes {stable_mosaic.version = 11 : i64} {
  func.func @_conv0_kernel(%arg0: memref<96x128xbf16, #tpu.memory_space<vmem>>, %arg1: memref<128x128xbf16, #tpu.memory_space<vmem>>, %arg2: memref<1x128xf32, #tpu.memory_space<vmem>>, %arg3: memref<1x1xf32, #tpu.memory_space<vmem>>, %arg4: memref<96x128xbf16, #tpu.memory_space<vmem>>) attributes {dimension_semantics = [], scalar_prefetch = 0 : i64, scratch_operands = 0 : i64, tpu.core_type = #tpu.core_type<tc>} {
    %c0 = arith.constant 0 : index
    %c0_0 = arith.constant 0 : index
    %0 = vector.load %arg0[%c0, %c0_0] : memref<96x128xbf16, #tpu.memory_space<vmem>>, vector<96x128xbf16>
    %c0_1 = arith.constant 0 : index
    %c0_2 = arith.constant 0 : index
    %1 = vector.load %arg1[%c0_1, %c0_2] : memref<128x128xbf16, #tpu.memory_space<vmem>>, vector<128x128xbf16>
    %c0_3 = arith.constant 0 : index
    %c0_4 = arith.constant 0 : index
    %2 = vector.load %arg2[%c0_3, %c0_4] : memref<1x128xf32, #tpu.memory_space<vmem>>, vector<1x128xf32>
    %c0_5 = arith.constant 0 : index
    %c0_6 = arith.constant 0 : index
    %3 = vector.load %arg3[%c0_5, %c0_6] : memref<1x1xf32, #tpu.memory_space<vmem>>, vector<1x1xf32>
    %cst = arith.constant dense<0.000000e+00> : vector<96x128xf32>
    %4 = tpu.matmul %0, %1, %cst {dimension_numbers = #tpu.dot_dimension_numbers<[1], [0], [0], [1], [0, 0, 1, 1], [], []>} : vector<96x128xbf16>, vector<128x128xbf16>, vector<96x128xf32> -> vector<96x128xf32>
    %5 = vector.broadcast %2 : vector<1x128xf32> to vector<96x128xf32>
    %6 = arith.addf %4, %5 : vector<96x128xf32>
    %7 = tpu.iota {dimensions = array<i32: 0>} : vector<96x1xi32>
    %c0_i32 = arith.constant 0 : i32
    %8 = vector.broadcast %c0_i32 : i32 to vector<96x1xi32>
    %9 = arith.addi %7, %8 : vector<96x1xi32>
    %c8_i32 = arith.constant 8 : i32
    %10 = vector.broadcast %c8_i32 : i32 to vector<96x1xi32>
    %11 = arith.cmpi sge, %9, %10 : vector<96x1xi32>
    %c41_i32 = arith.constant 41 : i32
    %12 = vector.broadcast %c41_i32 : i32 to vector<96x1xi32>
    %13 = arith.cmpi slt, %9, %12 : vector<96x1xi32>
    %14 = arith.andi %11, %13 : vector<96x1xi1>
    %c56_i32 = arith.constant 56 : i32
    %15 = vector.broadcast %c56_i32 : i32 to vector<96x1xi32>
    %16 = arith.cmpi sge, %9, %15 : vector<96x1xi32>
    %c89_i32 = arith.constant 89 : i32
    %17 = vector.broadcast %c89_i32 : i32 to vector<96x1xi32>
    %18 = arith.cmpi slt, %9, %17 : vector<96x1xi32>
    %19 = arith.andi %16, %18 : vector<96x1xi1>
    %20 = arith.ori %14, %19 : vector<96x1xi1>
    %cst_7 = arith.constant 0.000000e+00 : f32
    %21 = vector.broadcast %cst_7 : f32 to vector<96x128xf32>
    %22 = arith.cmpf oge, %6, %21 : vector<96x128xf32>
    %23 = vector.broadcast %3 : vector<1x1xf32> to vector<96x128xf32>
    %24 = arith.mulf %23, %6 : vector<96x128xf32>
    %25 = arith.select %22, %6, %24 : vector<96x128xi1>, vector<96x128xf32>
    %cst_8 = arith.constant 0.000000e+00 : f32
    %26 = vector.shape_cast %20 : vector<96x1xi1> to vector<96x1xi1>
    %27 = vector.broadcast %26 : vector<96x1xi1> to vector<96x128xi1>
    %28 = vector.broadcast %cst_8 : f32 to vector<96x128xf32>
    %29 = arith.select %27, %25, %28 : vector<96x128xi1>, vector<96x128xf32>
    %30 = arith.truncf %29 : vector<96x128xf32> to vector<96x128xbf16>
    %c0_9 = arith.constant 0 : index
    %c0_10 = arith.constant 0 : index
    %31 = vector.load %arg4[%c0_9, %c0_10] : memref<96x128xbf16, #tpu.memory_space<vmem>>, vector<96x128xbf16>
    tpu.vector_store %arg4[%c0_9, %c0_10], %30 {strides = array<i32>} : memref<96x128xbf16, #tpu.memory_space<vmem>>, vector<96x128xbf16>,
    return
  }
}

module attributes {stable_mosaic.version = 11 : i64} {
  func.func @_resblock_kernel(%arg0: memref<96x128xbf16, #tpu.memory_space<vmem>>, %arg1: memref<896x128xbf16, #tpu.memory_space<vmem>>, %arg2: memref<1x128xf32, #tpu.memory_space<vmem>>, %arg3: memref<1x1xf32, #tpu.memory_space<vmem>>, %arg4: memref<896x128xbf16, #tpu.memory_space<vmem>>, %arg5: memref<128x128xbf16, #tpu.memory_space<vmem>>, %arg6: memref<1x128xf32, #tpu.memory_space<vmem>>, %arg7: memref<1x1xf32, #tpu.memory_space<vmem>>, %arg8: memref<32x48xbf16, #tpu.memory_space<vmem>>, %arg9: memref<64x128xbf16, #tpu.memory_space<vmem>>) attributes {dimension_semantics = [], scalar_prefetch = 0 : i64, scratch_operands = 0 : i64, tpu.core_type = #tpu.core_type<tc>} {
    %c0 = arith.constant 0 : index
    %c0_0 = arith.constant 0 : index
    %0 = vector.load %arg8[%c0, %c0_0] : memref<32x48xbf16, #tpu.memory_space<vmem>>, vector<32x48xbf16>
    %c0_1 = arith.constant 0 : index
    %c0_2 = arith.constant 0 : index
    %1 = vector.load %arg0[%c0_1, %c0_2] : memref<96x128xbf16, #tpu.memory_space<vmem>>, vector<96x128xbf16>
    %c0_3 = arith.constant 0 : index
    %c0_4 = arith.constant 0 : index
    %2 = vector.load %arg1[%c0_3, %c0_4] : memref<896x128xbf16, #tpu.memory_space<vmem>>, vector<896x128xbf16>
    %c0_5 = arith.constant 0 : index
    %c0_6 = arith.constant 0 : index
    %3 = vector.load %arg2[%c0_5, %c0_6] : memref<1x128xf32, #tpu.memory_space<vmem>>, vector<1x128xf32>
    %c0_7 = arith.constant 0 : index
    %c0_8 = arith.constant 0 : index
    %4 = vector.load %arg3[%c0_7, %c0_8] : memref<1x1xf32, #tpu.memory_space<vmem>>, vector<1x1xf32>
    %c0_9 = arith.constant 0 : index
    %c0_10 = arith.constant 0 : index
    %5 = vector.load %arg4[%c0_9, %c0_10] : memref<896x128xbf16, #tpu.memory_space<vmem>>, vector<896x128xbf16>
    %c0_11 = arith.constant 0 : index
    %c0_12 = arith.constant 0 : index
    %6 = vector.load %arg5[%c0_11, %c0_12] : memref<128x128xbf16, #tpu.memory_space<vmem>>, vector<128x128xbf16>
    %c0_13 = arith.constant 0 : index
    %c0_14 = arith.constant 0 : index
    %7 = vector.load %arg6[%c0_13, %c0_14] : memref<1x128xf32, #tpu.memory_space<vmem>>, vector<1x128xf32>
    %c0_15 = arith.constant 0 : index
    %c0_16 = arith.constant 0 : index
    %8 = vector.load %arg7[%c0_15, %c0_16] : memref<1x1xf32, #tpu.memory_space<vmem>>, vector<1x1xf32>
    %9 = tpu.iota {dimensions = array<i32: 0>} : vector<90x1xi32>
    %c3_i32 = arith.constant 3 : i32
    %10 = vector.broadcast %c3_i32 : i32 to vector<90x1xi32>
    %11 = arith.addi %9, %10 : vector<90x1xi32>
    %c8_i32 = arith.constant 8 : i32
    %12 = vector.broadcast %c8_i32 : i32 to vector<90x1xi32>
    %13 = arith.cmpi sge, %11, %12 : vector<90x1xi32>
    %c41_i32 = arith.constant 41 : i32
    %14 = vector.broadcast %c41_i32 : i32 to vector<90x1xi32>
    %15 = arith.cmpi slt, %11, %14 : vector<90x1xi32>
    %16 = arith.andi %13, %15 : vector<90x1xi1>
    %c56_i32 = arith.constant 56 : i32
    %17 = vector.broadcast %c56_i32 : i32 to vector<90x1xi32>
    %18 = arith.cmpi sge, %11, %17 : vector<90x1xi32>
    %c89_i32 = arith.constant 89 : i32
    %19 = vector.broadcast %c89_i32 : i32 to vector<90x1xi32>
    %20 = arith.cmpi slt, %11, %19 : vector<90x1xi32>
    %21 = arith.andi %18, %20 : vector<90x1xi1>
    %22 = arith.ori %16, %21 : vector<90x1xi1>
    %23 = vector.extract_strided_slice %1 {offsets = [0, 0], sizes = [90, 128], strides = [1, 1]} : vector<96x128xbf16> to vector<90x128xbf16>
    %24 = vector.extract_strided_slice %1 {offsets = [1, 0], sizes = [90, 128], strides = [1, 1]} : vector<96x128xbf16> to vector<90x128xbf16>
    %25 = vector.extract_strided_slice %1 {offsets = [2, 0], sizes = [90, 128], strides = [1, 1]} : vector<96x128xbf16> to vector<90x128xbf16>
    %26 = vector.extract_strided_slice %1 {offsets = [3, 0], sizes = [90, 128], strides = [1, 1]} : vector<96x128xbf16> to vector<90x128xbf16>
    %27 = vector.extract_strided_slice %1 {offsets = [4, 0], sizes = [90, 128], strides = [1, 1]} : vector<96x128xbf16> to vector<90x128xbf16>
    %28 = vector.extract_strided_slice %1 {offsets = [5, 0], sizes = [90, 128], strides = [1, 1]} : vector<96x128xbf16> to vector<90x128xbf16>
    %29 = vector.extract_strided_slice %1 {offsets = [6, 0], sizes = [90, 128], strides = [1, 1]} : vector<96x128xbf16> to vector<90x128xbf16>
    %30 = tpu.concatenate %23, %24, %25, %26, %27, %28, %29 in 1 : vector<90x128xbf16>, vector<90x128xbf16>, vector<90x128xbf16>, vector<90x128xbf16>, vector<90x128xbf16>, vector<90x128xbf16>, vector<90x128xbf16> -> vector<90x896xbf16>
    %cst = arith.constant dense<0.000000e+00> : vector<90x128xf32>
    %31 = tpu.matmul %30, %2, %cst {dimension_numbers = #tpu.dot_dimension_numbers<[1], [0], [0], [1], [0, 0, 1, 1], [], []>} : vector<90x896xbf16>, vector<896x128xbf16>, vector<90x128xf32> -> vector<90x128xf32>
    %32 = vector.broadcast %3 : vector<1x128xf32> to vector<90x128xf32>
    %33 = arith.addf %31, %32 : vector<90x128xf32>
    %cst_17 = arith.constant 0.000000e+00 : f32
    %34 = vector.broadcast %cst_17 : f32 to vector<90x128xf32>
    %35 = arith.cmpf oge, %33, %34 : vector<90x128xf32>
    %36 = vector.broadcast %4 : vector<1x1xf32> to vector<90x128xf32>
    %37 = arith.mulf %36, %33 : vector<90x128xf32>
    %38 = arith.select %35, %33, %37 : vector<90x128xi1>, vector<90x128xf32>
    %cst_18 = arith.constant 0.000000e+00 : f32
    %39 = vector.shape_cast %22 : vector<90x1xi1> to vector<90x1xi1>
    %40 = vector.broadcast %39 : vector<90x1xi1> to vector<90x128xi1>
    %41 = vector.broadcast %cst_18 : f32 to vector<90x128xf32>
    %42 = arith.select %40, %38, %41 : vector<90x128xi1>, vector<90x128xf32>
    %43 = arith.truncf %42 : vector<90x128xf32> to vector<90x128xbf16>
    %cst_19 = arith.constant 0.000000e+00 : bf16
    %44 = vector.broadcast %cst_19 : bf16 to vector<3x128xbf16>
    %45 = tpu.concatenate %44, %43, %44 in 0 : vector<3x128xbf16>, vector<90x128xbf16>, vector<3x128xbf16> -> vector<96x128xbf16>
    %46 = vector.extract_strided_slice %45 {offsets = [0, 0], sizes = [90, 128], strides = [1, 1]} : vector<96x128xbf16> to vector<90x128xbf16>
    %47 = vector.extract_strided_slice %45 {offsets = [1, 0], sizes = [90, 128], strides = [1, 1]} : vector<96x128xbf16> to vector<90x128xbf16>
    %48 = vector.extract_strided_slice %45 {offsets = [2, 0], sizes = [90, 128], strides = [1, 1]} : vector<96x128xbf16> to vector<90x128xbf16>
    %49 = vector.extract_strided_slice %45 {offsets = [3, 0], sizes = [90, 128], strides = [1, 1]} : vector<96x128xbf16> to vector<90x128xbf16>
    %50 = vector.extract_strided_slice %45 {offsets = [4, 0], sizes = [90, 128], strides = [1, 1]} : vector<96x128xbf16> to vector<90x128xbf16>
    %51 = vector.extract_strided_slice %45 {offsets = [5, 0], sizes = [90, 128], strides = [1, 1]} : vector<96x128xbf16> to vector<90x128xbf16>
    %52 = vector.extract_strided_slice %45 {offsets = [6, 0], sizes = [90, 128], strides = [1, 1]} : vector<96x128xbf16> to vector<90x128xbf16>
    %53 = tpu.concatenate %46, %47, %48, %49, %50, %51, %52 in 1 : vector<90x128xbf16>, vector<90x128xbf16>, vector<90x128xbf16>, vector<90x128xbf16>, vector<90x128xbf16>, vector<90x128xbf16>, vector<90x128xbf16> -> vector<90x896xbf16>
    %cst_20 = arith.constant dense<0.000000e+00> : vector<90x128xf32>
    %54 = tpu.matmul %53, %5, %cst_20 {dimension_numbers = #tpu.dot_dimension_numbers<[1], [0], [0], [1], [0, 0, 1, 1], [], []>} : vector<90x896xbf16>, vector<896x128xbf16>, vector<90x128xf32> -> vector<90x128xf32>
    %cst_21 = arith.constant dense<0.000000e+00> : vector<90x128xf32>
    %55 = tpu.matmul %26, %6, %cst_21 {dimension_numbers = #tpu.dot_dimension_numbers<[1], [0], [0], [1], [0, 0, 1, 1], [], []>} : vector<90x128xbf16>, vector<128x128xbf16>, vector<90x128xf32> -> vector<90x128xf32>
    %56 = arith.addf %54, %55 : vector<90x128xf32>
    %57 = vector.broadcast %7 : vector<1x128xf32> to vector<90x128xf32>
    %58 = arith.addf %56, %57 : vector<90x128xf32>
    %cst_22 = arith.constant 0.000000e+00 : f32
    %59 = vector.broadcast %cst_22 : f32 to vector<90x128xf32>
    %60 = arith.cmpf oge, %58, %59 : vector<90x128xf32>
    %61 = vector.broadcast %8 : vector<1x1xf32> to vector<90x128xf32>
    %62 = arith.mulf %61, %58 : vector<90x128xf32>
    %63 = arith.select %60, %58, %62 : vector<90x128xi1>, vector<90x128xf32>
    %cst_23 = arith.constant 0.000000e+00 : bf16
    %64 = vector.broadcast %cst_23 : bf16 to vector<3x128xbf16>
    %65 = arith.truncf %63 : vector<90x128xf32> to vector<90x128xbf16>
    %66 = tpu.concatenate %64, %65, %64 in 0 : vector<3x128xbf16>, vector<90x128xbf16>, vector<3x128xbf16> -> vector<96x128xbf16>
    %67 = vector.extract_strided_slice %66 {offsets = [0, 0], sizes = [48, 128], strides = [1, 1]} : vector<96x128xbf16> to vector<48x128xbf16>
    %cst_24 = arith.constant dense<0.000000e+00> : vector<32x128xf32>
    %68 = tpu.matmul %0, %67, %cst_24 {dimension_numbers = #tpu.dot_dimension_numbers<[1], [0], [0], [1], [0, 0, 1, 1], [], []>} : vector<32x48xbf16>, vector<48x128xbf16>, vector<32x128xf32> -> vector<32x128xf32>
    %69 = vector.extract_strided_slice %66 {offsets = [48, 0], sizes = [48, 128], strides = [1, 1]} : vector<96x128xbf16> to vector<48x128xbf16>
    %cst_25 = arith.constant dense<0.000000e+00> : vector<32x128xf32>
    %70 = tpu.matmul %0, %69, %cst_25 {dimension_numbers = #tpu.dot_dimension_numbers<[1], [0], [0], [1], [0, 0, 1, 1], [], []>} : vector<32x48xbf16>, vector<48x128xbf16>, vector<32x128xf32> -> vector<32x128xf32>
    %71 = tpu.concatenate %68, %70 in 0 : vector<32x128xf32>, vector<32x128xf32> -> vector<64x128xf32>
    %72 = arith.truncf %71 : vector<64x128xf32> to vector<64x128xbf16>
    %c0_26 = arith.constant 0 : index
    %c0_27 = arith.constant 0 : index
    %73 = vector.load %arg9[%c0_26, %c0_27] : memref<64x128xbf16, #tpu.memory_space<vmem>>, vector<64x128xbf16>
    tpu.vector_store %arg9[%c0_26, %c0_27], %72 {strides = array<i32>} : memref<64x128xbf16, #tpu.memory_space<vmem>>, vector<64x128xbf16>,
    return
  }
}

module attributes {stable_mosaic.version = 11 : i64} {
  func.func @_resblock_kernel(%arg0: memref<64x128xbf16, #tpu.memory_space<vmem>>, %arg1: memref<896x128xbf16, #tpu.memory_space<vmem>>, %arg2: memref<1x128xf32, #tpu.memory_space<vmem>>, %arg3: memref<1x1xf32, #tpu.memory_space<vmem>>, %arg4: memref<896x128xbf16, #tpu.memory_space<vmem>>, %arg5: memref<128x128xbf16, #tpu.memory_space<vmem>>, %arg6: memref<1x128xf32, #tpu.memory_space<vmem>>, %arg7: memref<1x1xf32, #tpu.memory_space<vmem>>, %arg8: memref<24x32xbf16, #tpu.memory_space<vmem>>, %arg9: memref<48x128xbf16, #tpu.memory_space<vmem>>) attributes {dimension_semantics = [], scalar_prefetch = 0 : i64, scratch_operands = 0 : i64, tpu.core_type = #tpu.core_type<tc>} {
    %c0 = arith.constant 0 : index
    %c0_0 = arith.constant 0 : index
    %0 = vector.load %arg8[%c0, %c0_0] : memref<24x32xbf16, #tpu.memory_space<vmem>>, vector<24x32xbf16>
    %c0_1 = arith.constant 0 : index
    %c0_2 = arith.constant 0 : index
    %1 = vector.load %arg0[%c0_1, %c0_2] : memref<64x128xbf16, #tpu.memory_space<vmem>>, vector<64x128xbf16>
    %c0_3 = arith.constant 0 : index
    %c0_4 = arith.constant 0 : index
    %2 = vector.load %arg1[%c0_3, %c0_4] : memref<896x128xbf16, #tpu.memory_space<vmem>>, vector<896x128xbf16>
    %c0_5 = arith.constant 0 : index
    %c0_6 = arith.constant 0 : index
    %3 = vector.load %arg2[%c0_5, %c0_6] : memref<1x128xf32, #tpu.memory_space<vmem>>, vector<1x128xf32>
    %c0_7 = arith.constant 0 : index
    %c0_8 = arith.constant 0 : index
    %4 = vector.load %arg3[%c0_7, %c0_8] : memref<1x1xf32, #tpu.memory_space<vmem>>, vector<1x1xf32>
    %c0_9 = arith.constant 0 : index
    %c0_10 = arith.constant 0 : index
    %5 = vector.load %arg4[%c0_9, %c0_10] : memref<896x128xbf16, #tpu.memory_space<vmem>>, vector<896x128xbf16>
    %c0_11 = arith.constant 0 : index
    %c0_12 = arith.constant 0 : index
    %6 = vector.load %arg5[%c0_11, %c0_12] : memref<128x128xbf16, #tpu.memory_space<vmem>>, vector<128x128xbf16>
    %c0_13 = arith.constant 0 : index
    %c0_14 = arith.constant 0 : index
    %7 = vector.load %arg6[%c0_13, %c0_14] : memref<1x128xf32, #tpu.memory_space<vmem>>, vector<1x128xf32>
    %c0_15 = arith.constant 0 : index
    %c0_16 = arith.constant 0 : index
    %8 = vector.load %arg7[%c0_15, %c0_16] : memref<1x1xf32, #tpu.memory_space<vmem>>, vector<1x1xf32>
    %9 = tpu.iota {dimensions = array<i32: 0>} : vector<58x1xi32>
    %c3_i32 = arith.constant 3 : i32
    %10 = vector.broadcast %c3_i32 : i32 to vector<58x1xi32>
    %11 = arith.addi %9, %10 : vector<58x1xi32>
    %c8_i32 = arith.constant 8 : i32
    %12 = vector.broadcast %c8_i32 : i32 to vector<58x1xi32>
    %13 = arith.cmpi sge, %11, %12 : vector<58x1xi32>
    %c24_i32 = arith.constant 24 : i32
    %14 = vector.broadcast %c24_i32 : i32 to vector<58x1xi32>
    %15 = arith.cmpi slt, %11, %14 : vector<58x1xi32>
    %16 = arith.andi %13, %15 : vector<58x1xi1>
    %c40_i32 = arith.constant 40 : i32
    %17 = vector.broadcast %c40_i32 : i32 to vector<58x1xi32>
    %18 = arith.cmpi sge, %11, %17 : vector<58x1xi32>
    %c56_i32 = arith.constant 56 : i32
    %19 = vector.broadcast %c56_i32 : i32 to vector<58x1xi32>
    %20 = arith.cmpi slt, %11, %19 : vector<58x1xi32>
    %21 = arith.andi %18, %20 : vector<58x1xi1>
    %22 = arith.ori %16, %21 : vector<58x1xi1>
    %23 = vector.extract_strided_slice %1 {offsets = [0, 0], sizes = [58, 128], strides = [1, 1]} : vector<64x128xbf16> to vector<58x128xbf16>
    %24 = vector.extract_strided_slice %1 {offsets = [1, 0], sizes = [58, 128], strides = [1, 1]} : vector<64x128xbf16> to vector<58x128xbf16>
    %25 = vector.extract_strided_slice %1 {offsets = [2, 0], sizes = [58, 128], strides = [1, 1]} : vector<64x128xbf16> to vector<58x128xbf16>
    %26 = vector.extract_strided_slice %1 {offsets = [3, 0], sizes = [58, 128], strides = [1, 1]} : vector<64x128xbf16> to vector<58x128xbf16>
    %27 = vector.extract_strided_slice %1 {offsets = [4, 0], sizes = [58, 128], strides = [1, 1]} : vector<64x128xbf16> to vector<58x128xbf16>
    %28 = vector.extract_strided_slice %1 {offsets = [5, 0], sizes = [58, 128], strides = [1, 1]} : vector<64x128xbf16> to vector<58x128xbf16>
    %29 = vector.extract_strided_slice %1 {offsets = [6, 0], sizes = [58, 128], strides = [1, 1]} : vector<64x128xbf16> to vector<58x128xbf16>
    %30 = tpu.concatenate %23, %24, %25, %26, %27, %28, %29 in 1 : vector<58x128xbf16>, vector<58x128xbf16>, vector<58x128xbf16>, vector<58x128xbf16>, vector<58x128xbf16>, vector<58x128xbf16>, vector<58x128xbf16> -> vector<58x896xbf16>
    %cst = arith.constant dense<0.000000e+00> : vector<58x128xf32>
    %31 = tpu.matmul %30, %2, %cst {dimension_numbers = #tpu.dot_dimension_numbers<[1], [0], [0], [1], [0, 0, 1, 1], [], []>} : vector<58x896xbf16>, vector<896x128xbf16>, vector<58x128xf32> -> vector<58x128xf32>
    %32 = vector.broadcast %3 : vector<1x128xf32> to vector<58x128xf32>
    %33 = arith.addf %31, %32 : vector<58x128xf32>
    %cst_17 = arith.constant 0.000000e+00 : f32
    %34 = vector.broadcast %cst_17 : f32 to vector<58x128xf32>
    %35 = arith.cmpf oge, %33, %34 : vector<58x128xf32>
    %36 = vector.broadcast %4 : vector<1x1xf32> to vector<58x128xf32>
    %37 = arith.mulf %36, %33 : vector<58x128xf32>
    %38 = arith.select %35, %33, %37 : vector<58x128xi1>, vector<58x128xf32>
    %cst_18 = arith.constant 0.000000e+00 : f32
    %39 = vector.shape_cast %22 : vector<58x1xi1> to vector<58x1xi1>
    %40 = vector.broadcast %39 : vector<58x1xi1> to vector<58x128xi1>
    %41 = vector.broadcast %cst_18 : f32 to vector<58x128xf32>
    %42 = arith.select %40, %38, %41 : vector<58x128xi1>, vector<58x128xf32>
    %43 = arith.truncf %42 : vector<58x128xf32> to vector<58x128xbf16>
    %cst_19 = arith.constant 0.000000e+00 : bf16
    %44 = vector.broadcast %cst_19 : bf16 to vector<3x128xbf16>
    %45 = tpu.concatenate %44, %43, %44 in 0 : vector<3x128xbf16>, vector<58x128xbf16>, vector<3x128xbf16> -> vector<64x128xbf16>
    %46 = vector.extract_strided_slice %45 {offsets = [0, 0], sizes = [58, 128], strides = [1, 1]} : vector<64x128xbf16> to vector<58x128xbf16>
    %47 = vector.extract_strided_slice %45 {offsets = [1, 0], sizes = [58, 128], strides = [1, 1]} : vector<64x128xbf16> to vector<58x128xbf16>
    %48 = vector.extract_strided_slice %45 {offsets = [2, 0], sizes = [58, 128], strides = [1, 1]} : vector<64x128xbf16> to vector<58x128xbf16>
    %49 = vector.extract_strided_slice %45 {offsets = [3, 0], sizes = [58, 128], strides = [1, 1]} : vector<64x128xbf16> to vector<58x128xbf16>
    %50 = vector.extract_strided_slice %45 {offsets = [4, 0], sizes = [58, 128], strides = [1, 1]} : vector<64x128xbf16> to vector<58x128xbf16>
    %51 = vector.extract_strided_slice %45 {offsets = [5, 0], sizes = [58, 128], strides = [1, 1]} : vector<64x128xbf16> to vector<58x128xbf16>
    %52 = vector.extract_strided_slice %45 {offsets = [6, 0], sizes = [58, 128], strides = [1, 1]} : vector<64x128xbf16> to vector<58x128xbf16>
    %53 = tpu.concatenate %46, %47, %48, %49, %50, %51, %52 in 1 : vector<58x128xbf16>, vector<58x128xbf16>, vector<58x128xbf16>, vector<58x128xbf16>, vector<58x128xbf16>, vector<58x128xbf16>, vector<58x128xbf16> -> vector<58x896xbf16>
    %cst_20 = arith.constant dense<0.000000e+00> : vector<58x128xf32>
    %54 = tpu.matmul %53, %5, %cst_20 {dimension_numbers = #tpu.dot_dimension_numbers<[1], [0], [0], [1], [0, 0, 1, 1], [], []>} : vector<58x896xbf16>, vector<896x128xbf16>, vector<58x128xf32> -> vector<58x128xf32>
    %cst_21 = arith.constant dense<0.000000e+00> : vector<58x128xf32>
    %55 = tpu.matmul %26, %6, %cst_21 {dimension_numbers = #tpu.dot_dimension_numbers<[1], [0], [0], [1], [0, 0, 1, 1], [], []>} : vector<58x128xbf16>, vector<128x128xbf16>, vector<58x128xf32> -> vector<58x128xf32>
    %56 = arith.addf %54, %55 : vector<58x128xf32>
    %57 = vector.broadcast %7 : vector<1x128xf32> to vector<58x128xf32>
    %58 = arith.addf %56, %57 : vector<58x128xf32>
    %cst_22 = arith.constant 0.000000e+00 : f32
    %59 = vector.broadcast %cst_22 : f32 to vector<58x128xf32>
    %60 = arith.cmpf oge, %58, %59 : vector<58x128xf32>
    %61 = vector.broadcast %8 : vector<1x1xf32> to vector<58x128xf32>
    %62 = arith.mulf %61, %58 : vector<58x128xf32>
    %63 = arith.select %60, %58, %62 : vector<58x128xi1>, vector<58x128xf32>
    %cst_23 = arith.constant 0.000000e+00 : bf16
    %64 = vector.broadcast %cst_23 : bf16 to vector<3x128xbf16>
    %65 = arith.truncf %63 : vector<58x128xf32> to vector<58x128xbf16>
    %66 = tpu.concatenate %64, %65, %64 in 0 : vector<3x128xbf16>, vector<58x128xbf16>, vector<3x128xbf16> -> vector<64x128xbf16>
    %67 = vector.extract_strided_slice %66 {offsets = [0, 0], sizes = [32, 128], strides = [1, 1]} : vector<64x128xbf16> to vector<32x128xbf16>
    %cst_24 = arith.constant dense<0.000000e+00> : vector<24x128xf32>
    %68 = tpu.matmul %0, %67, %cst_24 {dimension_numbers = #tpu.dot_dimension_numbers<[1], [0], [0], [1], [0, 0, 1, 1], [], []>} : vector<24x32xbf16>, vector<32x128xbf16>, vector<24x128xf32> -> vector<24x128xf32>
    %69 = vector.extract_strided_slice %66 {offsets = [32, 0], sizes = [32, 128], strides = [1, 1]} : vector<64x128xbf16> to vector<32x128xbf16>
    %cst_25 = arith.constant dense<0.000000e+00> : vector<24x128xf32>
    %70 = tpu.matmul %0, %69, %cst_25 {dimension_numbers = #tpu.dot_dimension_numbers<[1], [0], [0], [1], [0, 0, 1, 1], [], []>} : vector<24x32xbf16>, vector<32x128xbf16>, vector<24x128xf32> -> vector<24x128xf32>
    %71 = tpu.concatenate %68, %70 in 0 : vector<24x128xf32>, vector<24x128xf32> -> vector<48x128xf32>
    %72 = arith.truncf %71 : vector<48x128xf32> to vector<48x128xbf16>
    %c0_26 = arith.constant 0 : index
    %c0_27 = arith.constant 0 : index
    %73 = vector.load %arg9[%c0_26, %c0_27] : memref<48x128xbf16, #tpu.memory_space<vmem>>, vector<48x128xbf16>
    tpu.vector_store %arg9[%c0_26, %c0_27], %72 {strides = array<i32>} : memref<48x128xbf16, #tpu.memory_space<vmem>>, vector<48x128xbf16>,
    return
  }
}

module attributes {stable_mosaic.version = 11 : i64} {
  func.func @_resblock_kernel(%arg0: memref<48x128xbf16, #tpu.memory_space<vmem>>, %arg1: memref<896x128xbf16, #tpu.memory_space<vmem>>, %arg2: memref<1x128xf32, #tpu.memory_space<vmem>>, %arg3: memref<1x1xf32, #tpu.memory_space<vmem>>, %arg4: memref<896x128xbf16, #tpu.memory_space<vmem>>, %arg5: memref<128x128xbf16, #tpu.memory_space<vmem>>, %arg6: memref<1x128xf32, #tpu.memory_space<vmem>>, %arg7: memref<1x1xf32, #tpu.memory_space<vmem>>, %arg8: memref<16x24xbf16, #tpu.memory_space<vmem>>, %arg9: memref<32x128xbf16, #tpu.memory_space<vmem>>) attributes {dimension_semantics = [], scalar_prefetch = 0 : i64, scratch_operands = 0 : i64, tpu.core_type = #tpu.core_type<tc>} {
    %c0 = arith.constant 0 : index
    %c0_0 = arith.constant 0 : index
    %0 = vector.load %arg8[%c0, %c0_0] : memref<16x24xbf16, #tpu.memory_space<vmem>>, vector<16x24xbf16>
    %c0_1 = arith.constant 0 : index
    %c0_2 = arith.constant 0 : index
    %1 = vector.load %arg0[%c0_1, %c0_2] : memref<48x128xbf16, #tpu.memory_space<vmem>>, vector<48x128xbf16>
    %c0_3 = arith.constant 0 : index
    %c0_4 = arith.constant 0 : index
    %2 = vector.load %arg1[%c0_3, %c0_4] : memref<896x128xbf16, #tpu.memory_space<vmem>>, vector<896x128xbf16>
    %c0_5 = arith.constant 0 : index
    %c0_6 = arith.constant 0 : index
    %3 = vector.load %arg2[%c0_5, %c0_6] : memref<1x128xf32, #tpu.memory_space<vmem>>, vector<1x128xf32>
    %c0_7 = arith.constant 0 : index
    %c0_8 = arith.constant 0 : index
    %4 = vector.load %arg3[%c0_7, %c0_8] : memref<1x1xf32, #tpu.memory_space<vmem>>, vector<1x1xf32>
    %c0_9 = arith.constant 0 : index
    %c0_10 = arith.constant 0 : index
    %5 = vector.load %arg4[%c0_9, %c0_10] : memref<896x128xbf16, #tpu.memory_space<vmem>>, vector<896x128xbf16>
    %c0_11 = arith.constant 0 : index
    %c0_12 = arith.constant 0 : index
    %6 = vector.load %arg5[%c0_11, %c0_12] : memref<128x128xbf16, #tpu.memory_space<vmem>>, vector<128x128xbf16>
    %c0_13 = arith.constant 0 : index
    %c0_14 = arith.constant 0 : index
    %7 = vector.load %arg6[%c0_13, %c0_14] : memref<1x128xf32, #tpu.memory_space<vmem>>, vector<1x128xf32>
    %c0_15 = arith.constant 0 : index
    %c0_16 = arith.constant 0 : index
    %8 = vector.load %arg7[%c0_15, %c0_16] : memref<1x1xf32, #tpu.memory_space<vmem>>, vector<1x1xf32>
    %9 = tpu.iota {dimensions = array<i32: 0>} : vector<42x1xi32>
    %c3_i32 = arith.constant 3 : i32
    %10 = vector.broadcast %c3_i32 : i32 to vector<42x1xi32>
    %11 = arith.addi %9, %10 : vector<42x1xi32>
    %c8_i32 = arith.constant 8 : i32
    %12 = vector.broadcast %c8_i32 : i32 to vector<42x1xi32>
    %13 = arith.cmpi sge, %11, %12 : vector<42x1xi32>
    %c16_i32 = arith.constant 16 : i32
    %14 = vector.broadcast %c16_i32 : i32 to vector<42x1xi32>
    %15 = arith.cmpi slt, %11, %14 : vector<42x1xi32>
    %16 = arith.andi %13, %15 : vector<42x1xi1>
    %c32_i32 = arith.constant 32 : i32
    %17 = vector.broadcast %c32_i32 : i32 to vector<42x1xi32>
    %18 = arith.cmpi sge, %11, %17 : vector<42x1xi32>
    %c40_i32 = arith.constant 40 : i32
    %19 = vector.broadcast %c40_i32 : i32 to vector<42x1xi32>
    %20 = arith.cmpi slt, %11, %19 : vector<42x1xi32>
    %21 = arith.andi %18, %20 : vector<42x1xi1>
    %22 = arith.ori %16, %21 : vector<42x1xi1>
    %23 = vector.extract_strided_slice %1 {offsets = [0, 0], sizes = [42, 128], strides = [1, 1]} : vector<48x128xbf16> to vector<42x128xbf16>
    %24 = vector.extract_strided_slice %1 {offsets = [1, 0], sizes = [42, 128], strides = [1, 1]} : vector<48x128xbf16> to vector<42x128xbf16>
    %25 = vector.extract_strided_slice %1 {offsets = [2, 0], sizes = [42, 128], strides = [1, 1]} : vector<48x128xbf16> to vector<42x128xbf16>
    %26 = vector.extract_strided_slice %1 {offsets = [3, 0], sizes = [42, 128], strides = [1, 1]} : vector<48x128xbf16> to vector<42x128xbf16>
    %27 = vector.extract_strided_slice %1 {offsets = [4, 0], sizes = [42, 128], strides = [1, 1]} : vector<48x128xbf16> to vector<42x128xbf16>
    %28 = vector.extract_strided_slice %1 {offsets = [5, 0], sizes = [42, 128], strides = [1, 1]} : vector<48x128xbf16> to vector<42x128xbf16>
    %29 = vector.extract_strided_slice %1 {offsets = [6, 0], sizes = [42, 128], strides = [1, 1]} : vector<48x128xbf16> to vector<42x128xbf16>
    %30 = tpu.concatenate %23, %24, %25, %26, %27, %28, %29 in 1 : vector<42x128xbf16>, vector<42x128xbf16>, vector<42x128xbf16>, vector<42x128xbf16>, vector<42x128xbf16>, vector<42x128xbf16>, vector<42x128xbf16> -> vector<42x896xbf16>
    %cst = arith.constant dense<0.000000e+00> : vector<42x128xf32>
    %31 = tpu.matmul %30, %2, %cst {dimension_numbers = #tpu.dot_dimension_numbers<[1], [0], [0], [1], [0, 0, 1, 1], [], []>} : vector<42x896xbf16>, vector<896x128xbf16>, vector<42x128xf32> -> vector<42x128xf32>
    %32 = vector.broadcast %3 : vector<1x128xf32> to vector<42x128xf32>
    %33 = arith.addf %31, %32 : vector<42x128xf32>
    %cst_17 = arith.constant 0.000000e+00 : f32
    %34 = vector.broadcast %cst_17 : f32 to vector<42x128xf32>
    %35 = arith.cmpf oge, %33, %34 : vector<42x128xf32>
    %36 = vector.broadcast %4 : vector<1x1xf32> to vector<42x128xf32>
    %37 = arith.mulf %36, %33 : vector<42x128xf32>
    %38 = arith.select %35, %33, %37 : vector<42x128xi1>, vector<42x128xf32>
    %cst_18 = arith.constant 0.000000e+00 : f32
    %39 = vector.shape_cast %22 : vector<42x1xi1> to vector<42x1xi1>
    %40 = vector.broadcast %39 : vector<42x1xi1> to vector<42x128xi1>
    %41 = vector.broadcast %cst_18 : f32 to vector<42x128xf32>
    %42 = arith.select %40, %38, %41 : vector<42x128xi1>, vector<42x128xf32>
    %43 = arith.truncf %42 : vector<42x128xf32> to vector<42x128xbf16>
    %cst_19 = arith.constant 0.000000e+00 : bf16
    %44 = vector.broadcast %cst_19 : bf16 to vector<3x128xbf16>
    %45 = tpu.concatenate %44, %43, %44 in 0 : vector<3x128xbf16>, vector<42x128xbf16>, vector<3x128xbf16> -> vector<48x128xbf16>
    %46 = vector.extract_strided_slice %45 {offsets = [0, 0], sizes = [42, 128], strides = [1, 1]} : vector<48x128xbf16> to vector<42x128xbf16>
    %47 = vector.extract_strided_slice %45 {offsets = [1, 0], sizes = [42, 128], strides = [1, 1]} : vector<48x128xbf16> to vector<42x128xbf16>
    %48 = vector.extract_strided_slice %45 {offsets = [2, 0], sizes = [42, 128], strides = [1, 1]} : vector<48x128xbf16> to vector<42x128xbf16>
    %49 = vector.extract_strided_slice %45 {offsets = [3, 0], sizes = [42, 128], strides = [1, 1]} : vector<48x128xbf16> to vector<42x128xbf16>
    %50 = vector.extract_strided_slice %45 {offsets = [4, 0], sizes = [42, 128], strides = [1, 1]} : vector<48x128xbf16> to vector<42x128xbf16>
    %51 = vector.extract_strided_slice %45 {offsets = [5, 0], sizes = [42, 128], strides = [1, 1]} : vector<48x128xbf16> to vector<42x128xbf16>
    %52 = vector.extract_strided_slice %45 {offsets = [6, 0], sizes = [42, 128], strides = [1, 1]} : vector<48x128xbf16> to vector<42x128xbf16>
    %53 = tpu.concatenate %46, %47, %48, %49, %50, %51, %52 in 1 : vector<42x128xbf16>, vector<42x128xbf16>, vector<42x128xbf16>, vector<42x128xbf16>, vector<42x128xbf16>, vector<42x128xbf16>, vector<42x128xbf16> -> vector<42x896xbf16>
    %cst_20 = arith.constant dense<0.000000e+00> : vector<42x128xf32>
    %54 = tpu.matmul %53, %5, %cst_20 {dimension_numbers = #tpu.dot_dimension_numbers<[1], [0], [0], [1], [0, 0, 1, 1], [], []>} : vector<42x896xbf16>, vector<896x128xbf16>, vector<42x128xf32> -> vector<42x128xf32>
    %cst_21 = arith.constant dense<0.000000e+00> : vector<42x128xf32>
    %55 = tpu.matmul %26, %6, %cst_21 {dimension_numbers = #tpu.dot_dimension_numbers<[1], [0], [0], [1], [0, 0, 1, 1], [], []>} : vector<42x128xbf16>, vector<128x128xbf16>, vector<42x128xf32> -> vector<42x128xf32>
    %56 = arith.addf %54, %55 : vector<42x128xf32>
    %57 = vector.broadcast %7 : vector<1x128xf32> to vector<42x128xf32>
    %58 = arith.addf %56, %57 : vector<42x128xf32>
    %cst_22 = arith.constant 0.000000e+00 : f32
    %59 = vector.broadcast %cst_22 : f32 to vector<42x128xf32>
    %60 = arith.cmpf oge, %58, %59 : vector<42x128xf32>
    %61 = vector.broadcast %8 : vector<1x1xf32> to vector<42x128xf32>
    %62 = arith.mulf %61, %58 : vector<42x128xf32>
    %63 = arith.select %60, %58, %62 : vector<42x128xi1>, vector<42x128xf32>
    %cst_23 = arith.constant 0.000000e+00 : bf16
    %64 = vector.broadcast %cst_23 : bf16 to vector<3x128xbf16>
    %65 = arith.truncf %63 : vector<42x128xf32> to vector<42x128xbf16>
    %66 = tpu.concatenate %64, %65, %64 in 0 : vector<3x128xbf16>, vector<42x128xbf16>, vector<3x128xbf16> -> vector<48x128xbf16>
    %67 = vector.extract_strided_slice %66 {offsets = [0, 0], sizes = [24, 128], strides = [1, 1]} : vector<48x128xbf16> to vector<24x128xbf16>
    %cst_24 = arith.constant dense<0.000000e+00> : vector<16x128xf32>
    %68 = tpu.matmul %0, %67, %cst_24 {dimension_numbers = #tpu.dot_dimension_numbers<[1], [0], [0], [1], [0, 0, 1, 1], [], []>} : vector<16x24xbf16>, vector<24x128xbf16>, vector<16x128xf32> -> vector<16x128xf32>
    %69 = vector.extract_strided_slice %66 {offsets = [24, 0], sizes = [24, 128], strides = [1, 1]} : vector<48x128xbf16> to vector<24x128xbf16>
    %cst_25 = arith.constant dense<0.000000e+00> : vector<16x128xf32>
    %70 = tpu.matmul %0, %69, %cst_25 {dimension_numbers = #tpu.dot_dimension_numbers<[1], [0], [0], [1], [0, 0, 1, 1], [], []>} : vector<16x24xbf16>, vector<24x128xbf16>, vector<16x128xf32> -> vector<16x128xf32>
    %71 = tpu.concatenate %68, %70 in 0 : vector<16x128xf32>, vector<16x128xf32> -> vector<32x128xf32>
    %72 = arith.truncf %71 : vector<32x128xf32> to vector<32x128xbf16>
    %c0_26 = arith.constant 0 : index
    %c0_27 = arith.constant 0 : index
    %73 = vector.load %arg9[%c0_26, %c0_27] : memref<32x128xbf16, #tpu.memory_space<vmem>>, vector<32x128xbf16>
    tpu.vector_store %arg9[%c0_26, %c0_27], %72 {strides = array<i32>} : memref<32x128xbf16, #tpu.memory_space<vmem>>, vector<32x128xbf16>,
    return
  }
}

module attributes {stable_mosaic.version = 11 : i64} {
  func.func @_resblock_kernel(%arg0: memref<32x128xbf16, #tpu.memory_space<vmem>>, %arg1: memref<896x128xbf16, #tpu.memory_space<vmem>>, %arg2: memref<1x128xf32, #tpu.memory_space<vmem>>, %arg3: memref<1x1xf32, #tpu.memory_space<vmem>>, %arg4: memref<896x128xbf16, #tpu.memory_space<vmem>>, %arg5: memref<128x128xbf16, #tpu.memory_space<vmem>>, %arg6: memref<1x128xf32, #tpu.memory_space<vmem>>, %arg7: memref<1x1xf32, #tpu.memory_space<vmem>>, %arg8: memref<16x16xbf16, #tpu.memory_space<vmem>>, %arg9: memref<32x128xbf16, #tpu.memory_space<vmem>>) attributes {dimension_semantics = [], scalar_prefetch = 0 : i64, scratch_operands = 0 : i64, tpu.core_type = #tpu.core_type<tc>} {
    %c0 = arith.constant 0 : index
    %c0_0 = arith.constant 0 : index
    %0 = vector.load %arg8[%c0, %c0_0] : memref<16x16xbf16, #tpu.memory_space<vmem>>, vector<16x16xbf16>
    %c0_1 = arith.constant 0 : index
    %c0_2 = arith.constant 0 : index
    %1 = vector.load %arg0[%c0_1, %c0_2] : memref<32x128xbf16, #tpu.memory_space<vmem>>, vector<32x128xbf16>
    %c0_3 = arith.constant 0 : index
    %c0_4 = arith.constant 0 : index
    %2 = vector.load %arg1[%c0_3, %c0_4] : memref<896x128xbf16, #tpu.memory_space<vmem>>, vector<896x128xbf16>
    %c0_5 = arith.constant 0 : index
    %c0_6 = arith.constant 0 : index
    %3 = vector.load %arg2[%c0_5, %c0_6] : memref<1x128xf32, #tpu.memory_space<vmem>>, vector<1x128xf32>
    %c0_7 = arith.constant 0 : index
    %c0_8 = arith.constant 0 : index
    %4 = vector.load %arg3[%c0_7, %c0_8] : memref<1x1xf32, #tpu.memory_space<vmem>>, vector<1x1xf32>
    %c0_9 = arith.constant 0 : index
    %c0_10 = arith.constant 0 : index
    %5 = vector.load %arg4[%c0_9, %c0_10] : memref<896x128xbf16, #tpu.memory_space<vmem>>, vector<896x128xbf16>
    %c0_11 = arith.constant 0 : index
    %c0_12 = arith.constant 0 : index
    %6 = vector.load %arg5[%c0_11, %c0_12] : memref<128x128xbf16, #tpu.memory_space<vmem>>, vector<128x128xbf16>
    %c0_13 = arith.constant 0 : index
    %c0_14 = arith.constant 0 : index
    %7 = vector.load %arg6[%c0_13, %c0_14] : memref<1x128xf32, #tpu.memory_space<vmem>>, vector<1x128xf32>
    %c0_15 = arith.constant 0 : index
    %c0_16 = arith.constant 0 : index
    %8 = vector.load %arg7[%c0_15, %c0_16] : memref<1x1xf32, #tpu.memory_space<vmem>>, vector<1x1xf32>
    %9 = tpu.iota {dimensions = array<i32: 0>} : vector<26x1xi32>
    %c3_i32 = arith.constant 3 : i32
    %10 = vector.broadcast %c3_i32 : i32 to vector<26x1xi32>
    %11 = arith.addi %9, %10 : vector<26x1xi32>
    %c8_i32 = arith.constant 8 : i32
    %12 = vector.broadcast %c8_i32 : i32 to vector<26x1xi32>
    %13 = arith.cmpi sge, %11, %12 : vector<26x1xi32>
    %c12_i32 = arith.constant 12 : i32
    %14 = vector.broadcast %c12_i32 : i32 to vector<26x1xi32>
    %15 = arith.cmpi slt, %11, %14 : vector<26x1xi32>
    %16 = arith.andi %13, %15 : vector<26x1xi1>
    %c24_i32 = arith.constant 24 : i32
    %17 = vector.broadcast %c24_i32 : i32 to vector<26x1xi32>
    %18 = arith.cmpi sge, %11, %17 : vector<26x1xi32>
    %c28_i32 = arith.constant 28 : i32
    %19 = vector.broadcast %c28_i32 : i32 to vector<26x1xi32>
    %20 = arith.cmpi slt, %11, %19 : vector<26x1xi32>
    %21 = arith.andi %18, %20 : vector<26x1xi1>
    %22 = arith.ori %16, %21 : vector<26x1xi1>
    %23 = vector.extract_strided_slice %1 {offsets = [0, 0], sizes = [26, 128], strides = [1, 1]} : vector<32x128xbf16> to vector<26x128xbf16>
    %24 = vector.extract_strided_slice %1 {offsets = [1, 0], sizes = [26, 128], strides = [1, 1]} : vector<32x128xbf16> to vector<26x128xbf16>
    %25 = vector.extract_strided_slice %1 {offsets = [2, 0], sizes = [26, 128], strides = [1, 1]} : vector<32x128xbf16> to vector<26x128xbf16>
    %26 = vector.extract_strided_slice %1 {offsets = [3, 0], sizes = [26, 128], strides = [1, 1]} : vector<32x128xbf16> to vector<26x128xbf16>
    %27 = vector.extract_strided_slice %1 {offsets = [4, 0], sizes = [26, 128], strides = [1, 1]} : vector<32x128xbf16> to vector<26x128xbf16>
    %28 = vector.extract_strided_slice %1 {offsets = [5, 0], sizes = [26, 128], strides = [1, 1]} : vector<32x128xbf16> to vector<26x128xbf16>
    %29 = vector.extract_strided_slice %1 {offsets = [6, 0], sizes = [26, 128], strides = [1, 1]} : vector<32x128xbf16> to vector<26x128xbf16>
    %30 = tpu.concatenate %23, %24, %25, %26, %27, %28, %29 in 1 : vector<26x128xbf16>, vector<26x128xbf16>, vector<26x128xbf16>, vector<26x128xbf16>, vector<26x128xbf16>, vector<26x128xbf16>, vector<26x128xbf16> -> vector<26x896xbf16>
    %cst = arith.constant dense<0.000000e+00> : vector<26x128xf32>
    %31 = tpu.matmul %30, %2, %cst {dimension_numbers = #tpu.dot_dimension_numbers<[1], [0], [0], [1], [0, 0, 1, 1], [], []>} : vector<26x896xbf16>, vector<896x128xbf16>, vector<26x128xf32> -> vector<26x128xf32>
    %32 = vector.broadcast %3 : vector<1x128xf32> to vector<26x128xf32>
    %33 = arith.addf %31, %32 : vector<26x128xf32>
    %cst_17 = arith.constant 0.000000e+00 : f32
    %34 = vector.broadcast %cst_17 : f32 to vector<26x128xf32>
    %35 = arith.cmpf oge, %33, %34 : vector<26x128xf32>
    %36 = vector.broadcast %4 : vector<1x1xf32> to vector<26x128xf32>
    %37 = arith.mulf %36, %33 : vector<26x128xf32>
    %38 = arith.select %35, %33, %37 : vector<26x128xi1>, vector<26x128xf32>
    %cst_18 = arith.constant 0.000000e+00 : f32
    %39 = vector.shape_cast %22 : vector<26x1xi1> to vector<26x1xi1>
    %40 = vector.broadcast %39 : vector<26x1xi1> to vector<26x128xi1>
    %41 = vector.broadcast %cst_18 : f32 to vector<26x128xf32>
    %42 = arith.select %40, %38, %41 : vector<26x128xi1>, vector<26x128xf32>
    %43 = arith.truncf %42 : vector<26x128xf32> to vector<26x128xbf16>
    %cst_19 = arith.constant 0.000000e+00 : bf16
    %44 = vector.broadcast %cst_19 : bf16 to vector<3x128xbf16>
    %45 = tpu.concatenate %44, %43, %44 in 0 : vector<3x128xbf16>, vector<26x128xbf16>, vector<3x128xbf16> -> vector<32x128xbf16>
    %46 = vector.extract_strided_slice %45 {offsets = [0, 0], sizes = [26, 128], strides = [1, 1]} : vector<32x128xbf16> to vector<26x128xbf16>
    %47 = vector.extract_strided_slice %45 {offsets = [1, 0], sizes = [26, 128], strides = [1, 1]} : vector<32x128xbf16> to vector<26x128xbf16>
    %48 = vector.extract_strided_slice %45 {offsets = [2, 0], sizes = [26, 128], strides = [1, 1]} : vector<32x128xbf16> to vector<26x128xbf16>
    %49 = vector.extract_strided_slice %45 {offsets = [3, 0], sizes = [26, 128], strides = [1, 1]} : vector<32x128xbf16> to vector<26x128xbf16>
    %50 = vector.extract_strided_slice %45 {offsets = [4, 0], sizes = [26, 128], strides = [1, 1]} : vector<32x128xbf16> to vector<26x128xbf16>
    %51 = vector.extract_strided_slice %45 {offsets = [5, 0], sizes = [26, 128], strides = [1, 1]} : vector<32x128xbf16> to vector<26x128xbf16>
    %52 = vector.extract_strided_slice %45 {offsets = [6, 0], sizes = [26, 128], strides = [1, 1]} : vector<32x128xbf16> to vector<26x128xbf16>
    %53 = tpu.concatenate %46, %47, %48, %49, %50, %51, %52 in 1 : vector<26x128xbf16>, vector<26x128xbf16>, vector<26x128xbf16>, vector<26x128xbf16>, vector<26x128xbf16>, vector<26x128xbf16>, vector<26x128xbf16> -> vector<26x896xbf16>
    %cst_20 = arith.constant dense<0.000000e+00> : vector<26x128xf32>
    %54 = tpu.matmul %53, %5, %cst_20 {dimension_numbers = #tpu.dot_dimension_numbers<[1], [0], [0], [1], [0, 0, 1, 1], [], []>} : vector<26x896xbf16>, vector<896x128xbf16>, vector<26x128xf32> -> vector<26x128xf32>
    %cst_21 = arith.constant dense<0.000000e+00> : vector<26x128xf32>
    %55 = tpu.matmul %26, %6, %cst_21 {dimension_numbers = #tpu.dot_dimension_numbers<[1], [0], [0], [1], [0, 0, 1, 1], [], []>} : vector<26x128xbf16>, vector<128x128xbf16>, vector<26x128xf32> -> vector<26x128xf32>
    %56 = arith.addf %54, %55 : vector<26x128xf32>
    %57 = vector.broadcast %7 : vector<1x128xf32> to vector<26x128xf32>
    %58 = arith.addf %56, %57 : vector<26x128xf32>
    %cst_22 = arith.constant 0.000000e+00 : f32
    %59 = vector.broadcast %cst_22 : f32 to vector<26x128xf32>
    %60 = arith.cmpf oge, %58, %59 : vector<26x128xf32>
    %61 = vector.broadcast %8 : vector<1x1xf32> to vector<26x128xf32>
    %62 = arith.mulf %61, %58 : vector<26x128xf32>
    %63 = arith.select %60, %58, %62 : vector<26x128xi1>, vector<26x128xf32>
    %cst_23 = arith.constant 0.000000e+00 : bf16
    %64 = vector.broadcast %cst_23 : bf16 to vector<3x128xbf16>
    %65 = arith.truncf %63 : vector<26x128xf32> to vector<26x128xbf16>
    %66 = tpu.concatenate %64, %65, %64 in 0 : vector<3x128xbf16>, vector<26x128xbf16>, vector<3x128xbf16> -> vector<32x128xbf16>
    %67 = vector.extract_strided_slice %66 {offsets = [0, 0], sizes = [16, 128], strides = [1, 1]} : vector<32x128xbf16> to vector<16x128xbf16>
    %cst_24 = arith.constant dense<0.000000e+00> : vector<16x128xf32>
    %68 = tpu.matmul %0, %67, %cst_24 {dimension_numbers = #tpu.dot_dimension_numbers<[1], [0], [0], [1], [0, 0, 1, 1], [], []>} : vector<16x16xbf16>, vector<16x128xbf16>, vector<16x128xf32> -> vector<16x128xf32>
    %69 = vector.extract_strided_slice %66 {offsets = [16, 0], sizes = [16, 128], strides = [1, 1]} : vector<32x128xbf16> to vector<16x128xbf16>
    %cst_25 = arith.constant dense<0.000000e+00> : vector<16x128xf32>
    %70 = tpu.matmul %0, %69, %cst_25 {dimension_numbers = #tpu.dot_dimension_numbers<[1], [0], [0], [1], [0, 0, 1, 1], [], []>} : vector<16x16xbf16>, vector<16x128xbf16>, vector<16x128xf32> -> vector<16x128xf32>
    %71 = tpu.concatenate %68, %70 in 0 : vector<16x128xf32>, vector<16x128xf32> -> vector<32x128xf32>
    %72 = arith.truncf %71 : vector<32x128xf32> to vector<32x128xbf16>
    %c0_26 = arith.constant 0 : index
    %c0_27 = arith.constant 0 : index
    %73 = vector.load %arg9[%c0_26, %c0_27] : memref<32x128xbf16, #tpu.memory_space<vmem>>, vector<32x128xbf16>
    tpu.vector_store %arg9[%c0_26, %c0_27], %72 {strides = array<i32>} : memref<32x128xbf16, #tpu.memory_space<vmem>>, vector<32x128xbf16>,
    return
  }
}

module attributes {stable_mosaic.version = 11 : i64} {
  func.func @_resblock_kernel(%arg0: memref<32x128xbf16, #tpu.memory_space<vmem>>, %arg1: memref<896x128xbf16, #tpu.memory_space<vmem>>, %arg2: memref<1x128xf32, #tpu.memory_space<vmem>>, %arg3: memref<1x1xf32, #tpu.memory_space<vmem>>, %arg4: memref<896x128xbf16, #tpu.memory_space<vmem>>, %arg5: memref<128x128xbf16, #tpu.memory_space<vmem>>, %arg6: memref<1x128xf32, #tpu.memory_space<vmem>>, %arg7: memref<1x1xf32, #tpu.memory_space<vmem>>, %arg8: memref<32x128xbf16, #tpu.memory_space<vmem>>) attributes {dimension_semantics = [], scalar_prefetch = 0 : i64, scratch_operands = 0 : i64, tpu.core_type = #tpu.core_type<tc>} {
    %c0 = arith.constant 0 : index
    %c0_0 = arith.constant 0 : index
    %0 = vector.load %arg0[%c0, %c0_0] : memref<32x128xbf16, #tpu.memory_space<vmem>>, vector<32x128xbf16>
    %c0_1 = arith.constant 0 : index
    %c0_2 = arith.constant 0 : index
    %1 = vector.load %arg1[%c0_1, %c0_2] : memref<896x128xbf16, #tpu.memory_space<vmem>>, vector<896x128xbf16>
    %c0_3 = arith.constant 0 : index
    %c0_4 = arith.constant 0 : index
    %2 = vector.load %arg2[%c0_3, %c0_4] : memref<1x128xf32, #tpu.memory_space<vmem>>, vector<1x128xf32>
    %c0_5 = arith.constant 0 : index
    %c0_6 = arith.constant 0 : index
    %3 = vector.load %arg3[%c0_5, %c0_6] : memref<1x1xf32, #tpu.memory_space<vmem>>, vector<1x1xf32>
    %c0_7 = arith.constant 0 : index
    %c0_8 = arith.constant 0 : index
    %4 = vector.load %arg4[%c0_7, %c0_8] : memref<896x128xbf16, #tpu.memory_space<vmem>>, vector<896x128xbf16>
    %c0_9 = arith.constant 0 : index
    %c0_10 = arith.constant 0 : index
    %5 = vector.load %arg5[%c0_9, %c0_10] : memref<128x128xbf16, #tpu.memory_space<vmem>>, vector<128x128xbf16>
    %c0_11 = arith.constant 0 : index
    %c0_12 = arith.constant 0 : index
    %6 = vector.load %arg6[%c0_11, %c0_12] : memref<1x128xf32, #tpu.memory_space<vmem>>, vector<1x128xf32>
    %c0_13 = arith.constant 0 : index
    %c0_14 = arith.constant 0 : index
    %7 = vector.load %arg7[%c0_13, %c0_14] : memref<1x1xf32, #tpu.memory_space<vmem>>, vector<1x1xf32>
    %8 = tpu.iota {dimensions = array<i32: 0>} : vector<26x1xi32>
    %c3_i32 = arith.constant 3 : i32
    %9 = vector.broadcast %c3_i32 : i32 to vector<26x1xi32>
    %10 = arith.addi %8, %9 : vector<26x1xi32>
    %c8_i32 = arith.constant 8 : i32
    %11 = vector.broadcast %c8_i32 : i32 to vector<26x1xi32>
    %12 = arith.cmpi sge, %10, %11 : vector<26x1xi32>
    %c10_i32 = arith.constant 10 : i32
    %13 = vector.broadcast %c10_i32 : i32 to vector<26x1xi32>
    %14 = arith.cmpi slt, %10, %13 : vector<26x1xi32>
    %15 = arith.andi %12, %14 : vector<26x1xi1>
    %c24_i32 = arith.constant 24 : i32
    %16 = vector.broadcast %c24_i32 : i32 to vector<26x1xi32>
    %17 = arith.cmpi sge, %10, %16 : vector<26x1xi32>
    %c26_i32 = arith.constant 26 : i32
    %18 = vector.broadcast %c26_i32 : i32 to vector<26x1xi32>
    %19 = arith.cmpi slt, %10, %18 : vector<26x1xi32>
    %20 = arith.andi %17, %19 : vector<26x1xi1>
    %21 = arith.ori %15, %20 : vector<26x1xi1>
    %22 = vector.extract_strided_slice %0 {offsets = [0, 0], sizes = [26, 128], strides = [1, 1]} : vector<32x128xbf16> to vector<26x128xbf16>
    %23 = vector.extract_strided_slice %0 {offsets = [1, 0], sizes = [26, 128], strides = [1, 1]} : vector<32x128xbf16> to vector<26x128xbf16>
    %24 = vector.extract_strided_slice %0 {offsets = [2, 0], sizes = [26, 128], strides = [1, 1]} : vector<32x128xbf16> to vector<26x128xbf16>
    %25 = vector.extract_strided_slice %0 {offsets = [3, 0], sizes = [26, 128], strides = [1, 1]} : vector<32x128xbf16> to vector<26x128xbf16>
    %26 = vector.extract_strided_slice %0 {offsets = [4, 0], sizes = [26, 128], strides = [1, 1]} : vector<32x128xbf16> to vector<26x128xbf16>
    %27 = vector.extract_strided_slice %0 {offsets = [5, 0], sizes = [26, 128], strides = [1, 1]} : vector<32x128xbf16> to vector<26x128xbf16>
    %28 = vector.extract_strided_slice %0 {offsets = [6, 0], sizes = [26, 128], strides = [1, 1]} : vector<32x128xbf16> to vector<26x128xbf16>
    %29 = tpu.concatenate %22, %23, %24, %25, %26, %27, %28 in 1 : vector<26x128xbf16>, vector<26x128xbf16>, vector<26x128xbf16>, vector<26x128xbf16>, vector<26x128xbf16>, vector<26x128xbf16>, vector<26x128xbf16> -> vector<26x896xbf16>
    %cst = arith.constant dense<0.000000e+00> : vector<26x128xf32>
    %30 = tpu.matmul %29, %1, %cst {dimension_numbers = #tpu.dot_dimension_numbers<[1], [0], [0], [1], [0, 0, 1, 1], [], []>} : vector<26x896xbf16>, vector<896x128xbf16>, vector<26x128xf32> -> vector<26x128xf32>
    %31 = vector.broadcast %2 : vector<1x128xf32> to vector<26x128xf32>
    %32 = arith.addf %30, %31 : vector<26x128xf32>
    %cst_15 = arith.constant 0.000000e+00 : f32
    %33 = vector.broadcast %cst_15 : f32 to vector<26x128xf32>
    %34 = arith.cmpf oge, %32, %33 : vector<26x128xf32>
    %35 = vector.broadcast %3 : vector<1x1xf32> to vector<26x128xf32>
    %36 = arith.mulf %35, %32 : vector<26x128xf32>
    %37 = arith.select %34, %32, %36 : vector<26x128xi1>, vector<26x128xf32>
    %cst_16 = arith.constant 0.000000e+00 : f32
    %38 = vector.shape_cast %21 : vector<26x1xi1> to vector<26x1xi1>
    %39 = vector.broadcast %38 : vector<26x1xi1> to vector<26x128xi1>
    %40 = vector.broadcast %cst_16 : f32 to vector<26x128xf32>
    %41 = arith.select %39, %37, %40 : vector<26x128xi1>, vector<26x128xf32>
    %42 = arith.truncf %41 : vector<26x128xf32> to vector<26x128xbf16>
    %cst_17 = arith.constant 0.000000e+00 : bf16
    %43 = vector.broadcast %cst_17 : bf16 to vector<3x128xbf16>
    %44 = tpu.concatenate %43, %42, %43 in 0 : vector<3x128xbf16>, vector<26x128xbf16>, vector<3x128xbf16> -> vector<32x128xbf16>
    %45 = vector.extract_strided_slice %44 {offsets = [0, 0], sizes = [26, 128], strides = [1, 1]} : vector<32x128xbf16> to vector<26x128xbf16>
    %46 = vector.extract_strided_slice %44 {offsets = [1, 0], sizes = [26, 128], strides = [1, 1]} : vector<32x128xbf16> to vector<26x128xbf16>
    %47 = vector.extract_strided_slice %44 {offsets = [2, 0], sizes = [26, 128], strides = [1, 1]} : vector<32x128xbf16> to vector<26x128xbf16>
    %48 = vector.extract_strided_slice %44 {offsets = [3, 0], sizes = [26, 128], strides = [1, 1]} : vector<32x128xbf16> to vector<26x128xbf16>
    %49 = vector.extract_strided_slice %44 {offsets = [4, 0], sizes = [26, 128], strides = [1, 1]} : vector<32x128xbf16> to vector<26x128xbf16>
    %50 = vector.extract_strided_slice %44 {offsets = [5, 0], sizes = [26, 128], strides = [1, 1]} : vector<32x128xbf16> to vector<26x128xbf16>
    %51 = vector.extract_strided_slice %44 {offsets = [6, 0], sizes = [26, 128], strides = [1, 1]} : vector<32x128xbf16> to vector<26x128xbf16>
    %52 = tpu.concatenate %45, %46, %47, %48, %49, %50, %51 in 1 : vector<26x128xbf16>, vector<26x128xbf16>, vector<26x128xbf16>, vector<26x128xbf16>, vector<26x128xbf16>, vector<26x128xbf16>, vector<26x128xbf16> -> vector<26x896xbf16>
    %cst_18 = arith.constant dense<0.000000e+00> : vector<26x128xf32>
    %53 = tpu.matmul %52, %4, %cst_18 {dimension_numbers = #tpu.dot_dimension_numbers<[1], [0], [0], [1], [0, 0, 1, 1], [], []>} : vector<26x896xbf16>, vector<896x128xbf16>, vector<26x128xf32> -> vector<26x128xf32>
    %cst_19 = arith.constant dense<0.000000e+00> : vector<26x128xf32>
    %54 = tpu.matmul %25, %5, %cst_19 {dimension_numbers = #tpu.dot_dimension_numbers<[1], [0], [0], [1], [0, 0, 1, 1], [], []>} : vector<26x128xbf16>, vector<128x128xbf16>, vector<26x128xf32> -> vector<26x128xf32>
    %55 = arith.addf %53, %54 : vector<26x128xf32>
    %56 = vector.broadcast %6 : vector<1x128xf32> to vector<26x128xf32>
    %57 = arith.addf %55, %56 : vector<26x128xf32>
    %cst_20 = arith.constant 0.000000e+00 : f32
    %58 = vector.broadcast %cst_20 : f32 to vector<26x128xf32>
    %59 = arith.cmpf oge, %57, %58 : vector<26x128xf32>
    %60 = vector.broadcast %7 : vector<1x1xf32> to vector<26x128xf32>
    %61 = arith.mulf %60, %57 : vector<26x128xf32>
    %62 = arith.select %59, %57, %61 : vector<26x128xi1>, vector<26x128xf32>
    %cst_21 = arith.constant 0.000000e+00 : bf16
    %63 = vector.broadcast %cst_21 : bf16 to vector<3x128xbf16>
    %cst_22 = arith.constant 0.000000e+00 : f32
    %64 = vector.shape_cast %21 : vector<26x1xi1> to vector<26x1xi1>
    %65 = vector.broadcast %64 : vector<26x1xi1> to vector<26x128xi1>
    %66 = vector.broadcast %cst_22 : f32 to vector<26x128xf32>
    %67 = arith.select %65, %62, %66 : vector<26x128xi1>, vector<26x128xf32>
    %68 = arith.truncf %67 : vector<26x128xf32> to vector<26x128xbf16>
    %69 = tpu.concatenate %63, %68, %63 in 0 : vector<3x128xbf16>, vector<26x128xbf16>, vector<3x128xbf16> -> vector<32x128xbf16>
    %c0_23 = arith.constant 0 : index
    %c0_24 = arith.constant 0 : index
    %70 = vector.load %arg8[%c0_23, %c0_24] : memref<32x128xbf16, #tpu.memory_space<vmem>>, vector<32x128xbf16>
    tpu.vector_store %arg8[%c0_23, %c0_24], %69 {strides = array<i32>} : memref<32x128xbf16, #tpu.memory_space<vmem>>, vector<32x128xbf16>,
    return
  }
}

module attributes {stable_mosaic.version = 11 : i64} {
  func.func @_head_kernel(%arg0: memref<32x128xbf16, #tpu.memory_space<vmem>>, %arg1: memref<128x128xf32, #tpu.memory_space<vmem>>, %arg2: memref<1x128xf32, #tpu.memory_space<vmem>>, %arg3: memref<1x1xf32, #tpu.memory_space<vmem>>, %arg4: memref<128x7xf32, #tpu.memory_space<vmem>>, %arg5: memref<1x7xf32, #tpu.memory_space<vmem>>, %arg6: memref<2x7xf32, #tpu.memory_space<vmem>>) attributes {dimension_semantics = [], scalar_prefetch = 0 : i64, scratch_operands = 0 : i64, tpu.core_type = #tpu.core_type<tc>} {
    %c0 = arith.constant 0 : index
    %c0_0 = arith.constant 0 : index
    %0 = vector.load %arg0[%c0, %c0_0] : memref<32x128xbf16, #tpu.memory_space<vmem>>, vector<32x128xbf16>
    %c0_1 = arith.constant 0 : index
    %c0_2 = arith.constant 0 : index
    %1 = vector.load %arg1[%c0_1, %c0_2] : memref<128x128xf32, #tpu.memory_space<vmem>>, vector<128x128xf32>
    %c0_3 = arith.constant 0 : index
    %c0_4 = arith.constant 0 : index
    %2 = vector.load %arg2[%c0_3, %c0_4] : memref<1x128xf32, #tpu.memory_space<vmem>>, vector<1x128xf32>
    %c0_5 = arith.constant 0 : index
    %c0_6 = arith.constant 0 : index
    %3 = vector.load %arg3[%c0_5, %c0_6] : memref<1x1xf32, #tpu.memory_space<vmem>>, vector<1x1xf32>
    %c0_7 = arith.constant 0 : index
    %c0_8 = arith.constant 0 : index
    %4 = vector.load %arg4[%c0_7, %c0_8] : memref<128x7xf32, #tpu.memory_space<vmem>>, vector<128x7xf32>
    %c0_9 = arith.constant 0 : index
    %c0_10 = arith.constant 0 : index
    %5 = vector.load %arg5[%c0_9, %c0_10] : memref<1x7xf32, #tpu.memory_space<vmem>>, vector<1x7xf32>
    %6 = arith.extf %0 : vector<32x128xbf16> to vector<32x128xf32>
    %7 = vector.extract_strided_slice %6 {offsets = [0, 0], sizes = [16, 128], strides = [1, 1]} : vector<32x128xf32> to vector<16x128xf32>
    %cst = arith.constant dense<0.000000e+00> : vector<128xf32>
    %8 = vector.multi_reduction <add>, %7, %cst [0] : vector<16x128xf32> to vector<128xf32>
    %9 = vector.shape_cast %8 : vector<128xf32> to vector<1x128xf32>
    %10 = vector.extract_strided_slice %6 {offsets = [16, 0], sizes = [16, 128], strides = [1, 1]} : vector<32x128xf32> to vector<16x128xf32>
    %cst_11 = arith.constant dense<0.000000e+00> : vector<128xf32>
    %11 = vector.multi_reduction <add>, %10, %cst_11 [0] : vector<16x128xf32> to vector<128xf32>
    %12 = vector.shape_cast %11 : vector<128xf32> to vector<1x128xf32>
    %13 = tpu.concatenate %9, %12 in 0 : vector<1x128xf32>, vector<1x128xf32> -> vector<2x128xf32>
    %cst_12 = arith.constant dense<0.000000e+00> : vector<2x128xf32>
    %14 = tpu.matmul %13, %1, %cst_12 {dimension_numbers = #tpu.dot_dimension_numbers<[1], [0], [0], [1], [0, 0, 1, 1], [], []>} : vector<2x128xf32>, vector<128x128xf32>, vector<2x128xf32> -> vector<2x128xf32>
    %15 = vector.broadcast %2 : vector<1x128xf32> to vector<2x128xf32>
    %16 = arith.addf %14, %15 : vector<2x128xf32>
    %cst_13 = arith.constant 0.000000e+00 : f32
    %17 = vector.broadcast %cst_13 : f32 to vector<2x128xf32>
    %18 = arith.cmpf oge, %16, %17 : vector<2x128xf32>
    %19 = vector.broadcast %3 : vector<1x1xf32> to vector<2x128xf32>
    %20 = arith.mulf %19, %16 : vector<2x128xf32>
    %21 = arith.select %18, %16, %20 : vector<2x128xi1>, vector<2x128xf32>
    %cst_14 = arith.constant dense<0.000000e+00> : vector<2x7xf32>
    %22 = tpu.matmul %21, %4, %cst_14 {dimension_numbers = #tpu.dot_dimension_numbers<[1], [0], [0], [1], [0, 0, 1, 1], [], []>} : vector<2x128xf32>, vector<128x7xf32>, vector<2x7xf32> -> vector<2x7xf32>
    %23 = vector.broadcast %5 : vector<1x7xf32> to vector<2x7xf32>
    %24 = arith.addf %22, %23 : vector<2x7xf32>
    %25 = vector.extract_strided_slice %24 {offsets = [0, 3], sizes = [2, 4], strides = [1, 1]} : vector<2x7xf32> to vector<2x4xf32>
    %26 = arith.mulf %25, %25 : vector<2x4xf32>
    %cst_15 = arith.constant dense<0.000000e+00> : vector<2xf32>
    %27 = vector.multi_reduction <add>, %26, %cst_15 [1] : vector<2x4xf32> to vector<2xf32>
    %28 = vector.shape_cast %27 : vector<2xf32> to vector<2x1xf32>
    %29 = math.sqrt %28 : vector<2x1xf32>
    %cst_16 = arith.constant 9.99999996E-13 : f32
    %30 = vector.broadcast %cst_16 : f32 to vector<2x1xf32>
    %31 = arith.maximumf %29, %30 : vector<2x1xf32>
    %cst_17 = arith.constant 1.000000e+00 : f32
    %32 = vector.broadcast %cst_17 : f32 to vector<2x1xf32>
    %33 = arith.divf %32, %31 : vector<2x1xf32>
    %34 = tpu.iota {dimensions = array<i32: 1>} : vector<2x7xi32>
    %c3_i32 = arith.constant 3 : i32
    %35 = vector.broadcast %c3_i32 : i32 to vector<2x7xi32>
    %36 = arith.cmpi sge, %34, %35 : vector<2x7xi32>
    %37 = vector.broadcast %33 : vector<2x1xf32> to vector<2x7xf32>
    %38 = arith.mulf %24, %37 : vector<2x7xf32>
    %39 = arith.select %36, %38, %24 : vector<2x7xi1>, vector<2x7xf32>
    %c0_18 = arith.constant 0 : index
    %c0_19 = arith.constant 0 : index
    %40 = vector.load %arg6[%c0_18, %c0_19] : memref<2x7xf32, #tpu.memory_space<vmem>>, vector<2x7xf32>
    tpu.vector_store %arg6[%c0_18, %c0_19], %39 {strides = array<i32>} : memref<2x7xf32, #tpu.memory_space<vmem>>, vector<2x7xf32>,
    return
  }
}

</mosaic_0001>

<llo_original>
// kernel: _lambda_.7
$region0: #{_lambda_.7}
  #allocation0 [shape = 'u32[]', space=smem, size = 0x4, offset = 0x4, fixed_abs, tag = 'smem constant byte address 0x4 - core index']
  #allocation1 [shape = 'u32[144,128]{1,0:T(1,128)}', space=vmem, size = 0x12000, scoped, tag = 'internal scratch']
  #allocation2 [shape = 'f32[1,1]{1,0:T(1,128)S(1)}', space=vmem, size = 0x200, scoped, tag = 'scoped memory for _lambda_.7']
  %s0 = inlined_call_operand.vmem [shape: bf16[96,128], index: 0, kind: input, shape index: {}]
  %s1 = inlined_call_operand.vmem [shape: bf16[128,128], index: 1, kind: input, shape index: {}]
  %s2 = inlined_call_operand.vmem [shape: f32[1,128], index: 2, kind: input, shape index: {}]
  %s3 = inlined_call_operand.<no memory space> [shape: f32[1,1], index: 3, kind: input, shape index: {}]
  %s4 = inlined_call_operand.vmem [shape: bf16[96,128], index: 4, kind: output, shape index: {}]
  %s5 = sld [smem:[#allocation0]]
  $region26: #{_lambda_.7} parent=0
    _
  %s7 = ssub.s32 1, %s5
  %s8 = scalar_select 0, %s7, %s5
  %v9 = vstv %s3
  %10 = vst [vmem:[#allocation2] sm:$0x1] %v9
  // Predicated region
  $region2: #{_lambda_.7} parent=0 // pred_check
    _
  $region3: #{_lambda_.7} parent=0 // pred_check_branch
    %12 = sbr.rel (0) target = $region5
  $region4: #{_lambda_.7} parent=0 // pred_region
    _
  $region5: #{_lambda_.7} parent=0 // pred_fallthru
    _
  // Predicated region
  $region6: #{_lambda_.7} parent=0 // pred_check
    _
  $region7: #{_lambda_.7} parent=0 // pred_check_branch
    %14 = sbr.rel (0) target = $region9
  $region8: #{_lambda_.7} parent=0 // pred_region
    _
  $region9: #{_lambda_.7} parent=0 // pred_fallthru
    _
  // Predicated region
  $region10: #{_lambda_.7} parent=0 // pred_check
    _
  $region11: #{_lambda_.7} parent=0 // pred_check_branch
    %16 = sbr.rel (0) target = $region13
  $region12: #{_lambda_.7} parent=0 // pred_region
    _
  $region13: #{_lambda_.7} parent=0 // pred_fallthru
    _
  // Predicated region
  $region14: #{_lambda_.7} parent=0 // pred_check
    _
  $region15: #{_lambda_.7} parent=0 // pred_check_branch
    %18 = sbr.rel (0) target = $region17
  $region16: #{_lambda_.7} parent=0 // pred_region
    _
  $region17: #{_lambda_.7} parent=0 // pred_fallthru
    _
  %v20 = vld [vmem:[%s0] sm:$0xf]
  %v21 = vld [vmem:[%s0 + $0x4] sm:$0xf]
  %v22 = vld [vmem:[%s0 + $0x8] sm:$0xf]
  %v23 = vld [vmem:[%s0 + $0xc] sm:$0xf]
  %v24 = vld [vmem:[%s0 + $0x10] sm:$0xf]
  %v25 = vld [vmem:[%s0 + $0x14] sm:$0xf]
  %v26 = vld [vmem:[%s0 + $0x18] sm:$0xf]
  %v27 = vld [vmem:[%s0 + $0x1c] sm:$0xf]
  %v28 = vld [vmem:[%s0 + $0x20] sm:$0xf]
  %v29 = vld [vmem:[%s0 + $0x24] sm:$0xf]
  %v30 = vld [vmem:[%s0 + $0x28] sm:$0xf]
  %v31 = vld [vmem:[%s0 + $0x2c] sm:$0xf]
  %v32 = vld [vmem:[%s1] sm:$0xf]
  %v33 = vld [vmem:[%s1 + $0x4] sm:$0xf]
  %v34 = vld [vmem:[%s1 + $0x8] sm:$0xf]
  %v35 = vld [vmem:[%s1 + $0xc] sm:$0xf]
  %v36 = vld [vmem:[%s1 + $0x10] sm:$0xf]
  %v37 = vld [vmem:[%s1 + $0x14] sm:$0xf]
  %v38 = vld [vmem:[%s1 + $0x18] sm:$0xf]
  %v39 = vld [vmem:[%s1 + $0x1c] sm:$0xf]
  %v40 = vld [vmem:[%s1 + $0x20] sm:$0xf]
  %v41 = vld [vmem:[%s1 + $0x24] sm:$0xf]
  %v42 = vld [vmem:[%s1 + $0x28] sm:$0xf]
  %v43 = vld [vmem:[%s1 + $0x2c] sm:$0xf]
  %v44 = vld [vmem:[%s1 + $0x30] sm:$0xf]
  %v45 = vld [vmem:[%s1 + $0x34] sm:$0xf]
  %v46 = vld [vmem:[%s1 + $0x38] sm:$0xf]
  %v47 = vld [vmem:[%s1 + $0x3c] sm:$0xf]
  %v48 = vld [vmem:[%s2] sm:$0x1]
  %v49 = vld [vmem:[#allocation2] sm:$0x1]
  %v51 = vlaneseq
  %v52 = vshrl.u32 %v51, 7
  %v53 = vsub.s32 0, %v52
  %v54 = vrot.slane %v48, %v53
  %v68 = vunpack.c.l.b16 %v20
  %v69 = vunpack.c.l.b16 %v21
  %v70 = vunpack.c.l.b16 %v22
  %v71 = vunpack.c.l.b16 %v23
  %v72 = vunpack.c.l.b16 %v24
  %v73 = vunpack.c.l.b16 %v25
  %v74 = vunpack.c.l.b16 %v26
  %v75 = vunpack.c.l.b16 %v27
  %v76 = vunpack.c.l.b16 %v28
  %v77 = vunpack.c.l.b16 %v29
  %v78 = vunpack.c.l.b16 %v30
  %v79 = vunpack.c.l.b16 %v31
  %v80 = vpack.c.b16 %v69, %v68
  %v81 = vpack.c.b16 %v71, %v70
  %v82 = vpack.c.b16 %v73, %v72
  %v83 = vpack.c.b16 %v75, %v74
  %v84 = vpack.c.b16 %v77, %v76
  %v85 = vpack.c.b16 %v79, %v78
  %v108 = vunpack.c.l.b16 %v32
  %v109 = vunpack.c.l.b16 %v33
  %v110 = vunpack.c.l.b16 %v34
  %v111 = vunpack.c.l.b16 %v35
  %v112 = vunpack.c.l.b16 %v36
  %v113 = vunpack.c.l.b16 %v37
  %v114 = vunpack.c.l.b16 %v38
  %v115 = vunpack.c.l.b16 %v39
  %v116 = vunpack.c.l.b16 %v40
  %v117 = vunpack.c.l.b16 %v41
  %v118 = vunpack.c.l.b16 %v42
  %v119 = vunpack.c.l.b16 %v43
  %v120 = vunpack.c.l.b16 %v44
  %v121 = vunpack.c.l.b16 %v45
  %v122 = vunpack.c.l.b16 %v46
  %v123 = vunpack.c.l.b16 %v47
  %v124 = vpack.c.b16 %v109, %v108
  %v125 = vpack.c.b16 %v111, %v110
  %v126 = vpack.c.b16 %v113, %v112
  %v127 = vpack.c.b16 %v115, %v114
  %v128 = vpack.c.b16 %v117, %v116
  %v129 = vpack.c.b16 %v119, %v118
  %v130 = vpack.c.b16 %v121, %v120
  %v131 = vpack.c.b16 %v123, %v122
  %140 = vmatprep.subr.bf16.mxu0 0
  %141 = vmatpush1.bf16.msra.mxu0 %v124
  %142 = vmatprep.subr.bf16.mxu0 0
  %143 = vmatpush1.bf16.msra.mxu0 %v125
  %144 = vmatprep.subr.bf16.mxu0 0
  %145 = vmatpush1.bf16.msra.mxu0 %v126
  %146 = vmatprep.subr.bf16.mxu0 0
  %147 = vmatpush1.bf16.msra.mxu0 %v127
  %148 = vmatprep.subr.bf16.mxu0 0
  %149 = vmatpush1.bf16.msra.mxu0 %v128
  %150 = vmatprep.subr.bf16.mxu0 0
  %151 = vmatpush1.bf16.msra.mxu0 %v129
  %152 = vmatprep.subr.bf16.mxu0 0
  %153 = vmatpush1.bf16.msra.mxu0 %v130
  %154 = vmatprep.subr.bf16.mxu0 0
  %155 = vmatpush1.bf16.msra.mxu0 %v131
  %156 = vmatprep.subr.bf16.mxu0 0
  %157 = vmatpush1.bf16.msra.mxu0 0
  %158 = vmatprep.subr.bf16.mxu0 0
  %159 = vmatpush1.bf16.msra.mxu0 0
  %160 = vmatprep.subr.bf16.mxu0 0
  %161 = vmatpush1.bf16.msra.mxu0 0
  %162 = vmatprep.subr.bf16.mxu0 0
  %163 = vmatpush1.bf16.msra.mxu0 0
  %164 = vmatprep.subr.bf16.mxu0 0
  %165 = vmatpush1.bf16.msra.mxu0 0
  %166 = vmatprep.subr.bf16.mxu0 0
  %167 = vmatpush1.bf16.msra.mxu0 0
  %168 = vmatprep.subr.bf16.mxu0 0
  %169 = vmatpush1.bf16.msra.mxu0 0
  %170 = vmatprep.subr.bf16.mxu0 0
  %171 = vmatpush1.bf16.msra.mxu0 0
  %172 = vmatprep.mubr.bf16.mxu0 0
  %173 = vmatmul.mubr.bf16.gmra.mrb[0].mxu0 %v80
  %v174 = vpop.f32.mrb[0].mxu0
  %v175 = vadd.f32 %v54, %v174
  %v176 = vpop.f32.mrb[0].mxu0
  %v177 = vpop.f32.mrb[0].mxu0
  %v178 = vadd.f32 %v54, %v177
  %v179 = vpop.f32.mrb[0].mxu0
  %180 = vmatprep.mubr.bf16.mxu0 0
  %181 = vmatmul.mubr.bf16.gmra.mrb[0].mxu0 %v81
  %v182 = vpop.f32.mrb[0].mxu0
  %v183 = vadd.f32 %v54, %v182
  %v184 = vpop.f32.mrb[0].mxu0
  %v185 = vpop.f32.mrb[0].mxu0
  %v186 = vadd.f32 %v54, %v185
  %v187 = vpop.f32.mrb[0].mxu0
  %188 = vmatprep.mubr.bf16.mxu0 0
  %189 = vmatmul.mubr.bf16.gmra.mrb[0].mxu0 %v82
  %v190 = vpop.f32.mrb[0].mxu0
  %v191 = vadd.f32 %v54, %v190
  %v192 = vpop.f32.mrb[0].mxu0
  %v193 = vpop.f32.mrb[0].mxu0
  %v194 = vadd.f32 %v54, %v193
  %v195 = vpop.f32.mrb[0].mxu0
  %196 = vmatprep.mubr.bf16.mxu0 0
  %197 = vmatmul.mubr.bf16.gmra.mrb[0].mxu0 %v83
  %v198 = vpop.f32.mrb[0].mxu0
  %v199 = vadd.f32 %v54, %v198
  %v200 = vpop.f32.mrb[0].mxu0
  %v201 = vpop.f32.mrb[0].mxu0
  %v202 = vadd.f32 %v54, %v201
  %v203 = vpop.f32.mrb[0].mxu0
  %204 = vmatprep.mubr.bf16.mxu0 0
  %205 = vmatmul.mubr.bf16.gmra.mrb[0].mxu0 %v84
  %v206 = vpop.f32.mrb[0].mxu0
  %v207 = vadd.f32 %v54, %v206
  %v208 = vpop.f32.mrb[0].mxu0
  %v209 = vpop.f32.mrb[0].mxu0
  %v210 = vadd.f32 %v54, %v209
  %v211 = vpop.f32.mrb[0].mxu0
  %212 = vmatprep.mubr.bf16.mxu0 0
  %213 = vmatmul.mubr.bf16.gmra.mrb[0].mxu0 %v85
  %v214 = vpop.f32.mrb[0].mxu0
  %v215 = vadd.f32 %v54, %v214
  %v216 = vpop.f32.mrb[0].mxu0
  %v217 = vpop.f32.mrb[0].mxu0
  %v218 = vadd.f32 %v54, %v217
  %v219 = vpop.f32.mrb[0].mxu0
  %220 = vdwg.mxu0
  %v221 = vlaneseq
  %v222 = vshrl.u32 %v221, 7
  %v223 = vadd.s32 %v222, 8
  %v224 = vadd.s32 %v222, 16
  %v225 = vadd.s32 %v222, 24
  %v226 = vadd.s32 %v222, 32
  %v227 = vadd.s32 %v222, 40
  %v228 = vadd.s32 %v222, 48
  %v229 = vadd.s32 %v222, 56
  %v230 = vadd.s32 %v222, 64
  %v231 = vadd.s32 %v222, 72
  %v232 = vadd.s32 %v222, 80
  %v233 = vadd.s32 %v222, 88
  %vm234 = vcmp.ge.s32.totalorder %v222, 8
  %vm235 = vcmp.ge.s32.totalorder %v223, 8
  %vm236 = vcmp.ge.s32.totalorder %v224, 8
  %vm237 = vcmp.ge.s32.totalorder %v225, 8
  %vm238 = vcmp.ge.s32.totalorder %v226, 8
  %vm239 = vcmp.ge.s32.totalorder %v227, 8
  %vm240 = vcmp.ge.s32.totalorder %v228, 8
  %vm241 = vcmp.ge.s32.totalorder %v229, 8
  %vm242 = vcmp.ge.s32.totalorder %v230, 8
  %vm243 = vcmp.ge.s32.totalorder %v231, 8
  %vm244 = vcmp.ge.s32.totalorder %v232, 8
  %vm245 = vcmp.ge.s32.totalorder %v233, 8
  %vm246 = vcmp.lt.s32.totalorder %v222, 41
  %vm247 = vcmp.lt.s32.totalorder %v223, 41
  %vm248 = vcmp.lt.s32.totalorder %v224, 41
  %vm249 = vcmp.lt.s32.totalorder %v225, 41
  %vm250 = vcmp.lt.s32.totalorder %v226, 41
  %vm251 = vcmp.lt.s32.totalorder %v227, 41
  %vm252 = vcmp.lt.s32.totalorder %v228, 41
  %vm253 = vcmp.lt.s32.totalorder %v229, 41
  %vm254 = vcmp.lt.s32.totalorder %v230, 41
  %vm255 = vcmp.lt.s32.totalorder %v231, 41
  %vm256 = vcmp.lt.s32.totalorder %v232, 41
  %vm257 = vcmp.lt.s32.totalorder %v233, 41
  %vm258 = vmand %vm234, %vm246
  %vm259 = vmand %vm235, %vm247
  %vm260 = vmand %vm236, %vm248
  %vm261 = vmand %vm237, %vm249
  %vm262 = vmand %vm238, %vm250
  %vm263 = vmand %vm239, %vm251
  %vm264 = vmand %vm240, %vm252
  %vm265 = vmand %vm241, %vm253
  %vm266 = vmand %vm242, %vm254
  %vm267 = vmand %vm243, %vm255
  %vm268 = vmand %vm244, %vm256
  %vm269 = vmand %vm245, %vm257
  %vm270 = vcmp.ge.s32.totalorder %v222, 56
  %vm271 = vcmp.ge.s32.totalorder %v223, 56
  %vm272 = vcmp.ge.s32.totalorder %v224, 56
  %vm273 = vcmp.ge.s32.totalorder %v225, 56
  %vm274 = vcmp.ge.s32.totalorder %v226, 56
  %vm275 = vcmp.ge.s32.totalorder %v227, 56
  %vm276 = vcmp.ge.s32.totalorder %v228, 56
  %vm277 = vcmp.ge.s32.totalorder %v229, 56
  %vm278 = vcmp.ge.s32.totalorder %v230, 56
  %vm279 = vcmp.ge.s32.totalorder %v231, 56
  %vm280 = vcmp.ge.s32.totalorder %v232, 56
  %vm281 = vcmp.ge.s32.totalorder %v233, 56
  %vm282 = vcmp.lt.s32.totalorder %v222, 89
  %vm283 = vcmp.lt.s32.totalorder %v223, 89
  %vm284 = vcmp.lt.s32.totalorder %v224, 89
  %vm285 = vcmp.lt.s32.totalorder %v225, 89
  %vm286 = vcmp.lt.s32.totalorder %v226, 89
  %vm287 = vcmp.lt.s32.totalorder %v227, 89
  %vm288 = vcmp.lt.s32.totalorder %v228, 89
  %vm289 = vcmp.lt.s32.totalorder %v229, 89
  %vm290 = vcmp.lt.s32.totalorder %v230, 89
  %vm291 = vcmp.lt.s32.totalorder %v231, 89
  %vm292 = vcmp.lt.s32.totalorder %v232, 89
  %vm293 = vcmp.lt.s32.totalorder %v233, 89
  %vm294 = vmand %vm270, %vm282
  %vm295 = vmand %vm271, %vm283
  %vm296 = vmand %vm272, %vm284
  %vm297 = vmand %vm273, %vm285
  %vm298 = vmand %vm274, %vm286
  %vm299 = vmand %vm275, %vm287
  %vm300 = vmand %vm276, %vm288
  %vm301 = vmand %vm277, %vm289
  %vm302 = vmand %vm278, %vm290
  %vm303 = vmand %vm279, %vm291
  %vm304 = vmand %vm280, %vm292
  %vm305 = vmand %vm281, %vm293
  %vm306 = vmor %vm258, %vm294
  %vm307 = vmor %vm259, %vm295
  %vm308 = vmor %vm260, %vm296
  %vm309 = vmor %vm261, %vm297
  %vm310 = vmor %vm262, %vm298
  %vm311 = vmor %vm263, %vm299
  %vm312 = vmor %vm264, %vm300
  %vm313 = vmor %vm265, %vm301
  %vm314 = vmor %vm266, %vm302
  %vm315 = vmor %vm267, %vm303
  %vm316 = vmor %vm268, %vm304
  %vm317 = vmor %vm269, %vm305
  %vm318 = vcmp.ge.f32.partialorder %v175, 0.0
  %vm319 = vcmp.ge.f32.partialorder %v178, 0.0
  %vm320 = vcmp.ge.f32.partialorder %v183, 0.0
  %vm321 = vcmp.ge.f32.partialorder %v186, 0.0
  %vm322 = vcmp.ge.f32.partialorder %v191, 0.0
  %vm323 = vcmp.ge.f32.partialorder %v194, 0.0
  %vm324 = vcmp.ge.f32.partialorder %v199, 0.0
  %vm325 = vcmp.ge.f32.partialorder %v202, 0.0
  %vm326 = vcmp.ge.f32.partialorder %v207, 0.0
  %vm327 = vcmp.ge.f32.partialorder %v210, 0.0
  %vm328 = vcmp.ge.f32.partialorder %v215, 0.0
  %vm329 = vcmp.ge.f32.partialorder %v218, 0.0
  %v331 = vlaneseq
  %v332 = vshrl.u32 %v331, 7
  %v333 = vsub.s32 0, %v332
  %v334 = vrot.slane %v49, %v333
  %335 = vset.pattern.permute.xlu0 0
  %336 = vperm.xlu0 %335, %v334
  %v337 = vpop.permute.xlu0 %336
  %v339 = vmul.f32 %v337, %v175
  %v340 = vmul.f32 %v337, %v178
  %v341 = vmul.f32 %v337, %v183
  %v342 = vmul.f32 %v337, %v186
  %v343 = vmul.f32 %v337, %v191
  %v344 = vmul.f32 %v337, %v194
  %v345 = vmul.f32 %v337, %v199
  %v346 = vmul.f32 %v337, %v202
  %v347 = vmul.f32 %v337, %v207
  %v348 = vmul.f32 %v337, %v210
  %v349 = vmul.f32 %v337, %v215
  %v350 = vmul.f32 %v337, %v218
  %v351 = vsel %vm318, %v175, %v339
  %v352 = vsel %vm319, %v178, %v340
  %v353 = vsel %vm320, %v183, %v341
  %v354 = vsel %vm321, %v186, %v342
  %v355 = vsel %vm322, %v191, %v343
  %v356 = vsel %vm323, %v194, %v344
  %v357 = vsel %vm324, %v199, %v345
  %v358 = vsel %vm325, %v202, %v346
  %v359 = vsel %vm326, %v207, %v347
  %v360 = vsel %vm327, %v210, %v348
  %v361 = vsel %vm328, %v215, %v349
  %v362 = vsel %vm329, %v218, %v350
  %v363 = vsel %vm306, 1, 0
  %v364 = vsel %vm307, 1, 0
  %v365 = vsel %vm308, 1, 0
  %v366 = vsel %vm309, 1, 0
  %v367 = vsel %vm310, 1, 0
  %v368 = vsel %vm311, 1, 0
  %v369 = vsel %vm312, 1, 0
  %v370 = vsel %vm313, 1, 0
  %v371 = vsel %vm314, 1, 0
  %v372 = vsel %vm315, 1, 0
  %v373 = vsel %vm316, 1, 0
  %v374 = vsel %vm317, 1, 0
  %vm375 = vcmp.eq.s32.totalorder %v363, 1
  %vm376 = vcmp.eq.s32.totalorder %v364, 1
  %vm377 = vcmp.eq.s32.totalorder %v365, 1
  %vm378 = vcmp.eq.s32.totalorder %v366, 1
  %vm379 = vcmp.eq.s32.totalorder %v367, 1
  %vm380 = vcmp.eq.s32.totalorder %v368, 1
  %vm381 = vcmp.eq.s32.totalorder %v369, 1
  %vm382 = vcmp.eq.s32.totalorder %v370, 1
  %vm383 = vcmp.eq.s32.totalorder %v371, 1
  %vm384 = vcmp.eq.s32.totalorder %v372, 1
  %vm385 = vcmp.eq.s32.totalorder %v373, 1
  %vm386 = vcmp.eq.s32.totalorder %v374, 1
  %v387 = vsel %vm375, %v351, 0.0
  %v388 = vsel %vm376, %v352, 0.0
  %v389 = vsel %vm377, %v353, 0.0
  %v390 = vsel %vm378, %v354, 0.0
  %v391 = vsel %vm379, %v355, 0.0
  %v392 = vsel %vm380, %v356, 0.0
  %v393 = vsel %vm381, %v357, 0.0
  %v394 = vsel %vm382, %v358, 0.0
  %v395 = vsel %vm383, %v359, 0.0
  %v396 = vsel %vm384, %v360, 0.0
  %v397 = vsel %vm385, %v361, 0.0
  %v398 = vsel %vm386, %v362, 0.0
  %v399 = vpack.c.bf16 %v388, %v387
  %v400 = vpack.c.bf16 %v390, %v389
  %v401 = vpack.c.bf16 %v392, %v391
  %v402 = vpack.c.bf16 %v394, %v393
  %v403 = vpack.c.bf16 %v396, %v395
  %v404 = vpack.c.bf16 %v398, %v397
  %v411 = vunpack.c.l.b16 %v399
  %v412 = vunpack.c.h.b16 %v399
  %v413 = vunpack.c.l.b16 %v400
  %v414 = vunpack.c.h.b16 %v400
  %v415 = vunpack.c.l.b16 %v401
  %v416 = vunpack.c.h.b16 %v401
  %v417 = vunpack.c.l.b16 %v402
  %v418 = vunpack.c.h.b16 %v402
  %v419 = vunpack.c.l.b16 %v403
  %v420 = vunpack.c.h.b16 %v403
  %v421 = vunpack.c.l.b16 %v404
  %v422 = vunpack.c.h.b16 %v404
  %v423 = vpack.c.b16 %v411, %v411
  %v424 = vpack.c.b16 %v412, %v412
  %v425 = vpack.c.b16 %v413, %v413
  %v426 = vpack.c.b16 %v414, %v414
  %v427 = vpack.c.b16 %v415, %v415
  %v428 = vpack.c.b16 %v416, %v416
  %v429 = vpack.c.b16 %v417, %v417
  %v430 = vpack.c.b16 %v418, %v418
  %v431 = vpack.c.b16 %v419, %v419
  %v432 = vpack.c.b16 %v420, %v420
  %v433 = vpack.c.b16 %v421, %v421
  %v434 = vpack.c.b16 %v422, %v422
  %447 = vst [vmem:[%s4] sm:$0xf] %v423
  %448 = vst [vmem:[%s4 + $0x4] sm:$0xf] %v424
  %449 = vst [vmem:[%s4 + $0x8] sm:$0xf] %v425
  %450 = vst [vmem:[%s4 + $0xc] sm:$0xf] %v426
  %451 = vst [vmem:[%s4 + $0x10] sm:$0xf] %v427
  %452 = vst [vmem:[%s4 + $0x14] sm:$0xf] %v428
  %453 = vst [vmem:[%s4 + $0x18] sm:$0xf] %v429
  %454 = vst [vmem:[%s4 + $0x1c] sm:$0xf] %v430
  %455 = vst [vmem:[%s4 + $0x20] sm:$0xf] %v431
  %456 = vst [vmem:[%s4 + $0x24] sm:$0xf] %v432
  %457 = vst [vmem:[%s4 + $0x28] sm:$0xf] %v433
  %458 = vst [vmem:[%s4 + $0x2c] sm:$0xf] %v434
  // Predicated region
  $region18: #{_lambda_.7} parent=0 // pred_check
    _
  $region19: #{_lambda_.7} parent=0 // pred_check_branch
    %460 = sbr.rel (0) target = $region21
  $region20: #{_lambda_.7} parent=0 // pred_region
    _
  $region21: #{_lambda_.7} parent=0 // pred_fallthru
    _
  // Predicated region
  $region22: #{_lambda_.7} parent=0 // pred_check
    _
  $region23: #{_lambda_.7} parent=0 // pred_check_branch
    %462 = sbr.rel (0) target = $region25
  $region24: #{_lambda_.7} parent=0 // pred_region
    _
  $region25: #{_lambda_.7} parent=0 // pred_fallthru
    _

// kernel: _lambda_.11
$region0: #{_lambda_.11}
  #allocation0 [shape = 'u32[]', space=smem, size = 0x4, offset = 0x4, fixed_abs, tag = 'smem constant byte address 0x4 - core index']
  #allocation1 [shape = 'u32[144,128]{1,0:T(1,128)}', space=vmem, size = 0x12000, scoped, tag = 'internal scratch']
  #allocation2 [shape = 'f32[1,1]{1,0:T(1,128)S(1)}', space=vmem, size = 0x200, scoped, tag = 'scoped memory for _lambda_.11']
  #allocation3 [shape = 'f32[1,1]{1,0:T(1,128)S(1)}', space=vmem, size = 0x200, scoped, tag = 'scoped memory for _lambda_.11']
  %s0 = inlined_call_operand.vmem [shape: bf16[32,128], index: 0, kind: input, shape index: {}]
  %s1 = inlined_call_operand.vmem [shape: bf16[896,128], index: 1, kind: input, shape index: {}]
  %s2 = inlined_call_operand.vmem [shape: f32[1,128], index: 2, kind: input, shape index: {}]
  %s3 = inlined_call_operand.<no memory space> [shape: f32[1,1], index: 3, kind: input, shape index: {}]
  %s4 = inlined_call_operand.vmem [shape: bf16[896,128], index: 4, kind: input, shape index: {}]
  %s5 = inlined_call_operand.vmem [shape: bf16[128,128], index: 5, kind: input, shape index: {}]
  %s6 = inlined_call_operand.vmem [shape: f32[1,128], index: 6, kind: input, shape index: {}]
  %s7 = inlined_call_operand.<no memory space> [shape: f32[1,1], index: 7, kind: input, shape index: {}]
  %s8 = inlined_call_operand.vmem [shape: bf16[16,16], index: 8, kind: input, shape index: {}]
  %s9 = inlined_call_operand.vmem [shape: bf16[32,128], index: 9, kind: output, shape index: {}]
  %s10 = sld [smem:[#allocation0]]
  $region46: #{_lambda_.11} parent=0
    _
  %s12 = ssub.s32 1, %s10
  %s13 = scalar_select 0, %s12, %s10
  %v14 = vstv %s3
  %15 = vst [vmem:[#allocation2] sm:$0x1] %v14
  %v16 = vstv %s7
  %17 = vst [vmem:[#allocation3] sm:$0x1] %v16
  // Predicated region
  $region2: #{_lambda_.11} parent=0 // pred_check
    _
  $region3: #{_lambda_.11} parent=0 // pred_check_branch
    %19 = sbr.rel (0) target = $region5
  $region4: #{_lambda_.11} parent=0 // pred_region
    _
  $region5: #{_lambda_.11} parent=0 // pred_fallthru
    _
  // Predicated region
  $region6: #{_lambda_.11} parent=0 // pred_check
    _
  $region7: #{_lambda_.11} parent=0 // pred_check_branch
    %21 = sbr.rel (0) target = $region9
  $region8: #{_lambda_.11} parent=0 // pred_region
    _
  $region9: #{_lambda_.11} parent=0 // pred_fallthru
    _
  // Predicated region
  $region10: #{_lambda_.11} parent=0 // pred_check
    _
  $region11: #{_lambda_.11} parent=0 // pred_check_branch
    %23 = sbr.rel (0) target = $region13
  $region12: #{_lambda_.11} parent=0 // pred_region
    _
  $region13: #{_lambda_.11} parent=0 // pred_fallthru
    _
  // Predicated region
  $region14: #{_lambda_.11} parent=0 // pred_check
    _
  $region15: #{_lambda_.11} parent=0 // pred_check_branch
    %25 = sbr.rel (0) target = $region17
  $region16: #{_lambda_.11} parent=0 // pred_region
    _
  $region17: #{_lambda_.11} parent=0 // pred_fallthru
    _
  // Predicated region
  $region18: #{_lambda_.11} parent=0 // pred_check
    _
  $region19: #{_lambda_.11} parent=0 // pred_check_branch
    %27 = sbr.rel (0) target = $region21
  $region20: #{_lambda_.11} parent=0 // pred_region
    _
  $region21: #{_lambda_.11} parent=0 // pred_fallthru
    _
  // Predicated region
  $region22: #{_lambda_.11} parent=0 // pred_check
    _
  $region23: #{_lambda_.11} parent=0 // pred_check_branch
    %29 = sbr.rel (0) target = $region25
  $region24: #{_lambda_.11} parent=0 // pred_region
    _
  $region25: #{_lambda_.11} parent=0 // pred_fallthru
    _
  // Predicated region
  $region26: #{_lambda_.11} parent=0 // pred_check
    _
  $region27: #{_lambda_.11} parent=0 // pred_check_branch
    %31 = sbr.rel (0) target = $region29
  $region28: #{_lambda_.11} parent=0 // pred_region
    _
  $region29: #{_lambda_.11} parent=0 // pred_fallthru
    _
  // Predicated region
  $region30: #{_lambda_.11} parent=0 // pred_check
    _
  $region31: #{_lambda_.11} parent=0 // pred_check_branch
    %33 = sbr.rel (0) target = $region33
  $region32: #{_lambda_.11} parent=0 // pred_region
    _
  $region33: #{_lambda_.11} parent=0 // pred_fallthru
    _
  // Predicated region
  $region34: #{_lambda_.11} parent=0 // pred_check
    _
  $region35: #{_lambda_.11} parent=0 // pred_check_branch
    %35 = sbr.rel (0) target = $region37
  $region36: #{_lambda_.11} parent=0 // pred_region
    _
  $region37: #{_lambda_.11} parent=0 // pred_fallthru
    _
  %v37 = vld [vmem:[%s8] sm:$0xf]
  %v38 = vld [vmem:[%s8 + $0x4] sm:$0xf]
  %v39 = vld [vmem:[%s0] sm:$0xf]
  %v40 = vld [vmem:[%s0 + $0x4] sm:$0xf]
  %v41 = vld [vmem:[%s0 + $0x8] sm:$0xf]
  %v42 = vld [vmem:[%s0 + $0xc] sm:$0xf]
  %v43 = vld [vmem:[%s1] sm:$0xf]
  %v44 = vld [vmem:[%s1 + $0x4] sm:$0xf]
  %v45 = vld [vmem:[%s1 + $0x8] sm:$0xf]
  %v46 = vld [vmem:[%s1 + $0xc] sm:$0xf]
  %v47 = vld [vmem:[%s1 + $0x10] sm:$0xf]
  %v48 = vld [vmem:[%s1 + $0x14] sm:$0xf]
  %v49 = vld [vmem:[%s1 + $0x18] sm:$0xf]
  %v50 = vld [vmem:[%s1 + $0x1c] sm:$0xf]
  %v51 = vld [vmem:[%s1 + $0x20] sm:$0xf]
  %v52 = vld [vmem:[%s1 + $0x24] sm:$0xf]
  %v53 = vld [vmem:[%s1 + $0x28] sm:$0xf]
  %v54 = vld [vmem:[%s1 + $0x2c] sm:$0xf]
  %v55 = vld [vmem:[%s1 + $0x30] sm:$0xf]
  %v56 = vld [vmem:[%s1 + $0x34] sm:$0xf]
  %v57 = vld [vmem:[%s1 + $0x38] sm:$0xf]
  %v58 = vld [vmem:[%s1 + $0x3c] sm:$0xf]
  %v59 = vld [vmem:[%s1 + $0x40] sm:$0xf]
  %v60 = vld [vmem:[%s1 + $0x44] sm:$0xf]
  %v61 = vld [vmem:[%s1 + $0x48] sm:$0xf]
  %v62 = vld [vmem:[%s1 + $0x4c] sm:$0xf]
  %v63 = vld [vmem:[%s1 + $0x50] sm:$0xf]
  %v64 = vld [vmem:[%s1 + $0x54] sm:$0xf]
  %v65 = vld [vmem:[%s1 + $0x58] sm:$0xf]
  %v66 = vld [vmem:[%s1 + $0x5c] sm:$0xf]
  %v67 = vld [vmem:[%s1 + $0x60] sm:$0xf]
  %v68 = vld [vmem:[%s1 + $0x64] sm:$0xf]
  %v69 = vld [vmem:[%s1 + $0x68] sm:$0xf]
  %v70 = vld [vmem:[%s1 + $0x6c] sm:$0xf]
  %v71 = vld [vmem:[%s1 + $0x70] sm:$0xf]
  %v72 = vld [vmem:[%s1 + $0x74] sm:$0xf]
  %v73 = vld [vmem:[%s1 + $0x78] sm:$0xf]
  %v74 = vld [vmem:[%s1 + $0x7c] sm:$0xf]
  %v75 = vld [vmem:[%s1 + $0x80] sm:$0xf]
  %v76 = vld [vmem:[%s1 + $0x84] sm:$0xf]
  %v77 = vld [vmem:[%s1 + $0x88] sm:$0xf]
  %v78 = vld [vmem:[%s1 + $0x8c] sm:$0xf]
  %v79 = vld [vmem:[%s1 + $0x90] sm:$0xf]
  %v80 = vld [vmem:[%s1 + $0x94] sm:$0xf]
  %v81 = vld [vmem:[%s1 + $0x98] sm:$0xf]
  %v82 = vld [vmem:[%s1 + $0x9c] sm:$0xf]
  %v83 = vld [vmem:[%s1 + $0xa0] sm:$0xf]
  %v84 = vld [vmem:[%s1 + $0xa4] sm:$0xf]
  %v85 = vld [vmem:[%s1 + $0xa8] sm:$0xf]
  %v86 = vld [vmem:[%s1 + $0xac] sm:$0xf]
  %v87 = vld [vmem:[%s1 + $0xb0] sm:$0xf]
  %v88 = vld [vmem:[%s1 + $0xb4] sm:$0xf]
  %v89 = vld [vmem:[%s1 + $0xb8] sm:$0xf]
  %v90 = vld [vmem:[%s1 + $0xbc] sm:$0xf]
  %v91 = vld [vmem:[%s1 + $0xc0] sm:$0xf]
  %v92 = vld [vmem:[%s1 + $0xc4] sm:$0xf]
  %v93 = vld [vmem:[%s1 + $0xc8] sm:$0xf]
  %v94 = vld [vmem:[%s1 + $0xcc] sm:$0xf]
  %v95 = vld [vmem:[%s1 + $0xd0] sm:$0xf]
  %v96 = vld [vmem:[%s1 + $0xd4] sm:$0xf]
  %v97 = vld [vmem:[%s1 + $0xd8] sm:$0xf]
  %v98 = vld [vmem:[%s1 + $0xdc] sm:$0xf]
  %v99 = vld [vmem:[%s1 + $0xe0] sm:$0xf]
  %v100 = vld [vmem:[%s1 + $0xe4] sm:$0xf]
  %v101 = vld [vmem:[%s1 + $0xe8] sm:$0xf]
  %v102 = vld [vmem:[%s1 + $0xec] sm:$0xf]
  %v103 = vld [vmem:[%s1 + $0xf0] sm:$0xf]
  %v104 = vld [vmem:[%s1 + $0xf4] sm:$0xf]
  %v105 = vld [vmem:[%s1 + $0xf8] sm:$0xf]
  %v106 = vld [vmem:[%s1 + $0xfc] sm:$0xf]
  %v107 = vld [vmem:[%s1 + $0x100] sm:$0xf]
  %v108 = vld [vmem:[%s1 + $0x104] sm:$0xf]
  %v109 = vld [vmem:[%s1 + $0x108] sm:$0xf]
  %v110 = vld [vmem:[%s1 + $0x10c] sm:$0xf]
  %v111 = vld [vmem:[%s1 + $0x110] sm:$0xf]
  %v112 = vld [vmem:[%s1 + $0x114] sm:$0xf]
  %v113 = vld [vmem:[%s1 + $0x118] sm:$0xf]
  %v114 = vld [vmem:[%s1 + $0x11c] sm:$0xf]
  %v115 = vld [vmem:[%s1 + $0x120] sm:$0xf]
  %v116 = vld [vmem:[%s1 + $0x124] sm:$0xf]
  %v117 = vld [vmem:[%s1 + $0x128] sm:$0xf]
  %v118 = vld [vmem:[%s1 + $0x12c] sm:$0xf]
  %v119 = vld [vmem:[%s1 + $0x130] sm:$0xf]
  %v120 = vld [vmem:[%s1 + $0x134] sm:$0xf]
  %v121 = vld [vmem:[%s1 + $0x138] sm:$0xf]
  %v122 = vld [vmem:[%s1 + $0x13c] sm:$0xf]
  %v123 = vld [vmem:[%s1 + $0x140] sm:$0xf]
  %v124 = vld [vmem:[%s1 + $0x144] sm:$0xf]
  %v125 = vld [vmem:[%s1 + $0x148] sm:$0xf]
  %v126 = vld [vmem:[%s1 + $0x14c] sm:$0xf]
  %v127 = vld [vmem:[%s1 + $0x150] sm:$0xf]
  %v128 = vld [vmem:[%s1 + $0x154] sm:$0xf]
  %v129 = vld [vmem:[%s1 + $0x158] sm:$0xf]
  %v130 = vld [vmem:[%s1 + $0x15c] sm:$0xf]
  %v131 = vld [vmem:[%s1 + $0x160] sm:$0xf]
  %v132 = vld [vmem:[%s1 + $0x164] sm:$0xf]
  %v133 = vld [vmem:[%s1 + $0x168] sm:$0xf]
  %v134 = vld [vmem:[%s1 + $0x16c] sm:$0xf]
  %v135 = vld [vmem:[%s1 + $0x170] sm:$0xf]
  %v136 = vld [vmem:[%s1 + $0x174] sm:$0xf]
  %v137 = vld [vmem:[%s1 + $0x178] sm:$0xf]
  %v138 = vld [vmem:[%s1 + $0x17c] sm:$0xf]
  %v139 = vld [vmem:[%s1 + $0x180] sm:$0xf]
  %v140 = vld [vmem:[%s1 + $0x184] sm:$0xf]
  %v141 = vld [vmem:[%s1 + $0x188] sm:$0xf]
  %v142 = vld [vmem:[%s1 + $0x18c] sm:$0xf]
  %v143 = vld [vmem:[%s1 + $0x190] sm:$0xf]
  %v144 = vld [vmem:[%s1 + $0x194] sm:$0xf]
  %v145 = vld [vmem:[%s1 + $0x198] sm:$0xf]
  %v146 = vld [vmem:[%s1 + $0x19c] sm:$0xf]
  %v147 = vld [vmem:[%s1 + $0x1a0] sm:$0xf]
  %v148 = vld [vmem:[%s1 + $0x1a4] sm:$0xf]
  %v149 = vld [vmem:[%s1 + $0x1a8] sm:$0xf]
  %v150 = vld [vmem:[%s1 + $0x1ac] sm:$0xf]
  %v151 = vld [vmem:[%s1 + $0x1b0] sm:$0xf]
  %v152 = vld [vmem:[%s1 + $0x1b4] sm:$0xf]
  %v153 = vld [vmem:[%s1 + $0x1b8] sm:$0xf]
  %v154 = vld [vmem:[%s1 + $0x1bc] sm:$0xf]
  %v155 = vld [vmem:[%s2] sm:$0x1]
  %v156 = vld [vmem:[#allocation2] sm:$0x1]
  %v157 = vld [vmem:[%s4] sm:$0xf]
  %v158 = vld [vmem:[%s4 + $0x4] sm:$0xf]
  %v159 = vld [vmem:[%s4 + $0x8] sm:$0xf]
  %v160 = vld [vmem:[%s4 + $0xc] sm:$0xf]
  %v161 = vld [vmem:[%s4 + $0x10] sm:$0xf]
  %v162 = vld [vmem:[%s4 + $0x14] sm:$0xf]
  %v163 = vld [vmem:[%s4 + $0x18] sm:$0xf]
  %v164 = vld [vmem:[%s4 + $0x1c] sm:$0xf]
  %v165 = vld [vmem:[%s4 + $0x20] sm:$0xf]
  %v166 = vld [vmem:[%s4 + $0x24] sm:$0xf]
  %v167 = vld [vmem:[%s4 + $0x28] sm:$0xf]
  %v168 = vld [vmem:[%s4 + $0x2c] sm:$0xf]
  %v169 = vld [vmem:[%s4 + $0x30] sm:$0xf]
  %v170 = vld [vmem:[%s4 + $0x34] sm:$0xf]
  %v171 = vld [vmem:[%s4 + $0x38] sm:$0xf]
  %v172 = vld [vmem:[%s4 + $0x3c] sm:$0xf]
  %v173 = vld [vmem:[%s4 + $0x40] sm:$0xf]
  %v174 = vld [vmem:[%s4 + $0x44] sm:$0xf]
  %v175 = vld [vmem:[%s4 + $0x48] sm:$0xf]
  %v176 = vld [vmem:[%s4 + $0x4c] sm:$0xf]
  %v177 = vld [vmem:[%s4 + $0x50] sm:$0xf]
  %v178 = vld [vmem:[%s4 + $0x54] sm:$0xf]
  %v179 = vld [vmem:[%s4 + $0x58] sm:$0xf]
  %v180 = vld [vmem:[%s4 + $0x5c] sm:$0xf]
  %v181 = vld [vmem:[%s4 + $0x60] sm:$0xf]
  %v182 = vld [vmem:[%s4 + $0x64] sm:$0xf]
  %v183 = vld [vmem:[%s4 + $0x68] sm:$0xf]
  %v184 = vld [vmem:[%s4 + $0x6c] sm:$0xf]
  %v185 = vld [vmem:[%s4 + $0x70] sm:$0xf]
  %v186 = vld [vmem:[%s4 + $0x74] sm:$0xf]
  %v187 = vld [vmem:[%s4 + $0x78] sm:$0xf]
  %v188 = vld [vmem:[%s4 + $0x7c] sm:$0xf]
  %v189 = vld [vmem:[%s4 + $0x80] sm:$0xf]
  %v190 = vld [vmem:[%s4 + $0x84] sm:$0xf]
  %v191 = vld [vmem:[%s4 + $0x88] sm:$0xf]
  %v192 = vld [vmem:[%s4 + $0x8c] sm:$0xf]
  %v193 = vld [vmem:[%s4 + $0x90] sm:$0xf]
  %v194 = vld [vmem:[%s4 + $0x94] sm:$0xf]
  %v195 = vld [vmem:[%s4 + $0x98] sm:$0xf]
  %v196 = vld [vmem:[%s4 + $0x9c] sm:$0xf]
  %v197 = vld [vmem:[%s4 + $0xa0] sm:$0xf]
  %v198 = vld [vmem:[%s4 + $0xa4] sm:$0xf]
  %v199 = vld [vmem:[%s4 + $0xa8] sm:$0xf]
  %v200 = vld [vmem:[%s4 + $0xac] sm:$0xf]
  %v201 = vld [vmem:[%s4 + $0xb0] sm:$0xf]
  %v202 = vld [vmem:[%s4 + $0xb4] sm:$0xf]
  %v203 = vld [vmem:[%s4 + $0xb8] sm:$0xf]
  %v204 = vld [vmem:[%s4 + $0xbc] sm:$0xf]
  %v205 = vld [vmem:[%s4 + $0xc0] sm:$0xf]
  %v206 = vld [vmem:[%s4 + $0xc4] sm:$0xf]
  %v207 = vld [vmem:[%s4 + $0xc8] sm:$0xf]
  %v208 = vld [vmem:[%s4 + $0xcc] sm:$0xf]
  %v209 = vld [vmem:[%s4 + $0xd0] sm:$0xf]
  %v210 = vld [vmem:[%s4 + $0xd4] sm:$0xf]
  %v211 = vld [vmem:[%s4 + $0xd8] sm:$0xf]
  %v212 = vld [vmem:[%s4 + $0xdc] sm:$0xf]
  %v213 = vld [vmem:[%s4 + $0xe0] sm:$0xf]
  %v214 = vld [vmem:[%s4 + $0xe4] sm:$0xf]
  %v215 = vld [vmem:[%s4 + $0xe8] sm:$0xf]
  %v216 = vld [vmem:[%s4 + $0xec] sm:$0xf]
  %v217 = vld [vmem:[%s4 + $0xf0] sm:$0xf]
  %v218 = vld [vmem:[%s4 + $0xf4] sm:$0xf]
  %v219 = vld [vmem:[%s4 + $0xf8] sm:$0xf]
  %v220 = vld [vmem:[%s4 + $0xfc] sm:$0xf]
  %v221 = vld [vmem:[%s4 + $0x100] sm:$0xf]
  %v222 = vld [vmem:[%s4 + $0x104] sm:$0xf]
  %v223 = vld [vmem:[%s4 + $0x108] sm:$0xf]
  %v224 = vld [vmem:[%s4 + $0x10c] sm:$0xf]
  %v225 = vld [vmem:[%s4 + $0x110] sm:$0xf]
  %v226 = vld [vmem:[%s4 + $0x114] sm:$0xf]
  %v227 = vld [vmem:[%s4 + $0x118] sm:$0xf]
  %v228 = vld [vmem:[%s4 + $0x11c] sm:$0xf]
  %v229 = vld [vmem:[%s4 + $0x120] sm:$0xf]
  %v230 = vld [vmem:[%s4 + $0x124] sm:$0xf]
  %v231 = vld [vmem:[%s4 + $0x128] sm:$0xf]
  %v232 = vld [vmem:[%s4 + $0x12c] sm:$0xf]
  %v233 = vld [vmem:[%s4 + $0x130] sm:$0xf]
  %v234 = vld [vmem:[%s4 + $0x134] sm:$0xf]
  %v235 = vld [vmem:[%s4 + $0x138] sm:$0xf]
  %v236 = vld [vmem:[%s4 + $0x13c] sm:$0xf]
  %v237 = vld [vmem:[%s4 + $0x140] sm:$0xf]
  %v238 = vld [vmem:[%s4 + $0x144] sm:$0xf]
  %v239 = vld [vmem:[%s4 + $0x148] sm:$0xf]
  %v240 = vld [vmem:[%s4 + $0x14c] sm:$0xf]
  %v241 = vld [vmem:[%s4 + $0x150] sm:$0xf]
  %v242 = vld [vmem:[%s4 + $0x154] sm:$0xf]
  %v243 = vld [vmem:[%s4 + $0x158] sm:$0xf]
  %v244 = vld [vmem:[%s4 + $0x15c] sm:$0xf]
  %v245 = vld [vmem:[%s4 + $0x160] sm:$0xf]
  %v246 = vld [vmem:[%s4 + $0x164] sm:$0xf]
  %v247 = vld [vmem:[%s4 + $0x168] sm:$0xf]
  %v248 = vld [vmem:[%s4 + $0x16c] sm:$0xf]
  %v249 = vld [vmem:[%s4 + $0x170] sm:$0xf]
  %v250 = vld [vmem:[%s4 + $0x174] sm:$0xf]
  %v251 = vld [vmem:[%s4 + $0x178] sm:$0xf]
  %v252 = vld [vmem:[%s4 + $0x17c] sm:$0xf]
  %v253 = vld [vmem:[%s4 + $0x180] sm:$0xf]
  %v254 = vld [vmem:[%s4 + $0x184] sm:$0xf]
  %v255 = vld [vmem:[%s4 + $0x188] sm:$0xf]
  %v256 = vld [vmem:[%s4 + $0x18c] sm:$0xf]
  %v257 = vld [vmem:[%s4 + $0x190] sm:$0xf]
  %v258 = vld [vmem:[%s4 + $0x194] sm:$0xf]
  %v259 = vld [vmem:[%s4 + $0x198] sm:$0xf]
  %v260 = vld [vmem:[%s4 + $0x19c] sm:$0xf]
  %v261 = vld [vmem:[%s4 + $0x1a0] sm:$0xf]
  %v262 = vld [vmem:[%s4 + $0x1a4] sm:$0xf]
  %v263 = vld [vmem:[%s4 + $0x1a8] sm:$0xf]
  %v264 = vld [vmem:[%s4 + $0x1ac] sm:$0xf]
  %v265 = vld [vmem:[%s4 + $0x1b0] sm:$0xf]
  %v266 = vld [vmem:[%s4 + $0x1b4] sm:$0xf]
  %v267 = vld [vmem:[%s4 + $0x1b8] sm:$0xf]
  %v268 = vld [vmem:[%s4 + $0x1bc] sm:$0xf]
  %v269 = vld [vmem:[%s5] sm:$0xf]
  %v270 = vld [vmem:[%s5 + $0x4] sm:$0xf]
  %v271 = vld [vmem:[%s5 + $0x8] sm:$0xf]
  %v272 = vld [vmem:[%s5 + $0xc] sm:$0xf]
  %v273 = vld [vmem:[%s5 + $0x10] sm:$0xf]
  %v274 = vld [vmem:[%s5 + $0x14] sm:$0xf]
  %v275 = vld [vmem:[%s5 + $0x18] sm:$0xf]
  %v276 = vld [vmem:[%s5 + $0x1c] sm:$0xf]
  %v277 = vld [vmem:[%s5 + $0x20] sm:$0xf]
  %v278 = vld [vmem:[%s5 + $0x24] sm:$0xf]
  %v279 = vld [vmem:[%s5 + $0x28] sm:$0xf]
  %v280 = vld [vmem:[%s5 + $0x2c] sm:$0xf]
  %v281 = vld [vmem:[%s5 + $0x30] sm:$0xf]
  %v282 = vld [vmem:[%s5 + $0x34] sm:$0xf]
  %v283 = vld [vmem:[%s5 + $0x38] sm:$0xf]
  %v284 = vld [vmem:[%s5 + $0x3c] sm:$0xf]
  %v285 = vld [vmem:[%s6] sm:$0x1]
  %v286 = vld [vmem:[#allocation3] sm:$0x1]
  %v287 = vlaneseq
  %v288 = vshrl.u32 %v287, 7
  %v289 = vadd.s32 %v288, 8
  %v290 = vadd.s32 %v288, 16
  %v291 = vadd.s32 %v288, 24
  %v292 = vadd.s32 %v288, 3
  %v293 = vadd.s32 %v289, 3
  %v294 = vadd.s32 %v290, 3
  %v295 = vadd.s32 %v291, 3
  %vm296 = vcmp.ge.s32.totalorder %v292, 8
  %vm297 = vcmp.ge.s32.totalorder %v293, 8
  %vm298 = vcmp.ge.s32.totalorder %v294, 8
  %vm299 = vcmp.ge.s32.totalorder %v295, 8
  %vm300 = vcmp.lt.s32.totalorder %v292, 12
  %vm301 = vcmp.lt.s32.totalorder %v293, 12
  %vm302 = vcmp.lt.s32.totalorder %v294, 12
  %vm303 = vcmp.lt.s32.totalorder %v295, 12
  %vm304 = vmand %vm296, %vm300
  %vm305 = vmand %vm297, %vm301
  %vm306 = vmand %vm298, %vm302
  %vm307 = vmand %vm299, %vm303
  %vm308 = vcmp.ge.s32.totalorder %v292, 24
  %vm309 = vcmp.ge.s32.totalorder %v293, 24
  %vm310 = vcmp.ge.s32.totalorder %v294, 24
  %vm311 = vcmp.ge.s32.totalorder %v295, 24
  %vm312 = vcmp.lt.s32.totalorder %v292, 28
  %vm313 = vcmp.lt.s32.totalorder %v293, 28
  %vm314 = vcmp.lt.s32.totalorder %v294, 28
  %vm315 = vcmp.lt.s32.totalorder %v295, 28
  %vm316 = vmand %vm308, %vm312
  %vm317 = vmand %vm309, %vm313
  %vm318 = vmand %vm310, %vm314
  %vm319 = vmand %vm311, %vm315
  %vm320 = vmor %vm304, %vm316
  %vm321 = vmor %vm305, %vm317
  %vm322 = vmor %vm306, %vm318
  %vm323 = vmor %vm307, %vm319
  %v328 = vunpack.c.l.b16 %v39
  %v329 = vunpack.c.l.b16 %v40
  %v330 = vunpack.c.l.b16 %v41
  %v331 = vunpack.c.l.b16 %v42
  %v332 = vpack.c.b16 %v329, %v328
  %v333 = vpack.c.b16 %v331, %v330
  %vm336 = vsmask.f32 7424
  %v338 = vshrl.u32 %v332, 16
  %v340 = vshll.u32 %v332, 16
  %v342 = vrot.slane %v340, 1
  %v343 = vor.u32 %v338, %v342
  %v345 = vshll.u32 %v333, 16
  %v347 = vrot.slane %v345, 1
  %v348 = vsel %vm336, %v343, %v347
  %v349 = vshrl.u32 %v333, 16
  %v351 = vor.u32 %v349, %v347
  %vm354 = vcmask 1046528
  %v355 = vrot.slane %v332, 1
  %v356 = vrot.slane %v333, 1
  %v357 = vsel %vm354, %v355, %v356
  %vm360 = vsmask.f32 6400
  %v361 = vrot.slane %v338, 1
  %v362 = vrot.slane %v340, 2
  %v363 = vor.u32 %v361, %v362
  %v364 = vrot.slane %v349, 1
  %v365 = vrot.slane %v345, 2
  %v366 = vor.u32 %v364, %v365
  %v367 = vsel %vm360, %v363, %v366
  %vm370 = vcmask 1045504
  %v371 = vrot.slane %v332, 2
  %v372 = vrot.slane %v333, 2
  %v373 = vsel %vm370, %v371, %v372
  %vm376 = vsmask.f32 5376
  %v377 = vrot.slane %v338, 2
  %v378 = vrot.slane %v340, 3
  %v379 = vor.u32 %v377, %v378
  %v380 = vrot.slane %v349, 2
  %v381 = vrot.slane %v345, 3
  %v382 = vor.u32 %v380, %v381
  %v383 = vsel %vm376, %v379, %v382
  %vm386 = vcmask 1044480
  %v387 = vrot.slane %v332, 3
  %v388 = vrot.slane %v333, 3
  %v389 = vsel %vm386, %v387, %v388
  %v393 = vlaneseq
  %v394 = vshrl.u32 %v393, 7
  %v395 = vsub.s32 0, %v394
  %v396 = vrot.slane %v155, %v395
  %v510 = vunpack.c.l.b16 %v43
  %v511 = vunpack.c.l.b16 %v44
  %v512 = vunpack.c.l.b16 %v45
  %v513 = vunpack.c.l.b16 %v46
  %v514 = vunpack.c.l.b16 %v47
  %v515 = vunpack.c.l.b16 %v48
  %v516 = vunpack.c.l.b16 %v49
  %v517 = vunpack.c.l.b16 %v50
  %v518 = vunpack.c.l.b16 %v51
  %v519 = vunpack.c.l.b16 %v52
  %v520 = vunpack.c.l.b16 %v53
  %v521 = vunpack.c.l.b16 %v54
  %v522 = vunpack.c.l.b16 %v55
  %v523 = vunpack.c.l.b16 %v56
  %v524 = vunpack.c.l.b16 %v57
  %v525 = vunpack.c.l.b16 %v58
  %v526 = vunpack.c.l.b16 %v59
  %v527 = vunpack.c.l.b16 %v60
  %v528 = vunpack.c.l.b16 %v61
  %v529 = vunpack.c.l.b16 %v62
  %v530 = vunpack.c.l.b16 %v63
  %v531 = vunpack.c.l.b16 %v64
  %v532 = vunpack.c.l.b16 %v65
  %v533 = vunpack.c.l.b16 %v66
  %v534 = vunpack.c.l.b16 %v67
  %v535 = vunpack.c.l.b16 %v68
  %v536 = vunpack.c.l.b16 %v69
  %v537 = vunpack.c.l.b16 %v70
  %v538 = vunpack.c.l.b16 %v71
  %v539 = vunpack.c.l.b16 %v72
  %v540 = vunpack.c.l.b16 %v73
  %v541 = vunpack.c.l.b16 %v74
  %v542 = vunpack.c.l.b16 %v75
  %v543 = vunpack.c.l.b16 %v76
  %v544 = vunpack.c.l.b16 %v77
  %v545 = vunpack.c.l.b16 %v78
  %v546 = vunpack.c.l.b16 %v79
  %v547 = vunpack.c.l.b16 %v80
  %v548 = vunpack.c.l.b16 %v81
  %v549 = vunpack.c.l.b16 %v82
  %v550 = vunpack.c.l.b16 %v83
  %v551 = vunpack.c.l.b16 %v84
  %v552 = vunpack.c.l.b16 %v85
  %v553 = vunpack.c.l.b16 %v86
  %v554 = vunpack.c.l.b16 %v87
  %v555 = vunpack.c.l.b16 %v88
  %v556 = vunpack.c.l.b16 %v89
  %v557 = vunpack.c.l.b16 %v90
  %v558 = vunpack.c.l.b16 %v91
  %v559 = vunpack.c.l.b16 %v92
  %v560 = vunpack.c.l.b16 %v93
  %v561 = vunpack.c.l.b16 %v94
  %v562 = vunpack.c.l.b16 %v95
  %v563 = vunpack.c.l.b16 %v96
  %v564 = vunpack.c.l.b16 %v97
  %v565 = vunpack.c.l.b16 %v98
  %v566 = vunpack.c.l.b16 %v99
  %v567 = vunpack.c.l.b16 %v100
  %v568 = vunpack.c.l.b16 %v101
  %v569 = vunpack.c.l.b16 %v102
  %v570 = vunpack.c.l.b16 %v103
  %v571 = vunpack.c.l.b16 %v104
  %v572 = vunpack.c.l.b16 %v105
  %v573 = vunpack.c.l.b16 %v106
  %v574 = vunpack.c.l.b16 %v107
  %v575 = vunpack.c.l.b16 %v108
  %v576 = vunpack.c.l.b16 %v109
  %v577 = vunpack.c.l.b16 %v110
  %v578 = vunpack.c.l.b16 %v111
  %v579 = vunpack.c.l.b16 %v112
  %v580 = vunpack.c.l.b16 %v113
  %v581 = vunpack.c.l.b16 %v114
  %v582 = vunpack.c.l.b16 %v115
  %v583 = vunpack.c.l.b16 %v116
  %v584 = vunpack.c.l.b16 %v117
  %v585 = vunpack.c.l.b16 %v118
  %v586 = vunpack.c.l.b16 %v119
  %v587 = vunpack.c.l.b16 %v120
  %v588 = vunpack.c.l.b16 %v121
  %v589 = vunpack.c.l.b16 %v122
  %v590 = vunpack.c.l.b16 %v123
  %v591 = vunpack.c.l.b16 %v124
  %v592 = vunpack.c.l.b16 %v125
  %v593 = vunpack.c.l.b16 %v126
  %v594 = vunpack.c.l.b16 %v127
  %v595 = vunpack.c.l.b16 %v128
  %v596 = vunpack.c.l.b16 %v129
  %v597 = vunpack.c.l.b16 %v130
  %v598 = vunpack.c.l.b16 %v131
  %v599 = vunpack.c.l.b16 %v132
  %v600 = vunpack.c.l.b16 %v133
  %v601 = vunpack.c.l.b16 %v134
  %v602 = vunpack.c.l.b16 %v135
  %v603 = vunpack.c.l.b16 %v136
  %v604 = vunpack.c.l.b16 %v137
  %v605 = vunpack.c.l.b16 %v138
  %v606 = vunpack.c.l.b16 %v139
  %v607 = vunpack.c.l.b16 %v140
  %v608 = vunpack.c.l.b16 %v141
  %v609 = vunpack.c.l.b16 %v142
  %v610 = vunpack.c.l.b16 %v143
  %v611 = vunpack.c.l.b16 %v144
  %v612 = vunpack.c.l.b16 %v145
  %v613 = vunpack.c.l.b16 %v146
  %v614 = vunpack.c.l.b16 %v147
  %v615 = vunpack.c.l.b16 %v148
  %v616 = vunpack.c.l.b16 %v149
  %v617 = vunpack.c.l.b16 %v150
  %v618 = vunpack.c.l.b16 %v151
  %v619 = vunpack.c.l.b16 %v152
  %v620 = vunpack.c.l.b16 %v153
  %v621 = vunpack.c.l.b16 %v154
  %v622 = vpack.c.b16 %v511, %v510
  %v623 = vpack.c.b16 %v513, %v512
  %v624 = vpack.c.b16 %v515, %v514
  %v625 = vpack.c.b16 %v517, %v516
  %v626 = vpack.c.b16 %v519, %v518
  %v627 = vpack.c.b16 %v521, %v520
  %v628 = vpack.c.b16 %v523, %v522
  %v629 = vpack.c.b16 %v525, %v524
  %v630 = vpack.c.b16 %v527, %v526
  %v631 = vpack.c.b16 %v529, %v528
  %v632 = vpack.c.b16 %v531, %v530
  %v633 = vpack.c.b16 %v533, %v532
  %v634 = vpack.c.b16 %v535, %v534
  %v635 = vpack.c.b16 %v537, %v536
  %v636 = vpack.c.b16 %v539, %v538
  %v637 = vpack.c.b16 %v541, %v540
  %v638 = vpack.c.b16 %v543, %v542
  %v639 = vpack.c.b16 %v545, %v544
  %v640 = vpack.c.b16 %v547, %v546
  %v641 = vpack.c.b16 %v549, %v548
  %v642 = vpack.c.b16 %v551, %v550
  %v643 = vpack.c.b16 %v553, %v552
  %v644 = vpack.c.b16 %v555, %v554
  %v645 = vpack.c.b16 %v557, %v556
  %v646 = vpack.c.b16 %v559, %v558
  %v647 = vpack.c.b16 %v561, %v560
  %v648 = vpack.c.b16 %v563, %v562
  %v649 = vpack.c.b16 %v565, %v564
  %v650 = vpack.c.b16 %v567, %v566
  %v651 = vpack.c.b16 %v569, %v568
  %v652 = vpack.c.b16 %v571, %v570
  %v653 = vpack.c.b16 %v573, %v572
  %v654 = vpack.c.b16 %v575, %v574
  %v655 = vpack.c.b16 %v577, %v576
  %v656 = vpack.c.b16 %v579, %v578
  %v657 = vpack.c.b16 %v581, %v580
  %v658 = vpack.c.b16 %v583, %v582
  %v659 = vpack.c.b16 %v585, %v584
  %v660 = vpack.c.b16 %v587, %v586
  %v661 = vpack.c.b16 %v589, %v588
  %v662 = vpack.c.b16 %v591, %v590
  %v663 = vpack.c.b16 %v593, %v592
  %v664 = vpack.c.b16 %v595, %v594
  %v665 = vpack.c.b16 %v597, %v596
  %v666 = vpack.c.b16 %v599, %v598
  %v667 = vpack.c.b16 %v601, %v600
  %v668 = vpack.c.b16 %v603, %v602
  %v669 = vpack.c.b16 %v605, %v604
  %v670 = vpack.c.b16 %v607, %v606
  %v671 = vpack.c.b16 %v609, %v608
  %v672 = vpack.c.b16 %v611, %v610
  %v673 = vpack.c.b16 %v613, %v612
  %v674 = vpack.c.b16 %v615, %v614
  %v675 = vpack.c.b16 %v617, %v616
  %v676 = vpack.c.b16 %v619, %v618
  %v677 = vpack.c.b16 %v621, %v620
  %734 = vmatprep.subr.bf16.mxu0 0
  %735 = vmatpush1.bf16.msra.mxu0 %v622
  %736 = vmatprep.subr.bf16.mxu0 0
  %737 = vmatpush1.bf16.msra.mxu0 %v623
  %738 = vmatprep.subr.bf16.mxu0 0
  %739 = vmatpush1.bf16.msra.mxu0 %v624
  %740 = vmatprep.subr.bf16.mxu0 0
  %741 = vmatpush1.bf16.msra.mxu0 %v625
  %742 = vmatprep.subr.bf16.mxu0 0
  %743 = vmatpush1.bf16.msra.mxu0 %v626
  %744 = vmatprep.subr.bf16.mxu0 0
  %745 = vmatpush1.bf16.msra.mxu0 %v627
  %746 = vmatprep.subr.bf16.mxu0 0
  %747 = vmatpush1.bf16.msra.mxu0 %v628
  %748 = vmatprep.subr.bf16.mxu0 0
  %749 = vmatpush1.bf16.msra.mxu0 %v629
  %750 = vmatprep.subr.bf16.mxu0 0
  %751 = vmatpush1.bf16.msra.mxu0 %v630
  %752 = vmatprep.subr.bf16.mxu0 0
  %753 = vmatpush1.bf16.msra.mxu0 %v631
  %754 = vmatprep.subr.bf16.mxu0 0
  %755 = vmatpush1.bf16.msra.mxu0 %v632
  %756 = vmatprep.subr.bf16.mxu0 0
  %757 = vmatpush1.bf16.msra.mxu0 %v633
  %758 = vmatprep.subr.bf16.mxu0 0
  %759 = vmatpush1.bf16.msra.mxu0 %v634
  %760 = vmatprep.subr.bf16.mxu0 0
  %761 = vmatpush1.bf16.msra.mxu0 %v635
  %762 = vmatprep.subr.bf16.mxu0 0
  %763 = vmatpush1.bf16.msra.mxu0 %v636
  %764 = vmatprep.subr.bf16.mxu0 0
  %765 = vmatpush1.bf16.msra.mxu0 %v637
  %766 = vmatprep.mubr.bf16.mxu0 %v348
  %767 = vmatmul.mubr.bf16.gmra.mrb[0].mxu0 %v332
  %v768 = vpop.f32.mrb[0].mxu0
  %v769 = vadd.f32 %v396, %v768
  %v770 = vpop.f32.mrb[0].mxu0
  %v771 = vpop.f32.mrb[0].mxu0
  %v772 = vadd.f32 %v396, %v771
  %v773 = vpop.f32.mrb[0].mxu0
  %774 = vmatprep.mubr.bf16.mxu0 %v351
  %775 = vmatmul.mubr.bf16.gmra.mrb[0].mxu0 %v333
  %v776 = vpop.f32.mrb[0].mxu0
  %v777 = vadd.f32 %v396, %v776
  %v778 = vpop.f32.mrb[0].mxu0
  %v779 = vpop.f32.mrb[0].mxu0
  %v780 = vadd.f32 %v396, %v779
  %v781 = vpop.f32.mrb[0].mxu0
  %782 = vdwg.mxu0
  %783 = vmatprep.subr.bf16.mxu0 0
  %784 = vmatpush1.bf16.msra.mxu0 %v638
  %785 = vmatprep.subr.bf16.mxu0 0
  %786 = vmatpush1.bf16.msra.mxu0 %v639
  %787 = vmatprep.subr.bf16.mxu0 0
  %788 = vmatpush1.bf16.msra.mxu0 %v640
  %789 = vmatprep.subr.bf16.mxu0 0
  %790 = vmatpush1.bf16.msra.mxu0 %v641
  %791 = vmatprep.subr.bf16.mxu0 0
  %792 = vmatpush1.bf16.msra.mxu0 %v642
  %793 = vmatprep.subr.bf16.mxu0 0
  %794 = vmatpush1.bf16.msra.mxu0 %v643
  %795 = vmatprep.subr.bf16.mxu0 0
  %796 = vmatpush1.bf16.msra.mxu0 %v644
  %797 = vmatprep.subr.bf16.mxu0 0
  %798 = vmatpush1.bf16.msra.mxu0 %v645
  %799 = vmatprep.subr.bf16.mxu0 0
  %800 = vmatpush1.bf16.msra.mxu0 %v646
  %801 = vmatprep.subr.bf16.mxu0 0
  %802 = vmatpush1.bf16.msra.mxu0 %v647
  %803 = vmatprep.subr.bf16.mxu0 0
  %804 = vmatpush1.bf16.msra.mxu0 %v648
  %805 = vmatprep.subr.bf16.mxu0 0
  %806 = vmatpush1.bf16.msra.mxu0 %v649
  %807 = vmatprep.subr.bf16.mxu0 0
  %808 = vmatpush1.bf16.msra.mxu0 %v650
  %809 = vmatprep.subr.bf16.mxu0 0
  %810 = vmatpush1.bf16.msra.mxu0 %v651
  %811 = vmatprep.subr.bf16.mxu0 0
  %812 = vmatpush1.bf16.msra.mxu0 %v652
  %813 = vmatprep.subr.bf16.mxu0 0
  %814 = vmatpush1.bf16.msra.mxu0 %v653
  %815 = vmatprep.mubr.bf16.mxu0 %v367
  %816 = vmatmul.mubr.bf16.gmra.mrb[0].mxu0 %v357
  %v817 = vpop.f32.mrb[0].mxu0
  %v818 = vadd.f32 %v769, %v817
  %v819 = vpop.f32.mrb[0].mxu0
  %v820 = vpop.f32.mrb[0].mxu0
  %v821 = vadd.f32 %v772, %v820
  %v822 = vpop.f32.mrb[0].mxu0
  %823 = vmatprep.mubr.bf16.mxu0 %v366
  %824 = vmatmul.mubr.bf16.gmra.mrb[0].mxu0 %v356
  %v825 = vpop.f32.mrb[0].mxu0
  %v826 = vadd.f32 %v777, %v825
  %v827 = vpop.f32.mrb[0].mxu0
  %v828 = vpop.f32.mrb[0].mxu0
  %v829 = vadd.f32 %v780, %v828
  %v830 = vpop.f32.mrb[0].mxu0
  %831 = vdwg.mxu0
  %832 = vmatprep.subr.bf16.mxu0 0
  %833 = vmatpush1.bf16.msra.mxu0 %v654
  %834 = vmatprep.subr.bf16.mxu0 0
  %835 = vmatpush1.bf16.msra.mxu0 %v655
  %836 = vmatprep.subr.bf16.mxu0 0
  %837 = vmatpush1.bf16.msra.mxu0 %v656
  %838 = vmatprep.subr.bf16.mxu0 0
  %839 = vmatpush1.bf16.msra.mxu0 %v657
  %840 = vmatprep.subr.bf16.mxu0 0
  %841 = vmatpush1.bf16.msra.mxu0 %v658
  %842 = vmatprep.subr.bf16.mxu0 0
  %843 = vmatpush1.bf16.msra.mxu0 %v659
  %844 = vmatprep.subr.bf16.mxu0 0
  %845 = vmatpush1.bf16.msra.mxu0 %v660
  %846 = vmatprep.subr.bf16.mxu0 0
  %847 = vmatpush1.bf16.msra.mxu0 %v661
  %848 = vmatprep.subr.bf16.mxu0 0
  %849 = vmatpush1.bf16.msra.mxu0 %v662
  %850 = vmatprep.subr.bf16.mxu0 0
  %851 = vmatpush1.bf16.msra.mxu0 %v663
  %852 = vmatprep.subr.bf16.mxu0 0
  %853 = vmatpush1.bf16.msra.mxu0 %v664
  %854 = vmatprep.subr.bf16.mxu0 0
  %855 = vmatpush1.bf16.msra.mxu0 %v665
  %856 = vmatprep.subr.bf16.mxu0 0
  %857 = vmatpush1.bf16.msra.mxu0 %v666
  %858 = vmatprep.subr.bf16.mxu0 0
  %859 = vmatpush1.bf16.msra.mxu0 %v667
  %860 = vmatprep.subr.bf16.mxu0 0
  %861 = vmatpush1.bf16.msra.mxu0 %v668
  %862 = vmatprep.subr.bf16.mxu0 0
  %863 = vmatpush1.bf16.msra.mxu0 %v669
  %864 = vmatprep.mubr.bf16.mxu0 %v383
  %865 = vmatmul.mubr.bf16.gmra.mrb[0].mxu0 %v373
  %v866 = vpop.f32.mrb[0].mxu0
  %v867 = vadd.f32 %v818, %v866
  %v868 = vpop.f32.mrb[0].mxu0
  %v869 = vpop.f32.mrb[0].mxu0
  %v870 = vadd.f32 %v821, %v869
  %v871 = vpop.f32.mrb[0].mxu0
  %872 = vmatprep.mubr.bf16.mxu0 %v382
  %873 = vmatmul.mubr.bf16.gmra.mrb[0].mxu0 %v372
  %v874 = vpop.f32.mrb[0].mxu0
  %v875 = vadd.f32 %v826, %v874
  %v876 = vpop.f32.mrb[0].mxu0
  %v877 = vpop.f32.mrb[0].mxu0
  %v878 = vadd.f32 %v829, %v877
  %v879 = vpop.f32.mrb[0].mxu0
  %880 = vdwg.mxu0
  %881 = vmatprep.subr.bf16.mxu0 0
  %882 = vmatpush1.bf16.msra.mxu0 %v670
  %883 = vmatprep.subr.bf16.mxu0 0
  %884 = vmatpush1.bf16.msra.mxu0 %v671
  %885 = vmatprep.subr.bf16.mxu0 0
  %886 = vmatpush1.bf16.msra.mxu0 %v672
  %887 = vmatprep.subr.bf16.mxu0 0
  %888 = vmatpush1.bf16.msra.mxu0 %v673
  %889 = vmatprep.subr.bf16.mxu0 0
  %890 = vmatpush1.bf16.msra.mxu0 %v674
  %891 = vmatprep.subr.bf16.mxu0 0
  %892 = vmatpush1.bf16.msra.mxu0 %v675
  %893 = vmatprep.subr.bf16.mxu0 0
  %894 = vmatpush1.bf16.msra.mxu0 %v676
  %895 = vmatprep.subr.bf16.mxu0 0
  %896 = vmatpush1.bf16.msra.mxu0 %v677
  %897 = vmatprep.subr.bf16.mxu0 0
  %898 = vmatpush1.bf16.msra.mxu0 0
  %899 = vmatprep.subr.bf16.mxu0 0
  %900 = vmatpush1.bf16.msra.mxu0 0
  %901 = vmatprep.subr.bf16.mxu0 0
  %902 = vmatpush1.bf16.msra.mxu0 0
  %903 = vmatprep.subr.bf16.mxu0 0
  %904 = vmatpush1.bf16.msra.mxu0 0
  %905 = vmatprep.subr.bf16.mxu0 0
  %906 = vmatpush1.bf16.msra.mxu0 0
  %907 = vmatprep.subr.bf16.mxu0 0
  %908 = vmatpush1.bf16.msra.mxu0 0
  %909 = vmatprep.subr.bf16.mxu0 0
  %910 = vmatpush1.bf16.msra.mxu0 0
  %911 = vmatprep.subr.bf16.mxu0 0
  %912 = vmatpush1.bf16.msra.mxu0 0
  %913 = vmatprep.mubr.bf16.mxu0 0
  %914 = vmatmul.mubr.bf16.gmra.mrb[0].mxu0 %v389
  %v915 = vpop.f32.mrb[0].mxu0
  %v916 = vadd.f32 %v867, %v915
  %v917 = vpop.f32.mrb[0].mxu0
  %v918 = vpop.f32.mrb[0].mxu0
  %v919 = vadd.f32 %v870, %v918
  %v920 = vpop.f32.mrb[0].mxu0
  %921 = vmatprep.mubr.bf16.mxu0 0
  %922 = vmatmul.mubr.bf16.gmra.mrb[0].mxu0 %v388
  %v923 = vpop.f32.mrb[0].mxu0
  %v924 = vadd.f32 %v875, %v923
  %v925 = vpop.f32.mrb[0].mxu0
  %v926 = vpop.f32.mrb[0].mxu0
  %v927 = vadd.f32 %v878, %v926
  %v928 = vpop.f32.mrb[0].mxu0
  %929 = vdwg.mxu0
  %vm930 = vcmp.ge.f32.partialorder %v916, 0.0
  %vm931 = vcmp.ge.f32.partialorder %v919, 0.0
  %vm932 = vcmp.ge.f32.partialorder %v924, 0.0
  %vm933 = vcmp.ge.f32.partialorder %v927, 0.0
  %v935 = vlaneseq
  %v936 = vshrl.u32 %v935, 7
  %v937 = vsub.s32 0, %v936
  %v938 = vrot.slane %v156, %v937
  %939 = vset.pattern.permute.xlu0 0
  %940 = vperm.xlu0 %939, %v938
  %v941 = vpop.permute.xlu0 %940
  %v943 = vmul.f32 %v941, %v916
  %v944 = vmul.f32 %v941, %v919
  %v945 = vmul.f32 %v941, %v924
  %v946 = vmul.f32 %v941, %v927
  %v947 = vsel %vm930, %v916, %v943
  %v948 = vsel %vm931, %v919, %v944
  %v949 = vsel %vm932, %v924, %v945
  %v950 = vsel %vm933, %v927, %v946
  %v951 = vsel %vm320, 1, 0
  %v952 = vsel %vm321, 1, 0
  %v953 = vsel %vm322, 1, 0
  %v954 = vsel %vm323, 1, 0
  %vm955 = vcmp.eq.s32.totalorder %v951, 1
  %vm956 = vcmp.eq.s32.totalorder %v952, 1
  %vm957 = vcmp.eq.s32.totalorder %v953, 1
  %vm958 = vcmp.eq.s32.totalorder %v954, 1
  %v959 = vsel %vm955, %v947, 0.0
  %v960 = vsel %vm956, %v948, 0.0
  %v961 = vsel %vm957, %v949, 0.0
  %v962 = vsel %vm958, %v950, 0.0
  %v963 = vpack.c.bf16 %v960, %v959
  %v964 = vpack.c.bf16 %v962, %v961
  %vm965 = vsmask.f32 1280
  %v967 = vshrl.u32 %v963, 16
  %v969 = vrot.slane %v967, 6
  %v970 = vshll.u32 %v963, 16
  %v972 = vrot.slane %v970, 7
  %v973 = vor.u32 %v969, %v972
  %v975 = vshrl.u32 %v964, 16
  %v977 = vrot.slane %v975, 6
  %v978 = vshll.u32 %v964, 16
  %v980 = vrot.slane %v978, 7
  %v981 = vor.u32 %v977, %v980
  %v982 = vsel %vm965, %v973, %v981
  %vm985 = vcmask 1041408
  %vm986 = vmand %vm985, %vm965
  %v987 = vsel %vm986, 0, %v973
  %vm988 = vmand %vm354, %vm360
  %v989 = vsel %vm988, %v982, 0
  %v991 = vshrl.u32 %v987, 16
  %v993 = vshll.u32 %v987, 16
  %v995 = vrot.slane %v993, 1
  %v996 = vor.u32 %v991, %v995
  %v998 = vshll.u32 %v989, 16
  %v1000 = vrot.slane %v998, 1
  %v1001 = vsel %vm336, %v996, %v1000
  %v1002 = vshrl.u32 %v989, 16
  %v1004 = vor.u32 %v1002, %v1000
  %v1009 = vrot.slane %v987, 1
  %v1010 = vrot.slane %v989, 1
  %v1011 = vsel %vm354, %v1009, %v1010
  %v1014 = vrot.slane %v991, 1
  %v1015 = vrot.slane %v993, 2
  %v1016 = vor.u32 %v1014, %v1015
  %v1017 = vrot.slane %v1002, 1
  %v1018 = vrot.slane %v998, 2
  %v1019 = vor.u32 %v1017, %v1018
  %v1020 = vsel %vm360, %v1016, %v1019
  %v1023 = vrot.slane %v987, 2
  %v1024 = vrot.slane %v989, 2
  %v1025 = vsel %vm370, %v1023, %v1024
  %v1028 = vrot.slane %v991, 2
  %v1029 = vrot.slane %v993, 3
  %v1030 = vor.u32 %v1028, %v1029
  %v1031 = vrot.slane %v1002, 2
  %v1032 = vrot.slane %v998, 3
  %v1033 = vor.u32 %v1031, %v1032
  %v1034 = vsel %vm376, %v1030, %v1033
  %v1037 = vrot.slane %v987, 3
  %v1038 = vrot.slane %v989, 3
  %v1039 = vsel %vm386, %v1037, %v1038
  %v1058 = vunpack.c.l.b16 %v269
  %v1059 = vunpack.c.l.b16 %v270
  %v1060 = vunpack.c.l.b16 %v271
  %v1061 = vunpack.c.l.b16 %v272
  %v1062 = vunpack.c.l.b16 %v273
  %v1063 = vunpack.c.l.b16 %v274
  %v1064 = vunpack.c.l.b16 %v275
  %v1065 = vunpack.c.l.b16 %v276
  %v1066 = vunpack.c.l.b16 %v277
  %v1067 = vunpack.c.l.b16 %v278
  %v1068 = vunpack.c.l.b16 %v279
  %v1069 = vunpack.c.l.b16 %v280
  %v1070 = vunpack.c.l.b16 %v281
  %v1071 = vunpack.c.l.b16 %v282
  %v1072 = vunpack.c.l.b16 %v283
  %v1073 = vunpack.c.l.b16 %v284
  %v1074 = vpack.c.b16 %v1059, %v1058
  %v1075 = vpack.c.b16 %v1061, %v1060
  %v1076 = vpack.c.b16 %v1063, %v1062
  %v1077 = vpack.c.b16 %v1065, %v1064
  %v1078 = vpack.c.b16 %v1067, %v1066
  %v1079 = vpack.c.b16 %v1069, %v1068
  %v1080 = vpack.c.b16 %v1071, %v1070
  %v1081 = vpack.c.b16 %v1073, %v1072
  %1090 = vmatprep.subr.bf16.mxu0 0
  %1091 = vmatpush1.bf16.msra.mxu0 %v1074
  %1092 = vmatprep.subr.bf16.mxu0 0
  %1093 = vmatpush1.bf16.msra.mxu0 %v1075
  %1094 = vmatprep.subr.bf16.mxu0 0
  %1095 = vmatpush1.bf16.msra.mxu0 %v1076
  %1096 = vmatprep.subr.bf16.mxu0 0
  %1097 = vmatpush1.bf16.msra.mxu0 %v1077
  %1098 = vmatprep.subr.bf16.mxu0 0
  %1099 = vmatpush1.bf16.msra.mxu0 %v1078
  %1100 = vmatprep.subr.bf16.mxu0 0
  %1101 = vmatpush1.bf16.msra.mxu0 %v1079
  %1102 = vmatprep.subr.bf16.mxu0 0
  %1103 = vmatpush1.bf16.msra.mxu0 %v1080
  %1104 = vmatprep.subr.bf16.mxu0 0
  %1105 = vmatpush1.bf16.msra.mxu0 %v1081
  %1106 = vmatprep.subr.bf16.mxu0 0
  %1107 = vmatpush1.bf16.msra.mxu0 0
  %1108 = vmatprep.subr.bf16.mxu0 0
  %1109 = vmatpush1.bf16.msra.mxu0 0
  %1110 = vmatprep.subr.bf16.mxu0 0
  %1111 = vmatpush1.bf16.msra.mxu0 0
  %1112 = vmatprep.subr.bf16.mxu0 0
  %1113 = vmatpush1.bf16.msra.mxu0 0
  %1114 = vmatprep.subr.bf16.mxu0 0
  %1115 = vmatpush1.bf16.msra.mxu0 0
  %1116 = vmatprep.subr.bf16.mxu0 0
  %1117 = vmatpush1.bf16.msra.mxu0 0
  %1118 = vmatprep.subr.bf16.mxu0 0
  %1119 = vmatpush1.bf16.msra.mxu0 0
  %1120 = vmatprep.subr.bf16.mxu0 0
  %1121 = vmatpush1.bf16.msra.mxu0 0
  %1122 = vmatprep.mubr.bf16.mxu0 0
  %1123 = vmatmul.mubr.bf16.gmra.mrb[0].mxu0 %v367
  %v1124 = vpop.f32.mrb[0].mxu0
  %v1125 = vadd.f32 0.0, %v1124
  %v1126 = vpop.f32.mrb[0].mxu0
  %v1127 = vpop.f32.mrb[0].mxu0
  %v1128 = vadd.f32 0.0, %v1127
  %v1129 = vpop.f32.mrb[0].mxu0
  %1130 = vmatprep.mubr.bf16.mxu0 0
  %1131 = vmatmul.mubr.bf16.gmra.mrb[0].mxu0 %v366
  %v1132 = vpop.f32.mrb[0].mxu0
  %v1133 = vadd.f32 0.0, %v1132
  %v1134 = vpop.f32.mrb[0].mxu0
  %v1135 = vpop.f32.mrb[0].mxu0
  %v1136 = vadd.f32 0.0, %v1135
  %v1137 = vpop.f32.mrb[0].mxu0
  %1138 = vdwg.mxu0
  %v1251 = vunpack.c.l.b16 %v157
  %v1252 = vunpack.c.l.b16 %v158
  %v1253 = vunpack.c.l.b16 %v159
  %v1254 = vunpack.c.l.b16 %v160
  %v1255 = vunpack.c.l.b16 %v161
  %v1256 = vunpack.c.l.b16 %v162
  %v1257 = vunpack.c.l.b16 %v163
  %v1258 = vunpack.c.l.b16 %v164
  %v1259 = vunpack.c.l.b16 %v165
  %v1260 = vunpack.c.l.b16 %v166
  %v1261 = vunpack.c.l.b16 %v167
  %v1262 = vunpack.c.l.b16 %v168
  %v1263 = vunpack.c.l.b16 %v169
  %v1264 = vunpack.c.l.b16 %v170
  %v1265 = vunpack.c.l.b16 %v171
  %v1266 = vunpack.c.l.b16 %v172
  %v1267 = vunpack.c.l.b16 %v173
  %v1268 = vunpack.c.l.b16 %v174
  %v1269 = vunpack.c.l.b16 %v175
  %v1270 = vunpack.c.l.b16 %v176
  %v1271 = vunpack.c.l.b16 %v177
  %v1272 = vunpack.c.l.b16 %v178
  %v1273 = vunpack.c.l.b16 %v179
  %v1274 = vunpack.c.l.b16 %v180
  %v1275 = vunpack.c.l.b16 %v181
  %v1276 = vunpack.c.l.b16 %v182
  %v1277 = vunpack.c.l.b16 %v183
  %v1278 = vunpack.c.l.b16 %v184
  %v1279 = vunpack.c.l.b16 %v185
  %v1280 = vunpack.c.l.b16 %v186
  %v1281 = vunpack.c.l.b16 %v187
  %v1282 = vunpack.c.l.b16 %v188
  %v1283 = vunpack.c.l.b16 %v189
  %v1284 = vunpack.c.l.b16 %v190
  %v1285 = vunpack.c.l.b16 %v191
  %v1286 = vunpack.c.l.b16 %v192
  %v1287 = vunpack.c.l.b16 %v193
  %v1288 = vunpack.c.l.b16 %v194
  %v1289 = vunpack.c.l.b16 %v195
  %v1290 = vunpack.c.l.b16 %v196
  %v1291 = vunpack.c.l.b16 %v197
  %v1292 = vunpack.c.l.b16 %v198
  %v1293 = vunpack.c.l.b16 %v199
  %v1294 = vunpack.c.l.b16 %v200
  %v1295 = vunpack.c.l.b16 %v201
  %v1296 = vunpack.c.l.b16 %v202
  %v1297 = vunpack.c.l.b16 %v203
  %v1298 = vunpack.c.l.b16 %v204
  %v1299 = vunpack.c.l.b16 %v205
  %v1300 = vunpack.c.l.b16 %v206
  %v1301 = vunpack.c.l.b16 %v207
  %v1302 = vunpack.c.l.b16 %v208
  %v1303 = vunpack.c.l.b16 %v209
  %v1304 = vunpack.c.l.b16 %v210
  %v1305 = vunpack.c.l.b16 %v211
  %v1306 = vunpack.c.l.b16 %v212
  %v1307 = vunpack.c.l.b16 %v213
  %v1308 = vunpack.c.l.b16 %v214
  %v1309 = vunpack.c.l.b16 %v215
  %v1310 = vunpack.c.l.b16 %v216
  %v1311 = vunpack.c.l.b16 %v217
  %v1312 = vunpack.c.l.b16 %v218
  %v1313 = vunpack.c.l.b16 %v219
  %v1314 = vunpack.c.l.b16 %v220
  %v1315 = vunpack.c.l.b16 %v221
  %v1316 = vunpack.c.l.b16 %v222
  %v1317 = vunpack.c.l.b16 %v223
  %v1318 = vunpack.c.l.b16 %v224
  %v1319 = vunpack.c.l.b16 %v225
  %v1320 = vunpack.c.l.b16 %v226
  %v1321 = vunpack.c.l.b16 %v227
  %v1322 = vunpack.c.l.b16 %v228
  %v1323 = vunpack.c.l.b16 %v229
  %v1324 = vunpack.c.l.b16 %v230
  %v1325 = vunpack.c.l.b16 %v231
  %v1326 = vunpack.c.l.b16 %v232
  %v1327 = vunpack.c.l.b16 %v233
  %v1328 = vunpack.c.l.b16 %v234
  %v1329 = vunpack.c.l.b16 %v235
  %v1330 = vunpack.c.l.b16 %v236
  %v1331 = vunpack.c.l.b16 %v237
  %v1332 = vunpack.c.l.b16 %v238
  %v1333 = vunpack.c.l.b16 %v239
  %v1334 = vunpack.c.l.b16 %v240
  %v1335 = vunpack.c.l.b16 %v241
  %v1336 = vunpack.c.l.b16 %v242
  %v1337 = vunpack.c.l.b16 %v243
  %v1338 = vunpack.c.l.b16 %v244
  %v1339 = vunpack.c.l.b16 %v245
  %v1340 = vunpack.c.l.b16 %v246
  %v1341 = vunpack.c.l.b16 %v247
  %v1342 = vunpack.c.l.b16 %v248
  %v1343 = vunpack.c.l.b16 %v249
  %v1344 = vunpack.c.l.b16 %v250
  %v1345 = vunpack.c.l.b16 %v251
  %v1346 = vunpack.c.l.b16 %v252
  %v1347 = vunpack.c.l.b16 %v253
  %v1348 = vunpack.c.l.b16 %v254
  %v1349 = vunpack.c.l.b16 %v255
  %v1350 = vunpack.c.l.b16 %v256
  %v1351 = vunpack.c.l.b16 %v257
  %v1352 = vunpack.c.l.b16 %v258
  %v1353 = vunpack.c.l.b16 %v259
  %v1354 = vunpack.c.l.b16 %v260
  %v1355 = vunpack.c.l.b16 %v261
  %v1356 = vunpack.c.l.b16 %v262
  %v1357 = vunpack.c.l.b16 %v263
  %v1358 = vunpack.c.l.b16 %v264
  %v1359 = vunpack.c.l.b16 %v265
  %v1360 = vunpack.c.l.b16 %v266
  %v1361 = vunpack.c.l.b16 %v267
  %v1362 = vunpack.c.l.b16 %v268
  %v1363 = vpack.c.b16 %v1252, %v1251
  %v1364 = vpack.c.b16 %v1254, %v1253
  %v1365 = vpack.c.b16 %v1256, %v1255
  %v1366 = vpack.c.b16 %v1258, %v1257
  %v1367 = vpack.c.b16 %v1260, %v1259
  %v1368 = vpack.c.b16 %v1262, %v1261
  %v1369 = vpack.c.b16 %v1264, %v1263
  %v1370 = vpack.c.b16 %v1266, %v1265
  %v1371 = vpack.c.b16 %v1268, %v1267
  %v1372 = vpack.c.b16 %v1270, %v1269
  %v1373 = vpack.c.b16 %v1272, %v1271
  %v1374 = vpack.c.b16 %v1274, %v1273
  %v1375 = vpack.c.b16 %v1276, %v1275
  %v1376 = vpack.c.b16 %v1278, %v1277
  %v1377 = vpack.c.b16 %v1280, %v1279
  %v1378 = vpack.c.b16 %v1282, %v1281
  %v1379 = vpack.c.b16 %v1284, %v1283
  %v1380 = vpack.c.b16 %v1286, %v1285
  %v1381 = vpack.c.b16 %v1288, %v1287
  %v1382 = vpack.c.b16 %v1290, %v1289
  %v1383 = vpack.c.b16 %v1292, %v1291
  %v1384 = vpack.c.b16 %v1294, %v1293
  %v1385 = vpack.c.b16 %v1296, %v1295
  %v1386 = vpack.c.b16 %v1298, %v1297
  %v1387 = vpack.c.b16 %v1300, %v1299
  %v1388 = vpack.c.b16 %v1302, %v1301
  %v1389 = vpack.c.b16 %v1304, %v1303
  %v1390 = vpack.c.b16 %v1306, %v1305
  %v1391 = vpack.c.b16 %v1308, %v1307
  %v1392 = vpack.c.b16 %v1310, %v1309
  %v1393 = vpack.c.b16 %v1312, %v1311
  %v1394 = vpack.c.b16 %v1314, %v1313
  %v1395 = vpack.c.b16 %v1316, %v1315
  %v1396 = vpack.c.b16 %v1318, %v1317
  %v1397 = vpack.c.b16 %v1320, %v1319
  %v1398 = vpack.c.b16 %v1322, %v1321
  %v1399 = vpack.c.b16 %v1324, %v1323
  %v1400 = vpack.c.b16 %v1326, %v1325
  %v1401 = vpack.c.b16 %v1328, %v1327
  %v1402 = vpack.c.b16 %v1330, %v1329
  %v1403 = vpack.c.b16 %v1332, %v1331
  %v1404 = vpack.c.b16 %v1334, %v1333
  %v1405 = vpack.c.b16 %v1336, %v1335
  %v1406 = vpack.c.b16 %v1338, %v1337
  %v1407 = vpack.c.b16 %v1340, %v1339
  %v1408 = vpack.c.b16 %v1342, %v1341
  %v1409 = vpack.c.b16 %v1344, %v1343
  %v1410 = vpack.c.b16 %v1346, %v1345
  %v1411 = vpack.c.b16 %v1348, %v1347
  %v1412 = vpack.c.b16 %v1350, %v1349
  %v1413 = vpack.c.b16 %v1352, %v1351
  %v1414 = vpack.c.b16 %v1354, %v1353
  %v1415 = vpack.c.b16 %v1356, %v1355
  %v1416 = vpack.c.b16 %v1358, %v1357
  %v1417 = vpack.c.b16 %v1360, %v1359
  %v1418 = vpack.c.b16 %v1362, %v1361
  %1475 = vmatprep.subr.bf16.mxu0 0
  %1476 = vmatpush1.bf16.msra.mxu0 %v1363
  %1477 = vmatprep.subr.bf16.mxu0 0
  %1478 = vmatpush1.bf16.msra.mxu0 %v1364
  %1479 = vmatprep.subr.bf16.mxu0 0
  %1480 = vmatpush1.bf16.msra.mxu0 %v1365
  %1481 = vmatprep.subr.bf16.mxu0 0
  %1482 = vmatpush1.bf16.msra.mxu0 %v1366
  %1483 = vmatprep.subr.bf16.mxu0 0
  %1484 = vmatpush1.bf16.msra.mxu0 %v1367
  %1485 = vmatprep.subr.bf16.mxu0 0
  %1486 = vmatpush1.bf16.msra.mxu0 %v1368
  %1487 = vmatprep.subr.bf16.mxu0 0
  %1488 = vmatpush1.bf16.msra.mxu0 %v1369
  %1489 = vmatprep.subr.bf16.mxu0 0
  %1490 = vmatpush1.bf16.msra.mxu0 %v1370
  %1491 = vmatprep.subr.bf16.mxu0 0
  %1492 = vmatpush1.bf16.msra.mxu0 %v1371
  %1493 = vmatprep.subr.bf16.mxu0 0
  %1494 = vmatpush1.bf16.msra.mxu0 %v1372
  %1495 = vmatprep.subr.bf16.mxu0 0
  %1496 = vmatpush1.bf16.msra.mxu0 %v1373
  %1497 = vmatprep.subr.bf16.mxu0 0
  %1498 = vmatpush1.bf16.msra.mxu0 %v1374
  %1499 = vmatprep.subr.bf16.mxu0 0
  %1500 = vmatpush1.bf16.msra.mxu0 %v1375
  %1501 = vmatprep.subr.bf16.mxu0 0
  %1502 = vmatpush1.bf16.msra.mxu0 %v1376
  %1503 = vmatprep.subr.bf16.mxu0 0
  %1504 = vmatpush1.bf16.msra.mxu0 %v1377
  %1505 = vmatprep.subr.bf16.mxu0 0
  %1506 = vmatpush1.bf16.msra.mxu0 %v1378
  %1507 = vmatprep.mubr.bf16.mxu0 %v1001
  %1508 = vmatmul.mubr.bf16.gmra.mrb[0].mxu0 %v987
  %v1509 = vpop.f32.mrb[0].mxu0
  %v1510 = vadd.f32 %v1125, %v1509
  %v1511 = vpop.f32.mrb[0].mxu0
  %v1512 = vpop.f32.mrb[0].mxu0
  %v1513 = vadd.f32 %v1128, %v1512
  %v1514 = vpop.f32.mrb[0].mxu0
  %1515 = vmatprep.mubr.bf16.mxu0 %v1004
  %1516 = vmatmul.mubr.bf16.gmra.mrb[0].mxu0 %v989
  %v1517 = vpop.f32.mrb[0].mxu0
  %v1518 = vadd.f32 %v1133, %v1517
  %v1519 = vpop.f32.mrb[0].mxu0
  %v1520 = vpop.f32.mrb[0].mxu0
  %v1521 = vadd.f32 %v1136, %v1520
  %v1522 = vpop.f32.mrb[0].mxu0
  %1523 = vdwg.mxu0
  %1524 = vmatprep.subr.bf16.mxu0 0
  %1525 = vmatpush1.bf16.msra.mxu0 %v1379
  %1526 = vmatprep.subr.bf16.mxu0 0
  %1527 = vmatpush1.bf16.msra.mxu0 %v1380
  %1528 = vmatprep.subr.bf16.mxu0 0
  %1529 = vmatpush1.bf16.msra.mxu0 %v1381
  %1530 = vmatprep.subr.bf16.mxu0 0
  %1531 = vmatpush1.bf16.msra.mxu0 %v1382
  %1532 = vmatprep.subr.bf16.mxu0 0
  %1533 = vmatpush1.bf16.msra.mxu0 %v1383
  %1534 = vmatprep.subr.bf16.mxu0 0
  %1535 = vmatpush1.bf16.msra.mxu0 %v1384
  %1536 = vmatprep.subr.bf16.mxu0 0
  %1537 = vmatpush1.bf16.msra.mxu0 %v1385
  %1538 = vmatprep.subr.bf16.mxu0 0
  %1539 = vmatpush1.bf16.msra.mxu0 %v1386
  %1540 = vmatprep.subr.bf16.mxu0 0
  %1541 = vmatpush1.bf16.msra.mxu0 %v1387
  %1542 = vmatprep.subr.bf16.mxu0 0
  %1543 = vmatpush1.bf16.msra.mxu0 %v1388
  %1544 = vmatprep.subr.bf16.mxu0 0
  %1545 = vmatpush1.bf16.msra.mxu0 %v1389
  %1546 = vmatprep.subr.bf16.mxu0 0
  %1547 = vmatpush1.bf16.msra.mxu0 %v1390
  %1548 = vmatprep.subr.bf16.mxu0 0
  %1549 = vmatpush1.bf16.msra.mxu0 %v1391
  %1550 = vmatprep.subr.bf16.mxu0 0
  %1551 = vmatpush1.bf16.msra.mxu0 %v1392
  %1552 = vmatprep.subr.bf16.mxu0 0
  %1553 = vmatpush1.bf16.msra.mxu0 %v1393
  %1554 = vmatprep.subr.bf16.mxu0 0
  %1555 = vmatpush1.bf16.msra.mxu0 %v1394
  %1556 = vmatprep.mubr.bf16.mxu0 %v1020
  %1557 = vmatmul.mubr.bf16.gmra.mrb[0].mxu0 %v1011
  %v1558 = vpop.f32.mrb[0].mxu0
  %v1559 = vadd.f32 %v1510, %v1558
  %v1560 = vpop.f32.mrb[0].mxu0
  %v1561 = vpop.f32.mrb[0].mxu0
  %v1562 = vadd.f32 %v1513, %v1561
  %v1563 = vpop.f32.mrb[0].mxu0
  %1564 = vmatprep.mubr.bf16.mxu0 %v1019
  %1565 = vmatmul.mubr.bf16.gmra.mrb[0].mxu0 %v1010
  %v1566 = vpop.f32.mrb[0].mxu0
  %v1567 = vadd.f32 %v1518, %v1566
  %v1568 = vpop.f32.mrb[0].mxu0
  %v1569 = vpop.f32.mrb[0].mxu0
  %v1570 = vadd.f32 %v1521, %v1569
  %v1571 = vpop.f32.mrb[0].mxu0
  %1572 = vdwg.mxu0
  %1573 = vmatprep.subr.bf16.mxu0 0
  %1574 = vmatpush1.bf16.msra.mxu0 %v1395
  %1575 = vmatprep.subr.bf16.mxu0 0
  %1576 = vmatpush1.bf16.msra.mxu0 %v1396
  %1577 = vmatprep.subr.bf16.mxu0 0
  %1578 = vmatpush1.bf16.msra.mxu0 %v1397
  %1579 = vmatprep.subr.bf16.mxu0 0
  %1580 = vmatpush1.bf16.msra.mxu0 %v1398
  %1581 = vmatprep.subr.bf16.mxu0 0
  %1582 = vmatpush1.bf16.msra.mxu0 %v1399
  %1583 = vmatprep.subr.bf16.mxu0 0
  %1584 = vmatpush1.bf16.msra.mxu0 %v1400
  %1585 = vmatprep.subr.bf16.mxu0 0
  %1586 = vmatpush1.bf16.msra.mxu0 %v1401
  %1587 = vmatprep.subr.bf16.mxu0 0
  %1588 = vmatpush1.bf16.msra.mxu0 %v1402
  %1589 = vmatprep.subr.bf16.mxu0 0
  %1590 = vmatpush1.bf16.msra.mxu0 %v1403
  %1591 = vmatprep.subr.bf16.mxu0 0
  %1592 = vmatpush1.bf16.msra.mxu0 %v1404
  %1593 = vmatprep.subr.bf16.mxu0 0
  %1594 = vmatpush1.bf16.msra.mxu0 %v1405
  %1595 = vmatprep.subr.bf16.mxu0 0
  %1596 = vmatpush1.bf16.msra.mxu0 %v1406
  %1597 = vmatprep.subr.bf16.mxu0 0
  %1598 = vmatpush1.bf16.msra.mxu0 %v1407
  %1599 = vmatprep.subr.bf16.mxu0 0
  %1600 = vmatpush1.bf16.msra.mxu0 %v1408
  %1601 = vmatprep.subr.bf16.mxu0 0
  %1602 = vmatpush1.bf16.msra.mxu0 %v1409
  %1603 = vmatprep.subr.bf16.mxu0 0
  %1604 = vmatpush1.bf16.msra.mxu0 %v1410
  %1605 = vmatprep.mubr.bf16.mxu0 %v1034
  %1606 = vmatmul.mubr.bf16.gmra.mrb[0].mxu0 %v1025
  %v1607 = vpop.f32.mrb[0].mxu0
  %v1608 = vadd.f32 %v1559, %v1607
  %v1609 = vpop.f32.mrb[0].mxu0
  %v1610 = vpop.f32.mrb[0].mxu0
  %v1611 = vadd.f32 %v1562, %v1610
  %v1612 = vpop.f32.mrb[0].mxu0
  %1613 = vmatprep.mubr.bf16.mxu0 %v1033
  %1614 = vmatmul.mubr.bf16.gmra.mrb[0].mxu0 %v1024
  %v1615 = vpop.f32.mrb[0].mxu0
  %v1616 = vadd.f32 %v1567, %v1615
  %v1617 = vpop.f32.mrb[0].mxu0
  %v1618 = vpop.f32.mrb[0].mxu0
  %v1619 = vadd.f32 %v1570, %v1618
  %v1620 = vpop.f32.mrb[0].mxu0
  %1621 = vdwg.mxu0
  %1622 = vmatprep.subr.bf16.mxu0 0
  %1623 = vmatpush1.bf16.msra.mxu0 %v1411
  %1624 = vmatprep.subr.bf16.mxu0 0
  %1625 = vmatpush1.bf16.msra.mxu0 %v1412
  %1626 = vmatprep.subr.bf16.mxu0 0
  %1627 = vmatpush1.bf16.msra.mxu0 %v1413
  %1628 = vmatprep.subr.bf16.mxu0 0
  %1629 = vmatpush1.bf16.msra.mxu0 %v1414
  %1630 = vmatprep.subr.bf16.mxu0 0
  %1631 = vmatpush1.bf16.msra.mxu0 %v1415
  %1632 = vmatprep.subr.bf16.mxu0 0
  %1633 = vmatpush1.bf16.msra.mxu0 %v1416
  %1634 = vmatprep.subr.bf16.mxu0 0
  %1635 = vmatpush1.bf16.msra.mxu0 %v1417
  %1636 = vmatprep.subr.bf16.mxu0 0
  %1637 = vmatpush1.bf16.msra.mxu0 %v1418
  %1638 = vmatprep.subr.bf16.mxu0 0
  %1639 = vmatpush1.bf16.msra.mxu0 0
  %1640 = vmatprep.subr.bf16.mxu0 0
  %1641 = vmatpush1.bf16.msra.mxu0 0
  %1642 = vmatprep.subr.bf16.mxu0 0
  %1643 = vmatpush1.bf16.msra.mxu0 0
  %1644 = vmatprep.subr.bf16.mxu0 0
  %1645 = vmatpush1.bf16.msra.mxu0 0
  %1646 = vmatprep.subr.bf16.mxu0 0
  %1647 = vmatpush1.bf16.msra.mxu0 0
  %1648 = vmatprep.subr.bf16.mxu0 0
  %1649 = vmatpush1.bf16.msra.mxu0 0
  %1650 = vmatprep.subr.bf16.mxu0 0
  %1651 = vmatpush1.bf16.msra.mxu0 0
  %1652 = vmatprep.subr.bf16.mxu0 0
  %1653 = vmatpush1.bf16.msra.mxu0 0
  %1654 = vmatprep.mubr.bf16.mxu0 0
  %1655 = vmatmul.mubr.bf16.gmra.mrb[0].mxu0 %v1039
  %v1656 = vpop.f32.mrb[0].mxu0
  %v1657 = vadd.f32 %v1608, %v1656
  %v1658 = vpop.f32.mrb[0].mxu0
  %v1659 = vpop.f32.mrb[0].mxu0
  %v1660 = vadd.f32 %v1611, %v1659
  %v1661 = vpop.f32.mrb[0].mxu0
  %1662 = vmatprep.mubr.bf16.mxu0 0
  %1663 = vmatmul.mubr.bf16.gmra.mrb[0].mxu0 %v1038
  %v1664 = vpop.f32.mrb[0].mxu0
  %v1665 = vadd.f32 %v1616, %v1664
  %v1666 = vpop.f32.mrb[0].mxu0
  %v1667 = vpop.f32.mrb[0].mxu0
  %v1668 = vadd.f32 %v1619, %v1667
  %v1669 = vpop.f32.mrb[0].mxu0
  %1670 = vdwg.mxu0
  %v1672 = vlaneseq
  %v1673 = vshrl.u32 %v1672, 7
  %v1674 = vsub.s32 0, %v1673
  %v1675 = vrot.slane %v285, %v1674
  %v1677 = vadd.f32 %v1657, %v1675
  %v1678 = vadd.f32 %v1660, %v1675
  %v1679 = vadd.f32 %v1665, %v1675
  %v1680 = vadd.f32 %v1668, %v1675
  %vm1681 = vcmp.ge.f32.partialorder %v1677, 0.0
  %vm1682 = vcmp.ge.f32.partialorder %v1678, 0.0
  %vm1683 = vcmp.ge.f32.partialorder %v1679, 0.0
  %vm1684 = vcmp.ge.f32.partialorder %v1680, 0.0
  %v1686 = vlaneseq
  %v1687 = vshrl.u32 %v1686, 7
  %v1688 = vsub.s32 0, %v1687
  %v1689 = vrot.slane %v286, %v1688
  %1690 = vset.pattern.permute.xlu0 0
  %1691 = vperm.xlu0 %1690, %v1689
  %v1692 = vpop.permute.xlu0 %1691
  %v1694 = vmul.f32 %v1692, %v1677
  %v1695 = vmul.f32 %v1692, %v1678
  %v1696 = vmul.f32 %v1692, %v1679
  %v1697 = vmul.f32 %v1692, %v1680
  %v1698 = vsel %vm1681, %v1677, %v1694
  %v1699 = vsel %vm1682, %v1678, %v1695
  %v1700 = vsel %vm1683, %v1679, %v1696
  %v1701 = vsel %vm1684, %v1680, %v1697
  %v1702 = vpack.c.bf16 %v1699, %v1698
  %v1703 = vpack.c.bf16 %v1701, %v1700
  %v1705 = vshrl.u32 %v1702, 16
  %v1707 = vrot.slane %v1705, 6
  %v1708 = vshll.u32 %v1702, 16
  %v1710 = vrot.slane %v1708, 7
  %v1711 = vor.u32 %v1707, %v1710
  %v1713 = vshrl.u32 %v1703, 16
  %v1715 = vrot.slane %v1713, 6
  %v1716 = vshll.u32 %v1703, 16
  %v1718 = vrot.slane %v1716, 7
  %v1719 = vor.u32 %v1715, %v1718
  %v1720 = vsel %vm965, %v1711, %v1719
  %v1723 = vsel %vm986, 0, %v1711
  %v1724 = vsel %vm988, %v1720, 0
  %v1727 = vunpack.c.l.b16 %v37
  %v1728 = vunpack.c.l.b16 %v38
  %v1729 = vpack.c.b16 %v1728, %v1727
  %vm1730 = vcmask 130048
  %v1732 = vsel %vm1730, %v1729, 0
  %1734 = vmatprep.subr.bf16.mxu0 0
  %1735 = vmatpush1.bf16.msra.mxu0 %v1723
  %1736 = vmatprep.subr.bf16.mxu0 0
  %1737 = vmatpush1.bf16.msra.mxu0 0
  %1738 = vmatprep.subr.bf16.mxu0 0
  %1739 = vmatpush1.bf16.msra.mxu0 0
  %1740 = vmatprep.subr.bf16.mxu0 0
  %1741 = vmatpush1.bf16.msra.mxu0 0
  %1742 = vmatprep.subr.bf16.mxu0 0
  %1743 = vmatpush1.bf16.msra.mxu0 0
  %1744 = vmatprep.subr.bf16.mxu0 0
  %1745 = vmatpush1.bf16.msra.mxu0 0
  %1746 = vmatprep.subr.bf16.mxu0 0
  %1747 = vmatpush1.bf16.msra.mxu0 0
  %1748 = vmatprep.subr.bf16.mxu0 0
  %1749 = vmatpush1.bf16.msra.mxu0 0
  %1750 = vmatprep.subr.bf16.mxu0 0
  %1751 = vmatpush1.bf16.msra.mxu0 0
  %1752 = vmatprep.subr.bf16.mxu0 0
  %1753 = vmatpush1.bf16.msra.mxu0 0
  %1754 = vmatprep.subr.bf16.mxu0 0
  %1755 = vmatpush1.bf16.msra.mxu0 0
  %1756 = vmatprep.subr.bf16.mxu0 0
  %1757 = vmatpush1.bf16.msra.mxu0 0
  %1758 = vmatprep.subr.bf16.mxu0 0
  %1759 = vmatpush1.bf16.msra.mxu0 0
  %1760 = vmatprep.subr.bf16.mxu0 0
  %1761 = vmatpush1.bf16.msra.mxu0 0
  %1762 = vmatprep.subr.bf16.mxu0 0
  %1763 = vmatpush1.bf16.msra.mxu0 0
  %1764 = vmatprep.subr.bf16.mxu0 0
  %1765 = vmatpush1.bf16.msra.mxu0 0
  %1766 = vmatprep.mubr.bf16.mxu0 0
  %1767 = vmatmul.mubr.bf16.gmra.mrb[0].mxu0 %v1732
  %v1768 = vpop.f32.mrb[0].mxu0
  %v1769 = vadd.f32 0.0, %v1768
  %v1770 = vpop.f32.mrb[0].mxu0
  %v1771 = vpop.f32.mrb[0].mxu0
  %v1772 = vadd.f32 0.0, %v1771
  %v1773 = vpop.f32.mrb[0].mxu0
  %1774 = vdwg.mxu0
  %1775 = vmatprep.subr.bf16.mxu0 0
  %1776 = vmatpush1.bf16.msra.mxu0 %v1724
  %1777 = vmatprep.subr.bf16.mxu0 0
  %1778 = vmatpush1.bf16.msra.mxu0 0
  %1779 = vmatprep.subr.bf16.mxu0 0
  %1780 = vmatpush1.bf16.msra.mxu0 0
  %1781 = vmatprep.subr.bf16.mxu0 0
  %1782 = vmatpush1.bf16.msra.mxu0 0
  %1783 = vmatprep.subr.bf16.mxu0 0
  %1784 = vmatpush1.bf16.msra.mxu0 0
  %1785 = vmatprep.subr.bf16.mxu0 0
  %1786 = vmatpush1.bf16.msra.mxu0 0
  %1787 = vmatprep.subr.bf16.mxu0 0
  %1788 = vmatpush1.bf16.msra.mxu0 0
  %1789 = vmatprep.subr.bf16.mxu0 0
  %1790 = vmatpush1.bf16.msra.mxu0 0
  %1791 = vmatprep.subr.bf16.mxu0 0
  %1792 = vmatpush1.bf16.msra.mxu0 0
  %1793 = vmatprep.subr.bf16.mxu0 0
  %1794 = vmatpush1.bf16.msra.mxu0 0
  %1795 = vmatprep.subr.bf16.mxu0 0
  %1796 = vmatpush1.bf16.msra.mxu0 0
  %1797 = vmatprep.subr.bf16.mxu0 0
  %1798 = vmatpush1.bf16.msra.mxu0 0
  %1799 = vmatprep.subr.bf16.mxu0 0
  %1800 = vmatpush1.bf16.msra.mxu0 0
  %1801 = vmatprep.subr.bf16.mxu0 0
  %1802 = vmatpush1.bf16.msra.mxu0 0
  %1803 = vmatprep.subr.bf16.mxu0 0
  %1804 = vmatpush1.bf16.msra.mxu0 0
  %1805 = vmatprep.subr.bf16.mxu0 0
  %1806 = vmatpush1.bf16.msra.mxu0 0
  %1807 = vmatprep.mubr.bf16.mxu0 0
  %1808 = vmatmul.mubr.bf16.gmra.mrb[0].mxu0 %v1732
  %v1809 = vpop.f32.mrb[0].mxu0
  %v1810 = vadd.f32 0.0, %v1809
  %v1811 = vpop.f32.mrb[0].mxu0
  %v1812 = vpop.f32.mrb[0].mxu0
  %v1813 = vadd.f32 0.0, %v1812
  %v1814 = vpop.f32.mrb[0].mxu0
  %1815 = vdwg.mxu0
  %v1816 = vpack.c.bf16 %v1772, %v1769
  %v1817 = vpack.c.bf16 %v1813, %v1810
  %v1820 = vunpack.c.l.b16 %v1816
  %v1821 = vunpack.c.h.b16 %v1816
  %v1822 = vunpack.c.l.b16 %v1817
  %v1823 = vunpack.c.h.b16 %v1817
  %v1824 = vpack.c.b16 %v1820, %v1820
  %v1825 = vpack.c.b16 %v1821, %v1821
  %v1826 = vpack.c.b16 %v1822, %v1822
  %v1827 = vpack.c.b16 %v1823, %v1823
  %1832 = vst [vmem:[%s9] sm:$0xf] %v1824
  %1833 = vst [vmem:[%s9 + $0x4] sm:$0xf] %v1825
  %1834 = vst [vmem:[%s9 + $0x8] sm:$0xf] %v1826
  %1835 = vst [vmem:[%s9 + $0xc] sm:$0xf] %v1827
  // Predicated region
  $region38: #{_lambda_.11} parent=0 // pred_check
    _
  $region39: #{_lambda_.11} parent=0 // pred_check_branch
    %1837 = sbr.rel (0) target = $region41
  $region40: #{_lambda_.11} parent=0 // pred_region
    _
  $region41: #{_lambda_.11} parent=0 // pred_fallthru
    _
  // Predicated region
  $region42: #{_lambda_.11} parent=0 // pred_check
    _
  $region43: #{_lambda_.11} parent=0 // pred_check_branch
    %1839 = sbr.rel (0) target = $region45
  $region44: #{_lambda_.11} parent=0 // pred_region
    _
  $region45: #{_lambda_.11} parent=0 // pred_fallthru
    _

// kernel: _lambda_.10
$region0: #{_lambda_.10}
  #allocation0 [shape = 'u32[]', space=smem, size = 0x4, offset = 0x4, fixed_abs, tag = 'smem constant byte address 0x4 - core index']
  #allocation1 [shape = 'u32[144,128]{1,0:T(1,128)}', space=vmem, size = 0x12000, scoped, tag = 'internal scratch']
  #allocation2 [shape = 'f32[1,1]{1,0:T(1,128)S(1)}', space=vmem, size = 0x200, scoped, tag = 'scoped memory for _lambda_.10']
  #allocation3 [shape = 'f32[1,1]{1,0:T(1,128)S(1)}', space=vmem, size = 0x200, scoped, tag = 'scoped memory for _lambda_.10']
  %s0 = inlined_call_operand.vmem [shape: bf16[48,128], index: 0, kind: input, shape index: {}]
  %s1 = inlined_call_operand.vmem [shape: bf16[896,128], index: 1, kind: input, shape index: {}]
  %s2 = inlined_call_operand.vmem [shape: f32[1,128], index: 2, kind: input, shape index: {}]
  %s3 = inlined_call_operand.<no memory space> [shape: f32[1,1], index: 3, kind: input, shape index: {}]
  %s4 = inlined_call_operand.vmem [shape: bf16[896,128], index: 4, kind: input, shape index: {}]
  %s5 = inlined_call_operand.vmem [shape: bf16[128,128], index: 5, kind: input, shape index: {}]
  %s6 = inlined_call_operand.vmem [shape: f32[1,128], index: 6, kind: input, shape index: {}]
  %s7 = inlined_call_operand.<no memory space> [shape: f32[1,1], index: 7, kind: input, shape index: {}]
  %s8 = inlined_call_operand.vmem [shape: bf16[16,24], index: 8, kind: input, shape index: {}]
  %s9 = inlined_call_operand.vmem [shape: bf16[32,128], index: 9, kind: output, shape index: {}]
  %s10 = sld [smem:[#allocation0]]
  $region46: #{_lambda_.10} parent=0
    _
  %s12 = ssub.s32 1, %s10
  %s13 = scalar_select 0, %s12, %s10
  %v14 = vstv %s3
  %15 = vst [vmem:[#allocation2] sm:$0x1] %v14
  %v16 = vstv %s7
  %17 = vst [vmem:[#allocation3] sm:$0x1] %v16
  // Predicated region
  $region2: #{_lambda_.10} parent=0 // pred_check
    _
  $region3: #{_lambda_.10} parent=0 // pred_check_branch
    %19 = sbr.rel (0) target = $region5
  $region4: #{_lambda_.10} parent=0 // pred_region
    _
  $region5: #{_lambda_.10} parent=0 // pred_fallthru
    _
  // Predicated region
  $region6: #{_lambda_.10} parent=0 // pred_check
    _
  $region7: #{_lambda_.10} parent=0 // pred_check_branch
    %21 = sbr.rel (0) target = $region9
  $region8: #{_lambda_.10} parent=0 // pred_region
    _
  $region9: #{_lambda_.10} parent=0 // pred_fallthru
    _
  // Predicated region
  $region10: #{_lambda_.10} parent=0 // pred_check
    _
  $region11: #{_lambda_.10} parent=0 // pred_check_branch
    %23 = sbr.rel (0) target = $region13
  $region12: #{_lambda_.10} parent=0 // pred_region
    _
  $region13: #{_lambda_.10} parent=0 // pred_fallthru
    _
  // Predicated region
  $region14: #{_lambda_.10} parent=0 // pred_check
    _
  $region15: #{_lambda_.10} parent=0 // pred_check_branch
    %25 = sbr.rel (0) target = $region17
  $region16: #{_lambda_.10} parent=0 // pred_region
    _
  $region17: #{_lambda_.10} parent=0 // pred_fallthru
    _
  // Predicated region
  $region18: #{_lambda_.10} parent=0 // pred_check
    _
  $region19: #{_lambda_.10} parent=0 // pred_check_branch
    %27 = sbr.rel (0) target = $region21
  $region20: #{_lambda_.10} parent=0 // pred_region
    _
  $region21: #{_lambda_.10} parent=0 // pred_fallthru
    _
  // Predicated region
  $region22: #{_lambda_.10} parent=0 // pred_check
    _
  $region23: #{_lambda_.10} parent=0 // pred_check_branch
    %29 = sbr.rel (0) target = $region25
  $region24: #{_lambda_.10} parent=0 // pred_region
    _
  $region25: #{_lambda_.10} parent=0 // pred_fallthru
    _
  // Predicated region
  $region26: #{_lambda_.10} parent=0 // pred_check
    _
  $region27: #{_lambda_.10} parent=0 // pred_check_branch
    %31 = sbr.rel (0) target = $region29
  $region28: #{_lambda_.10} parent=0 // pred_region
    _
  $region29: #{_lambda_.10} parent=0 // pred_fallthru
    _
  // Predicated region
  $region30: #{_lambda_.10} parent=0 // pred_check
    _
  $region31: #{_lambda_.10} parent=0 // pred_check_branch
    %33 = sbr.rel (0) target = $region33
  $region32: #{_lambda_.10} parent=0 // pred_region
    _
  $region33: #{_lambda_.10} parent=0 // pred_fallthru
    _
  // Predicated region
  $region34: #{_lambda_.10} parent=0 // pred_check
    _
  $region35: #{_lambda_.10} parent=0 // pred_check_branch
    %35 = sbr.rel (0) target = $region37
  $region36: #{_lambda_.10} parent=0 // pred_region
    _
  $region37: #{_lambda_.10} parent=0 // pred_fallthru
    _
  %v37 = vld [vmem:[%s8] sm:$0xf]
  %v38 = vld [vmem:[%s8 + $0x4] sm:$0xf]
  %v39 = vld [vmem:[%s0] sm:$0xf]
  %v40 = vld [vmem:[%s0 + $0x4] sm:$0xf]
  %v41 = vld [vmem:[%s0 + $0x8] sm:$0xf]
  %v42 = vld [vmem:[%s0 + $0xc] sm:$0xf]
  %v43 = vld [vmem:[%s0 + $0x10] sm:$0xf]
  %v44 = vld [vmem:[%s0 + $0x14] sm:$0xf]
  %v45 = vld [vmem:[%s1] sm:$0xf]
  %v46 = vld [vmem:[%s1 + $0x4] sm:$0xf]
  %v47 = vld [vmem:[%s1 + $0x8] sm:$0xf]
  %v48 = vld [vmem:[%s1 + $0xc] sm:$0xf]
  %v49 = vld [vmem:[%s1 + $0x10] sm:$0xf]
  %v50 = vld [vmem:[%s1 + $0x14] sm:$0xf]
  %v51 = vld [vmem:[%s1 + $0x18] sm:$0xf]
  %v52 = vld [vmem:[%s1 + $0x1c] sm:$0xf]
  %v53 = vld [vmem:[%s1 + $0x20] sm:$0xf]
  %v54 = vld [vmem:[%s1 + $0x24] sm:$0xf]
  %v55 = vld [vmem:[%s1 + $0x28] sm:$0xf]
  %v56 = vld [vmem:[%s1 + $0x2c] sm:$0xf]
  %v57 = vld [vmem:[%s1 + $0x30] sm:$0xf]
  %v58 = vld [vmem:[%s1 + $0x34] sm:$0xf]
  %v59 = vld [vmem:[%s1 + $0x38] sm:$0xf]
  %v60 = vld [vmem:[%s1 + $0x3c] sm:$0xf]
  %v61 = vld [vmem:[%s1 + $0x40] sm:$0xf]
  %v62 = vld [vmem:[%s1 + $0x44] sm:$0xf]
  %v63 = vld [vmem:[%s1 + $0x48] sm:$0xf]
  %v64 = vld [vmem:[%s1 + $0x4c] sm:$0xf]
  %v65 = vld [vmem:[%s1 + $0x50] sm:$0xf]
  %v66 = vld [vmem:[%s1 + $0x54] sm:$0xf]
  %v67 = vld [vmem:[%s1 + $0x58] sm:$0xf]
  %v68 = vld [vmem:[%s1 + $0x5c] sm:$0xf]
  %v69 = vld [vmem:[%s1 + $0x60] sm:$0xf]
  %v70 = vld [vmem:[%s1 + $0x64] sm:$0xf]
  %v71 = vld [vmem:[%s1 + $0x68] sm:$0xf]
  %v72 = vld [vmem:[%s1 + $0x6c] sm:$0xf]
  %v73 = vld [vmem:[%s1 + $0x70] sm:$0xf]
  %v74 = vld [vmem:[%s1 + $0x74] sm:$0xf]
  %v75 = vld [vmem:[%s1 + $0x78] sm:$0xf]
  %v76 = vld [vmem:[%s1 + $0x7c] sm:$0xf]
  %v77 = vld [vmem:[%s1 + $0x80] sm:$0xf]
  %v78 = vld [vmem:[%s1 + $0x84] sm:$0xf]
  %v79 = vld [vmem:[%s1 + $0x88] sm:$0xf]
  %v80 = vld [vmem:[%s1 + $0x8c] sm:$0xf]
  %v81 = vld [vmem:[%s1 + $0x90] sm:$0xf]
  %v82 = vld [vmem:[%s1 + $0x94] sm:$0xf]
  %v83 = vld [vmem:[%s1 + $0x98] sm:$0xf]
  %v84 = vld [vmem:[%s1 + $0x9c] sm:$0xf]
  %v85 = vld [vmem:[%s1 + $0xa0] sm:$0xf]
  %v86 = vld [vmem:[%s1 + $0xa4] sm:$0xf]
  %v87 = vld [vmem:[%s1 + $0xa8] sm:$0xf]
  %v88 = vld [vmem:[%s1 + $0xac] sm:$0xf]
  %v89 = vld [vmem:[%s1 + $0xb0] sm:$0xf]
  %v90 = vld [vmem:[%s1 + $0xb4] sm:$0xf]
  %v91 = vld [vmem:[%s1 + $0xb8] sm:$0xf]
  %v92 = vld [vmem:[%s1 + $0xbc] sm:$0xf]
  %v93 = vld [vmem:[%s1 + $0xc0] sm:$0xf]
  %v94 = vld [vmem:[%s1 + $0xc4] sm:$0xf]
  %v95 = vld [vmem:[%s1 + $0xc8] sm:$0xf]
  %v96 = vld [vmem:[%s1 + $0xcc] sm:$0xf]
  %v97 = vld [vmem:[%s1 + $0xd0] sm:$0xf]
  %v98 = vld [vmem:[%s1 + $0xd4] sm:$0xf]
  %v99 = vld [vmem:[%s1 + $0xd8] sm:$0xf]
  %v100 = vld [vmem:[%s1 + $0xdc] sm:$0xf]
  %v101 = vld [vmem:[%s1 + $0xe0] sm:$0xf]
  %v102 = vld [vmem:[%s1 + $0xe4] sm:$0xf]
  %v103 = vld [vmem:[%s1 + $0xe8] sm:$0xf]
  %v104 = vld [vmem:[%s1 + $0xec] sm:$0xf]
  %v105 = vld [vmem:[%s1 + $0xf0] sm:$0xf]
  %v106 = vld [vmem:[%s1 + $0xf4] sm:$0xf]
  %v107 = vld [vmem:[%s1 + $0xf8] sm:$0xf]
  %v108 = vld [vmem:[%s1 + $0xfc] sm:$0xf]
  %v109 = vld [vmem:[%s1 + $0x100] sm:$0xf]
  %v110 = vld [vmem:[%s1 + $0x104] sm:$0xf]
  %v111 = vld [vmem:[%s1 + $0x108] sm:$0xf]
  %v112 = vld [vmem:[%s1 + $0x10c] sm:$0xf]
  %v113 = vld [vmem:[%s1 + $0x110] sm:$0xf]
  %v114 = vld [vmem:[%s1 + $0x114] sm:$0xf]
  %v115 = vld [vmem:[%s1 + $0x118] sm:$0xf]
  %v116 = vld [vmem:[%s1 + $0x11c] sm:$0xf]
  %v117 = vld [vmem:[%s1 + $0x120] sm:$0xf]
  %v118 = vld [vmem:[%s1 + $0x124] sm:$0xf]
  %v119 = vld [vmem:[%s1 + $0x128] sm:$0xf]
  %v120 = vld [vmem:[%s1 + $0x12c] sm:$0xf]
  %v121 = vld [vmem:[%s1 + $0x130] sm:$0xf]
  %v122 = vld [vmem:[%s1 + $0x134] sm:$0xf]
  %v123 = vld [vmem:[%s1 + $0x138] sm:$0xf]
  %v124 = vld [vmem:[%s1 + $0x13c] sm:$0xf]
  %v125 = vld [vmem:[%s1 + $0x140] sm:$0xf]
  %v126 = vld [vmem:[%s1 + $0x144] sm:$0xf]
  %v127 = vld [vmem:[%s1 + $0x148] sm:$0xf]
  %v128 = vld [vmem:[%s1 + $0x14c] sm:$0xf]
  %v129 = vld [vmem:[%s1 + $0x150] sm:$0xf]
  %v130 = vld [vmem:[%s1 + $0x154] sm:$0xf]
  %v131 = vld [vmem:[%s1 + $0x158] sm:$0xf]
  %v132 = vld [vmem:[%s1 + $0x15c] sm:$0xf]
  %v133 = vld [vmem:[%s1 + $0x160] sm:$0xf]
  %v134 = vld [vmem:[%s1 + $0x164] sm:$0xf]
  %v135 = vld [vmem:[%s1 + $0x168] sm:$0xf]
  %v136 = vld [vmem:[%s1 + $0x16c] sm:$0xf]
  %v137 = vld [vmem:[%s1 + $0x170] sm:$0xf]
  %v138 = vld [vmem:[%s1 + $0x174] sm:$0xf]
  %v139 = vld [vmem:[%s1 + $0x178] sm:$0xf]
  %v140 = vld [vmem:[%s1 + $0x17c] sm:$0xf]
  %v141 = vld [vmem:[%s1 + $0x180] sm:$0xf]
  %v142 = vld [vmem:[%s1 + $0x184] sm:$0xf]
  %v143 = vld [vmem:[%s1 + $0x188] sm:$0xf]
  %v144 = vld [vmem:[%s1 + $0x18c] sm:$0xf]
  %v145 = vld [vmem:[%s1 + $0x190] sm:$0xf]
  %v146 = vld [vmem:[%s1 + $0x194] sm:$0xf]
  %v147 = vld [vmem:[%s1 + $0x198] sm:$0xf]
  %v148 = vld [vmem:[%s1 + $0x19c] sm:$0xf]
  %v149 = vld [vmem:[%s1 + $0x1a0] sm:$0xf]
  %v150 = vld [vmem:[%s1 + $0x1a4] sm:$0xf]
  %v151 = vld [vmem:[%s1 + $0x1a8] sm:$0xf]
  %v152 = vld [vmem:[%s1 + $0x1ac] sm:$0xf]
  %v153 = vld [vmem:[%s1 + $0x1b0] sm:$0xf]
  %v154 = vld [vmem:[%s1 + $0x1b4] sm:$0xf]
  %v155 = vld [vmem:[%s1 + $0x1b8] sm:$0xf]
  %v156 = vld [vmem:[%s1 + $0x1bc] sm:$0xf]
  %v157 = vld [vmem:[%s2] sm:$0x1]
  %v158 = vld [vmem:[#allocation2] sm:$0x1]
  %v159 = vld [vmem:[%s4] sm:$0xf]
  %v160 = vld [vmem:[%s4 + $0x4] sm:$0xf]
  %v161 = vld [vmem:[%s4 + $0x8] sm:$0xf]
  %v162 = vld [vmem:[%s4 + $0xc] sm:$0xf]
  %v163 = vld [vmem:[%s4 + $0x10] sm:$0xf]
  %v164 = vld [vmem:[%s4 + $0x14] sm:$0xf]
  %v165 = vld [vmem:[%s4 + $0x18] sm:$0xf]
  %v166 = vld [vmem:[%s4 + $0x1c] sm:$0xf]
  %v167 = vld [vmem:[%s4 + $0x20] sm:$0xf]
  %v168 = vld [vmem:[%s4 + $0x24] sm:$0xf]
  %v169 = vld [vmem:[%s4 + $0x28] sm:$0xf]
  %v170 = vld [vmem:[%s4 + $0x2c] sm:$0xf]
  %v171 = vld [vmem:[%s4 + $0x30] sm:$0xf]
  %v172 = vld [vmem:[%s4 + $0x34] sm:$0xf]
  %v173 = vld [vmem:[%s4 + $0x38] sm:$0xf]
  %v174 = vld [vmem:[%s4 + $0x3c] sm:$0xf]
  %v175 = vld [vmem:[%s4 + $0x40] sm:$0xf]
  %v176 = vld [vmem:[%s4 + $0x44] sm:$0xf]
  %v177 = vld [vmem:[%s4 + $0x48] sm:$0xf]
  %v178 = vld [vmem:[%s4 + $0x4c] sm:$0xf]
  %v179 = vld [vmem:[%s4 + $0x50] sm:$0xf]
  %v180 = vld [vmem:[%s4 + $0x54] sm:$0xf]
  %v181 = vld [vmem:[%s4 + $0x58] sm:$0xf]
  %v182 = vld [vmem:[%s4 + $0x5c] sm:$0xf]
  %v183 = vld [vmem:[%s4 + $0x60] sm:$0xf]
  %v184 = vld [vmem:[%s4 + $0x64] sm:$0xf]
  %v185 = vld [vmem:[%s4 + $0x68] sm:$0xf]
  %v186 = vld [vmem:[%s4 + $0x6c] sm:$0xf]
  %v187 = vld [vmem:[%s4 + $0x70] sm:$0xf]
  %v188 = vld [vmem:[%s4 + $0x74] sm:$0xf]
  %v189 = vld [vmem:[%s4 + $0x78] sm:$0xf]
  %v190 = vld [vmem:[%s4 + $0x7c] sm:$0xf]
  %v191 = vld [vmem:[%s4 + $0x80] sm:$0xf]
  %v192 = vld [vmem:[%s4 + $0x84] sm:$0xf]
  %v193 = vld [vmem:[%s4 + $0x88] sm:$0xf]
  %v194 = vld [vmem:[%s4 + $0x8c] sm:$0xf]
  %v195 = vld [vmem:[%s4 + $0x90] sm:$0xf]
  %v196 = vld [vmem:[%s4 + $0x94] sm:$0xf]
  %v197 = vld [vmem:[%s4 + $0x98] sm:$0xf]
  %v198 = vld [vmem:[%s4 + $0x9c] sm:$0xf]
  %v199 = vld [vmem:[%s4 + $0xa0] sm:$0xf]
  %v200 = vld [vmem:[%s4 + $0xa4] sm:$0xf]
  %v201 = vld [vmem:[%s4 + $0xa8] sm:$0xf]
  %v202 = vld [vmem:[%s4 + $0xac] sm:$0xf]
  %v203 = vld [vmem:[%s4 + $0xb0] sm:$0xf]
  %v204 = vld [vmem:[%s4 + $0xb4] sm:$0xf]
  %v205 = vld [vmem:[%s4 + $0xb8] sm:$0xf]
  %v206 = vld [vmem:[%s4 + $0xbc] sm:$0xf]
  %v207 = vld [vmem:[%s4 + $0xc0] sm:$0xf]
  %v208 = vld [vmem:[%s4 + $0xc4] sm:$0xf]
  %v209 = vld [vmem:[%s4 + $0xc8] sm:$0xf]
  %v210 = vld [vmem:[%s4 + $0xcc] sm:$0xf]
  %v211 = vld [vmem:[%s4 + $0xd0] sm:$0xf]
  %v212 = vld [vmem:[%s4 + $0xd4] sm:$0xf]
  %v213 = vld [vmem:[%s4 + $0xd8] sm:$0xf]
  %v214 = vld [vmem:[%s4 + $0xdc] sm:$0xf]
  %v215 = vld [vmem:[%s4 + $0xe0] sm:$0xf]
  %v216 = vld [vmem:[%s4 + $0xe4] sm:$0xf]
  %v217 = vld [vmem:[%s4 + $0xe8] sm:$0xf]
  %v218 = vld [vmem:[%s4 + $0xec] sm:$0xf]
  %v219 = vld [vmem:[%s4 + $0xf0] sm:$0xf]
  %v220 = vld [vmem:[%s4 + $0xf4] sm:$0xf]
  %v221 = vld [vmem:[%s4 + $0xf8] sm:$0xf]
  %v222 = vld [vmem:[%s4 + $0xfc] sm:$0xf]
  %v223 = vld [vmem:[%s4 + $0x100] sm:$0xf]
  %v224 = vld [vmem:[%s4 + $0x104] sm:$0xf]
  %v225 = vld [vmem:[%s4 + $0x108] sm:$0xf]
  %v226 = vld [vmem:[%s4 + $0x10c] sm:$0xf]
  %v227 = vld [vmem:[%s4 + $0x110] sm:$0xf]
  %v228 = vld [vmem:[%s4 + $0x114] sm:$0xf]
  %v229 = vld [vmem:[%s4 + $0x118] sm:$0xf]
  %v230 = vld [vmem:[%s4 + $0x11c] sm:$0xf]
  %v231 = vld [vmem:[%s4 + $0x120] sm:$0xf]
  %v232 = vld [vmem:[%s4 + $0x124] sm:$0xf]
  %v233 = vld [vmem:[%s4 + $0x128] sm:$0xf]
  %v234 = vld [vmem:[%s4 + $0x12c] sm:$0xf]
  %v235 = vld [vmem:[%s4 + $0x130] sm:$0xf]
  %v236 = vld [vmem:[%s4 + $0x134] sm:$0xf]
  %v237 = vld [vmem:[%s4 + $0x138] sm:$0xf]
  %v238 = vld [vmem:[%s4 + $0x13c] sm:$0xf]
  %v239 = vld [vmem:[%s4 + $0x140] sm:$0xf]
  %v240 = vld [vmem:[%s4 + $0x144] sm:$0xf]
  %v241 = vld [vmem:[%s4 + $0x148] sm:$0xf]
  %v242 = vld [vmem:[%s4 + $0x14c] sm:$0xf]
  %v243 = vld [vmem:[%s4 + $0x150] sm:$0xf]
  %v244 = vld [vmem:[%s4 + $0x154] sm:$0xf]
  %v245 = vld [vmem:[%s4 + $0x158] sm:$0xf]
  %v246 = vld [vmem:[%s4 + $0x15c] sm:$0xf]
  %v247 = vld [vmem:[%s4 + $0x160] sm:$0xf]
  %v248 = vld [vmem:[%s4 + $0x164] sm:$0xf]
  %v249 = vld [vmem:[%s4 + $0x168] sm:$0xf]
  %v250 = vld [vmem:[%s4 + $0x16c] sm:$0xf]
  %v251 = vld [vmem:[%s4 + $0x170] sm:$0xf]
  %v252 = vld [vmem:[%s4 + $0x174] sm:$0xf]
  %v253 = vld [vmem:[%s4 + $0x178] sm:$0xf]
  %v254 = vld [vmem:[%s4 + $0x17c] sm:$0xf]
  %v255 = vld [vmem:[%s4 + $0x180] sm:$0xf]
  %v256 = vld [vmem:[%s4 + $0x184] sm:$0xf]
  %v257 = vld [vmem:[%s4 + $0x188] sm:$0xf]
  %v258 = vld [vmem:[%s4 + $0x18c] sm:$0xf]
  %v259 = vld [vmem:[%s4 + $0x190] sm:$0xf]
  %v260 = vld [vmem:[%s4 + $0x194] sm:$0xf]
  %v261 = vld [vmem:[%s4 + $0x198] sm:$0xf]
  %v262 = vld [vmem:[%s4 + $0x19c] sm:$0xf]
  %v263 = vld [vmem:[%s4 + $0x1a0] sm:$0xf]
  %v264 = vld [vmem:[%s4 + $0x1a4] sm:$0xf]
  %v265 = vld [vmem:[%s4 + $0x1a8] sm:$0xf]
  %v266 = vld [vmem:[%s4 + $0x1ac] sm:$0xf]
  %v267 = vld [vmem:[%s4 + $0x1b0] sm:$0xf]
  %v268 = vld [vmem:[%s4 + $0x1b4] sm:$0xf]
  %v269 = vld [vmem:[%s4 + $0x1b8] sm:$0xf]
  %v270 = vld [vmem:[%s4 + $0x1bc] sm:$0xf]
  %v271 = vld [vmem:[%s5] sm:$0xf]
  %v272 = vld [vmem:[%s5 + $0x4] sm:$0xf]
  %v273 = vld [vmem:[%s5 + $0x8] sm:$0xf]
  %v274 = vld [vmem:[%s5 + $0xc] sm:$0xf]
  %v275 = vld [vmem:[%s5 + $0x10] sm:$0xf]
  %v276 = vld [vmem:[%s5 + $0x14] sm:$0xf]
  %v277 = vld [vmem:[%s5 + $0x18] sm:$0xf]
  %v278 = vld [vmem:[%s5 + $0x1c] sm:$0xf]
  %v279 = vld [vmem:[%s5 + $0x20] sm:$0xf]
  %v280 = vld [vmem:[%s5 + $0x24] sm:$0xf]
  %v281 = vld [vmem:[%s5 + $0x28] sm:$0xf]
  %v282 = vld [vmem:[%s5 + $0x2c] sm:$0xf]
  %v283 = vld [vmem:[%s5 + $0x30] sm:$0xf]
  %v284 = vld [vmem:[%s5 + $0x34] sm:$0xf]
  %v285 = vld [vmem:[%s5 + $0x38] sm:$0xf]
  %v286 = vld [vmem:[%s5 + $0x3c] sm:$0xf]
  %v287 = vld [vmem:[%s6] sm:$0x1]
  %v288 = vld [vmem:[#allocation3] sm:$0x1]
  %v289 = vlaneseq
  %v290 = vshrl.u32 %v289, 7
  %v291 = vadd.s32 %v290, 8
  %v292 = vadd.s32 %v290, 16
  %v293 = vadd.s32 %v290, 24
  %v294 = vadd.s32 %v290, 32
  %v295 = vadd.s32 %v290, 40
  %v296 = vadd.s32 %v290, 3
  %v297 = vadd.s32 %v291, 3
  %v298 = vadd.s32 %v292, 3
  %v299 = vadd.s32 %v293, 3
  %v300 = vadd.s32 %v294, 3
  %v301 = vadd.s32 %v295, 3
  %vm302 = vcmp.ge.s32.totalorder %v296, 8
  %vm303 = vcmp.ge.s32.totalorder %v297, 8
  %vm304 = vcmp.ge.s32.totalorder %v298, 8
  %vm305 = vcmp.ge.s32.totalorder %v299, 8
  %vm306 = vcmp.ge.s32.totalorder %v300, 8
  %vm307 = vcmp.ge.s32.totalorder %v301, 8
  %vm308 = vcmp.lt.s32.totalorder %v296, 16
  %vm309 = vcmp.lt.s32.totalorder %v297, 16
  %vm310 = vcmp.lt.s32.totalorder %v298, 16
  %vm311 = vcmp.lt.s32.totalorder %v299, 16
  %vm312 = vcmp.lt.s32.totalorder %v300, 16
  %vm313 = vcmp.lt.s32.totalorder %v301, 16
  %vm314 = vmand %vm302, %vm308
  %vm315 = vmand %vm303, %vm309
  %vm316 = vmand %vm304, %vm310
  %vm317 = vmand %vm305, %vm311
  %vm318 = vmand %vm306, %vm312
  %vm319 = vmand %vm307, %vm313
  %vm320 = vcmp.ge.s32.totalorder %v296, 32
  %vm321 = vcmp.ge.s32.totalorder %v297, 32
  %vm322 = vcmp.ge.s32.totalorder %v298, 32
  %vm323 = vcmp.ge.s32.totalorder %v299, 32
  %vm324 = vcmp.ge.s32.totalorder %v300, 32
  %vm325 = vcmp.ge.s32.totalorder %v301, 32
  %vm326 = vcmp.lt.s32.totalorder %v296, 40
  %vm327 = vcmp.lt.s32.totalorder %v297, 40
  %vm328 = vcmp.lt.s32.totalorder %v298, 40
  %vm329 = vcmp.lt.s32.totalorder %v299, 40
  %vm330 = vcmp.lt.s32.totalorder %v300, 40
  %vm331 = vcmp.lt.s32.totalorder %v301, 40
  %vm332 = vmand %vm320, %vm326
  %vm333 = vmand %vm321, %vm327
  %vm334 = vmand %vm322, %vm328
  %vm335 = vmand %vm323, %vm329
  %vm336 = vmand %vm324, %vm330
  %vm337 = vmand %vm325, %vm331
  %vm338 = vmor %vm314, %vm332
  %vm339 = vmor %vm315, %vm333
  %vm340 = vmor %vm316, %vm334
  %vm341 = vmor %vm317, %vm335
  %vm342 = vmor %vm318, %vm336
  %vm343 = vmor %vm319, %vm337
  %v350 = vunpack.c.l.b16 %v39
  %v351 = vunpack.c.l.b16 %v40
  %v352 = vunpack.c.l.b16 %v41
  %v353 = vunpack.c.l.b16 %v42
  %v354 = vunpack.c.l.b16 %v43
  %v355 = vunpack.c.l.b16 %v44
  %v356 = vpack.c.b16 %v351, %v350
  %v357 = vpack.c.b16 %v353, %v352
  %v358 = vpack.c.b16 %v355, %v354
  %vm362 = vsmask.f32 7424
  %v364 = vshrl.u32 %v356, 16
  %v366 = vshll.u32 %v356, 16
  %v368 = vrot.slane %v366, 1
  %v369 = vor.u32 %v364, %v368
  %v371 = vshll.u32 %v357, 16
  %v373 = vrot.slane %v371, 1
  %v374 = vsel %vm362, %v369, %v373
  %v375 = vshrl.u32 %v357, 16
  %v377 = vor.u32 %v375, %v373
  %v379 = vshll.u32 %v358, 16
  %v381 = vrot.slane %v379, 1
  %v382 = vsel %vm362, %v377, %v381
  %v383 = vshrl.u32 %v358, 16
  %v385 = vor.u32 %v383, %v381
  %vm389 = vcmask 1046528
  %v390 = vrot.slane %v356, 1
  %v391 = vrot.slane %v357, 1
  %v392 = vsel %vm389, %v390, %v391
  %v393 = vrot.slane %v358, 1
  %v394 = vsel %vm389, %v391, %v393
  %vm398 = vsmask.f32 6400
  %v399 = vrot.slane %v364, 1
  %v400 = vrot.slane %v366, 2
  %v401 = vor.u32 %v399, %v400
  %v402 = vrot.slane %v375, 1
  %v403 = vrot.slane %v371, 2
  %v404 = vor.u32 %v402, %v403
  %v405 = vsel %vm398, %v401, %v404
  %v406 = vrot.slane %v383, 1
  %v407 = vrot.slane %v379, 2
  %v408 = vor.u32 %v406, %v407
  %v409 = vsel %vm398, %v404, %v408
  %vm413 = vcmask 1045504
  %v414 = vrot.slane %v356, 2
  %v415 = vrot.slane %v357, 2
  %v416 = vsel %vm413, %v414, %v415
  %v417 = vrot.slane %v358, 2
  %v418 = vsel %vm413, %v415, %v417
  %vm422 = vsmask.f32 5376
  %v423 = vrot.slane %v364, 2
  %v424 = vrot.slane %v366, 3
  %v425 = vor.u32 %v423, %v424
  %v426 = vrot.slane %v375, 2
  %v427 = vrot.slane %v371, 3
  %v428 = vor.u32 %v426, %v427
  %v429 = vsel %vm422, %v425, %v428
  %v430 = vrot.slane %v383, 2
  %v431 = vrot.slane %v379, 3
  %v432 = vor.u32 %v430, %v431
  %v433 = vsel %vm422, %v428, %v432
  %vm437 = vcmask 1044480
  %v438 = vrot.slane %v356, 3
  %v439 = vrot.slane %v357, 3
  %v440 = vsel %vm437, %v438, %v439
  %v441 = vrot.slane %v358, 3
  %v442 = vsel %vm437, %v439, %v441
  %v447 = vlaneseq
  %v448 = vshrl.u32 %v447, 7
  %v449 = vsub.s32 0, %v448
  %v450 = vrot.slane %v157, %v449
  %v564 = vunpack.c.l.b16 %v45
  %v565 = vunpack.c.l.b16 %v46
  %v566 = vunpack.c.l.b16 %v47
  %v567 = vunpack.c.l.b16 %v48
  %v568 = vunpack.c.l.b16 %v49
  %v569 = vunpack.c.l.b16 %v50
  %v570 = vunpack.c.l.b16 %v51
  %v571 = vunpack.c.l.b16 %v52
  %v572 = vunpack.c.l.b16 %v53
  %v573 = vunpack.c.l.b16 %v54
  %v574 = vunpack.c.l.b16 %v55
  %v575 = vunpack.c.l.b16 %v56
  %v576 = vunpack.c.l.b16 %v57
  %v577 = vunpack.c.l.b16 %v58
  %v578 = vunpack.c.l.b16 %v59
  %v579 = vunpack.c.l.b16 %v60
  %v580 = vunpack.c.l.b16 %v61
  %v581 = vunpack.c.l.b16 %v62
  %v582 = vunpack.c.l.b16 %v63
  %v583 = vunpack.c.l.b16 %v64
  %v584 = vunpack.c.l.b16 %v65
  %v585 = vunpack.c.l.b16 %v66
  %v586 = vunpack.c.l.b16 %v67
  %v587 = vunpack.c.l.b16 %v68
  %v588 = vunpack.c.l.b16 %v69
  %v589 = vunpack.c.l.b16 %v70
  %v590 = vunpack.c.l.b16 %v71
  %v591 = vunpack.c.l.b16 %v72
  %v592 = vunpack.c.l.b16 %v73
  %v593 = vunpack.c.l.b16 %v74
  %v594 = vunpack.c.l.b16 %v75
  %v595 = vunpack.c.l.b16 %v76
  %v596 = vunpack.c.l.b16 %v77
  %v597 = vunpack.c.l.b16 %v78
  %v598 = vunpack.c.l.b16 %v79
  %v599 = vunpack.c.l.b16 %v80
  %v600 = vunpack.c.l.b16 %v81
  %v601 = vunpack.c.l.b16 %v82
  %v602 = vunpack.c.l.b16 %v83
  %v603 = vunpack.c.l.b16 %v84
  %v604 = vunpack.c.l.b16 %v85
  %v605 = vunpack.c.l.b16 %v86
  %v606 = vunpack.c.l.b16 %v87
  %v607 = vunpack.c.l.b16 %v88
  %v608 = vunpack.c.l.b16 %v89
  %v609 = vunpack.c.l.b16 %v90
  %v610 = vunpack.c.l.b16 %v91
  %v611 = vunpack.c.l.b16 %v92
  %v612 = vunpack.c.l.b16 %v93
  %v613 = vunpack.c.l.b16 %v94
  %v614 = vunpack.c.l.b16 %v95
  %v615 = vunpack.c.l.b16 %v96
  %v616 = vunpack.c.l.b16 %v97
  %v617 = vunpack.c.l.b16 %v98
  %v618 = vunpack.c.l.b16 %v99
  %v619 = vunpack.c.l.b16 %v100
  %v620 = vunpack.c.l.b16 %v101
  %v621 = vunpack.c.l.b16 %v102
  %v622 = vunpack.c.l.b16 %v103
  %v623 = vunpack.c.l.b16 %v104
  %v624 = vunpack.c.l.b16 %v105
  %v625 = vunpack.c.l.b16 %v106
  %v626 = vunpack.c.l.b16 %v107
  %v627 = vunpack.c.l.b16 %v108
  %v628 = vunpack.c.l.b16 %v109
  %v629 = vunpack.c.l.b16 %v110
  %v630 = vunpack.c.l.b16 %v111
  %v631 = vunpack.c.l.b16 %v112
  %v632 = vunpack.c.l.b16 %v113
  %v633 = vunpack.c.l.b16 %v114
  %v634 = vunpack.c.l.b16 %v115
  %v635 = vunpack.c.l.b16 %v116
  %v636 = vunpack.c.l.b16 %v117
  %v637 = vunpack.c.l.b16 %v118
  %v638 = vunpack.c.l.b16 %v119
  %v639 = vunpack.c.l.b16 %v120
  %v640 = vunpack.c.l.b16 %v121
  %v641 = vunpack.c.l.b16 %v122
  %v642 = vunpack.c.l.b16 %v123
  %v643 = vunpack.c.l.b16 %v124
  %v644 = vunpack.c.l.b16 %v125
  %v645 = vunpack.c.l.b16 %v126
  %v646 = vunpack.c.l.b16 %v127
  %v647 = vunpack.c.l.b16 %v128
  %v648 = vunpack.c.l.b16 %v129
  %v649 = vunpack.c.l.b16 %v130
  %v650 = vunpack.c.l.b16 %v131
  %v651 = vunpack.c.l.b16 %v132
  %v652 = vunpack.c.l.b16 %v133
  %v653 = vunpack.c.l.b16 %v134
  %v654 = vunpack.c.l.b16 %v135
  %v655 = vunpack.c.l.b16 %v136
  %v656 = vunpack.c.l.b16 %v137
  %v657 = vunpack.c.l.b16 %v138
  %v658 = vunpack.c.l.b16 %v139
  %v659 = vunpack.c.l.b16 %v140
  %v660 = vunpack.c.l.b16 %v141
  %v661 = vunpack.c.l.b16 %v142
  %v662 = vunpack.c.l.b16 %v143
  %v663 = vunpack.c.l.b16 %v144
  %v664 = vunpack.c.l.b16 %v145
  %v665 = vunpack.c.l.b16 %v146
  %v666 = vunpack.c.l.b16 %v147
  %v667 = vunpack.c.l.b16 %v148
  %v668 = vunpack.c.l.b16 %v149
  %v669 = vunpack.c.l.b16 %v150
  %v670 = vunpack.c.l.b16 %v151
  %v671 = vunpack.c.l.b16 %v152
  %v672 = vunpack.c.l.b16 %v153
  %v673 = vunpack.c.l.b16 %v154
  %v674 = vunpack.c.l.b16 %v155
  %v675 = vunpack.c.l.b16 %v156
  %v676 = vpack.c.b16 %v565, %v564
  %v677 = vpack.c.b16 %v567, %v566
  %v678 = vpack.c.b16 %v569, %v568
  %v679 = vpack.c.b16 %v571, %v570
  %v680 = vpack.c.b16 %v573, %v572
  %v681 = vpack.c.b16 %v575, %v574
  %v682 = vpack.c.b16 %v577, %v576
  %v683 = vpack.c.b16 %v579, %v578
  %v684 = vpack.c.b16 %v581, %v580
  %v685 = vpack.c.b16 %v583, %v582
  %v686 = vpack.c.b16 %v585, %v584
  %v687 = vpack.c.b16 %v587, %v586
  %v688 = vpack.c.b16 %v589, %v588
  %v689 = vpack.c.b16 %v591, %v590
  %v690 = vpack.c.b16 %v593, %v592
  %v691 = vpack.c.b16 %v595, %v594
  %v692 = vpack.c.b16 %v597, %v596
  %v693 = vpack.c.b16 %v599, %v598
  %v694 = vpack.c.b16 %v601, %v600
  %v695 = vpack.c.b16 %v603, %v602
  %v696 = vpack.c.b16 %v605, %v604
  %v697 = vpack.c.b16 %v607, %v606
  %v698 = vpack.c.b16 %v609, %v608
  %v699 = vpack.c.b16 %v611, %v610
  %v700 = vpack.c.b16 %v613, %v612
  %v701 = vpack.c.b16 %v615, %v614
  %v702 = vpack.c.b16 %v617, %v616
  %v703 = vpack.c.b16 %v619, %v618
  %v704 = vpack.c.b16 %v621, %v620
  %v705 = vpack.c.b16 %v623, %v622
  %v706 = vpack.c.b16 %v625, %v624
  %v707 = vpack.c.b16 %v627, %v626
  %v708 = vpack.c.b16 %v629, %v628
  %v709 = vpack.c.b16 %v631, %v630
  %v710 = vpack.c.b16 %v633, %v632
  %v711 = vpack.c.b16 %v635, %v634
  %v712 = vpack.c.b16 %v637, %v636
  %v713 = vpack.c.b16 %v639, %v638
  %v714 = vpack.c.b16 %v641, %v640
  %v715 = vpack.c.b16 %v643, %v642
  %v716 = vpack.c.b16 %v645, %v644
  %v717 = vpack.c.b16 %v647, %v646
  %v718 = vpack.c.b16 %v649, %v648
  %v719 = vpack.c.b16 %v651, %v650
  %v720 = vpack.c.b16 %v653, %v652
  %v721 = vpack.c.b16 %v655, %v654
  %v722 = vpack.c.b16 %v657, %v656
  %v723 = vpack.c.b16 %v659, %v658
  %v724 = vpack.c.b16 %v661, %v660
  %v725 = vpack.c.b16 %v663, %v662
  %v726 = vpack.c.b16 %v665, %v664
  %v727 = vpack.c.b16 %v667, %v666
  %v728 = vpack.c.b16 %v669, %v668
  %v729 = vpack.c.b16 %v671, %v670
  %v730 = vpack.c.b16 %v673, %v672
  %v731 = vpack.c.b16 %v675, %v674
  %788 = vmatprep.subr.bf16.mxu0 0
  %789 = vmatpush1.bf16.msra.mxu0 %v676
  %790 = vmatprep.subr.bf16.mxu0 0
  %791 = vmatpush1.bf16.msra.mxu0 %v677
  %792 = vmatprep.subr.bf16.mxu0 0
  %793 = vmatpush1.bf16.msra.mxu0 %v678
  %794 = vmatprep.subr.bf16.mxu0 0
  %795 = vmatpush1.bf16.msra.mxu0 %v679
  %796 = vmatprep.subr.bf16.mxu0 0
  %797 = vmatpush1.bf16.msra.mxu0 %v680
  %798 = vmatprep.subr.bf16.mxu0 0
  %799 = vmatpush1.bf16.msra.mxu0 %v681
  %800 = vmatprep.subr.bf16.mxu0 0
  %801 = vmatpush1.bf16.msra.mxu0 %v682
  %802 = vmatprep.subr.bf16.mxu0 0
  %803 = vmatpush1.bf16.msra.mxu0 %v683
  %804 = vmatprep.subr.bf16.mxu0 0
  %805 = vmatpush1.bf16.msra.mxu0 %v684
  %806 = vmatprep.subr.bf16.mxu0 0
  %807 = vmatpush1.bf16.msra.mxu0 %v685
  %808 = vmatprep.subr.bf16.mxu0 0
  %809 = vmatpush1.bf16.msra.mxu0 %v686
  %810 = vmatprep.subr.bf16.mxu0 0
  %811 = vmatpush1.bf16.msra.mxu0 %v687
  %812 = vmatprep.subr.bf16.mxu0 0
  %813 = vmatpush1.bf16.msra.mxu0 %v688
  %814 = vmatprep.subr.bf16.mxu0 0
  %815 = vmatpush1.bf16.msra.mxu0 %v689
  %816 = vmatprep.subr.bf16.mxu0 0
  %817 = vmatpush1.bf16.msra.mxu0 %v690
  %818 = vmatprep.subr.bf16.mxu0 0
  %819 = vmatpush1.bf16.msra.mxu0 %v691
  %820 = vmatprep.mubr.bf16.mxu0 %v374
  %821 = vmatmul.mubr.bf16.gmra.mrb[0].mxu0 %v356
  %v822 = vpop.f32.mrb[0].mxu0
  %v823 = vadd.f32 %v450, %v822
  %v824 = vpop.f32.mrb[0].mxu0
  %v825 = vpop.f32.mrb[0].mxu0
  %v826 = vadd.f32 %v450, %v825
  %v827 = vpop.f32.mrb[0].mxu0
  %828 = vmatprep.mubr.bf16.mxu0 %v382
  %829 = vmatmul.mubr.bf16.gmra.mrb[0].mxu0 %v357
  %v830 = vpop.f32.mrb[0].mxu0
  %v831 = vadd.f32 %v450, %v830
  %v832 = vpop.f32.mrb[0].mxu0
  %v833 = vpop.f32.mrb[0].mxu0
  %v834 = vadd.f32 %v450, %v833
  %v835 = vpop.f32.mrb[0].mxu0
  %836 = vmatprep.mubr.bf16.mxu0 %v385
  %837 = vmatmul.mubr.bf16.gmra.mrb[0].mxu0 %v358
  %v838 = vpop.f32.mrb[0].mxu0
  %v839 = vadd.f32 %v450, %v838
  %v840 = vpop.f32.mrb[0].mxu0
  %v841 = vpop.f32.mrb[0].mxu0
  %v842 = vadd.f32 %v450, %v841
  %v843 = vpop.f32.mrb[0].mxu0
  %844 = vdwg.mxu0
  %845 = vmatprep.subr.bf16.mxu0 0
  %846 = vmatpush1.bf16.msra.mxu0 %v692
  %847 = vmatprep.subr.bf16.mxu0 0
  %848 = vmatpush1.bf16.msra.mxu0 %v693
  %849 = vmatprep.subr.bf16.mxu0 0
  %850 = vmatpush1.bf16.msra.mxu0 %v694
  %851 = vmatprep.subr.bf16.mxu0 0
  %852 = vmatpush1.bf16.msra.mxu0 %v695
  %853 = vmatprep.subr.bf16.mxu0 0
  %854 = vmatpush1.bf16.msra.mxu0 %v696
  %855 = vmatprep.subr.bf16.mxu0 0
  %856 = vmatpush1.bf16.msra.mxu0 %v697
  %857 = vmatprep.subr.bf16.mxu0 0
  %858 = vmatpush1.bf16.msra.mxu0 %v698
  %859 = vmatprep.subr.bf16.mxu0 0
  %860 = vmatpush1.bf16.msra.mxu0 %v699
  %861 = vmatprep.subr.bf16.mxu0 0
  %862 = vmatpush1.bf16.msra.mxu0 %v700
  %863 = vmatprep.subr.bf16.mxu0 0
  %864 = vmatpush1.bf16.msra.mxu0 %v701
  %865 = vmatprep.subr.bf16.mxu0 0
  %866 = vmatpush1.bf16.msra.mxu0 %v702
  %867 = vmatprep.subr.bf16.mxu0 0
  %868 = vmatpush1.bf16.msra.mxu0 %v703
  %869 = vmatprep.subr.bf16.mxu0 0
  %870 = vmatpush1.bf16.msra.mxu0 %v704
  %871 = vmatprep.subr.bf16.mxu0 0
  %872 = vmatpush1.bf16.msra.mxu0 %v705
  %873 = vmatprep.subr.bf16.mxu0 0
  %874 = vmatpush1.bf16.msra.mxu0 %v706
  %875 = vmatprep.subr.bf16.mxu0 0
  %876 = vmatpush1.bf16.msra.mxu0 %v707
  %877 = vmatprep.mubr.bf16.mxu0 %v405
  %878 = vmatmul.mubr.bf16.gmra.mrb[0].mxu0 %v392
  %v879 = vpop.f32.mrb[0].mxu0
  %v880 = vadd.f32 %v823, %v879
  %v881 = vpop.f32.mrb[0].mxu0
  %v882 = vpop.f32.mrb[0].mxu0
  %v883 = vadd.f32 %v826, %v882
  %v884 = vpop.f32.mrb[0].mxu0
  %885 = vmatprep.mubr.bf16.mxu0 %v409
  %886 = vmatmul.mubr.bf16.gmra.mrb[0].mxu0 %v394
  %v887 = vpop.f32.mrb[0].mxu0
  %v888 = vadd.f32 %v831, %v887
  %v889 = vpop.f32.mrb[0].mxu0
  %v890 = vpop.f32.mrb[0].mxu0
  %v891 = vadd.f32 %v834, %v890
  %v892 = vpop.f32.mrb[0].mxu0
  %893 = vmatprep.mubr.bf16.mxu0 %v408
  %894 = vmatmul.mubr.bf16.gmra.mrb[0].mxu0 %v393
  %v895 = vpop.f32.mrb[0].mxu0
  %v896 = vadd.f32 %v839, %v895
  %v897 = vpop.f32.mrb[0].mxu0
  %v898 = vpop.f32.mrb[0].mxu0
  %v899 = vadd.f32 %v842, %v898
  %v900 = vpop.f32.mrb[0].mxu0
  %901 = vdwg.mxu0
  %902 = vmatprep.subr.bf16.mxu0 0
  %903 = vmatpush1.bf16.msra.mxu0 %v708
  %904 = vmatprep.subr.bf16.mxu0 0
  %905 = vmatpush1.bf16.msra.mxu0 %v709
  %906 = vmatprep.subr.bf16.mxu0 0
  %907 = vmatpush1.bf16.msra.mxu0 %v710
  %908 = vmatprep.subr.bf16.mxu0 0
  %909 = vmatpush1.bf16.msra.mxu0 %v711
  %910 = vmatprep.subr.bf16.mxu0 0
  %911 = vmatpush1.bf16.msra.mxu0 %v712
  %912 = vmatprep.subr.bf16.mxu0 0
  %913 = vmatpush1.bf16.msra.mxu0 %v713
  %914 = vmatprep.subr.bf16.mxu0 0
  %915 = vmatpush1.bf16.msra.mxu0 %v714
  %916 = vmatprep.subr.bf16.mxu0 0
  %917 = vmatpush1.bf16.msra.mxu0 %v715
  %918 = vmatprep.subr.bf16.mxu0 0
  %919 = vmatpush1.bf16.msra.mxu0 %v716
  %920 = vmatprep.subr.bf16.mxu0 0
  %921 = vmatpush1.bf16.msra.mxu0 %v717
  %922 = vmatprep.subr.bf16.mxu0 0
  %923 = vmatpush1.bf16.msra.mxu0 %v718
  %924 = vmatprep.subr.bf16.mxu0 0
  %925 = vmatpush1.bf16.msra.mxu0 %v719
  %926 = vmatprep.subr.bf16.mxu0 0
  %927 = vmatpush1.bf16.msra.mxu0 %v720
  %928 = vmatprep.subr.bf16.mxu0 0
  %929 = vmatpush1.bf16.msra.mxu0 %v721
  %930 = vmatprep.subr.bf16.mxu0 0
  %931 = vmatpush1.bf16.msra.mxu0 %v722
  %932 = vmatprep.subr.bf16.mxu0 0
  %933 = vmatpush1.bf16.msra.mxu0 %v723
  %934 = vmatprep.mubr.bf16.mxu0 %v429
  %935 = vmatmul.mubr.bf16.gmra.mrb[0].mxu0 %v416
  %v936 = vpop.f32.mrb[0].mxu0
  %v937 = vadd.f32 %v880, %v936
  %v938 = vpop.f32.mrb[0].mxu0
  %v939 = vpop.f32.mrb[0].mxu0
  %v940 = vadd.f32 %v883, %v939
  %v941 = vpop.f32.mrb[0].mxu0
  %942 = vmatprep.mubr.bf16.mxu0 %v433
  %943 = vmatmul.mubr.bf16.gmra.mrb[0].mxu0 %v418
  %v944 = vpop.f32.mrb[0].mxu0
  %v945 = vadd.f32 %v888, %v944
  %v946 = vpop.f32.mrb[0].mxu0
  %v947 = vpop.f32.mrb[0].mxu0
  %v948 = vadd.f32 %v891, %v947
  %v949 = vpop.f32.mrb[0].mxu0
  %950 = vmatprep.mubr.bf16.mxu0 %v432
  %951 = vmatmul.mubr.bf16.gmra.mrb[0].mxu0 %v417
  %v952 = vpop.f32.mrb[0].mxu0
  %v953 = vadd.f32 %v896, %v952
  %v954 = vpop.f32.mrb[0].mxu0
  %v955 = vpop.f32.mrb[0].mxu0
  %v956 = vadd.f32 %v899, %v955
  %v957 = vpop.f32.mrb[0].mxu0
  %958 = vdwg.mxu0
  %959 = vmatprep.subr.bf16.mxu0 0
  %960 = vmatpush1.bf16.msra.mxu0 %v724
  %961 = vmatprep.subr.bf16.mxu0 0
  %962 = vmatpush1.bf16.msra.mxu0 %v725
  %963 = vmatprep.subr.bf16.mxu0 0
  %964 = vmatpush1.bf16.msra.mxu0 %v726
  %965 = vmatprep.subr.bf16.mxu0 0
  %966 = vmatpush1.bf16.msra.mxu0 %v727
  %967 = vmatprep.subr.bf16.mxu0 0
  %968 = vmatpush1.bf16.msra.mxu0 %v728
  %969 = vmatprep.subr.bf16.mxu0 0
  %970 = vmatpush1.bf16.msra.mxu0 %v729
  %971 = vmatprep.subr.bf16.mxu0 0
  %972 = vmatpush1.bf16.msra.mxu0 %v730
  %973 = vmatprep.subr.bf16.mxu0 0
  %974 = vmatpush1.bf16.msra.mxu0 %v731
  %975 = vmatprep.subr.bf16.mxu0 0
  %976 = vmatpush1.bf16.msra.mxu0 0
  %977 = vmatprep.subr.bf16.mxu0 0
  %978 = vmatpush1.bf16.msra.mxu0 0
  %979 = vmatprep.subr.bf16.mxu0 0
  %980 = vmatpush1.bf16.msra.mxu0 0
  %981 = vmatprep.subr.bf16.mxu0 0
  %982 = vmatpush1.bf16.msra.mxu0 0
  %983 = vmatprep.subr.bf16.mxu0 0
  %984 = vmatpush1.bf16.msra.mxu0 0
  %985 = vmatprep.subr.bf16.mxu0 0
  %986 = vmatpush1.bf16.msra.mxu0 0
  %987 = vmatprep.subr.bf16.mxu0 0
  %988 = vmatpush1.bf16.msra.mxu0 0
  %989 = vmatprep.subr.bf16.mxu0 0
  %990 = vmatpush1.bf16.msra.mxu0 0
  %991 = vmatprep.mubr.bf16.mxu0 0
  %992 = vmatmul.mubr.bf16.gmra.mrb[0].mxu0 %v440
  %v993 = vpop.f32.mrb[0].mxu0
  %v994 = vadd.f32 %v937, %v993
  %v995 = vpop.f32.mrb[0].mxu0
  %v996 = vpop.f32.mrb[0].mxu0
  %v997 = vadd.f32 %v940, %v996
  %v998 = vpop.f32.mrb[0].mxu0
  %999 = vmatprep.mubr.bf16.mxu0 0
  %1000 = vmatmul.mubr.bf16.gmra.mrb[0].mxu0 %v442
  %v1001 = vpop.f32.mrb[0].mxu0
  %v1002 = vadd.f32 %v945, %v1001
  %v1003 = vpop.f32.mrb[0].mxu0
  %v1004 = vpop.f32.mrb[0].mxu0
  %v1005 = vadd.f32 %v948, %v1004
  %v1006 = vpop.f32.mrb[0].mxu0
  %1007 = vmatprep.mubr.bf16.mxu0 0
  %1008 = vmatmul.mubr.bf16.gmra.mrb[0].mxu0 %v441
  %v1009 = vpop.f32.mrb[0].mxu0
  %v1010 = vadd.f32 %v953, %v1009
  %v1011 = vpop.f32.mrb[0].mxu0
  %v1012 = vpop.f32.mrb[0].mxu0
  %v1013 = vadd.f32 %v956, %v1012
  %v1014 = vpop.f32.mrb[0].mxu0
  %1015 = vdwg.mxu0
  %vm1016 = vcmp.ge.f32.partialorder %v994, 0.0
  %vm1017 = vcmp.ge.f32.partialorder %v997, 0.0
  %vm1018 = vcmp.ge.f32.partialorder %v1002, 0.0
  %vm1019 = vcmp.ge.f32.partialorder %v1005, 0.0
  %vm1020 = vcmp.ge.f32.partialorder %v1010, 0.0
  %vm1021 = vcmp.ge.f32.partialorder %v1013, 0.0
  %v1023 = vlaneseq
  %v1024 = vshrl.u32 %v1023, 7
  %v1025 = vsub.s32 0, %v1024
  %v1026 = vrot.slane %v158, %v1025
  %1027 = vset.pattern.permute.xlu0 0
  %1028 = vperm.xlu0 %1027, %v1026
  %v1029 = vpop.permute.xlu0 %1028
  %v1031 = vmul.f32 %v1029, %v994
  %v1032 = vmul.f32 %v1029, %v997
  %v1033 = vmul.f32 %v1029, %v1002
  %v1034 = vmul.f32 %v1029, %v1005
  %v1035 = vmul.f32 %v1029, %v1010
  %v1036 = vmul.f32 %v1029, %v1013
  %v1037 = vsel %vm1016, %v994, %v1031
  %v1038 = vsel %vm1017, %v997, %v1032
  %v1039 = vsel %vm1018, %v1002, %v1033
  %v1040 = vsel %vm1019, %v1005, %v1034
  %v1041 = vsel %vm1020, %v1010, %v1035
  %v1042 = vsel %vm1021, %v1013, %v1036
  %v1043 = vsel %vm338, 1, 0
  %v1044 = vsel %vm339, 1, 0
  %v1045 = vsel %vm340, 1, 0
  %v1046 = vsel %vm341, 1, 0
  %v1047 = vsel %vm342, 1, 0
  %v1048 = vsel %vm343, 1, 0
  %vm1049 = vcmp.eq.s32.totalorder %v1043, 1
  %vm1050 = vcmp.eq.s32.totalorder %v1044, 1
  %vm1051 = vcmp.eq.s32.totalorder %v1045, 1
  %vm1052 = vcmp.eq.s32.totalorder %v1046, 1
  %vm1053 = vcmp.eq.s32.totalorder %v1047, 1
  %vm1054 = vcmp.eq.s32.totalorder %v1048, 1
  %v1055 = vsel %vm1049, %v1037, 0.0
  %v1056 = vsel %vm1050, %v1038, 0.0
  %v1057 = vsel %vm1051, %v1039, 0.0
  %v1058 = vsel %vm1052, %v1040, 0.0
  %v1059 = vsel %vm1053, %v1041, 0.0
  %v1060 = vsel %vm1054, %v1042, 0.0
  %v1061 = vpack.c.bf16 %v1056, %v1055
  %v1062 = vpack.c.bf16 %v1058, %v1057
  %v1063 = vpack.c.bf16 %v1060, %v1059
  %vm1064 = vsmask.f32 1280
  %v1066 = vshrl.u32 %v1061, 16
  %v1068 = vrot.slane %v1066, 6
  %v1069 = vshll.u32 %v1061, 16
  %v1071 = vrot.slane %v1069, 7
  %v1072 = vor.u32 %v1068, %v1071
  %v1074 = vshrl.u32 %v1062, 16
  %v1076 = vrot.slane %v1074, 6
  %v1077 = vshll.u32 %v1062, 16
  %v1079 = vrot.slane %v1077, 7
  %v1080 = vor.u32 %v1076, %v1079
  %v1081 = vsel %vm1064, %v1072, %v1080
  %v1083 = vshrl.u32 %v1063, 16
  %v1085 = vrot.slane %v1083, 6
  %v1086 = vshll.u32 %v1063, 16
  %v1088 = vrot.slane %v1086, 7
  %v1089 = vor.u32 %v1085, %v1088
  %v1090 = vsel %vm1064, %v1080, %v1089
  %vm1094 = vcmask 1041408
  %vm1095 = vmand %vm1094, %vm1064
  %v1096 = vsel %vm1095, 0, %v1072
  %vm1097 = vmand %vm389, %vm398
  %v1098 = vsel %vm1097, %v1090, 0
  %v1100 = vshrl.u32 %v1096, 16
  %v1102 = vshll.u32 %v1096, 16
  %v1104 = vrot.slane %v1102, 1
  %v1105 = vor.u32 %v1100, %v1104
  %v1107 = vshll.u32 %v1081, 16
  %v1109 = vrot.slane %v1107, 1
  %v1110 = vsel %vm362, %v1105, %v1109
  %v1111 = vshrl.u32 %v1081, 16
  %v1113 = vor.u32 %v1111, %v1109
  %v1115 = vshll.u32 %v1098, 16
  %v1117 = vrot.slane %v1115, 1
  %v1118 = vsel %vm362, %v1113, %v1117
  %v1119 = vshrl.u32 %v1098, 16
  %v1121 = vor.u32 %v1119, %v1117
  %v1127 = vrot.slane %v1096, 1
  %v1128 = vrot.slane %v1081, 1
  %v1129 = vsel %vm389, %v1127, %v1128
  %v1130 = vrot.slane %v1098, 1
  %v1131 = vsel %vm389, %v1128, %v1130
  %v1135 = vrot.slane %v1100, 1
  %v1136 = vrot.slane %v1102, 2
  %v1137 = vor.u32 %v1135, %v1136
  %v1138 = vrot.slane %v1111, 1
  %v1139 = vrot.slane %v1107, 2
  %v1140 = vor.u32 %v1138, %v1139
  %v1141 = vsel %vm398, %v1137, %v1140
  %v1142 = vrot.slane %v1119, 1
  %v1143 = vrot.slane %v1115, 2
  %v1144 = vor.u32 %v1142, %v1143
  %v1145 = vsel %vm398, %v1140, %v1144
  %v1149 = vrot.slane %v1096, 2
  %v1150 = vrot.slane %v1081, 2
  %v1151 = vsel %vm413, %v1149, %v1150
  %v1152 = vrot.slane %v1098, 2
  %v1153 = vsel %vm413, %v1150, %v1152
  %v1157 = vrot.slane %v1100, 2
  %v1158 = vrot.slane %v1102, 3
  %v1159 = vor.u32 %v1157, %v1158
  %v1160 = vrot.slane %v1111, 2
  %v1161 = vrot.slane %v1107, 3
  %v1162 = vor.u32 %v1160, %v1161
  %v1163 = vsel %vm422, %v1159, %v1162
  %v1164 = vrot.slane %v1119, 2
  %v1165 = vrot.slane %v1115, 3
  %v1166 = vor.u32 %v1164, %v1165
  %v1167 = vsel %vm422, %v1162, %v1166
  %v1171 = vrot.slane %v1096, 3
  %v1172 = vrot.slane %v1081, 3
  %v1173 = vsel %vm437, %v1171, %v1172
  %v1174 = vrot.slane %v1098, 3
  %v1175 = vsel %vm437, %v1172, %v1174
  %v1195 = vunpack.c.l.b16 %v271
  %v1196 = vunpack.c.l.b16 %v272
  %v1197 = vunpack.c.l.b16 %v273
  %v1198 = vunpack.c.l.b16 %v274
  %v1199 = vunpack.c.l.b16 %v275
  %v1200 = vunpack.c.l.b16 %v276
  %v1201 = vunpack.c.l.b16 %v277
  %v1202 = vunpack.c.l.b16 %v278
  %v1203 = vunpack.c.l.b16 %v279
  %v1204 = vunpack.c.l.b16 %v280
  %v1205 = vunpack.c.l.b16 %v281
  %v1206 = vunpack.c.l.b16 %v282
  %v1207 = vunpack.c.l.b16 %v283
  %v1208 = vunpack.c.l.b16 %v284
  %v1209 = vunpack.c.l.b16 %v285
  %v1210 = vunpack.c.l.b16 %v286
  %v1211 = vpack.c.b16 %v1196, %v1195
  %v1212 = vpack.c.b16 %v1198, %v1197
  %v1213 = vpack.c.b16 %v1200, %v1199
  %v1214 = vpack.c.b16 %v1202, %v1201
  %v1215 = vpack.c.b16 %v1204, %v1203
  %v1216 = vpack.c.b16 %v1206, %v1205
  %v1217 = vpack.c.b16 %v1208, %v1207
  %v1218 = vpack.c.b16 %v1210, %v1209
  %1227 = vmatprep.subr.bf16.mxu0 0
  %1228 = vmatpush1.bf16.msra.mxu0 %v1211
  %1229 = vmatprep.subr.bf16.mxu0 0
  %1230 = vmatpush1.bf16.msra.mxu0 %v1212
  %1231 = vmatprep.subr.bf16.mxu0 0
  %1232 = vmatpush1.bf16.msra.mxu0 %v1213
  %1233 = vmatprep.subr.bf16.mxu0 0
  %1234 = vmatpush1.bf16.msra.mxu0 %v1214
  %1235 = vmatprep.subr.bf16.mxu0 0
  %1236 = vmatpush1.bf16.msra.mxu0 %v1215
  %1237 = vmatprep.subr.bf16.mxu0 0
  %1238 = vmatpush1.bf16.msra.mxu0 %v1216
  %1239 = vmatprep.subr.bf16.mxu0 0
  %1240 = vmatpush1.bf16.msra.mxu0 %v1217
  %1241 = vmatprep.subr.bf16.mxu0 0
  %1242 = vmatpush1.bf16.msra.mxu0 %v1218
  %1243 = vmatprep.subr.bf16.mxu0 0
  %1244 = vmatpush1.bf16.msra.mxu0 0
  %1245 = vmatprep.subr.bf16.mxu0 0
  %1246 = vmatpush1.bf16.msra.mxu0 0
  %1247 = vmatprep.subr.bf16.mxu0 0
  %1248 = vmatpush1.bf16.msra.mxu0 0
  %1249 = vmatprep.subr.bf16.mxu0 0
  %1250 = vmatpush1.bf16.msra.mxu0 0
  %1251 = vmatprep.subr.bf16.mxu0 0
  %1252 = vmatpush1.bf16.msra.mxu0 0
  %1253 = vmatprep.subr.bf16.mxu0 0
  %1254 = vmatpush1.bf16.msra.mxu0 0
  %1255 = vmatprep.subr.bf16.mxu0 0
  %1256 = vmatpush1.bf16.msra.mxu0 0
  %1257 = vmatprep.subr.bf16.mxu0 0
  %1258 = vmatpush1.bf16.msra.mxu0 0
  %1259 = vmatprep.mubr.bf16.mxu0 0
  %1260 = vmatmul.mubr.bf16.gmra.mrb[0].mxu0 %v405
  %v1261 = vpop.f32.mrb[0].mxu0
  %v1262 = vadd.f32 0.0, %v1261
  %v1263 = vpop.f32.mrb[0].mxu0
  %v1264 = vpop.f32.mrb[0].mxu0
  %v1265 = vadd.f32 0.0, %v1264
  %v1266 = vpop.f32.mrb[0].mxu0
  %1267 = vmatprep.mubr.bf16.mxu0 0
  %1268 = vmatmul.mubr.bf16.gmra.mrb[0].mxu0 %v409
  %v1269 = vpop.f32.mrb[0].mxu0
  %v1270 = vadd.f32 0.0, %v1269
  %v1271 = vpop.f32.mrb[0].mxu0
  %v1272 = vpop.f32.mrb[0].mxu0
  %v1273 = vadd.f32 0.0, %v1272
  %v1274 = vpop.f32.mrb[0].mxu0
  %1275 = vmatprep.mubr.bf16.mxu0 0
  %1276 = vmatmul.mubr.bf16.gmra.mrb[0].mxu0 %v408
  %v1277 = vpop.f32.mrb[0].mxu0
  %v1278 = vadd.f32 0.0, %v1277
  %v1279 = vpop.f32.mrb[0].mxu0
  %v1280 = vpop.f32.mrb[0].mxu0
  %v1281 = vadd.f32 0.0, %v1280
  %v1282 = vpop.f32.mrb[0].mxu0
  %1283 = vdwg.mxu0
  %v1396 = vunpack.c.l.b16 %v159
  %v1397 = vunpack.c.l.b16 %v160
  %v1398 = vunpack.c.l.b16 %v161
  %v1399 = vunpack.c.l.b16 %v162
  %v1400 = vunpack.c.l.b16 %v163
  %v1401 = vunpack.c.l.b16 %v164
  %v1402 = vunpack.c.l.b16 %v165
  %v1403 = vunpack.c.l.b16 %v166
  %v1404 = vunpack.c.l.b16 %v167
  %v1405 = vunpack.c.l.b16 %v168
  %v1406 = vunpack.c.l.b16 %v169
  %v1407 = vunpack.c.l.b16 %v170
  %v1408 = vunpack.c.l.b16 %v171
  %v1409 = vunpack.c.l.b16 %v172
  %v1410 = vunpack.c.l.b16 %v173
  %v1411 = vunpack.c.l.b16 %v174
  %v1412 = vunpack.c.l.b16 %v175
  %v1413 = vunpack.c.l.b16 %v176
  %v1414 = vunpack.c.l.b16 %v177
  %v1415 = vunpack.c.l.b16 %v178
  %v1416 = vunpack.c.l.b16 %v179
  %v1417 = vunpack.c.l.b16 %v180
  %v1418 = vunpack.c.l.b16 %v181
  %v1419 = vunpack.c.l.b16 %v182
  %v1420 = vunpack.c.l.b16 %v183
  %v1421 = vunpack.c.l.b16 %v184
  %v1422 = vunpack.c.l.b16 %v185
  %v1423 = vunpack.c.l.b16 %v186
  %v1424 = vunpack.c.l.b16 %v187
  %v1425 = vunpack.c.l.b16 %v188
  %v1426 = vunpack.c.l.b16 %v189
  %v1427 = vunpack.c.l.b16 %v190
  %v1428 = vunpack.c.l.b16 %v191
  %v1429 = vunpack.c.l.b16 %v192
  %v1430 = vunpack.c.l.b16 %v193
  %v1431 = vunpack.c.l.b16 %v194
  %v1432 = vunpack.c.l.b16 %v195
  %v1433 = vunpack.c.l.b16 %v196
  %v1434 = vunpack.c.l.b16 %v197
  %v1435 = vunpack.c.l.b16 %v198
  %v1436 = vunpack.c.l.b16 %v199
  %v1437 = vunpack.c.l.b16 %v200
  %v1438 = vunpack.c.l.b16 %v201
  %v1439 = vunpack.c.l.b16 %v202
  %v1440 = vunpack.c.l.b16 %v203
  %v1441 = vunpack.c.l.b16 %v204
  %v1442 = vunpack.c.l.b16 %v205
  %v1443 = vunpack.c.l.b16 %v206
  %v1444 = vunpack.c.l.b16 %v207
  %v1445 = vunpack.c.l.b16 %v208
  %v1446 = vunpack.c.l.b16 %v209
  %v1447 = vunpack.c.l.b16 %v210
  %v1448 = vunpack.c.l.b16 %v211
  %v1449 = vunpack.c.l.b16 %v212
  %v1450 = vunpack.c.l.b16 %v213
  %v1451 = vunpack.c.l.b16 %v214
  %v1452 = vunpack.c.l.b16 %v215
  %v1453 = vunpack.c.l.b16 %v216
  %v1454 = vunpack.c.l.b16 %v217
  %v1455 = vunpack.c.l.b16 %v218
  %v1456 = vunpack.c.l.b16 %v219
  %v1457 = vunpack.c.l.b16 %v220
  %v1458 = vunpack.c.l.b16 %v221
  %v1459 = vunpack.c.l.b16 %v222
  %v1460 = vunpack.c.l.b16 %v223
  %v1461 = vunpack.c.l.b16 %v224
  %v1462 = vunpack.c.l.b16 %v225
  %v1463 = vunpack.c.l.b16 %v226
  %v1464 = vunpack.c.l.b16 %v227
  %v1465 = vunpack.c.l.b16 %v228
  %v1466 = vunpack.c.l.b16 %v229
  %v1467 = vunpack.c.l.b16 %v230
  %v1468 = vunpack.c.l.b16 %v231
  %v1469 = vunpack.c.l.b16 %v232
  %v1470 = vunpack.c.l.b16 %v233
  %v1471 = vunpack.c.l.b16 %v234
  %v1472 = vunpack.c.l.b16 %v235
  %v1473 = vunpack.c.l.b16 %v236
  %v1474 = vunpack.c.l.b16 %v237
  %v1475 = vunpack.c.l.b16 %v238
  %v1476 = vunpack.c.l.b16 %v239
  %v1477 = vunpack.c.l.b16 %v240
  %v1478 = vunpack.c.l.b16 %v241
  %v1479 = vunpack.c.l.b16 %v242
  %v1480 = vunpack.c.l.b16 %v243
  %v1481 = vunpack.c.l.b16 %v244
  %v1482 = vunpack.c.l.b16 %v245
  %v1483 = vunpack.c.l.b16 %v246
  %v1484 = vunpack.c.l.b16 %v247
  %v1485 = vunpack.c.l.b16 %v248
  %v1486 = vunpack.c.l.b16 %v249
  %v1487 = vunpack.c.l.b16 %v250
  %v1488 = vunpack.c.l.b16 %v251
  %v1489 = vunpack.c.l.b16 %v252
  %v1490 = vunpack.c.l.b16 %v253
  %v1491 = vunpack.c.l.b16 %v254
  %v1492 = vunpack.c.l.b16 %v255
  %v1493 = vunpack.c.l.b16 %v256
  %v1494 = vunpack.c.l.b16 %v257
  %v1495 = vunpack.c.l.b16 %v258
  %v1496 = vunpack.c.l.b16 %v259
  %v1497 = vunpack.c.l.b16 %v260
  %v1498 = vunpack.c.l.b16 %v261
  %v1499 = vunpack.c.l.b16 %v262
  %v1500 = vunpack.c.l.b16 %v263
  %v1501 = vunpack.c.l.b16 %v264
  %v1502 = vunpack.c.l.b16 %v265
  %v1503 = vunpack.c.l.b16 %v266
  %v1504 = vunpack.c.l.b16 %v267
  %v1505 = vunpack.c.l.b16 %v268
  %v1506 = vunpack.c.l.b16 %v269
  %v1507 = vunpack.c.l.b16 %v270
  %v1508 = vpack.c.b16 %v1397, %v1396
  %v1509 = vpack.c.b16 %v1399, %v1398
  %v1510 = vpack.c.b16 %v1401, %v1400
  %v1511 = vpack.c.b16 %v1403, %v1402
  %v1512 = vpack.c.b16 %v1405, %v1404
  %v1513 = vpack.c.b16 %v1407, %v1406
  %v1514 = vpack.c.b16 %v1409, %v1408
  %v1515 = vpack.c.b16 %v1411, %v1410
  %v1516 = vpack.c.b16 %v1413, %v1412
  %v1517 = vpack.c.b16 %v1415, %v1414
  %v1518 = vpack.c.b16 %v1417, %v1416
  %v1519 = vpack.c.b16 %v1419, %v1418
  %v1520 = vpack.c.b16 %v1421, %v1420
  %v1521 = vpack.c.b16 %v1423, %v1422
  %v1522 = vpack.c.b16 %v1425, %v1424
  %v1523 = vpack.c.b16 %v1427, %v1426
  %v1524 = vpack.c.b16 %v1429, %v1428
  %v1525 = vpack.c.b16 %v1431, %v1430
  %v1526 = vpack.c.b16 %v1433, %v1432
  %v1527 = vpack.c.b16 %v1435, %v1434
  %v1528 = vpack.c.b16 %v1437, %v1436
  %v1529 = vpack.c.b16 %v1439, %v1438
  %v1530 = vpack.c.b16 %v1441, %v1440
  %v1531 = vpack.c.b16 %v1443, %v1442
  %v1532 = vpack.c.b16 %v1445, %v1444
  %v1533 = vpack.c.b16 %v1447, %v1446
  %v1534 = vpack.c.b16 %v1449, %v1448
  %v1535 = vpack.c.b16 %v1451, %v1450
  %v1536 = vpack.c.b16 %v1453, %v1452
  %v1537 = vpack.c.b16 %v1455, %v1454
  %v1538 = vpack.c.b16 %v1457, %v1456
  %v1539 = vpack.c.b16 %v1459, %v1458
  %v1540 = vpack.c.b16 %v1461, %v1460
  %v1541 = vpack.c.b16 %v1463, %v1462
  %v1542 = vpack.c.b16 %v1465, %v1464
  %v1543 = vpack.c.b16 %v1467, %v1466
  %v1544 = vpack.c.b16 %v1469, %v1468
  %v1545 = vpack.c.b16 %v1471, %v1470
  %v1546 = vpack.c.b16 %v1473, %v1472
  %v1547 = vpack.c.b16 %v1475, %v1474
  %v1548 = vpack.c.b16 %v1477, %v1476
  %v1549 = vpack.c.b16 %v1479, %v1478
  %v1550 = vpack.c.b16 %v1481, %v1480
  %v1551 = vpack.c.b16 %v1483, %v1482
  %v1552 = vpack.c.b16 %v1485, %v1484
  %v1553 = vpack.c.b16 %v1487, %v1486
  %v1554 = vpack.c.b16 %v1489, %v1488
  %v1555 = vpack.c.b16 %v1491, %v1490
  %v1556 = vpack.c.b16 %v1493, %v1492
  %v1557 = vpack.c.b16 %v1495, %v1494
  %v1558 = vpack.c.b16 %v1497, %v1496
  %v1559 = vpack.c.b16 %v1499, %v1498
  %v1560 = vpack.c.b16 %v1501, %v1500
  %v1561 = vpack.c.b16 %v1503, %v1502
  %v1562 = vpack.c.b16 %v1505, %v1504
  %v1563 = vpack.c.b16 %v1507, %v1506
  %1620 = vmatprep.subr.bf16.mxu0 0
  %1621 = vmatpush1.bf16.msra.mxu0 %v1508
  %1622 = vmatprep.subr.bf16.mxu0 0
  %1623 = vmatpush1.bf16.msra.mxu0 %v1509
  %1624 = vmatprep.subr.bf16.mxu0 0
  %1625 = vmatpush1.bf16.msra.mxu0 %v1510
  %1626 = vmatprep.subr.bf16.mxu0 0
  %1627 = vmatpush1.bf16.msra.mxu0 %v1511
  %1628 = vmatprep.subr.bf16.mxu0 0
  %1629 = vmatpush1.bf16.msra.mxu0 %v1512
  %1630 = vmatprep.subr.bf16.mxu0 0
  %1631 = vmatpush1.bf16.msra.mxu0 %v1513
  %1632 = vmatprep.subr.bf16.mxu0 0
  %1633 = vmatpush1.bf16.msra.mxu0 %v1514
  %1634 = vmatprep.subr.bf16.mxu0 0
  %1635 = vmatpush1.bf16.msra.mxu0 %v1515
  %1636 = vmatprep.subr.bf16.mxu0 0
  %1637 = vmatpush1.bf16.msra.mxu0 %v1516
  %1638 = vmatprep.subr.bf16.mxu0 0
  %1639 = vmatpush1.bf16.msra.mxu0 %v1517
  %1640 = vmatprep.subr.bf16.mxu0 0
  %1641 = vmatpush1.bf16.msra.mxu0 %v1518
  %1642 = vmatprep.subr.bf16.mxu0 0
  %1643 = vmatpush1.bf16.msra.mxu0 %v1519
  %1644 = vmatprep.subr.bf16.mxu0 0
  %1645 = vmatpush1.bf16.msra.mxu0 %v1520
  %1646 = vmatprep.subr.bf16.mxu0 0
  %1647 = vmatpush1.bf16.msra.mxu0 %v1521
  %1648 = vmatprep.subr.bf16.mxu0 0
  %1649 = vmatpush1.bf16.msra.mxu0 %v1522
  %1650 = vmatprep.subr.bf16.mxu0 0
  %1651 = vmatpush1.bf16.msra.mxu0 %v1523
  %1652 = vmatprep.mubr.bf16.mxu0 %v1110
  %1653 = vmatmul.mubr.bf16.gmra.mrb[0].mxu0 %v1096
  %v1654 = vpop.f32.mrb[0].mxu0
  %v1655 = vadd.f32 %v1262, %v1654
  %v1656 = vpop.f32.mrb[0].mxu0
  %v1657 = vpop.f32.mrb[0].mxu0
  %v1658 = vadd.f32 %v1265, %v1657
  %v1659 = vpop.f32.mrb[0].mxu0
  %1660 = vmatprep.mubr.bf16.mxu0 %v1118
  %1661 = vmatmul.mubr.bf16.gmra.mrb[0].mxu0 %v1081
  %v1662 = vpop.f32.mrb[0].mxu0
  %v1663 = vadd.f32 %v1270, %v1662
  %v1664 = vpop.f32.mrb[0].mxu0
  %v1665 = vpop.f32.mrb[0].mxu0
  %v1666 = vadd.f32 %v1273, %v1665
  %v1667 = vpop.f32.mrb[0].mxu0
  %1668 = vmatprep.mubr.bf16.mxu0 %v1121
  %1669 = vmatmul.mubr.bf16.gmra.mrb[0].mxu0 %v1098
  %v1670 = vpop.f32.mrb[0].mxu0
  %v1671 = vadd.f32 %v1278, %v1670
  %v1672 = vpop.f32.mrb[0].mxu0
  %v1673 = vpop.f32.mrb[0].mxu0
  %v1674 = vadd.f32 %v1281, %v1673
  %v1675 = vpop.f32.mrb[0].mxu0
  %1676 = vdwg.mxu0
  %1677 = vmatprep.subr.bf16.mxu0 0
  %1678 = vmatpush1.bf16.msra.mxu0 %v1524
  %1679 = vmatprep.subr.bf16.mxu0 0
  %1680 = vmatpush1.bf16.msra.mxu0 %v1525
  %1681 = vmatprep.subr.bf16.mxu0 0
  %1682 = vmatpush1.bf16.msra.mxu0 %v1526
  %1683 = vmatprep.subr.bf16.mxu0 0
  %1684 = vmatpush1.bf16.msra.mxu0 %v1527
  %1685 = vmatprep.subr.bf16.mxu0 0
  %1686 = vmatpush1.bf16.msra.mxu0 %v1528
  %1687 = vmatprep.subr.bf16.mxu0 0
  %1688 = vmatpush1.bf16.msra.mxu0 %v1529
  %1689 = vmatprep.subr.bf16.mxu0 0
  %1690 = vmatpush1.bf16.msra.mxu0 %v1530
  %1691 = vmatprep.subr.bf16.mxu0 0
  %1692 = vmatpush1.bf16.msra.mxu0 %v1531
  %1693 = vmatprep.subr.bf16.mxu0 0
  %1694 = vmatpush1.bf16.msra.mxu0 %v1532
  %1695 = vmatprep.subr.bf16.mxu0 0
  %1696 = vmatpush1.bf16.msra.mxu0 %v1533
  %1697 = vmatprep.subr.bf16.mxu0 0
  %1698 = vmatpush1.bf16.msra.mxu0 %v1534
  %1699 = vmatprep.subr.bf16.mxu0 0
  %1700 = vmatpush1.bf16.msra.mxu0 %v1535
  %1701 = vmatprep.subr.bf16.mxu0 0
  %1702 = vmatpush1.bf16.msra.mxu0 %v1536
  %1703 = vmatprep.subr.bf16.mxu0 0
  %1704 = vmatpush1.bf16.msra.mxu0 %v1537
  %1705 = vmatprep.subr.bf16.mxu0 0
  %1706 = vmatpush1.bf16.msra.mxu0 %v1538
  %1707 = vmatprep.subr.bf16.mxu0 0
  %1708 = vmatpush1.bf16.msra.mxu0 %v1539
  %1709 = vmatprep.mubr.bf16.mxu0 %v1141
  %1710 = vmatmul.mubr.bf16.gmra.mrb[0].mxu0 %v1129
  %v1711 = vpop.f32.mrb[0].mxu0
  %v1712 = vadd.f32 %v1655, %v1711
  %v1713 = vpop.f32.mrb[0].mxu0
  %v1714 = vpop.f32.mrb[0].mxu0
  %v1715 = vadd.f32 %v1658, %v1714
  %v1716 = vpop.f32.mrb[0].mxu0
  %1717 = vmatprep.mubr.bf16.mxu0 %v1145
  %1718 = vmatmul.mubr.bf16.gmra.mrb[0].mxu0 %v1131
  %v1719 = vpop.f32.mrb[0].mxu0
  %v1720 = vadd.f32 %v1663, %v1719
  %v1721 = vpop.f32.mrb[0].mxu0
  %v1722 = vpop.f32.mrb[0].mxu0
  %v1723 = vadd.f32 %v1666, %v1722
  %v1724 = vpop.f32.mrb[0].mxu0
  %1725 = vmatprep.mubr.bf16.mxu0 %v1144
  %1726 = vmatmul.mubr.bf16.gmra.mrb[0].mxu0 %v1130
  %v1727 = vpop.f32.mrb[0].mxu0
  %v1728 = vadd.f32 %v1671, %v1727
  %v1729 = vpop.f32.mrb[0].mxu0
  %v1730 = vpop.f32.mrb[0].mxu0
  %v1731 = vadd.f32 %v1674, %v1730
  %v1732 = vpop.f32.mrb[0].mxu0
  %1733 = vdwg.mxu0
  %1734 = vmatprep.subr.bf16.mxu0 0
  %1735 = vmatpush1.bf16.msra.mxu0 %v1540
  %1736 = vmatprep.subr.bf16.mxu0 0
  %1737 = vmatpush1.bf16.msra.mxu0 %v1541
  %1738 = vmatprep.subr.bf16.mxu0 0
  %1739 = vmatpush1.bf16.msra.mxu0 %v1542
  %1740 = vmatprep.subr.bf16.mxu0 0
  %1741 = vmatpush1.bf16.msra.mxu0 %v1543
  %1742 = vmatprep.subr.bf16.mxu0 0
  %1743 = vmatpush1.bf16.msra.mxu0 %v1544
  %1744 = vmatprep.subr.bf16.mxu0 0
  %1745 = vmatpush1.bf16.msra.mxu0 %v1545
  %1746 = vmatprep.subr.bf16.mxu0 0
  %1747 = vmatpush1.bf16.msra.mxu0 %v1546
  %1748 = vmatprep.subr.bf16.mxu0 0
  %1749 = vmatpush1.bf16.msra.mxu0 %v1547
  %1750 = vmatprep.subr.bf16.mxu0 0
  %1751 = vmatpush1.bf16.msra.mxu0 %v1548
  %1752 = vmatprep.subr.bf16.mxu0 0
  %1753 = vmatpush1.bf16.msra.mxu0 %v1549
  %1754 = vmatprep.subr.bf16.mxu0 0
  %1755 = vmatpush1.bf16.msra.mxu0 %v1550
  %1756 = vmatprep.subr.bf16.mxu0 0
  %1757 = vmatpush1.bf16.msra.mxu0 %v1551
  %1758 = vmatprep.subr.bf16.mxu0 0
  %1759 = vmatpush1.bf16.msra.mxu0 %v1552
  %1760 = vmatprep.subr.bf16.mxu0 0
  %1761 = vmatpush1.bf16.msra.mxu0 %v1553
  %1762 = vmatprep.subr.bf16.mxu0 0
  %1763 = vmatpush1.bf16.msra.mxu0 %v1554
  %1764 = vmatprep.subr.bf16.mxu0 0
  %1765 = vmatpush1.bf16.msra.mxu0 %v1555
  %1766 = vmatprep.mubr.bf16.mxu0 %v1163
  %1767 = vmatmul.mubr.bf16.gmra.mrb[0].mxu0 %v1151
  %v1768 = vpop.f32.mrb[0].mxu0
  %v1769 = vadd.f32 %v1712, %v1768
  %v1770 = vpop.f32.mrb[0].mxu0
  %v1771 = vpop.f32.mrb[0].mxu0
  %v1772 = vadd.f32 %v1715, %v1771
  %v1773 = vpop.f32.mrb[0].mxu0
  %1774 = vmatprep.mubr.bf16.mxu0 %v1167
  %1775 = vmatmul.mubr.bf16.gmra.mrb[0].mxu0 %v1153
  %v1776 = vpop.f32.mrb[0].mxu0
  %v1777 = vadd.f32 %v1720, %v1776
  %v1778 = vpop.f32.mrb[0].mxu0
  %v1779 = vpop.f32.mrb[0].mxu0
  %v1780 = vadd.f32 %v1723, %v1779
  %v1781 = vpop.f32.mrb[0].mxu0
  %1782 = vmatprep.mubr.bf16.mxu0 %v1166
  %1783 = vmatmul.mubr.bf16.gmra.mrb[0].mxu0 %v1152
  %v1784 = vpop.f32.mrb[0].mxu0
  %v1785 = vadd.f32 %v1728, %v1784
  %v1786 = vpop.f32.mrb[0].mxu0
  %v1787 = vpop.f32.mrb[0].mxu0
  %v1788 = vadd.f32 %v1731, %v1787
  %v1789 = vpop.f32.mrb[0].mxu0
  %1790 = vdwg.mxu0
  %1791 = vmatprep.subr.bf16.mxu0 0
  %1792 = vmatpush1.bf16.msra.mxu0 %v1556
  %1793 = vmatprep.subr.bf16.mxu0 0
  %1794 = vmatpush1.bf16.msra.mxu0 %v1557
  %1795 = vmatprep.subr.bf16.mxu0 0
  %1796 = vmatpush1.bf16.msra.mxu0 %v1558
  %1797 = vmatprep.subr.bf16.mxu0 0
  %1798 = vmatpush1.bf16.msra.mxu0 %v1559
  %1799 = vmatprep.subr.bf16.mxu0 0
  %1800 = vmatpush1.bf16.msra.mxu0 %v1560
  %1801 = vmatprep.subr.bf16.mxu0 0
  %1802 = vmatpush1.bf16.msra.mxu0 %v1561
  %1803 = vmatprep.subr.bf16.mxu0 0
  %1804 = vmatpush1.bf16.msra.mxu0 %v1562
  %1805 = vmatprep.subr.bf16.mxu0 0
  %1806 = vmatpush1.bf16.msra.mxu0 %v1563
  %1807 = vmatprep.subr.bf16.mxu0 0
  %1808 = vmatpush1.bf16.msra.mxu0 0
  %1809 = vmatprep.subr.bf16.mxu0 0
  %1810 = vmatpush1.bf16.msra.mxu0 0
  %1811 = vmatprep.subr.bf16.mxu0 0
  %1812 = vmatpush1.bf16.msra.mxu0 0
  %1813 = vmatprep.subr.bf16.mxu0 0
  %1814 = vmatpush1.bf16.msra.mxu0 0
  %1815 = vmatprep.subr.bf16.mxu0 0
  %1816 = vmatpush1.bf16.msra.mxu0 0
  %1817 = vmatprep.subr.bf16.mxu0 0
  %1818 = vmatpush1.bf16.msra.mxu0 0
  %1819 = vmatprep.subr.bf16.mxu0 0
  %1820 = vmatpush1.bf16.msra.mxu0 0
  %1821 = vmatprep.subr.bf16.mxu0 0
  %1822 = vmatpush1.bf16.msra.mxu0 0
  %1823 = vmatprep.mubr.bf16.mxu0 0
  %1824 = vmatmul.mubr.bf16.gmra.mrb[0].mxu0 %v1173
  %v1825 = vpop.f32.mrb[0].mxu0
  %v1826 = vadd.f32 %v1769, %v1825
  %v1827 = vpop.f32.mrb[0].mxu0
  %v1828 = vpop.f32.mrb[0].mxu0
  %v1829 = vadd.f32 %v1772, %v1828
  %v1830 = vpop.f32.mrb[0].mxu0
  %1831 = vmatprep.mubr.bf16.mxu0 0
  %1832 = vmatmul.mubr.bf16.gmra.mrb[0].mxu0 %v1175
  %v1833 = vpop.f32.mrb[0].mxu0
  %v1834 = vadd.f32 %v1777, %v1833
  %v1835 = vpop.f32.mrb[0].mxu0
  %v1836 = vpop.f32.mrb[0].mxu0
  %v1837 = vadd.f32 %v1780, %v1836
  %v1838 = vpop.f32.mrb[0].mxu0
  %1839 = vmatprep.mubr.bf16.mxu0 0
  %1840 = vmatmul.mubr.bf16.gmra.mrb[0].mxu0 %v1174
  %v1841 = vpop.f32.mrb[0].mxu0
  %v1842 = vadd.f32 %v1785, %v1841
  %v1843 = vpop.f32.mrb[0].mxu0
  %v1844 = vpop.f32.mrb[0].mxu0
  %v1845 = vadd.f32 %v1788, %v1844
  %v1846 = vpop.f32.mrb[0].mxu0
  %1847 = vdwg.mxu0
  %v1849 = vlaneseq
  %v1850 = vshrl.u32 %v1849, 7
  %v1851 = vsub.s32 0, %v1850
  %v1852 = vrot.slane %v287, %v1851
  %v1854 = vadd.f32 %v1826, %v1852
  %v1855 = vadd.f32 %v1829, %v1852
  %v1856 = vadd.f32 %v1834, %v1852
  %v1857 = vadd.f32 %v1837, %v1852
  %v1858 = vadd.f32 %v1842, %v1852
  %v1859 = vadd.f32 %v1845, %v1852
  %vm1860 = vcmp.ge.f32.partialorder %v1854, 0.0
  %vm1861 = vcmp.ge.f32.partialorder %v1855, 0.0
  %vm1862 = vcmp.ge.f32.partialorder %v1856, 0.0
  %vm1863 = vcmp.ge.f32.partialorder %v1857, 0.0
  %vm1864 = vcmp.ge.f32.partialorder %v1858, 0.0
  %vm1865 = vcmp.ge.f32.partialorder %v1859, 0.0
  %v1867 = vlaneseq
  %v1868 = vshrl.u32 %v1867, 7
  %v1869 = vsub.s32 0, %v1868
  %v1870 = vrot.slane %v288, %v1869
  %1871 = vset.pattern.permute.xlu0 0
  %1872 = vperm.xlu0 %1871, %v1870
  %v1873 = vpop.permute.xlu0 %1872
  %v1875 = vmul.f32 %v1873, %v1854
  %v1876 = vmul.f32 %v1873, %v1855
  %v1877 = vmul.f32 %v1873, %v1856
  %v1878 = vmul.f32 %v1873, %v1857
  %v1879 = vmul.f32 %v1873, %v1858
  %v1880 = vmul.f32 %v1873, %v1859
  %v1881 = vsel %vm1860, %v1854, %v1875
  %v1882 = vsel %vm1861, %v1855, %v1876
  %v1883 = vsel %vm1862, %v1856, %v1877
  %v1884 = vsel %vm1863, %v1857, %v1878
  %v1885 = vsel %vm1864, %v1858, %v1879
  %v1886 = vsel %vm1865, %v1859, %v1880
  %v1887 = vpack.c.bf16 %v1882, %v1881
  %v1888 = vpack.c.bf16 %v1884, %v1883
  %v1889 = vpack.c.bf16 %v1886, %v1885
  %v1891 = vshrl.u32 %v1887, 16
  %v1893 = vrot.slane %v1891, 6
  %v1894 = vshll.u32 %v1887, 16
  %v1896 = vrot.slane %v1894, 7
  %v1897 = vor.u32 %v1893, %v1896
  %v1899 = vshrl.u32 %v1888, 16
  %v1901 = vrot.slane %v1899, 6
  %v1902 = vshll.u32 %v1888, 16
  %v1904 = vrot.slane %v1902, 7
  %v1905 = vor.u32 %v1901, %v1904
  %v1906 = vsel %vm1064, %v1897, %v1905
  %v1908 = vshrl.u32 %v1889, 16
  %v1910 = vrot.slane %v1908, 6
  %v1911 = vshll.u32 %v1889, 16
  %v1913 = vrot.slane %v1911, 7
  %v1914 = vor.u32 %v1910, %v1913
  %v1915 = vsel %vm1064, %v1905, %v1914
  %v1918 = vsel %vm1095, 0, %v1897
  %v1919 = vsel %vm1097, %v1915, 0
  %v1922 = vunpack.c.l.b16 %v37
  %v1923 = vunpack.c.l.b16 %v38
  %v1924 = vpack.c.b16 %v1923, %v1922
  %vm1925 = vcmask 195584
  %v1927 = vsel %vm1925, %v1924, 0
  %vm1929 = vcmask 1043456
  %v1931 = vsel %vm1929, %v1906, 0
  %1933 = vmatprep.subr.bf16.mxu0 0
  %1934 = vmatpush1.bf16.msra.mxu0 %v1918
  %1935 = vmatprep.subr.bf16.mxu0 0
  %1936 = vmatpush1.bf16.msra.mxu0 %v1931
  %1937 = vmatprep.subr.bf16.mxu0 0
  %1938 = vmatpush1.bf16.msra.mxu0 0
  %1939 = vmatprep.subr.bf16.mxu0 0
  %1940 = vmatpush1.bf16.msra.mxu0 0
  %1941 = vmatprep.subr.bf16.mxu0 0
  %1942 = vmatpush1.bf16.msra.mxu0 0
  %1943 = vmatprep.subr.bf16.mxu0 0
  %1944 = vmatpush1.bf16.msra.mxu0 0
  %1945 = vmatprep.subr.bf16.mxu0 0
  %1946 = vmatpush1.bf16.msra.mxu0 0
  %1947 = vmatprep.subr.bf16.mxu0 0
  %1948 = vmatpush1.bf16.msra.mxu0 0
  %1949 = vmatprep.subr.bf16.mxu0 0
  %1950 = vmatpush1.bf16.msra.mxu0 0
  %1951 = vmatprep.subr.bf16.mxu0 0
  %1952 = vmatpush1.bf16.msra.mxu0 0
  %1953 = vmatprep.subr.bf16.mxu0 0
  %1954 = vmatpush1.bf16.msra.mxu0 0
  %1955 = vmatprep.subr.bf16.mxu0 0
  %1956 = vmatpush1.bf16.msra.mxu0 0
  %1957 = vmatprep.subr.bf16.mxu0 0
  %1958 = vmatpush1.bf16.msra.mxu0 0
  %1959 = vmatprep.subr.bf16.mxu0 0
  %1960 = vmatpush1.bf16.msra.mxu0 0
  %1961 = vmatprep.subr.bf16.mxu0 0
  %1962 = vmatpush1.bf16.msra.mxu0 0
  %1963 = vmatprep.subr.bf16.mxu0 0
  %1964 = vmatpush1.bf16.msra.mxu0 0
  %1965 = vmatprep.mubr.bf16.mxu0 0
  %1966 = vmatmul.mubr.bf16.gmra.mrb[0].mxu0 %v1927
  %v1967 = vpop.f32.mrb[0].mxu0
  %v1968 = vadd.f32 0.0, %v1967
  %v1969 = vpop.f32.mrb[0].mxu0
  %v1970 = vpop.f32.mrb[0].mxu0
  %v1971 = vadd.f32 0.0, %v1970
  %v1972 = vpop.f32.mrb[0].mxu0
  %1973 = vdwg.mxu0
  %vm1975 = vcmask 1043456
  %v1976 = vrot.slane %v1906, 4
  %v1977 = vrot.slane %v1919, 4
  %v1978 = vsel %vm1975, %v1976, %v1977
  %v1981 = vsel %vm1929, %v1977, 0
  %1983 = vmatprep.subr.bf16.mxu0 0
  %1984 = vmatpush1.bf16.msra.mxu0 %v1978
  %1985 = vmatprep.subr.bf16.mxu0 0
  %1986 = vmatpush1.bf16.msra.mxu0 %v1981
  %1987 = vmatprep.subr.bf16.mxu0 0
  %1988 = vmatpush1.bf16.msra.mxu0 0
  %1989 = vmatprep.subr.bf16.mxu0 0
  %1990 = vmatpush1.bf16.msra.mxu0 0
  %1991 = vmatprep.subr.bf16.mxu0 0
  %1992 = vmatpush1.bf16.msra.mxu0 0
  %1993 = vmatprep.subr.bf16.mxu0 0
  %1994 = vmatpush1.bf16.msra.mxu0 0
  %1995 = vmatprep.subr.bf16.mxu0 0
  %1996 = vmatpush1.bf16.msra.mxu0 0
  %1997 = vmatprep.subr.bf16.mxu0 0
  %1998 = vmatpush1.bf16.msra.mxu0 0
  %1999 = vmatprep.subr.bf16.mxu0 0
  %2000 = vmatpush1.bf16.msra.mxu0 0
  %2001 = vmatprep.subr.bf16.mxu0 0
  %2002 = vmatpush1.bf16.msra.mxu0 0
  %2003 = vmatprep.subr.bf16.mxu0 0
  %2004 = vmatpush1.bf16.msra.mxu0 0
  %2005 = vmatprep.subr.bf16.mxu0 0
  %2006 = vmatpush1.bf16.msra.mxu0 0
  %2007 = vmatprep.subr.bf16.mxu0 0
  %2008 = vmatpush1.bf16.msra.mxu0 0
  %2009 = vmatprep.subr.bf16.mxu0 0
  %2010 = vmatpush1.bf16.msra.mxu0 0
  %2011 = vmatprep.subr.bf16.mxu0 0
  %2012 = vmatpush1.bf16.msra.mxu0 0
  %2013 = vmatprep.subr.bf16.mxu0 0
  %2014 = vmatpush1.bf16.msra.mxu0 0
  %2015 = vmatprep.mubr.bf16.mxu0 0
  %2016 = vmatmul.mubr.bf16.gmra.mrb[0].mxu0 %v1927
  %v2017 = vpop.f32.mrb[0].mxu0
  %v2018 = vadd.f32 0.0, %v2017
  %v2019 = vpop.f32.mrb[0].mxu0
  %v2020 = vpop.f32.mrb[0].mxu0
  %v2021 = vadd.f32 0.0, %v2020
  %v2022 = vpop.f32.mrb[0].mxu0
  %2023 = vdwg.mxu0
  %v2024 = vpack.c.bf16 %v1971, %v1968
  %v2025 = vpack.c.bf16 %v2021, %v2018
  %v2028 = vunpack.c.l.b16 %v2024
  %v2029 = vunpack.c.h.b16 %v2024
  %v2030 = vunpack.c.l.b16 %v2025
  %v2031 = vunpack.c.h.b16 %v2025
  %v2032 = vpack.c.b16 %v2028, %v2028
  %v2033 = vpack.c.b16 %v2029, %v2029
  %v2034 = vpack.c.b16 %v2030, %v2030
  %v2035 = vpack.c.b16 %v2031, %v2031
  %2040 = vst [vmem:[%s9] sm:$0xf] %v2032
  %2041 = vst [vmem:[%s9 + $0x4] sm:$0xf] %v2033
  %2042 = vst [vmem:[%s9 + $0x8] sm:$0xf] %v2034
  %2043 = vst [vmem:[%s9 + $0xc] sm:$0xf] %v2035
  // Predicated region
  $region38: #{_lambda_.10} parent=0 // pred_check
    _
  $region39: #{_lambda_.10} parent=0 // pred_check_branch
    %2045 = sbr.rel (0) target = $region41
  $region40: #{_lambda_.10} parent=0 // pred_region
    _
  $region41: #{_lambda_.10} parent=0 // pred_fallthru
    _
  // Predicated region
  $region42: #{_lambda_.10} parent=0 // pred_check
    _
  $region43: #{_lambda_.10} parent=0 // pred_check_branch
    %2047 = sbr.rel (0) target = $region45
  $region44: #{_lambda_.10} parent=0 // pred_region
    _
  $region45: #{_lambda_.10} parent=0 // pred_fallthru
    _

// kernel: _lambda_.9
$region0: #{_lambda_.9}
  #allocation0 [shape = 'u32[]', space=smem, size = 0x4, offset = 0x4, fixed_abs, tag = 'smem constant byte address 0x4 - core index']
  #allocation1 [shape = 'u32[144,128]{1,0:T(1,128)}', space=vmem, size = 0x12000, scoped, tag = 'internal scratch']
  #allocation2 [shape = 'f32[1,1]{1,0:T(1,128)S(1)}', space=vmem, size = 0x200, scoped, tag = 'scoped memory for _lambda_.9']
  #allocation3 [shape = 'f32[1,1]{1,0:T(1,128)S(1)}', space=vmem, size = 0x200, scoped, tag = 'scoped memory for _lambda_.9']
  %s0 = inlined_call_operand.vmem [shape: bf16[64,128], index: 0, kind: input, shape index: {}]
  %s1 = inlined_call_operand.vmem [shape: bf16[896,128], index: 1, kind: input, shape index: {}]
  %s2 = inlined_call_operand.vmem [shape: f32[1,128], index: 2, kind: input, shape index: {}]
  %s3 = inlined_call_operand.<no memory space> [shape: f32[1,1], index: 3, kind: input, shape index: {}]
  %s4 = inlined_call_operand.vmem [shape: bf16[896,128], index: 4, kind: input, shape index: {}]
  %s5 = inlined_call_operand.vmem [shape: bf16[128,128], index: 5, kind: input, shape index: {}]
  %s6 = inlined_call_operand.vmem [shape: f32[1,128], index: 6, kind: input, shape index: {}]
  %s7 = inlined_call_operand.<no memory space> [shape: f32[1,1], index: 7, kind: input, shape index: {}]
  %s8 = inlined_call_operand.vmem [shape: bf16[24,32], index: 8, kind: input, shape index: {}]
  %s9 = inlined_call_operand.vmem [shape: bf16[48,128], index: 9, kind: output, shape index: {}]
  %s10 = sld [smem:[#allocation0]]
  $region46: #{_lambda_.9} parent=0
    _
  %s12 = ssub.s32 1, %s10
  %s13 = scalar_select 0, %s12, %s10
  %v14 = vstv %s3
  %15 = vst [vmem:[#allocation2] sm:$0x1] %v14
  %v16 = vstv %s7
  %17 = vst [vmem:[#allocation3] sm:$0x1] %v16
  // Predicated region
  $region2: #{_lambda_.9} parent=0 // pred_check
    _
  $region3: #{_lambda_.9} parent=0 // pred_check_branch
    %19 = sbr.rel (0) target = $region5
  $region4: #{_lambda_.9} parent=0 // pred_region
    _
  $region5: #{_lambda_.9} parent=0 // pred_fallthru
    _
  // Predicated region
  $region6: #{_lambda_.9} parent=0 // pred_check
    _
  $region7: #{_lambda_.9} parent=0 // pred_check_branch
    %21 = sbr.rel (0) target = $region9
  $region8: #{_lambda_.9} parent=0 // pred_region
    _
  $region9: #{_lambda_.9} parent=0 // pred_fallthru
    _
  // Predicated region
  $region10: #{_lambda_.9} parent=0 // pred_check
    _
  $region11: #{_lambda_.9} parent=0 // pred_check_branch
    %23 = sbr.rel (0) target = $region13
  $region12: #{_lambda_.9} parent=0 // pred_region
    _
  $region13: #{_lambda_.9} parent=0 // pred_fallthru
    _
  // Predicated region
  $region14: #{_lambda_.9} parent=0 // pred_check
    _
  $region15: #{_lambda_.9} parent=0 // pred_check_branch
    %25 = sbr.rel (0) target = $region17
  $region16: #{_lambda_.9} parent=0 // pred_region
    _
  $region17: #{_lambda_.9} parent=0 // pred_fallthru
    _
  // Predicated region
  $region18: #{_lambda_.9} parent=0 // pred_check
    _
  $region19: #{_lambda_.9} parent=0 // pred_check_branch
    %27 = sbr.rel (0) target = $region21
  $region20: #{_lambda_.9} parent=0 // pred_region
    _
  $region21: #{_lambda_.9} parent=0 // pred_fallthru
    _
  // Predicated region
  $region22: #{_lambda_.9} parent=0 // pred_check
    _
  $region23: #{_lambda_.9} parent=0 // pred_check_branch
    %29 = sbr.rel (0) target = $region25
  $region24: #{_lambda_.9} parent=0 // pred_region
    _
  $region25: #{_lambda_.9} parent=0 // pred_fallthru
    _
  // Predicated region
  $region26: #{_lambda_.9} parent=0 // pred_check
    _
  $region27: #{_lambda_.9} parent=0 // pred_check_branch
    %31 = sbr.rel (0) target = $region29
  $region28: #{_lambda_.9} parent=0 // pred_region
    _
  $region29: #{_lambda_.9} parent=0 // pred_fallthru
    _
  // Predicated region
  $region30: #{_lambda_.9} parent=0 // pred_check
    _
  $region31: #{_lambda_.9} parent=0 // pred_check_branch
    %33 = sbr.rel (0) target = $region33
  $region32: #{_lambda_.9} parent=0 // pred_region
    _
  $region33: #{_lambda_.9} parent=0 // pred_fallthru
    _
  // Predicated region
  $region34: #{_lambda_.9} parent=0 // pred_check
    _
  $region35: #{_lambda_.9} parent=0 // pred_check_branch
    %35 = sbr.rel (0) target = $region37
  $region36: #{_lambda_.9} parent=0 // pred_region
    _
  $region37: #{_lambda_.9} parent=0 // pred_fallthru
    _
  %v37 = vld [vmem:[%s8] sm:$0xf]
  %v38 = vld [vmem:[%s8 + $0x4] sm:$0xf]
  %v39 = vld [vmem:[%s8 + $0x8] sm:$0xf]
  %v40 = vld [vmem:[%s0] sm:$0xf]
  %v41 = vld [vmem:[%s0 + $0x4] sm:$0xf]
  %v42 = vld [vmem:[%s0 + $0x8] sm:$0xf]
  %v43 = vld [vmem:[%s0 + $0xc] sm:$0xf]
  %v44 = vld [vmem:[%s0 + $0x10] sm:$0xf]
  %v45 = vld [vmem:[%s0 + $0x14] sm:$0xf]
  %v46 = vld [vmem:[%s0 + $0x18] sm:$0xf]
  %v47 = vld [vmem:[%s0 + $0x1c] sm:$0xf]
  %v48 = vld [vmem:[%s1] sm:$0xf]
  %v49 = vld [vmem:[%s1 + $0x4] sm:$0xf]
  %v50 = vld [vmem:[%s1 + $0x8] sm:$0xf]
  %v51 = vld [vmem:[%s1 + $0xc] sm:$0xf]
  %v52 = vld [vmem:[%s1 + $0x10] sm:$0xf]
  %v53 = vld [vmem:[%s1 + $0x14] sm:$0xf]
  %v54 = vld [vmem:[%s1 + $0x18] sm:$0xf]
  %v55 = vld [vmem:[%s1 + $0x1c] sm:$0xf]
  %v56 = vld [vmem:[%s1 + $0x20] sm:$0xf]
  %v57 = vld [vmem:[%s1 + $0x24] sm:$0xf]
  %v58 = vld [vmem:[%s1 + $0x28] sm:$0xf]
  %v59 = vld [vmem:[%s1 + $0x2c] sm:$0xf]
  %v60 = vld [vmem:[%s1 + $0x30] sm:$0xf]
  %v61 = vld [vmem:[%s1 + $0x34] sm:$0xf]
  %v62 = vld [vmem:[%s1 + $0x38] sm:$0xf]
  %v63 = vld [vmem:[%s1 + $0x3c] sm:$0xf]
  %v64 = vld [vmem:[%s1 + $0x40] sm:$0xf]
  %v65 = vld [vmem:[%s1 + $0x44] sm:$0xf]
  %v66 = vld [vmem:[%s1 + $0x48] sm:$0xf]
  %v67 = vld [vmem:[%s1 + $0x4c] sm:$0xf]
  %v68 = vld [vmem:[%s1 + $0x50] sm:$0xf]
  %v69 = vld [vmem:[%s1 + $0x54] sm:$0xf]
  %v70 = vld [vmem:[%s1 + $0x58] sm:$0xf]
  %v71 = vld [vmem:[%s1 + $0x5c] sm:$0xf]
  %v72 = vld [vmem:[%s1 + $0x60] sm:$0xf]
  %v73 = vld [vmem:[%s1 + $0x64] sm:$0xf]
  %v74 = vld [vmem:[%s1 + $0x68] sm:$0xf]
  %v75 = vld [vmem:[%s1 + $0x6c] sm:$0xf]
  %v76 = vld [vmem:[%s1 + $0x70] sm:$0xf]
  %v77 = vld [vmem:[%s1 + $0x74] sm:$0xf]
  %v78 = vld [vmem:[%s1 + $0x78] sm:$0xf]
  %v79 = vld [vmem:[%s1 + $0x7c] sm:$0xf]
  %v80 = vld [vmem:[%s1 + $0x80] sm:$0xf]
  %v81 = vld [vmem:[%s1 + $0x84] sm:$0xf]
  %v82 = vld [vmem:[%s1 + $0x88] sm:$0xf]
  %v83 = vld [vmem:[%s1 + $0x8c] sm:$0xf]
  %v84 = vld [vmem:[%s1 + $0x90] sm:$0xf]
  %v85 = vld [vmem:[%s1 + $0x94] sm:$0xf]
  %v86 = vld [vmem:[%s1 + $0x98] sm:$0xf]
  %v87 = vld [vmem:[%s1 + $0x9c] sm:$0xf]
  %v88 = vld [vmem:[%s1 + $0xa0] sm:$0xf]
  %v89 = vld [vmem:[%s1 + $0xa4] sm:$0xf]
  %v90 = vld [vmem:[%s1 + $0xa8] sm:$0xf]
  %v91 = vld [vmem:[%s1 + $0xac] sm:$0xf]
  %v92 = vld [vmem:[%s1 + $0xb0] sm:$0xf]
  %v93 = vld [vmem:[%s1 + $0xb4] sm:$0xf]
  %v94 = vld [vmem:[%s1 + $0xb8] sm:$0xf]
  %v95 = vld [vmem:[%s1 + $0xbc] sm:$0xf]
  %v96 = vld [vmem:[%s1 + $0xc0] sm:$0xf]
  %v97 = vld [vmem:[%s1 + $0xc4] sm:$0xf]
  %v98 = vld [vmem:[%s1 + $0xc8] sm:$0xf]
  %v99 = vld [vmem:[%s1 + $0xcc] sm:$0xf]
  %v100 = vld [vmem:[%s1 + $0xd0] sm:$0xf]
  %v101 = vld [vmem:[%s1 + $0xd4] sm:$0xf]
  %v102 = vld [vmem:[%s1 + $0xd8] sm:$0xf]
  %v103 = vld [vmem:[%s1 + $0xdc] sm:$0xf]
  %v104 = vld [vmem:[%s1 + $0xe0] sm:$0xf]
  %v105 = vld [vmem:[%s1 + $0xe4] sm:$0xf]
  %v106 = vld [vmem:[%s1 + $0xe8] sm:$0xf]
  %v107 = vld [vmem:[%s1 + $0xec] sm:$0xf]
  %v108 = vld [vmem:[%s1 + $0xf0] sm:$0xf]
  %v109 = vld [vmem:[%s1 + $0xf4] sm:$0xf]
  %v110 = vld [vmem:[%s1 + $0xf8] sm:$0xf]
  %v111 = vld [vmem:[%s1 + $0xfc] sm:$0xf]
  %v112 = vld [vmem:[%s1 + $0x100] sm:$0xf]
  %v113 = vld [vmem:[%s1 + $0x104] sm:$0xf]
  %v114 = vld [vmem:[%s1 + $0x108] sm:$0xf]
  %v115 = vld [vmem:[%s1 + $0x10c] sm:$0xf]
  %v116 = vld [vmem:[%s1 + $0x110] sm:$0xf]
  %v117 = vld [vmem:[%s1 + $0x114] sm:$0xf]
  %v118 = vld [vmem:[%s1 + $0x118] sm:$0xf]
  %v119 = vld [vmem:[%s1 + $0x11c] sm:$0xf]
  %v120 = vld [vmem:[%s1 + $0x120] sm:$0xf]
  %v121 = vld [vmem:[%s1 + $0x124] sm:$0xf]
  %v122 = vld [vmem:[%s1 + $0x128] sm:$0xf]
  %v123 = vld [vmem:[%s1 + $0x12c] sm:$0xf]
  %v124 = vld [vmem:[%s1 + $0x130] sm:$0xf]
  %v125 = vld [vmem:[%s1 + $0x134] sm:$0xf]
  %v126 = vld [vmem:[%s1 + $0x138] sm:$0xf]
  %v127 = vld [vmem:[%s1 + $0x13c] sm:$0xf]
  %v128 = vld [vmem:[%s1 + $0x140] sm:$0xf]
  %v129 = vld [vmem:[%s1 + $0x144] sm:$0xf]
  %v130 = vld [vmem:[%s1 + $0x148] sm:$0xf]
  %v131 = vld [vmem:[%s1 + $0x14c] sm:$0xf]
  %v132 = vld [vmem:[%s1 + $0x150] sm:$0xf]
  %v133 = vld [vmem:[%s1 + $0x154] sm:$0xf]
  %v134 = vld [vmem:[%s1 + $0x158] sm:$0xf]
  %v135 = vld [vmem:[%s1 + $0x15c] sm:$0xf]
  %v136 = vld [vmem:[%s1 + $0x160] sm:$0xf]
  %v137 = vld [vmem:[%s1 + $0x164] sm:$0xf]
  %v138 = vld [vmem:[%s1 + $0x168] sm:$0xf]
  %v139 = vld [vmem:[%s1 + $0x16c] sm:$0xf]
  %v140 = vld [vmem:[%s1 + $0x170] sm:$0xf]
  %v141 = vld [vmem:[%s1 + $0x174] sm:$0xf]
  %v142 = vld [vmem:[%s1 + $0x178] sm:$0xf]
  %v143 = vld [vmem:[%s1 + $0x17c] sm:$0xf]
  %v144 = vld [vmem:[%s1 + $0x180] sm:$0xf]
  %v145 = vld [vmem:[%s1 + $0x184] sm:$0xf]
  %v146 = vld [vmem:[%s1 + $0x188] sm:$0xf]
  %v147 = vld [vmem:[%s1 + $0x18c] sm:$0xf]
  %v148 = vld [vmem:[%s1 + $0x190] sm:$0xf]
  %v149 = vld [vmem:[%s1 + $0x194] sm:$0xf]
  %v150 = vld [vmem:[%s1 + $0x198] sm:$0xf]
  %v151 = vld [vmem:[%s1 + $0x19c] sm:$0xf]
  %v152 = vld [vmem:[%s1 + $0x1a0] sm:$0xf]
  %v153 = vld [vmem:[%s1 + $0x1a4] sm:$0xf]
  %v154 = vld [vmem:[%s1 + $0x1a8] sm:$0xf]
  %v155 = vld [vmem:[%s1 + $0x1ac] sm:$0xf]
  %v156 = vld [vmem:[%s1 + $0x1b0] sm:$0xf]
  %v157 = vld [vmem:[%s1 + $0x1b4] sm:$0xf]
  %v158 = vld [vmem:[%s1 + $0x1b8] sm:$0xf]
  %v159 = vld [vmem:[%s1 + $0x1bc] sm:$0xf]
  %v160 = vld [vmem:[%s2] sm:$0x1]
  %v161 = vld [vmem:[#allocation2] sm:$0x1]
  %v162 = vld [vmem:[%s4] sm:$0xf]
  %v163 = vld [vmem:[%s4 + $0x4] sm:$0xf]
  %v164 = vld [vmem:[%s4 + $0x8] sm:$0xf]
  %v165 = vld [vmem:[%s4 + $0xc] sm:$0xf]
  %v166 = vld [vmem:[%s4 + $0x10] sm:$0xf]
  %v167 = vld [vmem:[%s4 + $0x14] sm:$0xf]
  %v168 = vld [vmem:[%s4 + $0x18] sm:$0xf]
  %v169 = vld [vmem:[%s4 + $0x1c] sm:$0xf]
  %v170 = vld [vmem:[%s4 + $0x20] sm:$0xf]
  %v171 = vld [vmem:[%s4 + $0x24] sm:$0xf]
  %v172 = vld [vmem:[%s4 + $0x28] sm:$0xf]
  %v173 = vld [vmem:[%s4 + $0x2c] sm:$0xf]
  %v174 = vld [vmem:[%s4 + $0x30] sm:$0xf]
  %v175 = vld [vmem:[%s4 + $0x34] sm:$0xf]
  %v176 = vld [vmem:[%s4 + $0x38] sm:$0xf]
  %v177 = vld [vmem:[%s4 + $0x3c] sm:$0xf]
  %v178 = vld [vmem:[%s4 + $0x40] sm:$0xf]
  %v179 = vld [vmem:[%s4 + $0x44] sm:$0xf]
  %v180 = vld [vmem:[%s4 + $0x48] sm:$0xf]
  %v181 = vld [vmem:[%s4 + $0x4c] sm:$0xf]
  %v182 = vld [vmem:[%s4 + $0x50] sm:$0xf]
  %v183 = vld [vmem:[%s4 + $0x54] sm:$0xf]
  %v184 = vld [vmem:[%s4 + $0x58] sm:$0xf]
  %v185 = vld [vmem:[%s4 + $0x5c] sm:$0xf]
  %v186 = vld [vmem:[%s4 + $0x60] sm:$0xf]
  %v187 = vld [vmem:[%s4 + $0x64] sm:$0xf]
  %v188 = vld [vmem:[%s4 + $0x68] sm:$0xf]
  %v189 = vld [vmem:[%s4 + $0x6c] sm:$0xf]
  %v190 = vld [vmem:[%s4 + $0x70] sm:$0xf]
  %v191 = vld [vmem:[%s4 + $0x74] sm:$0xf]
  %v192 = vld [vmem:[%s4 + $0x78] sm:$0xf]
  %v193 = vld [vmem:[%s4 + $0x7c] sm:$0xf]
  %v194 = vld [vmem:[%s4 + $0x80] sm:$0xf]
  %v195 = vld [vmem:[%s4 + $0x84] sm:$0xf]
  %v196 = vld [vmem:[%s4 + $0x88] sm:$0xf]
  %v197 = vld [vmem:[%s4 + $0x8c] sm:$0xf]
  %v198 = vld [vmem:[%s4 + $0x90] sm:$0xf]
  %v199 = vld [vmem:[%s4 + $0x94] sm:$0xf]
  %v200 = vld [vmem:[%s4 + $0x98] sm:$0xf]
  %v201 = vld [vmem:[%s4 + $0x9c] sm:$0xf]
  %v202 = vld [vmem:[%s4 + $0xa0] sm:$0xf]
  %v203 = vld [vmem:[%s4 + $0xa4] sm:$0xf]
  %v204 = vld [vmem:[%s4 + $0xa8] sm:$0xf]
  %v205 = vld [vmem:[%s4 + $0xac] sm:$0xf]
  %v206 = vld [vmem:[%s4 + $0xb0] sm:$0xf]
  %v207 = vld [vmem:[%s4 + $0xb4] sm:$0xf]
  %v208 = vld [vmem:[%s4 + $0xb8] sm:$0xf]
  %v209 = vld [vmem:[%s4 + $0xbc] sm:$0xf]
  %v210 = vld [vmem:[%s4 + $0xc0] sm:$0xf]
  %v211 = vld [vmem:[%s4 + $0xc4] sm:$0xf]
  %v212 = vld [vmem:[%s4 + $0xc8] sm:$0xf]
  %v213 = vld [vmem:[%s4 + $0xcc] sm:$0xf]
  %v214 = vld [vmem:[%s4 + $0xd0] sm:$0xf]
  %v215 = vld [vmem:[%s4 + $0xd4] sm:$0xf]
  %v216 = vld [vmem:[%s4 + $0xd8] sm:$0xf]
  %v217 = vld [vmem:[%s4 + $0xdc] sm:$0xf]
  %v218 = vld [vmem:[%s4 + $0xe0] sm:$0xf]
  %v219 = vld [vmem:[%s4 + $0xe4] sm:$0xf]
  %v220 = vld [vmem:[%s4 + $0xe8] sm:$0xf]
  %v221 = vld [vmem:[%s4 + $0xec] sm:$0xf]
  %v222 = vld [vmem:[%s4 + $0xf0] sm:$0xf]
  %v223 = vld [vmem:[%s4 + $0xf4] sm:$0xf]
  %v224 = vld [vmem:[%s4 + $0xf8] sm:$0xf]
  %v225 = vld [vmem:[%s4 + $0xfc] sm:$0xf]
  %v226 = vld [vmem:[%s4 + $0x100] sm:$0xf]
  %v227 = vld [vmem:[%s4 + $0x104] sm:$0xf]
  %v228 = vld [vmem:[%s4 + $0x108] sm:$0xf]
  %v229 = vld [vmem:[%s4 + $0x10c] sm:$0xf]
  %v230 = vld [vmem:[%s4 + $0x110] sm:$0xf]
  %v231 = vld [vmem:[%s4 + $0x114] sm:$0xf]
  %v232 = vld [vmem:[%s4 + $0x118] sm:$0xf]
  %v233 = vld [vmem:[%s4 + $0x11c] sm:$0xf]
  %v234 = vld [vmem:[%s4 + $0x120] sm:$0xf]
  %v235 = vld [vmem:[%s4 + $0x124] sm:$0xf]
  %v236 = vld [vmem:[%s4 + $0x128] sm:$0xf]
  %v237 = vld [vmem:[%s4 + $0x12c] sm:$0xf]
  %v238 = vld [vmem:[%s4 + $0x130] sm:$0xf]
  %v239 = vld [vmem:[%s4 + $0x134] sm:$0xf]
  %v240 = vld [vmem:[%s4 + $0x138] sm:$0xf]
  %v241 = vld [vmem:[%s4 + $0x13c] sm:$0xf]
  %v242 = vld [vmem:[%s4 + $0x140] sm:$0xf]
  %v243 = vld [vmem:[%s4 + $0x144] sm:$0xf]
  %v244 = vld [vmem:[%s4 + $0x148] sm:$0xf]
  %v245 = vld [vmem:[%s4 + $0x14c] sm:$0xf]
  %v246 = vld [vmem:[%s4 + $0x150] sm:$0xf]
  %v247 = vld [vmem:[%s4 + $0x154] sm:$0xf]
  %v248 = vld [vmem:[%s4 + $0x158] sm:$0xf]
  %v249 = vld [vmem:[%s4 + $0x15c] sm:$0xf]
  %v250 = vld [vmem:[%s4 + $0x160] sm:$0xf]
  %v251 = vld [vmem:[%s4 + $0x164] sm:$0xf]
  %v252 = vld [vmem:[%s4 + $0x168] sm:$0xf]
  %v253 = vld [vmem:[%s4 + $0x16c] sm:$0xf]
  %v254 = vld [vmem:[%s4 + $0x170] sm:$0xf]
  %v255 = vld [vmem:[%s4 + $0x174] sm:$0xf]
  %v256 = vld [vmem:[%s4 + $0x178] sm:$0xf]
  %v257 = vld [vmem:[%s4 + $0x17c] sm:$0xf]
  %v258 = vld [vmem:[%s4 + $0x180] sm:$0xf]
  %v259 = vld [vmem:[%s4 + $0x184] sm:$0xf]
  %v260 = vld [vmem:[%s4 + $0x188] sm:$0xf]
  %v261 = vld [vmem:[%s4 + $0x18c] sm:$0xf]
  %v262 = vld [vmem:[%s4 + $0x190] sm:$0xf]
  %v263 = vld [vmem:[%s4 + $0x194] sm:$0xf]
  %v264 = vld [vmem:[%s4 + $0x198] sm:$0xf]
  %v265 = vld [vmem:[%s4 + $0x19c] sm:$0xf]
  %v266 = vld [vmem:[%s4 + $0x1a0] sm:$0xf]
  %v267 = vld [vmem:[%s4 + $0x1a4] sm:$0xf]
  %v268 = vld [vmem:[%s4 + $0x1a8] sm:$0xf]
  %v269 = vld [vmem:[%s4 + $0x1ac] sm:$0xf]
  %v270 = vld [vmem:[%s4 + $0x1b0] sm:$0xf]
  %v271 = vld [vmem:[%s4 + $0x1b4] sm:$0xf]
  %v272 = vld [vmem:[%s4 + $0x1b8] sm:$0xf]
  %v273 = vld [vmem:[%s4 + $0x1bc] sm:$0xf]
  %v274 = vld [vmem:[%s5] sm:$0xf]
  %v275 = vld [vmem:[%s5 + $0x4] sm:$0xf]
  %v276 = vld [vmem:[%s5 + $0x8] sm:$0xf]
  %v277 = vld [vmem:[%s5 + $0xc] sm:$0xf]
  %v278 = vld [vmem:[%s5 + $0x10] sm:$0xf]
  %v279 = vld [vmem:[%s5 + $0x14] sm:$0xf]
  %v280 = vld [vmem:[%s5 + $0x18] sm:$0xf]
  %v281 = vld [vmem:[%s5 + $0x1c] sm:$0xf]
  %v282 = vld [vmem:[%s5 + $0x20] sm:$0xf]
  %v283 = vld [vmem:[%s5 + $0x24] sm:$0xf]
  %v284 = vld [vmem:[%s5 + $0x28] sm:$0xf]
  %v285 = vld [vmem:[%s5 + $0x2c] sm:$0xf]
  %v286 = vld [vmem:[%s5 + $0x30] sm:$0xf]
  %v287 = vld [vmem:[%s5 + $0x34] sm:$0xf]
  %v288 = vld [vmem:[%s5 + $0x38] sm:$0xf]
  %v289 = vld [vmem:[%s5 + $0x3c] sm:$0xf]
  %v290 = vld [vmem:[%s6] sm:$0x1]
  %v291 = vld [vmem:[#allocation3] sm:$0x1]
  %v292 = vlaneseq
  %v293 = vshrl.u32 %v292, 7
  %v294 = vadd.s32 %v293, 8
  %v295 = vadd.s32 %v293, 16
  %v296 = vadd.s32 %v293, 24
  %v297 = vadd.s32 %v293, 32
  %v298 = vadd.s32 %v293, 40
  %v299 = vadd.s32 %v293, 48
  %v300 = vadd.s32 %v293, 56
  %v301 = vadd.s32 %v293, 3
  %v302 = vadd.s32 %v294, 3
  %v303 = vadd.s32 %v295, 3
  %v304 = vadd.s32 %v296, 3
  %v305 = vadd.s32 %v297, 3
  %v306 = vadd.s32 %v298, 3
  %v307 = vadd.s32 %v299, 3
  %v308 = vadd.s32 %v300, 3
  %vm309 = vcmp.ge.s32.totalorder %v301, 8
  %vm310 = vcmp.ge.s32.totalorder %v302, 8
  %vm311 = vcmp.ge.s32.totalorder %v303, 8
  %vm312 = vcmp.ge.s32.totalorder %v304, 8
  %vm313 = vcmp.ge.s32.totalorder %v305, 8
  %vm314 = vcmp.ge.s32.totalorder %v306, 8
  %vm315 = vcmp.ge.s32.totalorder %v307, 8
  %vm316 = vcmp.ge.s32.totalorder %v308, 8
  %vm317 = vcmp.lt.s32.totalorder %v301, 24
  %vm318 = vcmp.lt.s32.totalorder %v302, 24
  %vm319 = vcmp.lt.s32.totalorder %v303, 24
  %vm320 = vcmp.lt.s32.totalorder %v304, 24
  %vm321 = vcmp.lt.s32.totalorder %v305, 24
  %vm322 = vcmp.lt.s32.totalorder %v306, 24
  %vm323 = vcmp.lt.s32.totalorder %v307, 24
  %vm324 = vcmp.lt.s32.totalorder %v308, 24
  %vm325 = vmand %vm309, %vm317
  %vm326 = vmand %vm310, %vm318
  %vm327 = vmand %vm311, %vm319
  %vm328 = vmand %vm312, %vm320
  %vm329 = vmand %vm313, %vm321
  %vm330 = vmand %vm314, %vm322
  %vm331 = vmand %vm315, %vm323
  %vm332 = vmand %vm316, %vm324
  %vm333 = vcmp.ge.s32.totalorder %v301, 40
  %vm334 = vcmp.ge.s32.totalorder %v302, 40
  %vm335 = vcmp.ge.s32.totalorder %v303, 40
  %vm336 = vcmp.ge.s32.totalorder %v304, 40
  %vm337 = vcmp.ge.s32.totalorder %v305, 40
  %vm338 = vcmp.ge.s32.totalorder %v306, 40
  %vm339 = vcmp.ge.s32.totalorder %v307, 40
  %vm340 = vcmp.ge.s32.totalorder %v308, 40
  %vm341 = vcmp.lt.s32.totalorder %v301, 56
  %vm342 = vcmp.lt.s32.totalorder %v302, 56
  %vm343 = vcmp.lt.s32.totalorder %v303, 56
  %vm344 = vcmp.lt.s32.totalorder %v304, 56
  %vm345 = vcmp.lt.s32.totalorder %v305, 56
  %vm346 = vcmp.lt.s32.totalorder %v306, 56
  %vm347 = vcmp.lt.s32.totalorder %v307, 56
  %vm348 = vcmp.lt.s32.totalorder %v308, 56
  %vm349 = vmand %vm333, %vm341
  %vm350 = vmand %vm334, %vm342
  %vm351 = vmand %vm335, %vm343
  %vm352 = vmand %vm336, %vm344
  %vm353 = vmand %vm337, %vm345
  %vm354 = vmand %vm338, %vm346
  %vm355 = vmand %vm339, %vm347
  %vm356 = vmand %vm340, %vm348
  %vm357 = vmor %vm325, %vm349
  %vm358 = vmor %vm326, %vm350
  %vm359 = vmor %vm327, %vm351
  %vm360 = vmor %vm328, %vm352
  %vm361 = vmor %vm329, %vm353
  %vm362 = vmor %vm330, %vm354
  %vm363 = vmor %vm331, %vm355
  %vm364 = vmor %vm332, %vm356
  %v373 = vunpack.c.l.b16 %v40
  %v374 = vunpack.c.l.b16 %v41
  %v375 = vunpack.c.l.b16 %v42
  %v376 = vunpack.c.l.b16 %v43
  %v377 = vunpack.c.l.b16 %v44
  %v378 = vunpack.c.l.b16 %v45
  %v379 = vunpack.c.l.b16 %v46
  %v380 = vunpack.c.l.b16 %v47
  %v381 = vpack.c.b16 %v374, %v373
  %v382 = vpack.c.b16 %v376, %v375
  %v383 = vpack.c.b16 %v378, %v377
  %v384 = vpack.c.b16 %v380, %v379
  %vm389 = vsmask.f32 7424
  %v391 = vshrl.u32 %v381, 16
  %v393 = vshll.u32 %v381, 16
  %v395 = vrot.slane %v393, 1
  %v396 = vor.u32 %v391, %v395
  %v398 = vshll.u32 %v382, 16
  %v400 = vrot.slane %v398, 1
  %v401 = vsel %vm389, %v396, %v400
  %v402 = vshrl.u32 %v382, 16
  %v404 = vor.u32 %v402, %v400
  %v406 = vshll.u32 %v383, 16
  %v408 = vrot.slane %v406, 1
  %v409 = vsel %vm389, %v404, %v408
  %v410 = vshrl.u32 %v383, 16
  %v412 = vor.u32 %v410, %v408
  %v414 = vshll.u32 %v384, 16
  %v416 = vrot.slane %v414, 1
  %v417 = vsel %vm389, %v412, %v416
  %v418 = vshrl.u32 %v384, 16
  %v420 = vor.u32 %v418, %v416
  %vm425 = vcmask 1046528
  %v426 = vrot.slane %v381, 1
  %v427 = vrot.slane %v382, 1
  %v428 = vsel %vm425, %v426, %v427
  %v429 = vrot.slane %v383, 1
  %v430 = vsel %vm425, %v427, %v429
  %v431 = vrot.slane %v384, 1
  %v432 = vsel %vm425, %v429, %v431
  %vm437 = vsmask.f32 6400
  %v438 = vrot.slane %v391, 1
  %v439 = vrot.slane %v393, 2
  %v440 = vor.u32 %v438, %v439
  %v441 = vrot.slane %v402, 1
  %v442 = vrot.slane %v398, 2
  %v443 = vor.u32 %v441, %v442
  %v444 = vsel %vm437, %v440, %v443
  %v445 = vrot.slane %v410, 1
  %v446 = vrot.slane %v406, 2
  %v447 = vor.u32 %v445, %v446
  %v448 = vsel %vm437, %v443, %v447
  %v449 = vrot.slane %v418, 1
  %v450 = vrot.slane %v414, 2
  %v451 = vor.u32 %v449, %v450
  %v452 = vsel %vm437, %v447, %v451
  %vm457 = vcmask 1045504
  %v458 = vrot.slane %v381, 2
  %v459 = vrot.slane %v382, 2
  %v460 = vsel %vm457, %v458, %v459
  %v461 = vrot.slane %v383, 2
  %v462 = vsel %vm457, %v459, %v461
  %v463 = vrot.slane %v384, 2
  %v464 = vsel %vm457, %v461, %v463
  %vm469 = vsmask.f32 5376
  %v470 = vrot.slane %v391, 2
  %v471 = vrot.slane %v393, 3
  %v472 = vor.u32 %v470, %v471
  %v473 = vrot.slane %v402, 2
  %v474 = vrot.slane %v398, 3
  %v475 = vor.u32 %v473, %v474
  %v476 = vsel %vm469, %v472, %v475
  %v477 = vrot.slane %v410, 2
  %v478 = vrot.slane %v406, 3
  %v479 = vor.u32 %v477, %v478
  %v480 = vsel %vm469, %v475, %v479
  %v481 = vrot.slane %v418, 2
  %v482 = vrot.slane %v414, 3
  %v483 = vor.u32 %v481, %v482
  %v484 = vsel %vm469, %v479, %v483
  %vm489 = vcmask 1044480
  %v490 = vrot.slane %v381, 3
  %v491 = vrot.slane %v382, 3
  %v492 = vsel %vm489, %v490, %v491
  %v493 = vrot.slane %v383, 3
  %v494 = vsel %vm489, %v491, %v493
  %v495 = vrot.slane %v384, 3
  %v496 = vsel %vm489, %v493, %v495
  %v502 = vlaneseq
  %v503 = vshrl.u32 %v502, 7
  %v504 = vsub.s32 0, %v503
  %v505 = vrot.slane %v160, %v504
  %v619 = vunpack.c.l.b16 %v48
  %v620 = vunpack.c.l.b16 %v49
  %v621 = vunpack.c.l.b16 %v50
  %v622 = vunpack.c.l.b16 %v51
  %v623 = vunpack.c.l.b16 %v52
  %v624 = vunpack.c.l.b16 %v53
  %v625 = vunpack.c.l.b16 %v54
  %v626 = vunpack.c.l.b16 %v55
  %v627 = vunpack.c.l.b16 %v56
  %v628 = vunpack.c.l.b16 %v57
  %v629 = vunpack.c.l.b16 %v58
  %v630 = vunpack.c.l.b16 %v59
  %v631 = vunpack.c.l.b16 %v60
  %v632 = vunpack.c.l.b16 %v61
  %v633 = vunpack.c.l.b16 %v62
  %v634 = vunpack.c.l.b16 %v63
  %v635 = vunpack.c.l.b16 %v64
  %v636 = vunpack.c.l.b16 %v65
  %v637 = vunpack.c.l.b16 %v66
  %v638 = vunpack.c.l.b16 %v67
  %v639 = vunpack.c.l.b16 %v68
  %v640 = vunpack.c.l.b16 %v69
  %v641 = vunpack.c.l.b16 %v70
  %v642 = vunpack.c.l.b16 %v71
  %v643 = vunpack.c.l.b16 %v72
  %v644 = vunpack.c.l.b16 %v73
  %v645 = vunpack.c.l.b16 %v74
  %v646 = vunpack.c.l.b16 %v75
  %v647 = vunpack.c.l.b16 %v76
  %v648 = vunpack.c.l.b16 %v77
  %v649 = vunpack.c.l.b16 %v78
  %v650 = vunpack.c.l.b16 %v79
  %v651 = vunpack.c.l.b16 %v80
  %v652 = vunpack.c.l.b16 %v81
  %v653 = vunpack.c.l.b16 %v82
  %v654 = vunpack.c.l.b16 %v83
  %v655 = vunpack.c.l.b16 %v84
  %v656 = vunpack.c.l.b16 %v85
  %v657 = vunpack.c.l.b16 %v86
  %v658 = vunpack.c.l.b16 %v87
  %v659 = vunpack.c.l.b16 %v88
  %v660 = vunpack.c.l.b16 %v89
  %v661 = vunpack.c.l.b16 %v90
  %v662 = vunpack.c.l.b16 %v91
  %v663 = vunpack.c.l.b16 %v92
  %v664 = vunpack.c.l.b16 %v93
  %v665 = vunpack.c.l.b16 %v94
  %v666 = vunpack.c.l.b16 %v95
  %v667 = vunpack.c.l.b16 %v96
  %v668 = vunpack.c.l.b16 %v97
  %v669 = vunpack.c.l.b16 %v98
  %v670 = vunpack.c.l.b16 %v99
  %v671 = vunpack.c.l.b16 %v100
  %v672 = vunpack.c.l.b16 %v101
  %v673 = vunpack.c.l.b16 %v102
  %v674 = vunpack.c.l.b16 %v103
  %v675 = vunpack.c.l.b16 %v104
  %v676 = vunpack.c.l.b16 %v105
  %v677 = vunpack.c.l.b16 %v106
  %v678 = vunpack.c.l.b16 %v107
  %v679 = vunpack.c.l.b16 %v108
  %v680 = vunpack.c.l.b16 %v109
  %v681 = vunpack.c.l.b16 %v110
  %v682 = vunpack.c.l.b16 %v111
  %v683 = vunpack.c.l.b16 %v112
  %v684 = vunpack.c.l.b16 %v113
  %v685 = vunpack.c.l.b16 %v114
  %v686 = vunpack.c.l.b16 %v115
  %v687 = vunpack.c.l.b16 %v116
  %v688 = vunpack.c.l.b16 %v117
  %v689 = vunpack.c.l.b16 %v118
  %v690 = vunpack.c.l.b16 %v119
  %v691 = vunpack.c.l.b16 %v120
  %v692 = vunpack.c.l.b16 %v121
  %v693 = vunpack.c.l.b16 %v122
  %v694 = vunpack.c.l.b16 %v123
  %v695 = vunpack.c.l.b16 %v124
  %v696 = vunpack.c.l.b16 %v125
  %v697 = vunpack.c.l.b16 %v126
  %v698 = vunpack.c.l.b16 %v127
  %v699 = vunpack.c.l.b16 %v128
  %v700 = vunpack.c.l.b16 %v129
  %v701 = vunpack.c.l.b16 %v130
  %v702 = vunpack.c.l.b16 %v131
  %v703 = vunpack.c.l.b16 %v132
  %v704 = vunpack.c.l.b16 %v133
  %v705 = vunpack.c.l.b16 %v134
  %v706 = vunpack.c.l.b16 %v135
  %v707 = vunpack.c.l.b16 %v136
  %v708 = vunpack.c.l.b16 %v137
  %v709 = vunpack.c.l.b16 %v138
  %v710 = vunpack.c.l.b16 %v139
  %v711 = vunpack.c.l.b16 %v140
  %v712 = vunpack.c.l.b16 %v141
  %v713 = vunpack.c.l.b16 %v142
  %v714 = vunpack.c.l.b16 %v143
  %v715 = vunpack.c.l.b16 %v144
  %v716 = vunpack.c.l.b16 %v145
  %v717 = vunpack.c.l.b16 %v146
  %v718 = vunpack.c.l.b16 %v147
  %v719 = vunpack.c.l.b16 %v148
  %v720 = vunpack.c.l.b16 %v149
  %v721 = vunpack.c.l.b16 %v150
  %v722 = vunpack.c.l.b16 %v151
  %v723 = vunpack.c.l.b16 %v152
  %v724 = vunpack.c.l.b16 %v153
  %v725 = vunpack.c.l.b16 %v154
  %v726 = vunpack.c.l.b16 %v155
  %v727 = vunpack.c.l.b16 %v156
  %v728 = vunpack.c.l.b16 %v157
  %v729 = vunpack.c.l.b16 %v158
  %v730 = vunpack.c.l.b16 %v159
  %v731 = vpack.c.b16 %v620, %v619
  %v732 = vpack.c.b16 %v622, %v621
  %v733 = vpack.c.b16 %v624, %v623
  %v734 = vpack.c.b16 %v626, %v625
  %v735 = vpack.c.b16 %v628, %v627
  %v736 = vpack.c.b16 %v630, %v629
  %v737 = vpack.c.b16 %v632, %v631
  %v738 = vpack.c.b16 %v634, %v633
  %v739 = vpack.c.b16 %v636, %v635
  %v740 = vpack.c.b16 %v638, %v637
  %v741 = vpack.c.b16 %v640, %v639
  %v742 = vpack.c.b16 %v642, %v641
  %v743 = vpack.c.b16 %v644, %v643
  %v744 = vpack.c.b16 %v646, %v645
  %v745 = vpack.c.b16 %v648, %v647
  %v746 = vpack.c.b16 %v650, %v649
  %v747 = vpack.c.b16 %v652, %v651
  %v748 = vpack.c.b16 %v654, %v653
  %v749 = vpack.c.b16 %v656, %v655
  %v750 = vpack.c.b16 %v658, %v657
  %v751 = vpack.c.b16 %v660, %v659
  %v752 = vpack.c.b16 %v662, %v661
  %v753 = vpack.c.b16 %v664, %v663
  %v754 = vpack.c.b16 %v666, %v665
  %v755 = vpack.c.b16 %v668, %v667
  %v756 = vpack.c.b16 %v670, %v669
  %v757 = vpack.c.b16 %v672, %v671
  %v758 = vpack.c.b16 %v674, %v673
  %v759 = vpack.c.b16 %v676, %v675
  %v760 = vpack.c.b16 %v678, %v677
  %v761 = vpack.c.b16 %v680, %v679
  %v762 = vpack.c.b16 %v682, %v681
  %v763 = vpack.c.b16 %v684, %v683
  %v764 = vpack.c.b16 %v686, %v685
  %v765 = vpack.c.b16 %v688, %v687
  %v766 = vpack.c.b16 %v690, %v689
  %v767 = vpack.c.b16 %v692, %v691
  %v768 = vpack.c.b16 %v694, %v693
  %v769 = vpack.c.b16 %v696, %v695
  %v770 = vpack.c.b16 %v698, %v697
  %v771 = vpack.c.b16 %v700, %v699
  %v772 = vpack.c.b16 %v702, %v701
  %v773 = vpack.c.b16 %v704, %v703
  %v774 = vpack.c.b16 %v706, %v705
  %v775 = vpack.c.b16 %v708, %v707
  %v776 = vpack.c.b16 %v710, %v709
  %v777 = vpack.c.b16 %v712, %v711
  %v778 = vpack.c.b16 %v714, %v713
  %v779 = vpack.c.b16 %v716, %v715
  %v780 = vpack.c.b16 %v718, %v717
  %v781 = vpack.c.b16 %v720, %v719
  %v782 = vpack.c.b16 %v722, %v721
  %v783 = vpack.c.b16 %v724, %v723
  %v784 = vpack.c.b16 %v726, %v725
  %v785 = vpack.c.b16 %v728, %v727
  %v786 = vpack.c.b16 %v730, %v729
  %843 = vmatprep.subr.bf16.mxu0 0
  %844 = vmatpush1.bf16.msra.mxu0 %v731
  %845 = vmatprep.subr.bf16.mxu0 0
  %846 = vmatpush1.bf16.msra.mxu0 %v732
  %847 = vmatprep.subr.bf16.mxu0 0
  %848 = vmatpush1.bf16.msra.mxu0 %v733
  %849 = vmatprep.subr.bf16.mxu0 0
  %850 = vmatpush1.bf16.msra.mxu0 %v734
  %851 = vmatprep.subr.bf16.mxu0 0
  %852 = vmatpush1.bf16.msra.mxu0 %v735
  %853 = vmatprep.subr.bf16.mxu0 0
  %854 = vmatpush1.bf16.msra.mxu0 %v736
  %855 = vmatprep.subr.bf16.mxu0 0
  %856 = vmatpush1.bf16.msra.mxu0 %v737
  %857 = vmatprep.subr.bf16.mxu0 0
  %858 = vmatpush1.bf16.msra.mxu0 %v738
  %859 = vmatprep.subr.bf16.mxu0 0
  %860 = vmatpush1.bf16.msra.mxu0 %v739
  %861 = vmatprep.subr.bf16.mxu0 0
  %862 = vmatpush1.bf16.msra.mxu0 %v740
  %863 = vmatprep.subr.bf16.mxu0 0
  %864 = vmatpush1.bf16.msra.mxu0 %v741
  %865 = vmatprep.subr.bf16.mxu0 0
  %866 = vmatpush1.bf16.msra.mxu0 %v742
  %867 = vmatprep.subr.bf16.mxu0 0
  %868 = vmatpush1.bf16.msra.mxu0 %v743
  %869 = vmatprep.subr.bf16.mxu0 0
  %870 = vmatpush1.bf16.msra.mxu0 %v744
  %871 = vmatprep.subr.bf16.mxu0 0
  %872 = vmatpush1.bf16.msra.mxu0 %v745
  %873 = vmatprep.subr.bf16.mxu0 0
  %874 = vmatpush1.bf16.msra.mxu0 %v746
  %875 = vmatprep.mubr.bf16.mxu0 %v401
  %876 = vmatmul.mubr.bf16.gmra.mrb[0].mxu0 %v381
  %v877 = vpop.f32.mrb[0].mxu0
  %v878 = vadd.f32 %v505, %v877
  %v879 = vpop.f32.mrb[0].mxu0
  %v880 = vpop.f32.mrb[0].mxu0
  %v881 = vadd.f32 %v505, %v880
  %v882 = vpop.f32.mrb[0].mxu0
  %883 = vmatprep.mubr.bf16.mxu0 %v409
  %884 = vmatmul.mubr.bf16.gmra.mrb[0].mxu0 %v382
  %v885 = vpop.f32.mrb[0].mxu0
  %v886 = vadd.f32 %v505, %v885
  %v887 = vpop.f32.mrb[0].mxu0
  %v888 = vpop.f32.mrb[0].mxu0
  %v889 = vadd.f32 %v505, %v888
  %v890 = vpop.f32.mrb[0].mxu0
  %891 = vmatprep.mubr.bf16.mxu0 %v417
  %892 = vmatmul.mubr.bf16.gmra.mrb[0].mxu0 %v383
  %v893 = vpop.f32.mrb[0].mxu0
  %v894 = vadd.f32 %v505, %v893
  %v895 = vpop.f32.mrb[0].mxu0
  %v896 = vpop.f32.mrb[0].mxu0
  %v897 = vadd.f32 %v505, %v896
  %v898 = vpop.f32.mrb[0].mxu0
  %899 = vmatprep.mubr.bf16.mxu0 %v420
  %900 = vmatmul.mubr.bf16.gmra.mrb[0].mxu0 %v384
  %v901 = vpop.f32.mrb[0].mxu0
  %v902 = vadd.f32 %v505, %v901
  %v903 = vpop.f32.mrb[0].mxu0
  %v904 = vpop.f32.mrb[0].mxu0
  %v905 = vadd.f32 %v505, %v904
  %v906 = vpop.f32.mrb[0].mxu0
  %907 = vdwg.mxu0
  %908 = vmatprep.subr.bf16.mxu0 0
  %909 = vmatpush1.bf16.msra.mxu0 %v747
  %910 = vmatprep.subr.bf16.mxu0 0
  %911 = vmatpush1.bf16.msra.mxu0 %v748
  %912 = vmatprep.subr.bf16.mxu0 0
  %913 = vmatpush1.bf16.msra.mxu0 %v749
  %914 = vmatprep.subr.bf16.mxu0 0
  %915 = vmatpush1.bf16.msra.mxu0 %v750
  %916 = vmatprep.subr.bf16.mxu0 0
  %917 = vmatpush1.bf16.msra.mxu0 %v751
  %918 = vmatprep.subr.bf16.mxu0 0
  %919 = vmatpush1.bf16.msra.mxu0 %v752
  %920 = vmatprep.subr.bf16.mxu0 0
  %921 = vmatpush1.bf16.msra.mxu0 %v753
  %922 = vmatprep.subr.bf16.mxu0 0
  %923 = vmatpush1.bf16.msra.mxu0 %v754
  %924 = vmatprep.subr.bf16.mxu0 0
  %925 = vmatpush1.bf16.msra.mxu0 %v755
  %926 = vmatprep.subr.bf16.mxu0 0
  %927 = vmatpush1.bf16.msra.mxu0 %v756
  %928 = vmatprep.subr.bf16.mxu0 0
  %929 = vmatpush1.bf16.msra.mxu0 %v757
  %930 = vmatprep.subr.bf16.mxu0 0
  %931 = vmatpush1.bf16.msra.mxu0 %v758
  %932 = vmatprep.subr.bf16.mxu0 0
  %933 = vmatpush1.bf16.msra.mxu0 %v759
  %934 = vmatprep.subr.bf16.mxu0 0
  %935 = vmatpush1.bf16.msra.mxu0 %v760
  %936 = vmatprep.subr.bf16.mxu0 0
  %937 = vmatpush1.bf16.msra.mxu0 %v761
  %938 = vmatprep.subr.bf16.mxu0 0
  %939 = vmatpush1.bf16.msra.mxu0 %v762
  %940 = vmatprep.mubr.bf16.mxu0 %v444
  %941 = vmatmul.mubr.bf16.gmra.mrb[0].mxu0 %v428
  %v942 = vpop.f32.mrb[0].mxu0
  %v943 = vadd.f32 %v878, %v942
  %v944 = vpop.f32.mrb[0].mxu0
  %v945 = vpop.f32.mrb[0].mxu0
  %v946 = vadd.f32 %v881, %v945
  %v947 = vpop.f32.mrb[0].mxu0
  %948 = vmatprep.mubr.bf16.mxu0 %v448
  %949 = vmatmul.mubr.bf16.gmra.mrb[0].mxu0 %v430
  %v950 = vpop.f32.mrb[0].mxu0
  %v951 = vadd.f32 %v886, %v950
  %v952 = vpop.f32.mrb[0].mxu0
  %v953 = vpop.f32.mrb[0].mxu0
  %v954 = vadd.f32 %v889, %v953
  %v955 = vpop.f32.mrb[0].mxu0
  %956 = vmatprep.mubr.bf16.mxu0 %v452
  %957 = vmatmul.mubr.bf16.gmra.mrb[0].mxu0 %v432
  %v958 = vpop.f32.mrb[0].mxu0
  %v959 = vadd.f32 %v894, %v958
  %v960 = vpop.f32.mrb[0].mxu0
  %v961 = vpop.f32.mrb[0].mxu0
  %v962 = vadd.f32 %v897, %v961
  %v963 = vpop.f32.mrb[0].mxu0
  %964 = vmatprep.mubr.bf16.mxu0 %v451
  %965 = vmatmul.mubr.bf16.gmra.mrb[0].mxu0 %v431
  %v966 = vpop.f32.mrb[0].mxu0
  %v967 = vadd.f32 %v902, %v966
  %v968 = vpop.f32.mrb[0].mxu0
  %v969 = vpop.f32.mrb[0].mxu0
  %v970 = vadd.f32 %v905, %v969
  %v971 = vpop.f32.mrb[0].mxu0
  %972 = vdwg.mxu0
  %973 = vmatprep.subr.bf16.mxu0 0
  %974 = vmatpush1.bf16.msra.mxu0 %v763
  %975 = vmatprep.subr.bf16.mxu0 0
  %976 = vmatpush1.bf16.msra.mxu0 %v764
  %977 = vmatprep.subr.bf16.mxu0 0
  %978 = vmatpush1.bf16.msra.mxu0 %v765
  %979 = vmatprep.subr.bf16.mxu0 0
  %980 = vmatpush1.bf16.msra.mxu0 %v766
  %981 = vmatprep.subr.bf16.mxu0 0
  %982 = vmatpush1.bf16.msra.mxu0 %v767
  %983 = vmatprep.subr.bf16.mxu0 0
  %984 = vmatpush1.bf16.msra.mxu0 %v768
  %985 = vmatprep.subr.bf16.mxu0 0
  %986 = vmatpush1.bf16.msra.mxu0 %v769
  %987 = vmatprep.subr.bf16.mxu0 0
  %988 = vmatpush1.bf16.msra.mxu0 %v770
  %989 = vmatprep.subr.bf16.mxu0 0
  %990 = vmatpush1.bf16.msra.mxu0 %v771
  %991 = vmatprep.subr.bf16.mxu0 0
  %992 = vmatpush1.bf16.msra.mxu0 %v772
  %993 = vmatprep.subr.bf16.mxu0 0
  %994 = vmatpush1.bf16.msra.mxu0 %v773
  %995 = vmatprep.subr.bf16.mxu0 0
  %996 = vmatpush1.bf16.msra.mxu0 %v774
  %997 = vmatprep.subr.bf16.mxu0 0
  %998 = vmatpush1.bf16.msra.mxu0 %v775
  %999 = vmatprep.subr.bf16.mxu0 0
  %1000 = vmatpush1.bf16.msra.mxu0 %v776
  %1001 = vmatprep.subr.bf16.mxu0 0
  %1002 = vmatpush1.bf16.msra.mxu0 %v777
  %1003 = vmatprep.subr.bf16.mxu0 0
  %1004 = vmatpush1.bf16.msra.mxu0 %v778
  %1005 = vmatprep.mubr.bf16.mxu0 %v476
  %1006 = vmatmul.mubr.bf16.gmra.mrb[0].mxu0 %v460
  %v1007 = vpop.f32.mrb[0].mxu0
  %v1008 = vadd.f32 %v943, %v1007
  %v1009 = vpop.f32.mrb[0].mxu0
  %v1010 = vpop.f32.mrb[0].mxu0
  %v1011 = vadd.f32 %v946, %v1010
  %v1012 = vpop.f32.mrb[0].mxu0
  %1013 = vmatprep.mubr.bf16.mxu0 %v480
  %1014 = vmatmul.mubr.bf16.gmra.mrb[0].mxu0 %v462
  %v1015 = vpop.f32.mrb[0].mxu0
  %v1016 = vadd.f32 %v951, %v1015
  %v1017 = vpop.f32.mrb[0].mxu0
  %v1018 = vpop.f32.mrb[0].mxu0
  %v1019 = vadd.f32 %v954, %v1018
  %v1020 = vpop.f32.mrb[0].mxu0
  %1021 = vmatprep.mubr.bf16.mxu0 %v484
  %1022 = vmatmul.mubr.bf16.gmra.mrb[0].mxu0 %v464
  %v1023 = vpop.f32.mrb[0].mxu0
  %v1024 = vadd.f32 %v959, %v1023
  %v1025 = vpop.f32.mrb[0].mxu0
  %v1026 = vpop.f32.mrb[0].mxu0
  %v1027 = vadd.f32 %v962, %v1026
  %v1028 = vpop.f32.mrb[0].mxu0
  %1029 = vmatprep.mubr.bf16.mxu0 %v483
  %1030 = vmatmul.mubr.bf16.gmra.mrb[0].mxu0 %v463
  %v1031 = vpop.f32.mrb[0].mxu0
  %v1032 = vadd.f32 %v967, %v1031
  %v1033 = vpop.f32.mrb[0].mxu0
  %v1034 = vpop.f32.mrb[0].mxu0
  %v1035 = vadd.f32 %v970, %v1034
  %v1036 = vpop.f32.mrb[0].mxu0
  %1037 = vdwg.mxu0
  %1038 = vmatprep.subr.bf16.mxu0 0
  %1039 = vmatpush1.bf16.msra.mxu0 %v779
  %1040 = vmatprep.subr.bf16.mxu0 0
  %1041 = vmatpush1.bf16.msra.mxu0 %v780
  %1042 = vmatprep.subr.bf16.mxu0 0
  %1043 = vmatpush1.bf16.msra.mxu0 %v781
  %1044 = vmatprep.subr.bf16.mxu0 0
  %1045 = vmatpush1.bf16.msra.mxu0 %v782
  %1046 = vmatprep.subr.bf16.mxu0 0
  %1047 = vmatpush1.bf16.msra.mxu0 %v783
  %1048 = vmatprep.subr.bf16.mxu0 0
  %1049 = vmatpush1.bf16.msra.mxu0 %v784
  %1050 = vmatprep.subr.bf16.mxu0 0
  %1051 = vmatpush1.bf16.msra.mxu0 %v785
  %1052 = vmatprep.subr.bf16.mxu0 0
  %1053 = vmatpush1.bf16.msra.mxu0 %v786
  %1054 = vmatprep.subr.bf16.mxu0 0
  %1055 = vmatpush1.bf16.msra.mxu0 0
  %1056 = vmatprep.subr.bf16.mxu0 0
  %1057 = vmatpush1.bf16.msra.mxu0 0
  %1058 = vmatprep.subr.bf16.mxu0 0
  %1059 = vmatpush1.bf16.msra.mxu0 0
  %1060 = vmatprep.subr.bf16.mxu0 0
  %1061 = vmatpush1.bf16.msra.mxu0 0
  %1062 = vmatprep.subr.bf16.mxu0 0
  %1063 = vmatpush1.bf16.msra.mxu0 0
  %1064 = vmatprep.subr.bf16.mxu0 0
  %1065 = vmatpush1.bf16.msra.mxu0 0
  %1066 = vmatprep.subr.bf16.mxu0 0
  %1067 = vmatpush1.bf16.msra.mxu0 0
  %1068 = vmatprep.subr.bf16.mxu0 0
  %1069 = vmatpush1.bf16.msra.mxu0 0
  %1070 = vmatprep.mubr.bf16.mxu0 0
  %1071 = vmatmul.mubr.bf16.gmra.mrb[0].mxu0 %v492
  %v1072 = vpop.f32.mrb[0].mxu0
  %v1073 = vadd.f32 %v1008, %v1072
  %v1074 = vpop.f32.mrb[0].mxu0
  %v1075 = vpop.f32.mrb[0].mxu0
  %v1076 = vadd.f32 %v1011, %v1075
  %v1077 = vpop.f32.mrb[0].mxu0
  %1078 = vmatprep.mubr.bf16.mxu0 0
  %1079 = vmatmul.mubr.bf16.gmra.mrb[0].mxu0 %v494
  %v1080 = vpop.f32.mrb[0].mxu0
  %v1081 = vadd.f32 %v1016, %v1080
  %v1082 = vpop.f32.mrb[0].mxu0
  %v1083 = vpop.f32.mrb[0].mxu0
  %v1084 = vadd.f32 %v1019, %v1083
  %v1085 = vpop.f32.mrb[0].mxu0
  %1086 = vmatprep.mubr.bf16.mxu0 0
  %1087 = vmatmul.mubr.bf16.gmra.mrb[0].mxu0 %v496
  %v1088 = vpop.f32.mrb[0].mxu0
  %v1089 = vadd.f32 %v1024, %v1088
  %v1090 = vpop.f32.mrb[0].mxu0
  %v1091 = vpop.f32.mrb[0].mxu0
  %v1092 = vadd.f32 %v1027, %v1091
  %v1093 = vpop.f32.mrb[0].mxu0
  %1094 = vmatprep.mubr.bf16.mxu0 0
  %1095 = vmatmul.mubr.bf16.gmra.mrb[0].mxu0 %v495
  %v1096 = vpop.f32.mrb[0].mxu0
  %v1097 = vadd.f32 %v1032, %v1096
  %v1098 = vpop.f32.mrb[0].mxu0
  %v1099 = vpop.f32.mrb[0].mxu0
  %v1100 = vadd.f32 %v1035, %v1099
  %v1101 = vpop.f32.mrb[0].mxu0
  %1102 = vdwg.mxu0
  %vm1103 = vcmp.ge.f32.partialorder %v1073, 0.0
  %vm1104 = vcmp.ge.f32.partialorder %v1076, 0.0
  %vm1105 = vcmp.ge.f32.partialorder %v1081, 0.0
  %vm1106 = vcmp.ge.f32.partialorder %v1084, 0.0
  %vm1107 = vcmp.ge.f32.partialorder %v1089, 0.0
  %vm1108 = vcmp.ge.f32.partialorder %v1092, 0.0
  %vm1109 = vcmp.ge.f32.partialorder %v1097, 0.0
  %vm1110 = vcmp.ge.f32.partialorder %v1100, 0.0
  %v1112 = vlaneseq
  %v1113 = vshrl.u32 %v1112, 7
  %v1114 = vsub.s32 0, %v1113
  %v1115 = vrot.slane %v161, %v1114
  %1116 = vset.pattern.permute.xlu0 0
  %1117 = vperm.xlu0 %1116, %v1115
  %v1118 = vpop.permute.xlu0 %1117
  %v1120 = vmul.f32 %v1118, %v1073
  %v1121 = vmul.f32 %v1118, %v1076
  %v1122 = vmul.f32 %v1118, %v1081
  %v1123 = vmul.f32 %v1118, %v1084
  %v1124 = vmul.f32 %v1118, %v1089
  %v1125 = vmul.f32 %v1118, %v1092
  %v1126 = vmul.f32 %v1118, %v1097
  %v1127 = vmul.f32 %v1118, %v1100
  %v1128 = vsel %vm1103, %v1073, %v1120
  %v1129 = vsel %vm1104, %v1076, %v1121
  %v1130 = vsel %vm1105, %v1081, %v1122
  %v1131 = vsel %vm1106, %v1084, %v1123
  %v1132 = vsel %vm1107, %v1089, %v1124
  %v1133 = vsel %vm1108, %v1092, %v1125
  %v1134 = vsel %vm1109, %v1097, %v1126
  %v1135 = vsel %vm1110, %v1100, %v1127
  %v1136 = vsel %vm357, 1, 0
  %v1137 = vsel %vm358, 1, 0
  %v1138 = vsel %vm359, 1, 0
  %v1139 = vsel %vm360, 1, 0
  %v1140 = vsel %vm361, 1, 0
  %v1141 = vsel %vm362, 1, 0
  %v1142 = vsel %vm363, 1, 0
  %v1143 = vsel %vm364, 1, 0
  %vm1144 = vcmp.eq.s32.totalorder %v1136, 1
  %vm1145 = vcmp.eq.s32.totalorder %v1137, 1
  %vm1146 = vcmp.eq.s32.totalorder %v1138, 1
  %vm1147 = vcmp.eq.s32.totalorder %v1139, 1
  %vm1148 = vcmp.eq.s32.totalorder %v1140, 1
  %vm1149 = vcmp.eq.s32.totalorder %v1141, 1
  %vm1150 = vcmp.eq.s32.totalorder %v1142, 1
  %vm1151 = vcmp.eq.s32.totalorder %v1143, 1
  %v1152 = vsel %vm1144, %v1128, 0.0
  %v1153 = vsel %vm1145, %v1129, 0.0
  %v1154 = vsel %vm1146, %v1130, 0.0
  %v1155 = vsel %vm1147, %v1131, 0.0
  %v1156 = vsel %vm1148, %v1132, 0.0
  %v1157 = vsel %vm1149, %v1133, 0.0
  %v1158 = vsel %vm1150, %v1134, 0.0
  %v1159 = vsel %vm1151, %v1135, 0.0
  %v1160 = vpack.c.bf16 %v1153, %v1152
  %v1161 = vpack.c.bf16 %v1155, %v1154
  %v1162 = vpack.c.bf16 %v1157, %v1156
  %v1163 = vpack.c.bf16 %v1159, %v1158
  %vm1164 = vsmask.f32 1280
  %v1166 = vshrl.u32 %v1160, 16
  %v1168 = vrot.slane %v1166, 6
  %v1169 = vshll.u32 %v1160, 16
  %v1171 = vrot.slane %v1169, 7
  %v1172 = vor.u32 %v1168, %v1171
  %v1174 = vshrl.u32 %v1161, 16
  %v1176 = vrot.slane %v1174, 6
  %v1177 = vshll.u32 %v1161, 16
  %v1179 = vrot.slane %v1177, 7
  %v1180 = vor.u32 %v1176, %v1179
  %v1181 = vsel %vm1164, %v1172, %v1180
  %v1183 = vshrl.u32 %v1162, 16
  %v1185 = vrot.slane %v1183, 6
  %v1186 = vshll.u32 %v1162, 16
  %v1188 = vrot.slane %v1186, 7
  %v1189 = vor.u32 %v1185, %v1188
  %v1190 = vsel %vm1164, %v1180, %v1189
  %v1192 = vshrl.u32 %v1163, 16
  %v1194 = vrot.slane %v1192, 6
  %v1195 = vshll.u32 %v1163, 16
  %v1197 = vrot.slane %v1195, 7
  %v1198 = vor.u32 %v1194, %v1197
  %v1199 = vsel %vm1164, %v1189, %v1198
  %vm1204 = vcmask 1041408
  %vm1205 = vmand %vm1204, %vm1164
  %v1206 = vsel %vm1205, 0, %v1172
  %vm1207 = vmand %vm425, %vm437
  %v1208 = vsel %vm1207, %v1199, 0
  %v1210 = vshrl.u32 %v1206, 16
  %v1212 = vshll.u32 %v1206, 16
  %v1214 = vrot.slane %v1212, 1
  %v1215 = vor.u32 %v1210, %v1214
  %v1217 = vshll.u32 %v1181, 16
  %v1219 = vrot.slane %v1217, 1
  %v1220 = vsel %vm389, %v1215, %v1219
  %v1221 = vshrl.u32 %v1181, 16
  %v1223 = vor.u32 %v1221, %v1219
  %v1225 = vshll.u32 %v1190, 16
  %v1227 = vrot.slane %v1225, 1
  %v1228 = vsel %vm389, %v1223, %v1227
  %v1229 = vshrl.u32 %v1190, 16
  %v1231 = vor.u32 %v1229, %v1227
  %v1233 = vshll.u32 %v1208, 16
  %v1235 = vrot.slane %v1233, 1
  %v1236 = vsel %vm389, %v1231, %v1235
  %v1237 = vshrl.u32 %v1208, 16
  %v1239 = vor.u32 %v1237, %v1235
  %v1246 = vrot.slane %v1206, 1
  %v1247 = vrot.slane %v1181, 1
  %v1248 = vsel %vm425, %v1246, %v1247
  %v1249 = vrot.slane %v1190, 1
  %v1250 = vsel %vm425, %v1247, %v1249
  %v1251 = vrot.slane %v1208, 1
  %v1252 = vsel %vm425, %v1249, %v1251
  %v1257 = vrot.slane %v1210, 1
  %v1258 = vrot.slane %v1212, 2
  %v1259 = vor.u32 %v1257, %v1258
  %v1260 = vrot.slane %v1221, 1
  %v1261 = vrot.slane %v1217, 2
  %v1262 = vor.u32 %v1260, %v1261
  %v1263 = vsel %vm437, %v1259, %v1262
  %v1264 = vrot.slane %v1229, 1
  %v1265 = vrot.slane %v1225, 2
  %v1266 = vor.u32 %v1264, %v1265
  %v1267 = vsel %vm437, %v1262, %v1266
  %v1268 = vrot.slane %v1237, 1
  %v1269 = vrot.slane %v1233, 2
  %v1270 = vor.u32 %v1268, %v1269
  %v1271 = vsel %vm437, %v1266, %v1270
  %v1276 = vrot.slane %v1206, 2
  %v1277 = vrot.slane %v1181, 2
  %v1278 = vsel %vm457, %v1276, %v1277
  %v1279 = vrot.slane %v1190, 2
  %v1280 = vsel %vm457, %v1277, %v1279
  %v1281 = vrot.slane %v1208, 2
  %v1282 = vsel %vm457, %v1279, %v1281
  %v1287 = vrot.slane %v1210, 2
  %v1288 = vrot.slane %v1212, 3
  %v1289 = vor.u32 %v1287, %v1288
  %v1290 = vrot.slane %v1221, 2
  %v1291 = vrot.slane %v1217, 3
  %v1292 = vor.u32 %v1290, %v1291
  %v1293 = vsel %vm469, %v1289, %v1292
  %v1294 = vrot.slane %v1229, 2
  %v1295 = vrot.slane %v1225, 3
  %v1296 = vor.u32 %v1294, %v1295
  %v1297 = vsel %vm469, %v1292, %v1296
  %v1298 = vrot.slane %v1237, 2
  %v1299 = vrot.slane %v1233, 3
  %v1300 = vor.u32 %v1298, %v1299
  %v1301 = vsel %vm469, %v1296, %v1300
  %v1306 = vrot.slane %v1206, 3
  %v1307 = vrot.slane %v1181, 3
  %v1308 = vsel %vm489, %v1306, %v1307
  %v1309 = vrot.slane %v1190, 3
  %v1310 = vsel %vm489, %v1307, %v1309
  %v1311 = vrot.slane %v1208, 3
  %v1312 = vsel %vm489, %v1309, %v1311
  %v1333 = vunpack.c.l.b16 %v274
  %v1334 = vunpack.c.l.b16 %v275
  %v1335 = vunpack.c.l.b16 %v276
  %v1336 = vunpack.c.l.b16 %v277
  %v1337 = vunpack.c.l.b16 %v278
  %v1338 = vunpack.c.l.b16 %v279
  %v1339 = vunpack.c.l.b16 %v280
  %v1340 = vunpack.c.l.b16 %v281
  %v1341 = vunpack.c.l.b16 %v282
  %v1342 = vunpack.c.l.b16 %v283
  %v1343 = vunpack.c.l.b16 %v284
  %v1344 = vunpack.c.l.b16 %v285
  %v1345 = vunpack.c.l.b16 %v286
  %v1346 = vunpack.c.l.b16 %v287
  %v1347 = vunpack.c.l.b16 %v288
  %v1348 = vunpack.c.l.b16 %v289
  %v1349 = vpack.c.b16 %v1334, %v1333
  %v1350 = vpack.c.b16 %v1336, %v1335
  %v1351 = vpack.c.b16 %v1338, %v1337
  %v1352 = vpack.c.b16 %v1340, %v1339
  %v1353 = vpack.c.b16 %v1342, %v1341
  %v1354 = vpack.c.b16 %v1344, %v1343
  %v1355 = vpack.c.b16 %v1346, %v1345
  %v1356 = vpack.c.b16 %v1348, %v1347
  %1365 = vmatprep.subr.bf16.mxu0 0
  %1366 = vmatpush1.bf16.msra.mxu0 %v1349
  %1367 = vmatprep.subr.bf16.mxu0 0
  %1368 = vmatpush1.bf16.msra.mxu0 %v1350
  %1369 = vmatprep.subr.bf16.mxu0 0
  %1370 = vmatpush1.bf16.msra.mxu0 %v1351
  %1371 = vmatprep.subr.bf16.mxu0 0
  %1372 = vmatpush1.bf16.msra.mxu0 %v1352
  %1373 = vmatprep.subr.bf16.mxu0 0
  %1374 = vmatpush1.bf16.msra.mxu0 %v1353
  %1375 = vmatprep.subr.bf16.mxu0 0
  %1376 = vmatpush1.bf16.msra.mxu0 %v1354
  %1377 = vmatprep.subr.bf16.mxu0 0
  %1378 = vmatpush1.bf16.msra.mxu0 %v1355
  %1379 = vmatprep.subr.bf16.mxu0 0
  %1380 = vmatpush1.bf16.msra.mxu0 %v1356
  %1381 = vmatprep.subr.bf16.mxu0 0
  %1382 = vmatpush1.bf16.msra.mxu0 0
  %1383 = vmatprep.subr.bf16.mxu0 0
  %1384 = vmatpush1.bf16.msra.mxu0 0
  %1385 = vmatprep.subr.bf16.mxu0 0
  %1386 = vmatpush1.bf16.msra.mxu0 0
  %1387 = vmatprep.subr.bf16.mxu0 0
  %1388 = vmatpush1.bf16.msra.mxu0 0
  %1389 = vmatprep.subr.bf16.mxu0 0
  %1390 = vmatpush1.bf16.msra.mxu0 0
  %1391 = vmatprep.subr.bf16.mxu0 0
  %1392 = vmatpush1.bf16.msra.mxu0 0
  %1393 = vmatprep.subr.bf16.mxu0 0
  %1394 = vmatpush1.bf16.msra.mxu0 0
  %1395 = vmatprep.subr.bf16.mxu0 0
  %1396 = vmatpush1.bf16.msra.mxu0 0
  %1397 = vmatprep.mubr.bf16.mxu0 0
  %1398 = vmatmul.mubr.bf16.gmra.mrb[0].mxu0 %v444
  %v1399 = vpop.f32.mrb[0].mxu0
  %v1400 = vadd.f32 0.0, %v1399
  %v1401 = vpop.f32.mrb[0].mxu0
  %v1402 = vpop.f32.mrb[0].mxu0
  %v1403 = vadd.f32 0.0, %v1402
  %v1404 = vpop.f32.mrb[0].mxu0
  %1405 = vmatprep.mubr.bf16.mxu0 0
  %1406 = vmatmul.mubr.bf16.gmra.mrb[0].mxu0 %v448
  %v1407 = vpop.f32.mrb[0].mxu0
  %v1408 = vadd.f32 0.0, %v1407
  %v1409 = vpop.f32.mrb[0].mxu0
  %v1410 = vpop.f32.mrb[0].mxu0
  %v1411 = vadd.f32 0.0, %v1410
  %v1412 = vpop.f32.mrb[0].mxu0
  %1413 = vmatprep.mubr.bf16.mxu0 0
  %1414 = vmatmul.mubr.bf16.gmra.mrb[0].mxu0 %v452
  %v1415 = vpop.f32.mrb[0].mxu0
  %v1416 = vadd.f32 0.0, %v1415
  %v1417 = vpop.f32.mrb[0].mxu0
  %v1418 = vpop.f32.mrb[0].mxu0
  %v1419 = vadd.f32 0.0, %v1418
  %v1420 = vpop.f32.mrb[0].mxu0
  %1421 = vmatprep.mubr.bf16.mxu0 0
  %1422 = vmatmul.mubr.bf16.gmra.mrb[0].mxu0 %v451
  %v1423 = vpop.f32.mrb[0].mxu0
  %v1424 = vadd.f32 0.0, %v1423
  %v1425 = vpop.f32.mrb[0].mxu0
  %v1426 = vpop.f32.mrb[0].mxu0
  %v1427 = vadd.f32 0.0, %v1426
  %v1428 = vpop.f32.mrb[0].mxu0
  %1429 = vdwg.mxu0
  %v1542 = vunpack.c.l.b16 %v162
  %v1543 = vunpack.c.l.b16 %v163
  %v1544 = vunpack.c.l.b16 %v164
  %v1545 = vunpack.c.l.b16 %v165
  %v1546 = vunpack.c.l.b16 %v166
  %v1547 = vunpack.c.l.b16 %v167
  %v1548 = vunpack.c.l.b16 %v168
  %v1549 = vunpack.c.l.b16 %v169
  %v1550 = vunpack.c.l.b16 %v170
  %v1551 = vunpack.c.l.b16 %v171
  %v1552 = vunpack.c.l.b16 %v172
  %v1553 = vunpack.c.l.b16 %v173
  %v1554 = vunpack.c.l.b16 %v174
  %v1555 = vunpack.c.l.b16 %v175
  %v1556 = vunpack.c.l.b16 %v176
  %v1557 = vunpack.c.l.b16 %v177
  %v1558 = vunpack.c.l.b16 %v178
  %v1559 = vunpack.c.l.b16 %v179
  %v1560 = vunpack.c.l.b16 %v180
  %v1561 = vunpack.c.l.b16 %v181
  %v1562 = vunpack.c.l.b16 %v182
  %v1563 = vunpack.c.l.b16 %v183
  %v1564 = vunpack.c.l.b16 %v184
  %v1565 = vunpack.c.l.b16 %v185
  %v1566 = vunpack.c.l.b16 %v186
  %v1567 = vunpack.c.l.b16 %v187
  %v1568 = vunpack.c.l.b16 %v188
  %v1569 = vunpack.c.l.b16 %v189
  %v1570 = vunpack.c.l.b16 %v190
  %v1571 = vunpack.c.l.b16 %v191
  %v1572 = vunpack.c.l.b16 %v192
  %v1573 = vunpack.c.l.b16 %v193
  %v1574 = vunpack.c.l.b16 %v194
  %v1575 = vunpack.c.l.b16 %v195
  %v1576 = vunpack.c.l.b16 %v196
  %v1577 = vunpack.c.l.b16 %v197
  %v1578 = vunpack.c.l.b16 %v198
  %v1579 = vunpack.c.l.b16 %v199
  %v1580 = vunpack.c.l.b16 %v200
  %v1581 = vunpack.c.l.b16 %v201
  %v1582 = vunpack.c.l.b16 %v202
  %v1583 = vunpack.c.l.b16 %v203
  %v1584 = vunpack.c.l.b16 %v204
  %v1585 = vunpack.c.l.b16 %v205
  %v1586 = vunpack.c.l.b16 %v206
  %v1587 = vunpack.c.l.b16 %v207
  %v1588 = vunpack.c.l.b16 %v208
  %v1589 = vunpack.c.l.b16 %v209
  %v1590 = vunpack.c.l.b16 %v210
  %v1591 = vunpack.c.l.b16 %v211
  %v1592 = vunpack.c.l.b16 %v212
  %v1593 = vunpack.c.l.b16 %v213
  %v1594 = vunpack.c.l.b16 %v214
  %v1595 = vunpack.c.l.b16 %v215
  %v1596 = vunpack.c.l.b16 %v216
  %v1597 = vunpack.c.l.b16 %v217
  %v1598 = vunpack.c.l.b16 %v218
  %v1599 = vunpack.c.l.b16 %v219
  %v1600 = vunpack.c.l.b16 %v220
  %v1601 = vunpack.c.l.b16 %v221
  %v1602 = vunpack.c.l.b16 %v222
  %v1603 = vunpack.c.l.b16 %v223
  %v1604 = vunpack.c.l.b16 %v224
  %v1605 = vunpack.c.l.b16 %v225
  %v1606 = vunpack.c.l.b16 %v226
  %v1607 = vunpack.c.l.b16 %v227
  %v1608 = vunpack.c.l.b16 %v228
  %v1609 = vunpack.c.l.b16 %v229
  %v1610 = vunpack.c.l.b16 %v230
  %v1611 = vunpack.c.l.b16 %v231
  %v1612 = vunpack.c.l.b16 %v232
  %v1613 = vunpack.c.l.b16 %v233
  %v1614 = vunpack.c.l.b16 %v234
  %v1615 = vunpack.c.l.b16 %v235
  %v1616 = vunpack.c.l.b16 %v236
  %v1617 = vunpack.c.l.b16 %v237
  %v1618 = vunpack.c.l.b16 %v238
  %v1619 = vunpack.c.l.b16 %v239
  %v1620 = vunpack.c.l.b16 %v240
  %v1621 = vunpack.c.l.b16 %v241
  %v1622 = vunpack.c.l.b16 %v242
  %v1623 = vunpack.c.l.b16 %v243
  %v1624 = vunpack.c.l.b16 %v244
  %v1625 = vunpack.c.l.b16 %v245
  %v1626 = vunpack.c.l.b16 %v246
  %v1627 = vunpack.c.l.b16 %v247
  %v1628 = vunpack.c.l.b16 %v248
  %v1629 = vunpack.c.l.b16 %v249
  %v1630 = vunpack.c.l.b16 %v250
  %v1631 = vunpack.c.l.b16 %v251
  %v1632 = vunpack.c.l.b16 %v252
  %v1633 = vunpack.c.l.b16 %v253
  %v1634 = vunpack.c.l.b16 %v254
  %v1635 = vunpack.c.l.b16 %v255
  %v1636 = vunpack.c.l.b16 %v256
  %v1637 = vunpack.c.l.b16 %v257
  %v1638 = vunpack.c.l.b16 %v258
  %v1639 = vunpack.c.l.b16 %v259
  %v1640 = vunpack.c.l.b16 %v260
  %v1641 = vunpack.c.l.b16 %v261
  %v1642 = vunpack.c.l.b16 %v262
  %v1643 = vunpack.c.l.b16 %v263
  %v1644 = vunpack.c.l.b16 %v264
  %v1645 = vunpack.c.l.b16 %v265
  %v1646 = vunpack.c.l.b16 %v266
  %v1647 = vunpack.c.l.b16 %v267
  %v1648 = vunpack.c.l.b16 %v268
  %v1649 = vunpack.c.l.b16 %v269
  %v1650 = vunpack.c.l.b16 %v270
  %v1651 = vunpack.c.l.b16 %v271
  %v1652 = vunpack.c.l.b16 %v272
  %v1653 = vunpack.c.l.b16 %v273
  %v1654 = vpack.c.b16 %v1543, %v1542
  %v1655 = vpack.c.b16 %v1545, %v1544
  %v1656 = vpack.c.b16 %v1547, %v1546
  %v1657 = vpack.c.b16 %v1549, %v1548
  %v1658 = vpack.c.b16 %v1551, %v1550
  %v1659 = vpack.c.b16 %v1553, %v1552
  %v1660 = vpack.c.b16 %v1555, %v1554
  %v1661 = vpack.c.b16 %v1557, %v1556
  %v1662 = vpack.c.b16 %v1559, %v1558
  %v1663 = vpack.c.b16 %v1561, %v1560
  %v1664 = vpack.c.b16 %v1563, %v1562
  %v1665 = vpack.c.b16 %v1565, %v1564
  %v1666 = vpack.c.b16 %v1567, %v1566
  %v1667 = vpack.c.b16 %v1569, %v1568
  %v1668 = vpack.c.b16 %v1571, %v1570
  %v1669 = vpack.c.b16 %v1573, %v1572
  %v1670 = vpack.c.b16 %v1575, %v1574
  %v1671 = vpack.c.b16 %v1577, %v1576
  %v1672 = vpack.c.b16 %v1579, %v1578
  %v1673 = vpack.c.b16 %v1581, %v1580
  %v1674 = vpack.c.b16 %v1583, %v1582
  %v1675 = vpack.c.b16 %v1585, %v1584
  %v1676 = vpack.c.b16 %v1587, %v1586
  %v1677 = vpack.c.b16 %v1589, %v1588
  %v1678 = vpack.c.b16 %v1591, %v1590
  %v1679 = vpack.c.b16 %v1593, %v1592
  %v1680 = vpack.c.b16 %v1595, %v1594
  %v1681 = vpack.c.b16 %v1597, %v1596
  %v1682 = vpack.c.b16 %v1599, %v1598
  %v1683 = vpack.c.b16 %v1601, %v1600
  %v1684 = vpack.c.b16 %v1603, %v1602
  %v1685 = vpack.c.b16 %v1605, %v1604
  %v1686 = vpack.c.b16 %v1607, %v1606
  %v1687 = vpack.c.b16 %v1609, %v1608
  %v1688 = vpack.c.b16 %v1611, %v1610
  %v1689 = vpack.c.b16 %v1613, %v1612
  %v1690 = vpack.c.b16 %v1615, %v1614
  %v1691 = vpack.c.b16 %v1617, %v1616
  %v1692 = vpack.c.b16 %v1619, %v1618
  %v1693 = vpack.c.b16 %v1621, %v1620
  %v1694 = vpack.c.b16 %v1623, %v1622
  %v1695 = vpack.c.b16 %v1625, %v1624
  %v1696 = vpack.c.b16 %v1627, %v1626
  %v1697 = vpack.c.b16 %v1629, %v1628
  %v1698 = vpack.c.b16 %v1631, %v1630
  %v1699 = vpack.c.b16 %v1633, %v1632
  %v1700 = vpack.c.b16 %v1635, %v1634
  %v1701 = vpack.c.b16 %v1637, %v1636
  %v1702 = vpack.c.b16 %v1639, %v1638
  %v1703 = vpack.c.b16 %v1641, %v1640
  %v1704 = vpack.c.b16 %v1643, %v1642
  %v1705 = vpack.c.b16 %v1645, %v1644
  %v1706 = vpack.c.b16 %v1647, %v1646
  %v1707 = vpack.c.b16 %v1649, %v1648
  %v1708 = vpack.c.b16 %v1651, %v1650
  %v1709 = vpack.c.b16 %v1653, %v1652
  %1766 = vmatprep.subr.bf16.mxu0 0
  %1767 = vmatpush1.bf16.msra.mxu0 %v1654
  %1768 = vmatprep.subr.bf16.mxu0 0
  %1769 = vmatpush1.bf16.msra.mxu0 %v1655
  %1770 = vmatprep.subr.bf16.mxu0 0
  %1771 = vmatpush1.bf16.msra.mxu0 %v1656
  %1772 = vmatprep.subr.bf16.mxu0 0
  %1773 = vmatpush1.bf16.msra.mxu0 %v1657
  %1774 = vmatprep.subr.bf16.mxu0 0
  %1775 = vmatpush1.bf16.msra.mxu0 %v1658
  %1776 = vmatprep.subr.bf16.mxu0 0
  %1777 = vmatpush1.bf16.msra.mxu0 %v1659
  %1778 = vmatprep.subr.bf16.mxu0 0
  %1779 = vmatpush1.bf16.msra.mxu0 %v1660
  %1780 = vmatprep.subr.bf16.mxu0 0
  %1781 = vmatpush1.bf16.msra.mxu0 %v1661
  %1782 = vmatprep.subr.bf16.mxu0 0
  %1783 = vmatpush1.bf16.msra.mxu0 %v1662
  %1784 = vmatprep.subr.bf16.mxu0 0
  %1785 = vmatpush1.bf16.msra.mxu0 %v1663
  %1786 = vmatprep.subr.bf16.mxu0 0
  %1787 = vmatpush1.bf16.msra.mxu0 %v1664
  %1788 = vmatprep.subr.bf16.mxu0 0
  %1789 = vmatpush1.bf16.msra.mxu0 %v1665
  %1790 = vmatprep.subr.bf16.mxu0 0
  %1791 = vmatpush1.bf16.msra.mxu0 %v1666
  %1792 = vmatprep.subr.bf16.mxu0 0
  %1793 = vmatpush1.bf16.msra.mxu0 %v1667
  %1794 = vmatprep.subr.bf16.mxu0 0
  %1795 = vmatpush1.bf16.msra.mxu0 %v1668
  %1796 = vmatprep.subr.bf16.mxu0 0
  %1797 = vmatpush1.bf16.msra.mxu0 %v1669
  %1798 = vmatprep.mubr.bf16.mxu0 %v1220
  %1799 = vmatmul.mubr.bf16.gmra.mrb[0].mxu0 %v1206
  %v1800 = vpop.f32.mrb[0].mxu0
  %v1801 = vadd.f32 %v1400, %v1800
  %v1802 = vpop.f32.mrb[0].mxu0
  %v1803 = vpop.f32.mrb[0].mxu0
  %v1804 = vadd.f32 %v1403, %v1803
  %v1805 = vpop.f32.mrb[0].mxu0
  %1806 = vmatprep.mubr.bf16.mxu0 %v1228
  %1807 = vmatmul.mubr.bf16.gmra.mrb[0].mxu0 %v1181
  %v1808 = vpop.f32.mrb[0].mxu0
  %v1809 = vadd.f32 %v1408, %v1808
  %v1810 = vpop.f32.mrb[0].mxu0
  %v1811 = vpop.f32.mrb[0].mxu0
  %v1812 = vadd.f32 %v1411, %v1811
  %v1813 = vpop.f32.mrb[0].mxu0
  %1814 = vmatprep.mubr.bf16.mxu0 %v1236
  %1815 = vmatmul.mubr.bf16.gmra.mrb[0].mxu0 %v1190
  %v1816 = vpop.f32.mrb[0].mxu0
  %v1817 = vadd.f32 %v1416, %v1816
  %v1818 = vpop.f32.mrb[0].mxu0
  %v1819 = vpop.f32.mrb[0].mxu0
  %v1820 = vadd.f32 %v1419, %v1819
  %v1821 = vpop.f32.mrb[0].mxu0
  %1822 = vmatprep.mubr.bf16.mxu0 %v1239
  %1823 = vmatmul.mubr.bf16.gmra.mrb[0].mxu0 %v1208
  %v1824 = vpop.f32.mrb[0].mxu0
  %v1825 = vadd.f32 %v1424, %v1824
  %v1826 = vpop.f32.mrb[0].mxu0
  %v1827 = vpop.f32.mrb[0].mxu0
  %v1828 = vadd.f32 %v1427, %v1827
  %v1829 = vpop.f32.mrb[0].mxu0
  %1830 = vdwg.mxu0
  %1831 = vmatprep.subr.bf16.mxu0 0
  %1832 = vmatpush1.bf16.msra.mxu0 %v1670
  %1833 = vmatprep.subr.bf16.mxu0 0
  %1834 = vmatpush1.bf16.msra.mxu0 %v1671
  %1835 = vmatprep.subr.bf16.mxu0 0
  %1836 = vmatpush1.bf16.msra.mxu0 %v1672
  %1837 = vmatprep.subr.bf16.mxu0 0
  %1838 = vmatpush1.bf16.msra.mxu0 %v1673
  %1839 = vmatprep.subr.bf16.mxu0 0
  %1840 = vmatpush1.bf16.msra.mxu0 %v1674
  %1841 = vmatprep.subr.bf16.mxu0 0
  %1842 = vmatpush1.bf16.msra.mxu0 %v1675
  %1843 = vmatprep.subr.bf16.mxu0 0
  %1844 = vmatpush1.bf16.msra.mxu0 %v1676
  %1845 = vmatprep.subr.bf16.mxu0 0
  %1846 = vmatpush1.bf16.msra.mxu0 %v1677
  %1847 = vmatprep.subr.bf16.mxu0 0
  %1848 = vmatpush1.bf16.msra.mxu0 %v1678
  %1849 = vmatprep.subr.bf16.mxu0 0
  %1850 = vmatpush1.bf16.msra.mxu0 %v1679
  %1851 = vmatprep.subr.bf16.mxu0 0
  %1852 = vmatpush1.bf16.msra.mxu0 %v1680
  %1853 = vmatprep.subr.bf16.mxu0 0
  %1854 = vmatpush1.bf16.msra.mxu0 %v1681
  %1855 = vmatprep.subr.bf16.mxu0 0
  %1856 = vmatpush1.bf16.msra.mxu0 %v1682
  %1857 = vmatprep.subr.bf16.mxu0 0
  %1858 = vmatpush1.bf16.msra.mxu0 %v1683
  %1859 = vmatprep.subr.bf16.mxu0 0
  %1860 = vmatpush1.bf16.msra.mxu0 %v1684
  %1861 = vmatprep.subr.bf16.mxu0 0
  %1862 = vmatpush1.bf16.msra.mxu0 %v1685
  %1863 = vmatprep.mubr.bf16.mxu0 %v1263
  %1864 = vmatmul.mubr.bf16.gmra.mrb[0].mxu0 %v1248
  %v1865 = vpop.f32.mrb[0].mxu0
  %v1866 = vadd.f32 %v1801, %v1865
  %v1867 = vpop.f32.mrb[0].mxu0
  %v1868 = vpop.f32.mrb[0].mxu0
  %v1869 = vadd.f32 %v1804, %v1868
  %v1870 = vpop.f32.mrb[0].mxu0
  %1871 = vmatprep.mubr.bf16.mxu0 %v1267
  %1872 = vmatmul.mubr.bf16.gmra.mrb[0].mxu0 %v1250
  %v1873 = vpop.f32.mrb[0].mxu0
  %v1874 = vadd.f32 %v1809, %v1873
  %v1875 = vpop.f32.mrb[0].mxu0
  %v1876 = vpop.f32.mrb[0].mxu0
  %v1877 = vadd.f32 %v1812, %v1876
  %v1878 = vpop.f32.mrb[0].mxu0
  %1879 = vmatprep.mubr.bf16.mxu0 %v1271
  %1880 = vmatmul.mubr.bf16.gmra.mrb[0].mxu0 %v1252
  %v1881 = vpop.f32.mrb[0].mxu0
  %v1882 = vadd.f32 %v1817, %v1881
  %v1883 = vpop.f32.mrb[0].mxu0
  %v1884 = vpop.f32.mrb[0].mxu0
  %v1885 = vadd.f32 %v1820, %v1884
  %v1886 = vpop.f32.mrb[0].mxu0
  %1887 = vmatprep.mubr.bf16.mxu0 %v1270
  %1888 = vmatmul.mubr.bf16.gmra.mrb[0].mxu0 %v1251
  %v1889 = vpop.f32.mrb[0].mxu0
  %v1890 = vadd.f32 %v1825, %v1889
  %v1891 = vpop.f32.mrb[0].mxu0
  %v1892 = vpop.f32.mrb[0].mxu0
  %v1893 = vadd.f32 %v1828, %v1892
  %v1894 = vpop.f32.mrb[0].mxu0
  %1895 = vdwg.mxu0
  %1896 = vmatprep.subr.bf16.mxu0 0
  %1897 = vmatpush1.bf16.msra.mxu0 %v1686
  %1898 = vmatprep.subr.bf16.mxu0 0
  %1899 = vmatpush1.bf16.msra.mxu0 %v1687
  %1900 = vmatprep.subr.bf16.mxu0 0
  %1901 = vmatpush1.bf16.msra.mxu0 %v1688
  %1902 = vmatprep.subr.bf16.mxu0 0
  %1903 = vmatpush1.bf16.msra.mxu0 %v1689
  %1904 = vmatprep.subr.bf16.mxu0 0
  %1905 = vmatpush1.bf16.msra.mxu0 %v1690
  %1906 = vmatprep.subr.bf16.mxu0 0
  %1907 = vmatpush1.bf16.msra.mxu0 %v1691
  %1908 = vmatprep.subr.bf16.mxu0 0
  %1909 = vmatpush1.bf16.msra.mxu0 %v1692
  %1910 = vmatprep.subr.bf16.mxu0 0
  %1911 = vmatpush1.bf16.msra.mxu0 %v1693
  %1912 = vmatprep.subr.bf16.mxu0 0
  %1913 = vmatpush1.bf16.msra.mxu0 %v1694
  %1914 = vmatprep.subr.bf16.mxu0 0
  %1915 = vmatpush1.bf16.msra.mxu0 %v1695
  %1916 = vmatprep.subr.bf16.mxu0 0
  %1917 = vmatpush1.bf16.msra.mxu0 %v1696
  %1918 = vmatprep.subr.bf16.mxu0 0
  %1919 = vmatpush1.bf16.msra.mxu0 %v1697
  %1920 = vmatprep.subr.bf16.mxu0 0
  %1921 = vmatpush1.bf16.msra.mxu0 %v1698
  %1922 = vmatprep.subr.bf16.mxu0 0
  %1923 = vmatpush1.bf16.msra.mxu0 %v1699
  %1924 = vmatprep.subr.bf16.mxu0 0
  %1925 = vmatpush1.bf16.msra.mxu0 %v1700
  %1926 = vmatprep.subr.bf16.mxu0 0
  %1927 = vmatpush1.bf16.msra.mxu0 %v1701
  %1928 = vmatprep.mubr.bf16.mxu0 %v1293
  %1929 = vmatmul.mubr.bf16.gmra.mrb[0].mxu0 %v1278
  %v1930 = vpop.f32.mrb[0].mxu0
  %v1931 = vadd.f32 %v1866, %v1930
  %v1932 = vpop.f32.mrb[0].mxu0
  %v1933 = vpop.f32.mrb[0].mxu0
  %v1934 = vadd.f32 %v1869, %v1933
  %v1935 = vpop.f32.mrb[0].mxu0
  %1936 = vmatprep.mubr.bf16.mxu0 %v1297
  %1937 = vmatmul.mubr.bf16.gmra.mrb[0].mxu0 %v1280
  %v1938 = vpop.f32.mrb[0].mxu0
  %v1939 = vadd.f32 %v1874, %v1938
  %v1940 = vpop.f32.mrb[0].mxu0
  %v1941 = vpop.f32.mrb[0].mxu0
  %v1942 = vadd.f32 %v1877, %v1941
  %v1943 = vpop.f32.mrb[0].mxu0
  %1944 = vmatprep.mubr.bf16.mxu0 %v1301
  %1945 = vmatmul.mubr.bf16.gmra.mrb[0].mxu0 %v1282
  %v1946 = vpop.f32.mrb[0].mxu0
  %v1947 = vadd.f32 %v1882, %v1946
  %v1948 = vpop.f32.mrb[0].mxu0
  %v1949 = vpop.f32.mrb[0].mxu0
  %v1950 = vadd.f32 %v1885, %v1949
  %v1951 = vpop.f32.mrb[0].mxu0
  %1952 = vmatprep.mubr.bf16.mxu0 %v1300
  %1953 = vmatmul.mubr.bf16.gmra.mrb[0].mxu0 %v1281
  %v1954 = vpop.f32.mrb[0].mxu0
  %v1955 = vadd.f32 %v1890, %v1954
  %v1956 = vpop.f32.mrb[0].mxu0
  %v1957 = vpop.f32.mrb[0].mxu0
  %v1958 = vadd.f32 %v1893, %v1957
  %v1959 = vpop.f32.mrb[0].mxu0
  %1960 = vdwg.mxu0
  %1961 = vmatprep.subr.bf16.mxu0 0
  %1962 = vmatpush1.bf16.msra.mxu0 %v1702
  %1963 = vmatprep.subr.bf16.mxu0 0
  %1964 = vmatpush1.bf16.msra.mxu0 %v1703
  %1965 = vmatprep.subr.bf16.mxu0 0
  %1966 = vmatpush1.bf16.msra.mxu0 %v1704
  %1967 = vmatprep.subr.bf16.mxu0 0
  %1968 = vmatpush1.bf16.msra.mxu0 %v1705
  %1969 = vmatprep.subr.bf16.mxu0 0
  %1970 = vmatpush1.bf16.msra.mxu0 %v1706
  %1971 = vmatprep.subr.bf16.mxu0 0
  %1972 = vmatpush1.bf16.msra.mxu0 %v1707
  %1973 = vmatprep.subr.bf16.mxu0 0
  %1974 = vmatpush1.bf16.msra.mxu0 %v1708
  %1975 = vmatprep.subr.bf16.mxu0 0
  %1976 = vmatpush1.bf16.msra.mxu0 %v1709
  %1977 = vmatprep.subr.bf16.mxu0 0
  %1978 = vmatpush1.bf16.msra.mxu0 0
  %1979 = vmatprep.subr.bf16.mxu0 0
  %1980 = vmatpush1.bf16.msra.mxu0 0
  %1981 = vmatprep.subr.bf16.mxu0 0
  %1982 = vmatpush1.bf16.msra.mxu0 0
  %1983 = vmatprep.subr.bf16.mxu0 0
  %1984 = vmatpush1.bf16.msra.mxu0 0
  %1985 = vmatprep.subr.bf16.mxu0 0
  %1986 = vmatpush1.bf16.msra.mxu0 0
  %1987 = vmatprep.subr.bf16.mxu0 0
  %1988 = vmatpush1.bf16.msra.mxu0 0
  %1989 = vmatprep.subr.bf16.mxu0 0
  %1990 = vmatpush1.bf16.msra.mxu0 0
  %1991 = vmatprep.subr.bf16.mxu0 0
  %1992 = vmatpush1.bf16.msra.mxu0 0
  %1993 = vmatprep.mubr.bf16.mxu0 0
  %1994 = vmatmul.mubr.bf16.gmra.mrb[0].mxu0 %v1308
  %v1995 = vpop.f32.mrb[0].mxu0
  %v1996 = vadd.f32 %v1931, %v1995
  %v1997 = vpop.f32.mrb[0].mxu0
  %v1998 = vpop.f32.mrb[0].mxu0
  %v1999 = vadd.f32 %v1934, %v1998
  %v2000 = vpop.f32.mrb[0].mxu0
  %2001 = vmatprep.mubr.bf16.mxu0 0
  %2002 = vmatmul.mubr.bf16.gmra.mrb[0].mxu0 %v1310
  %v2003 = vpop.f32.mrb[0].mxu0
  %v2004 = vadd.f32 %v1939, %v2003
  %v2005 = vpop.f32.mrb[0].mxu0
  %v2006 = vpop.f32.mrb[0].mxu0
  %v2007 = vadd.f32 %v1942, %v2006
  %v2008 = vpop.f32.mrb[0].mxu0
  %2009 = vmatprep.mubr.bf16.mxu0 0
  %2010 = vmatmul.mubr.bf16.gmra.mrb[0].mxu0 %v1312
  %v2011 = vpop.f32.mrb[0].mxu0
  %v2012 = vadd.f32 %v1947, %v2011
  %v2013 = vpop.f32.mrb[0].mxu0
  %v2014 = vpop.f32.mrb[0].mxu0
  %v2015 = vadd.f32 %v1950, %v2014
  %v2016 = vpop.f32.mrb[0].mxu0
  %2017 = vmatprep.mubr.bf16.mxu0 0
  %2018 = vmatmul.mubr.bf16.gmra.mrb[0].mxu0 %v1311
  %v2019 = vpop.f32.mrb[0].mxu0
  %v2020 = vadd.f32 %v1955, %v2019
  %v2021 = vpop.f32.mrb[0].mxu0
  %v2022 = vpop.f32.mrb[0].mxu0
  %v2023 = vadd.f32 %v1958, %v2022
  %v2024 = vpop.f32.mrb[0].mxu0
  %2025 = vdwg.mxu0
  %v2027 = vlaneseq
  %v2028 = vshrl.u32 %v2027, 7
  %v2029 = vsub.s32 0, %v2028
  %v2030 = vrot.slane %v290, %v2029
  %v2032 = vadd.f32 %v1996, %v2030
  %v2033 = vadd.f32 %v1999, %v2030
  %v2034 = vadd.f32 %v2004, %v2030
  %v2035 = vadd.f32 %v2007, %v2030
  %v2036 = vadd.f32 %v2012, %v2030
  %v2037 = vadd.f32 %v2015, %v2030
  %v2038 = vadd.f32 %v2020, %v2030
  %v2039 = vadd.f32 %v2023, %v2030
  %vm2040 = vcmp.ge.f32.partialorder %v2032, 0.0
  %vm2041 = vcmp.ge.f32.partialorder %v2033, 0.0
  %vm2042 = vcmp.ge.f32.partialorder %v2034, 0.0
  %vm2043 = vcmp.ge.f32.partialorder %v2035, 0.0
  %vm2044 = vcmp.ge.f32.partialorder %v2036, 0.0
  %vm2045 = vcmp.ge.f32.partialorder %v2037, 0.0
  %vm2046 = vcmp.ge.f32.partialorder %v2038, 0.0
  %vm2047 = vcmp.ge.f32.partialorder %v2039, 0.0
  %v2049 = vlaneseq
  %v2050 = vshrl.u32 %v2049, 7
  %v2051 = vsub.s32 0, %v2050
  %v2052 = vrot.slane %v291, %v2051
  %2053 = vset.pattern.permute.xlu0 0
  %2054 = vperm.xlu0 %2053, %v2052
  %v2055 = vpop.permute.xlu0 %2054
  %v2057 = vmul.f32 %v2055, %v2032
  %v2058 = vmul.f32 %v2055, %v2033
  %v2059 = vmul.f32 %v2055, %v2034
  %v2060 = vmul.f32 %v2055, %v2035
  %v2061 = vmul.f32 %v2055, %v2036
  %v2062 = vmul.f32 %v2055, %v2037
  %v2063 = vmul.f32 %v2055, %v2038
  %v2064 = vmul.f32 %v2055, %v2039
  %v2065 = vsel %vm2040, %v2032, %v2057
  %v2066 = vsel %vm2041, %v2033, %v2058
  %v2067 = vsel %vm2042, %v2034, %v2059
  %v2068 = vsel %vm2043, %v2035, %v2060
  %v2069 = vsel %vm2044, %v2036, %v2061
  %v2070 = vsel %vm2045, %v2037, %v2062
  %v2071 = vsel %vm2046, %v2038, %v2063
  %v2072 = vsel %vm2047, %v2039, %v2064
  %v2073 = vpack.c.bf16 %v2066, %v2065
  %v2074 = vpack.c.bf16 %v2068, %v2067
  %v2075 = vpack.c.bf16 %v2070, %v2069
  %v2076 = vpack.c.bf16 %v2072, %v2071
  %v2078 = vshrl.u32 %v2073, 16
  %v2080 = vrot.slane %v2078, 6
  %v2081 = vshll.u32 %v2073, 16
  %v2083 = vrot.slane %v2081, 7
  %v2084 = vor.u32 %v2080, %v2083
  %v2086 = vshrl.u32 %v2074, 16
  %v2088 = vrot.slane %v2086, 6
  %v2089 = vshll.u32 %v2074, 16
  %v2091 = vrot.slane %v2089, 7
  %v2092 = vor.u32 %v2088, %v2091
  %v2093 = vsel %vm1164, %v2084, %v2092
  %v2095 = vshrl.u32 %v2075, 16
  %v2097 = vrot.slane %v2095, 6
  %v2098 = vshll.u32 %v2075, 16
  %v2100 = vrot.slane %v2098, 7
  %v2101 = vor.u32 %v2097, %v2100
  %v2102 = vsel %vm1164, %v2092, %v2101
  %v2104 = vshrl.u32 %v2076, 16
  %v2106 = vrot.slane %v2104, 6
  %v2107 = vshll.u32 %v2076, 16
  %v2109 = vrot.slane %v2107, 7
  %v2110 = vor.u32 %v2106, %v2109
  %v2111 = vsel %vm1164, %v2101, %v2110
  %v2116 = vsel %vm1205, 0, %v2084
  %v2117 = vsel %vm1207, %v2111, 0
  %v2121 = vunpack.c.l.b16 %v37
  %v2122 = vunpack.c.l.b16 %v38
  %v2123 = vunpack.c.l.b16 %v39
  %v2124 = vpack.c.b16 %v2122, %v2121
  %v2125 = vpack.c.b16 %v2123, %v2123
  %vm2126 = vcmask 261120
  %v2128 = vsel %vm2126, %v2124, 0
  %v2131 = vsel %vm2126, %v2125, 0
  %2133 = vmatprep.subr.bf16.mxu0 0
  %2134 = vmatpush1.bf16.msra.mxu0 %v2116
  %2135 = vmatprep.subr.bf16.mxu0 0
  %2136 = vmatpush1.bf16.msra.mxu0 %v2093
  %2137 = vmatprep.subr.bf16.mxu0 0
  %2138 = vmatpush1.bf16.msra.mxu0 0
  %2139 = vmatprep.subr.bf16.mxu0 0
  %2140 = vmatpush1.bf16.msra.mxu0 0
  %2141 = vmatprep.subr.bf16.mxu0 0
  %2142 = vmatpush1.bf16.msra.mxu0 0
  %2143 = vmatprep.subr.bf16.mxu0 0
  %2144 = vmatpush1.bf16.msra.mxu0 0
  %2145 = vmatprep.subr.bf16.mxu0 0
  %2146 = vmatpush1.bf16.msra.mxu0 0
  %2147 = vmatprep.subr.bf16.mxu0 0
  %2148 = vmatpush1.bf16.msra.mxu0 0
  %2149 = vmatprep.subr.bf16.mxu0 0
  %2150 = vmatpush1.bf16.msra.mxu0 0
  %2151 = vmatprep.subr.bf16.mxu0 0
  %2152 = vmatpush1.bf16.msra.mxu0 0
  %2153 = vmatprep.subr.bf16.mxu0 0
  %2154 = vmatpush1.bf16.msra.mxu0 0
  %2155 = vmatprep.subr.bf16.mxu0 0
  %2156 = vmatpush1.bf16.msra.mxu0 0
  %2157 = vmatprep.subr.bf16.mxu0 0
  %2158 = vmatpush1.bf16.msra.mxu0 0
  %2159 = vmatprep.subr.bf16.mxu0 0
  %2160 = vmatpush1.bf16.msra.mxu0 0
  %2161 = vmatprep.subr.bf16.mxu0 0
  %2162 = vmatpush1.bf16.msra.mxu0 0
  %2163 = vmatprep.subr.bf16.mxu0 0
  %2164 = vmatpush1.bf16.msra.mxu0 0
  %2165 = vmatprep.mubr.bf16.mxu0 0
  %2166 = vmatmul.mubr.bf16.gmra.mrb[0].mxu0 %v2128
  %v2167 = vpop.f32.mrb[0].mxu0
  %v2168 = vadd.f32 0.0, %v2167
  %v2169 = vpop.f32.mrb[0].mxu0
  %v2170 = vpop.f32.mrb[0].mxu0
  %v2171 = vadd.f32 0.0, %v2170
  %v2172 = vpop.f32.mrb[0].mxu0
  %2173 = vmatprep.mubr.bf16.mxu0 0
  %2174 = vmatmul.mubr.bf16.gmra.mrb[0].mxu0 %v2131
  %v2175 = vpop.f32.mrb[0].mxu0
  %v2176 = vadd.f32 0.0, %v2175
  %v2177 = vpop.f32.mrb[0].mxu0
  %v2178 = vpop.f32.mrb[0].mxu0
  %v2179 = vpop.f32.mrb[0].mxu0
  %2180 = vdwg.mxu0
  %2181 = vmatprep.subr.bf16.mxu0 0
  %2182 = vmatpush1.bf16.msra.mxu0 %v2102
  %2183 = vmatprep.subr.bf16.mxu0 0
  %2184 = vmatpush1.bf16.msra.mxu0 %v2117
  %2185 = vmatprep.subr.bf16.mxu0 0
  %2186 = vmatpush1.bf16.msra.mxu0 0
  %2187 = vmatprep.subr.bf16.mxu0 0
  %2188 = vmatpush1.bf16.msra.mxu0 0
  %2189 = vmatprep.subr.bf16.mxu0 0
  %2190 = vmatpush1.bf16.msra.mxu0 0
  %2191 = vmatprep.subr.bf16.mxu0 0
  %2192 = vmatpush1.bf16.msra.mxu0 0
  %2193 = vmatprep.subr.bf16.mxu0 0
  %2194 = vmatpush1.bf16.msra.mxu0 0
  %2195 = vmatprep.subr.bf16.mxu0 0
  %2196 = vmatpush1.bf16.msra.mxu0 0
  %2197 = vmatprep.subr.bf16.mxu0 0
  %2198 = vmatpush1.bf16.msra.mxu0 0
  %2199 = vmatprep.subr.bf16.mxu0 0
  %2200 = vmatpush1.bf16.msra.mxu0 0
  %2201 = vmatprep.subr.bf16.mxu0 0
  %2202 = vmatpush1.bf16.msra.mxu0 0
  %2203 = vmatprep.subr.bf16.mxu0 0
  %2204 = vmatpush1.bf16.msra.mxu0 0
  %2205 = vmatprep.subr.bf16.mxu0 0
  %2206 = vmatpush1.bf16.msra.mxu0 0
  %2207 = vmatprep.subr.bf16.mxu0 0
  %2208 = vmatpush1.bf16.msra.mxu0 0
  %2209 = vmatprep.subr.bf16.mxu0 0
  %2210 = vmatpush1.bf16.msra.mxu0 0
  %2211 = vmatprep.subr.bf16.mxu0 0
  %2212 = vmatpush1.bf16.msra.mxu0 0
  %2213 = vmatprep.mubr.bf16.mxu0 0
  %2214 = vmatmul.mubr.bf16.gmra.mrb[0].mxu0 %v2128
  %v2215 = vpop.f32.mrb[0].mxu0
  %v2216 = vadd.f32 0.0, %v2215
  %v2217 = vpop.f32.mrb[0].mxu0
  %v2218 = vpop.f32.mrb[0].mxu0
  %v2219 = vadd.f32 0.0, %v2218
  %v2220 = vpop.f32.mrb[0].mxu0
  %2221 = vmatprep.mubr.bf16.mxu0 0
  %2222 = vmatmul.mubr.bf16.gmra.mrb[0].mxu0 %v2131
  %v2223 = vpop.f32.mrb[0].mxu0
  %v2224 = vadd.f32 0.0, %v2223
  %v2225 = vpop.f32.mrb[0].mxu0
  %v2226 = vpop.f32.mrb[0].mxu0
  %v2227 = vpop.f32.mrb[0].mxu0
  %2228 = vdwg.mxu0
  %v2229 = vpack.c.bf16 %v2171, %v2168
  %v2230 = vpack.c.bf16 %v2216, %v2176
  %v2231 = vpack.c.bf16 %v2224, %v2219
  %v2235 = vunpack.c.l.b16 %v2229
  %v2236 = vunpack.c.h.b16 %v2229
  %v2237 = vunpack.c.l.b16 %v2230
  %v2238 = vunpack.c.h.b16 %v2230
  %v2239 = vunpack.c.l.b16 %v2231
  %v2240 = vunpack.c.h.b16 %v2231
  %v2241 = vpack.c.b16 %v2235, %v2235
  %v2242 = vpack.c.b16 %v2236, %v2236
  %v2243 = vpack.c.b16 %v2237, %v2237
  %v2244 = vpack.c.b16 %v2238, %v2238
  %v2245 = vpack.c.b16 %v2239, %v2239
  %v2246 = vpack.c.b16 %v2240, %v2240
  %2253 = vst [vmem:[%s9] sm:$0xf] %v2241
  %2254 = vst [vmem:[%s9 + $0x4] sm:$0xf] %v2242
  %2255 = vst [vmem:[%s9 + $0x8] sm:$0xf] %v2243
  %2256 = vst [vmem:[%s9 + $0xc] sm:$0xf] %v2244
  %2257 = vst [vmem:[%s9 + $0x10] sm:$0xf] %v2245
  %2258 = vst [vmem:[%s9 + $0x14] sm:$0xf] %v2246
  // Predicated region
  $region38: #{_lambda_.9} parent=0 // pred_check
    _
  $region39: #{_lambda_.9} parent=0 // pred_check_branch
    %2260 = sbr.rel (0) target = $region41
  $region40: #{_lambda_.9} parent=0 // pred_region
    _
  $region41: #{_lambda_.9} parent=0 // pred_fallthru
    _
  // Predicated region
  $region42: #{_lambda_.9} parent=0 // pred_check
    _
  $region43: #{_lambda_.9} parent=0 // pred_check_branch
    %2262 = sbr.rel (0) target = $region45
  $region44: #{_lambda_.9} parent=0 // pred_region
    _
  $region45: #{_lambda_.9} parent=0 // pred_fallthru
    _

// kernel: _lambda_.8
$region0: #{_lambda_.8}
  #allocation0 [shape = 'u32[]', space=smem, size = 0x4, offset = 0x4, fixed_abs, tag = 'smem constant byte address 0x4 - core index']
  #allocation1 [shape = 'u32[144,128]{1,0:T(1,128)}', space=vmem, size = 0x12000, scoped, tag = 'internal scratch']
  #allocation2 [shape = 'f32[1,1]{1,0:T(1,128)S(1)}', space=vmem, size = 0x200, scoped, tag = 'scoped memory for _lambda_.8']
  #allocation3 [shape = 'f32[1,1]{1,0:T(1,128)S(1)}', space=vmem, size = 0x200, scoped, tag = 'scoped memory for _lambda_.8']
  %s0 = inlined_call_operand.vmem [shape: bf16[96,128], index: 0, kind: input, shape index: {}]
  %s1 = inlined_call_operand.vmem [shape: bf16[896,128], index: 1, kind: input, shape index: {}]
  %s2 = inlined_call_operand.vmem [shape: f32[1,128], index: 2, kind: input, shape index: {}]
  %s3 = inlined_call_operand.<no memory space> [shape: f32[1,1], index: 3, kind: input, shape index: {}]
  %s4 = inlined_call_operand.hbm [shape: bf16[896,128], index: 4, kind: input, shape index: {}]
  %s5 = inlined_call_operand.vmem [shape: bf16[128,128], index: 5, kind: input, shape index: {}]
  %s6 = inlined_call_operand.vmem [shape: f32[1,128], index: 6, kind: input, shape index: {}]
  %s7 = inlined_call_operand.<no memory space> [shape: f32[1,1], index: 7, kind: input, shape index: {}]
  %s8 = inlined_call_operand.vmem [shape: bf16[32,48], index: 8, kind: input, shape index: {}]
  %s9 = inlined_call_operand.vmem [shape: bf16[64,128], index: 9, kind: output, shape index: {}]
  %s10 = sld [smem:[#allocation0]]
  $region50: #{_lambda_.8} parent=0
    _
  %s12 = ssub.s32 1, %s10
  %s13 = scalar_select 0, %s12, %s10
  %v14 = vstv %s3
  %15 = vst [vmem:[#allocation2] sm:$0x1] %v14
  %v16 = vstv %s7
  %17 = vst [vmem:[#allocation3] sm:$0x1] %v16
  $region1: #{_lambda_.8} parent=0
    #allocation4 [shape = 'u8[229376]{0}', space=vmem, size = 0x38000, scoped, tag = 'input window, operand 4, single buffered']
    #allocation5 [shape = 's32[1]{0}', space=sflag, size = 0x4, scoped, tag = 'scoped memory for _lambda_.8']
    %18 = vsyncpa [#allocation5], 0
    // Predicated region
    $region2: #{_lambda_.8} parent=1 // pred_check
      _
    $region3: #{_lambda_.8} parent=1 // pred_check_branch
      %20 = sbr.rel (0) target = $region5
    $region4: #{_lambda_.8} parent=1 // pred_region
      _
    $region5: #{_lambda_.8} parent=1 // pred_fallthru
      _
    // Predicated region
    $region6: #{_lambda_.8} parent=1 // pred_check
      _
    $region7: #{_lambda_.8} parent=1 // pred_check_branch
      %22 = sbr.rel (0) target = $region9
    $region8: #{_lambda_.8} parent=1 // pred_region
      _
    $region9: #{_lambda_.8} parent=1 // pred_fallthru
      _
    // Predicated region
    $region10: #{_lambda_.8} parent=1 // pred_check
      _
    $region11: #{_lambda_.8} parent=1 // pred_check_branch
      %24 = sbr.rel (0) target = $region13
    $region12: #{_lambda_.8} parent=1 // pred_region
      _
    $region13: #{_lambda_.8} parent=1 // pred_fallthru
      _
    // Predicated region
    $region14: #{_lambda_.8} parent=1 // pred_check
      _
    $region15: #{_lambda_.8} parent=1 // pred_check_branch
      %26 = sbr.rel (0) target = $region17
    $region16: #{_lambda_.8} parent=1 // pred_region
      _
    $region17: #{_lambda_.8} parent=1 // pred_fallthru
      _
    // Predicated region
    $region18: #{_lambda_.8} parent=1 // pred_check
      _
    $region19: #{_lambda_.8} parent=1 // pred_check_branch
      %28 = sbr.rel (0) target = $region21
    $region20: #{_lambda_.8} parent=1 // pred_region
      %s30 = ssub.s32 7168, 7168
      %31 = vsyncadd [#allocation5], %s30
      %s32 = sshll.u32 [#allocation4], 4
      %s33 = int_to_ptr.vmem [resolvable:$true] %s32
      %38 = dma.hbm_to_vmem [thread:$0]  %s4, 7168, %s33, [#allocation5], 64, 64, 4
    $region21: #{_lambda_.8} parent=1 // pred_fallthru
      _
    // Predicated region
    $region22: #{_lambda_.8} parent=1 // pred_check
      _
    $region23: #{_lambda_.8} parent=1 // pred_check_branch
      %40 = sbr.rel (0) target = $region25
    $region24: #{_lambda_.8} parent=1 // pred_region
      _
    $region25: #{_lambda_.8} parent=1 // pred_fallthru
      _
    // Predicated region
    $region26: #{_lambda_.8} parent=1 // pred_check
      _
    $region27: #{_lambda_.8} parent=1 // pred_check_branch
      %42 = sbr.rel (0) target = $region29
    $region28: #{_lambda_.8} parent=1 // pred_region
      _
    $region29: #{_lambda_.8} parent=1 // pred_fallthru
      _
    // Predicated region
    $region30: #{_lambda_.8} parent=1 // pred_check
      _
    $region31: #{_lambda_.8} parent=1 // pred_check_branch
      %44 = sbr.rel (0) target = $region33
    $region32: #{_lambda_.8} parent=1 // pred_region
      _
    $region33: #{_lambda_.8} parent=1 // pred_fallthru
      _
    // Predicated region
    $region34: #{_lambda_.8} parent=1 // pred_check
      _
    $region35: #{_lambda_.8} parent=1 // pred_check_branch
      %46 = sbr.rel (0) target = $region37
    $region36: #{_lambda_.8} parent=1 // pred_region
      _
    $region37: #{_lambda_.8} parent=1 // pred_fallthru
      _
    // Predicated region
    $region38: #{_lambda_.8} parent=1 // pred_check
      _
    $region39: #{_lambda_.8} parent=1 // pred_check_branch
      %48 = sbr.rel (0) target = $region41
    $region40: #{_lambda_.8} parent=1 // pred_region
      %49 = dma.done [#allocation5], 7168
    $region41: #{_lambda_.8} parent=1 // pred_fallthru
      _
    %v51 = vld [vmem:[%s8] sm:$0xf]
    %v52 = vld [vmem:[%s8 + $0x4] sm:$0xf]
    %v53 = vld [vmem:[%s8 + $0x8] sm:$0xf]
    %v54 = vld [vmem:[%s8 + $0xc] sm:$0xf]
    %v55 = vld [vmem:[%s0] sm:$0xf]
    %v56 = vld [vmem:[%s0 + $0x4] sm:$0xf]
    %v57 = vld [vmem:[%s0 + $0x8] sm:$0xf]
    %v58 = vld [vmem:[%s0 + $0xc] sm:$0xf]
    %v59 = vld [vmem:[%s0 + $0x10] sm:$0xf]
    %v60 = vld [vmem:[%s0 + $0x14] sm:$0xf]
    %v61 = vld [vmem:[%s0 + $0x18] sm:$0xf]
    %v62 = vld [vmem:[%s0 + $0x1c] sm:$0xf]
    %v63 = vld [vmem:[%s0 + $0x20] sm:$0xf]
    %v64 = vld [vmem:[%s0 + $0x24] sm:$0xf]
    %v65 = vld [vmem:[%s0 + $0x28] sm:$0xf]
    %v66 = vld [vmem:[%s0 + $0x2c] sm:$0xf]
    %v67 = vld [vmem:[%s1] sm:$0xf]
    %v68 = vld [vmem:[%s1 + $0x4] sm:$0xf]
    %v69 = vld [vmem:[%s1 + $0x8] sm:$0xf]
    %v70 = vld [vmem:[%s1 + $0xc] sm:$0xf]
    %v71 = vld [vmem:[%s1 + $0x10] sm:$0xf]
    %v72 = vld [vmem:[%s1 + $0x14] sm:$0xf]
    %v73 = vld [vmem:[%s1 + $0x18] sm:$0xf]
    %v74 = vld [vmem:[%s1 + $0x1c] sm:$0xf]
    %v75 = vld [vmem:[%s1 + $0x20] sm:$0xf]
    %v76 = vld [vmem:[%s1 + $0x24] sm:$0xf]
    %v77 = vld [vmem:[%s1 + $0x28] sm:$0xf]
    %v78 = vld [vmem:[%s1 + $0x2c] sm:$0xf]
    %v79 = vld [vmem:[%s1 + $0x30] sm:$0xf]
    %v80 = vld [vmem:[%s1 + $0x34] sm:$0xf]
    %v81 = vld [vmem:[%s1 + $0x38] sm:$0xf]
    %v82 = vld [vmem:[%s1 + $0x3c] sm:$0xf]
    %v83 = vld [vmem:[%s1 + $0x40] sm:$0xf]
    %v84 = vld [vmem:[%s1 + $0x44] sm:$0xf]
    %v85 = vld [vmem:[%s1 + $0x48] sm:$0xf]
    %v86 = vld [vmem:[%s1 + $0x4c] sm:$0xf]
    %v87 = vld [vmem:[%s1 + $0x50] sm:$0xf]
    %v88 = vld [vmem:[%s1 + $0x54] sm:$0xf]
    %v89 = vld [vmem:[%s1 + $0x58] sm:$0xf]
    %v90 = vld [vmem:[%s1 + $0x5c] sm:$0xf]
    %v91 = vld [vmem:[%s1 + $0x60] sm:$0xf]
    %v92 = vld [vmem:[%s1 + $0x64] sm:$0xf]
    %v93 = vld [vmem:[%s1 + $0x68] sm:$0xf]
    %v94 = vld [vmem:[%s1 + $0x6c] sm:$0xf]
    %v95 = vld [vmem:[%s1 + $0x70] sm:$0xf]
    %v96 = vld [vmem:[%s1 + $0x74] sm:$0xf]
    %v97 = vld [vmem:[%s1 + $0x78] sm:$0xf]
    %v98 = vld [vmem:[%s1 + $0x7c] sm:$0xf]
    %v99 = vld [vmem:[%s1 + $0x80] sm:$0xf]
    %v100 = vld [vmem:[%s1 + $0x84] sm:$0xf]
    %v101 = vld [vmem:[%s1 + $0x88] sm:$0xf]
    %v102 = vld [vmem:[%s1 + $0x8c] sm:$0xf]
    %v103 = vld [vmem:[%s1 + $0x90] sm:$0xf]
    %v104 = vld [vmem:[%s1 + $0x94] sm:$0xf]
    %v105 = vld [vmem:[%s1 + $0x98] sm:$0xf]
    %v106 = vld [vmem:[%s1 + $0x9c] sm:$0xf]
    %v107 = vld [vmem:[%s1 + $0xa0] sm:$0xf]
    %v108 = vld [vmem:[%s1 + $0xa4] sm:$0xf]
    %v109 = vld [vmem:[%s1 + $0xa8] sm:$0xf]
    %v110 = vld [vmem:[%s1 + $0xac] sm:$0xf]
    %v111 = vld [vmem:[%s1 + $0xb0] sm:$0xf]
    %v112 = vld [vmem:[%s1 + $0xb4] sm:$0xf]
    %v113 = vld [vmem:[%s1 + $0xb8] sm:$0xf]
    %v114 = vld [vmem:[%s1 + $0xbc] sm:$0xf]
    %v115 = vld [vmem:[%s1 + $0xc0] sm:$0xf]
    %v116 = vld [vmem:[%s1 + $0xc4] sm:$0xf]
    %v117 = vld [vmem:[%s1 + $0xc8] sm:$0xf]
    %v118 = vld [vmem:[%s1 + $0xcc] sm:$0xf]
    %v119 = vld [vmem:[%s1 + $0xd0] sm:$0xf]
    %v120 = vld [vmem:[%s1 + $0xd4] sm:$0xf]
    %v121 = vld [vmem:[%s1 + $0xd8] sm:$0xf]
    %v122 = vld [vmem:[%s1 + $0xdc] sm:$0xf]
    %v123 = vld [vmem:[%s1 + $0xe0] sm:$0xf]
    %v124 = vld [vmem:[%s1 + $0xe4] sm:$0xf]
    %v125 = vld [vmem:[%s1 + $0xe8] sm:$0xf]
    %v126 = vld [vmem:[%s1 + $0xec] sm:$0xf]
    %v127 = vld [vmem:[%s1 + $0xf0] sm:$0xf]
    %v128 = vld [vmem:[%s1 + $0xf4] sm:$0xf]
    %v129 = vld [vmem:[%s1 + $0xf8] sm:$0xf]
    %v130 = vld [vmem:[%s1 + $0xfc] sm:$0xf]
    %v131 = vld [vmem:[%s1 + $0x100] sm:$0xf]
    %v132 = vld [vmem:[%s1 + $0x104] sm:$0xf]
    %v133 = vld [vmem:[%s1 + $0x108] sm:$0xf]
    %v134 = vld [vmem:[%s1 + $0x10c] sm:$0xf]
    %v135 = vld [vmem:[%s1 + $0x110] sm:$0xf]
    %v136 = vld [vmem:[%s1 + $0x114] sm:$0xf]
    %v137 = vld [vmem:[%s1 + $0x118] sm:$0xf]
    %v138 = vld [vmem:[%s1 + $0x11c] sm:$0xf]
    %v139 = vld [vmem:[%s1 + $0x120] sm:$0xf]
    %v140 = vld [vmem:[%s1 + $0x124] sm:$0xf]
    %v141 = vld [vmem:[%s1 + $0x128] sm:$0xf]
    %v142 = vld [vmem:[%s1 + $0x12c] sm:$0xf]
    %v143 = vld [vmem:[%s1 + $0x130] sm:$0xf]
    %v144 = vld [vmem:[%s1 + $0x134] sm:$0xf]
    %v145 = vld [vmem:[%s1 + $0x138] sm:$0xf]
    %v146 = vld [vmem:[%s1 + $0x13c] sm:$0xf]
    %v147 = vld [vmem:[%s1 + $0x140] sm:$0xf]
    %v148 = vld [vmem:[%s1 + $0x144] sm:$0xf]
    %v149 = vld [vmem:[%s1 + $0x148] sm:$0xf]
    %v150 = vld [vmem:[%s1 + $0x14c] sm:$0xf]
    %v151 = vld [vmem:[%s1 + $0x150] sm:$0xf]
    %v152 = vld [vmem:[%s1 + $0x154] sm:$0xf]
    %v153 = vld [vmem:[%s1 + $0x158] sm:$0xf]
    %v154 = vld [vmem:[%s1 + $0x15c] sm:$0xf]
    %v155 = vld [vmem:[%s1 + $0x160] sm:$0xf]
    %v156 = vld [vmem:[%s1 + $0x164] sm:$0xf]
    %v157 = vld [vmem:[%s1 + $0x168] sm:$0xf]
    %v158 = vld [vmem:[%s1 + $0x16c] sm:$0xf]
    %v159 = vld [vmem:[%s1 + $0x170] sm:$0xf]
    %v160 = vld [vmem:[%s1 + $0x174] sm:$0xf]
    %v161 = vld [vmem:[%s1 + $0x178] sm:$0xf]
    %v162 = vld [vmem:[%s1 + $0x17c] sm:$0xf]
    %v163 = vld [vmem:[%s1 + $0x180] sm:$0xf]
    %v164 = vld [vmem:[%s1 + $0x184] sm:$0xf]
    %v165 = vld [vmem:[%s1 + $0x188] sm:$0xf]
    %v166 = vld [vmem:[%s1 + $0x18c] sm:$0xf]
    %v167 = vld [vmem:[%s1 + $0x190] sm:$0xf]
    %v168 = vld [vmem:[%s1 + $0x194] sm:$0xf]
    %v169 = vld [vmem:[%s1 + $0x198] sm:$0xf]
    %v170 = vld [vmem:[%s1 + $0x19c] sm:$0xf]
    %v171 = vld [vmem:[%s1 + $0x1a0] sm:$0xf]
    %v172 = vld [vmem:[%s1 + $0x1a4] sm:$0xf]
    %v173 = vld [vmem:[%s1 + $0x1a8] sm:$0xf]
    %v174 = vld [vmem:[%s1 + $0x1ac] sm:$0xf]
    %v175 = vld [vmem:[%s1 + $0x1b0] sm:$0xf]
    %v176 = vld [vmem:[%s1 + $0x1b4] sm:$0xf]
    %v177 = vld [vmem:[%s1 + $0x1b8] sm:$0xf]
    %v178 = vld [vmem:[%s1 + $0x1bc] sm:$0xf]
    %v179 = vld [vmem:[%s2] sm:$0x1]
    %v180 = vld [vmem:[#allocation2] sm:$0x1]
    %v181 = vld [vmem:[#allocation4] sm:$0xf]
    %v182 = vld [vmem:[#allocation4 + $0x4] sm:$0xf]
    %v183 = vld [vmem:[#allocation4 + $0x8] sm:$0xf]
    %v184 = vld [vmem:[#allocation4 + $0xc] sm:$0xf]
    %v185 = vld [vmem:[#allocation4 + $0x10] sm:$0xf]
    %v186 = vld [vmem:[#allocation4 + $0x14] sm:$0xf]
    %v187 = vld [vmem:[#allocation4 + $0x18] sm:$0xf]
    %v188 = vld [vmem:[#allocation4 + $0x1c] sm:$0xf]
    %v189 = vld [vmem:[#allocation4 + $0x20] sm:$0xf]
    %v190 = vld [vmem:[#allocation4 + $0x24] sm:$0xf]
    %v191 = vld [vmem:[#allocation4 + $0x28] sm:$0xf]
    %v192 = vld [vmem:[#allocation4 + $0x2c] sm:$0xf]
    %v193 = vld [vmem:[#allocation4 + $0x30] sm:$0xf]
    %v194 = vld [vmem:[#allocation4 + $0x34] sm:$0xf]
    %v195 = vld [vmem:[#allocation4 + $0x38] sm:$0xf]
    %v196 = vld [vmem:[#allocation4 + $0x3c] sm:$0xf]
    %v197 = vld [vmem:[#allocation4 + $0x40] sm:$0xf]
    %v198 = vld [vmem:[#allocation4 + $0x44] sm:$0xf]
    %v199 = vld [vmem:[#allocation4 + $0x48] sm:$0xf]
    %v200 = vld [vmem:[#allocation4 + $0x4c] sm:$0xf]
    %v201 = vld [vmem:[#allocation4 + $0x50] sm:$0xf]
    %v202 = vld [vmem:[#allocation4 + $0x54] sm:$0xf]
    %v203 = vld [vmem:[#allocation4 + $0x58] sm:$0xf]
    %v204 = vld [vmem:[#allocation4 + $0x5c] sm:$0xf]
    %v205 = vld [vmem:[#allocation4 + $0x60] sm:$0xf]
    %v206 = vld [vmem:[#allocation4 + $0x64] sm:$0xf]
    %v207 = vld [vmem:[#allocation4 + $0x68] sm:$0xf]
    %v208 = vld [vmem:[#allocation4 + $0x6c] sm:$0xf]
    %v209 = vld [vmem:[#allocation4 + $0x70] sm:$0xf]
    %v210 = vld [vmem:[#allocation4 + $0x74] sm:$0xf]
    %v211 = vld [vmem:[#allocation4 + $0x78] sm:$0xf]
    %v212 = vld [vmem:[#allocation4 + $0x7c] sm:$0xf]
    %v213 = vld [vmem:[#allocation4 + $0x80] sm:$0xf]
    %v214 = vld [vmem:[#allocation4 + $0x84] sm:$0xf]
    %v215 = vld [vmem:[#allocation4 + $0x88] sm:$0xf]
    %v216 = vld [vmem:[#allocation4 + $0x8c] sm:$0xf]
    %v217 = vld [vmem:[#allocation4 + $0x90] sm:$0xf]
    %v218 = vld [vmem:[#allocation4 + $0x94] sm:$0xf]
    %v219 = vld [vmem:[#allocation4 + $0x98] sm:$0xf]
    %v220 = vld [vmem:[#allocation4 + $0x9c] sm:$0xf]
    %v221 = vld [vmem:[#allocation4 + $0xa0] sm:$0xf]
    %v222 = vld [vmem:[#allocation4 + $0xa4] sm:$0xf]
    %v223 = vld [vmem:[#allocation4 + $0xa8] sm:$0xf]
    %v224 = vld [vmem:[#allocation4 + $0xac] sm:$0xf]
    %v225 = vld [vmem:[#allocation4 + $0xb0] sm:$0xf]
    %v226 = vld [vmem:[#allocation4 + $0xb4] sm:$0xf]
    %v227 = vld [vmem:[#allocation4 + $0xb8] sm:$0xf]
    %v228 = vld [vmem:[#allocation4 + $0xbc] sm:$0xf]
    %v229 = vld [vmem:[#allocation4 + $0xc0] sm:$0xf]
    %v230 = vld [vmem:[#allocation4 + $0xc4] sm:$0xf]
    %v231 = vld [vmem:[#allocation4 + $0xc8] sm:$0xf]
    %v232 = vld [vmem:[#allocation4 + $0xcc] sm:$0xf]
    %v233 = vld [vmem:[#allocation4 + $0xd0] sm:$0xf]
    %v234 = vld [vmem:[#allocation4 + $0xd4] sm:$0xf]
    %v235 = vld [vmem:[#allocation4 + $0xd8] sm:$0xf]
    %v236 = vld [vmem:[#allocation4 + $0xdc] sm:$0xf]
    %v237 = vld [vmem:[#allocation4 + $0xe0] sm:$0xf]
    %v238 = vld [vmem:[#allocation4 + $0xe4] sm:$0xf]
    %v239 = vld [vmem:[#allocation4 + $0xe8] sm:$0xf]
    %v240 = vld [vmem:[#allocation4 + $0xec] sm:$0xf]
    %v241 = vld [vmem:[#allocation4 + $0xf0] sm:$0xf]
    %v242 = vld [vmem:[#allocation4 + $0xf4] sm:$0xf]
    %v243 = vld [vmem:[#allocation4 + $0xf8] sm:$0xf]
    %v244 = vld [vmem:[#allocation4 + $0xfc] sm:$0xf]
    %v245 = vld [vmem:[#allocation4 + $0x100] sm:$0xf]
    %v246 = vld [vmem:[#allocation4 + $0x104] sm:$0xf]
    %v247 = vld [vmem:[#allocation4 + $0x108] sm:$0xf]
    %v248 = vld [vmem:[#allocation4 + $0x10c] sm:$0xf]
    %v249 = vld [vmem:[#allocation4 + $0x110] sm:$0xf]
    %v250 = vld [vmem:[#allocation4 + $0x114] sm:$0xf]
    %v251 = vld [vmem:[#allocation4 + $0x118] sm:$0xf]
    %v252 = vld [vmem:[#allocation4 + $0x11c] sm:$0xf]
    %v253 = vld [vmem:[#allocation4 + $0x120] sm:$0xf]
    %v254 = vld [vmem:[#allocation4 + $0x124] sm:$0xf]
    %v255 = vld [vmem:[#allocation4 + $0x128] sm:$0xf]
    %v256 = vld [vmem:[#allocation4 + $0x12c] sm:$0xf]
    %v257 = vld [vmem:[#allocation4 + $0x130] sm:$0xf]
    %v258 = vld [vmem:[#allocation4 + $0x134] sm:$0xf]
    %v259 = vld [vmem:[#allocation4 + $0x138] sm:$0xf]
    %v260 = vld [vmem:[#allocation4 + $0x13c] sm:$0xf]
    %v261 = vld [vmem:[#allocation4 + $0x140] sm:$0xf]
    %v262 = vld [vmem:[#allocation4 + $0x144] sm:$0xf]
    %v263 = vld [vmem:[#allocation4 + $0x148] sm:$0xf]
    %v264 = vld [vmem:[#allocation4 + $0x14c] sm:$0xf]
    %v265 = vld [vmem:[#allocation4 + $0x150] sm:$0xf]
    %v266 = vld [vmem:[#allocation4 + $0x154] sm:$0xf]
    %v267 = vld [vmem:[#allocation4 + $0x158] sm:$0xf]
    %v268 = vld [vmem:[#allocation4 + $0x15c] sm:$0xf]
    %v269 = vld [vmem:[#allocation4 + $0x160] sm:$0xf]
    %v270 = vld [vmem:[#allocation4 + $0x164] sm:$0xf]
    %v271 = vld [vmem:[#allocation4 + $0x168] sm:$0xf]
    %v272 = vld [vmem:[#allocation4 + $0x16c] sm:$0xf]
    %v273 = vld [vmem:[#allocation4 + $0x170] sm:$0xf]
    %v274 = vld [vmem:[#allocation4 + $0x174] sm:$0xf]
    %v275 = vld [vmem:[#allocation4 + $0x178] sm:$0xf]
    %v276 = vld [vmem:[#allocation4 + $0x17c] sm:$0xf]
    %v277 = vld [vmem:[#allocation4 + $0x180] sm:$0xf]
    %v278 = vld [vmem:[#allocation4 + $0x184] sm:$0xf]
    %v279 = vld [vmem:[#allocation4 + $0x188] sm:$0xf]
    %v280 = vld [vmem:[#allocation4 + $0x18c] sm:$0xf]
    %v281 = vld [vmem:[#allocation4 + $0x190] sm:$0xf]
    %v282 = vld [vmem:[#allocation4 + $0x194] sm:$0xf]
    %v283 = vld [vmem:[#allocation4 + $0x198] sm:$0xf]
    %v284 = vld [vmem:[#allocation4 + $0x19c] sm:$0xf]
    %v285 = vld [vmem:[#allocation4 + $0x1a0] sm:$0xf]
    %v286 = vld [vmem:[#allocation4 + $0x1a4] sm:$0xf]
    %v287 = vld [vmem:[#allocation4 + $0x1a8] sm:$0xf]
    %v288 = vld [vmem:[#allocation4 + $0x1ac] sm:$0xf]
    %v289 = vld [vmem:[#allocation4 + $0x1b0] sm:$0xf]
    %v290 = vld [vmem:[#allocation4 + $0x1b4] sm:$0xf]
    %v291 = vld [vmem:[#allocation4 + $0x1b8] sm:$0xf]
    %v292 = vld [vmem:[#allocation4 + $0x1bc] sm:$0xf]
    %v293 = vld [vmem:[%s5] sm:$0xf]
    %v294 = vld [vmem:[%s5 + $0x4] sm:$0xf]
    %v295 = vld [vmem:[%s5 + $0x8] sm:$0xf]
    %v296 = vld [vmem:[%s5 + $0xc] sm:$0xf]
    %v297 = vld [vmem:[%s5 + $0x10] sm:$0xf]
    %v298 = vld [vmem:[%s5 + $0x14] sm:$0xf]
    %v299 = vld [vmem:[%s5 + $0x18] sm:$0xf]
    %v300 = vld [vmem:[%s5 + $0x1c] sm:$0xf]
    %v301 = vld [vmem:[%s5 + $0x20] sm:$0xf]
    %v302 = vld [vmem:[%s5 + $0x24] sm:$0xf]
    %v303 = vld [vmem:[%s5 + $0x28] sm:$0xf]
    %v304 = vld [vmem:[%s5 + $0x2c] sm:$0xf]
    %v305 = vld [vmem:[%s5 + $0x30] sm:$0xf]
    %v306 = vld [vmem:[%s5 + $0x34] sm:$0xf]
    %v307 = vld [vmem:[%s5 + $0x38] sm:$0xf]
    %v308 = vld [vmem:[%s5 + $0x3c] sm:$0xf]
    %v309 = vld [vmem:[%s6] sm:$0x1]
    %v310 = vld [vmem:[#allocation3] sm:$0x1]
    %v311 = vlaneseq
    %v312 = vshrl.u32 %v311, 7
    %v313 = vadd.s32 %v312, 8
    %v314 = vadd.s32 %v312, 16
    %v315 = vadd.s32 %v312, 24
    %v316 = vadd.s32 %v312, 32
    %v317 = vadd.s32 %v312, 40
    %v318 = vadd.s32 %v312, 48
    %v319 = vadd.s32 %v312, 56
    %v320 = vadd.s32 %v312, 64
    %v321 = vadd.s32 %v312, 72
    %v322 = vadd.s32 %v312, 80
    %v323 = vadd.s32 %v312, 88
    %v324 = vadd.s32 %v312, 3
    %v325 = vadd.s32 %v313, 3
    %v326 = vadd.s32 %v314, 3
    %v327 = vadd.s32 %v315, 3
    %v328 = vadd.s32 %v316, 3
    %v329 = vadd.s32 %v317, 3
    %v330 = vadd.s32 %v318, 3
    %v331 = vadd.s32 %v319, 3
    %v332 = vadd.s32 %v320, 3
    %v333 = vadd.s32 %v321, 3
    %v334 = vadd.s32 %v322, 3
    %v335 = vadd.s32 %v323, 3
    %vm336 = vcmp.ge.s32.totalorder %v324, 8
    %vm337 = vcmp.ge.s32.totalorder %v325, 8
    %vm338 = vcmp.ge.s32.totalorder %v326, 8
    %vm339 = vcmp.ge.s32.totalorder %v327, 8
    %vm340 = vcmp.ge.s32.totalorder %v328, 8
    %vm341 = vcmp.ge.s32.totalorder %v329, 8
    %vm342 = vcmp.ge.s32.totalorder %v330, 8
    %vm343 = vcmp.ge.s32.totalorder %v331, 8
    %vm344 = vcmp.ge.s32.totalorder %v332, 8
    %vm345 = vcmp.ge.s32.totalorder %v333, 8
    %vm346 = vcmp.ge.s32.totalorder %v334, 8
    %vm347 = vcmp.ge.s32.totalorder %v335, 8
    %vm348 = vcmp.lt.s32.totalorder %v324, 41
    %vm349 = vcmp.lt.s32.totalorder %v325, 41
    %vm350 = vcmp.lt.s32.totalorder %v326, 41
    %vm351 = vcmp.lt.s32.totalorder %v327, 41
    %vm352 = vcmp.lt.s32.totalorder %v328, 41
    %vm353 = vcmp.lt.s32.totalorder %v329, 41
    %vm354 = vcmp.lt.s32.totalorder %v330, 41
    %vm355 = vcmp.lt.s32.totalorder %v331, 41
    %vm356 = vcmp.lt.s32.totalorder %v332, 41
    %vm357 = vcmp.lt.s32.totalorder %v333, 41
    %vm358 = vcmp.lt.s32.totalorder %v334, 41
    %vm359 = vcmp.lt.s32.totalorder %v335, 41
    %vm360 = vmand %vm336, %vm348
    %vm361 = vmand %vm337, %vm349
    %vm362 = vmand %vm338, %vm350
    %vm363 = vmand %vm339, %vm351
    %vm364 = vmand %vm340, %vm352
    %vm365 = vmand %vm341, %vm353
    %vm366 = vmand %vm342, %vm354
    %vm367 = vmand %vm343, %vm355
    %vm368 = vmand %vm344, %vm356
    %vm369 = vmand %vm345, %vm357
    %vm370 = vmand %vm346, %vm358
    %vm371 = vmand %vm347, %vm359
    %vm372 = vcmp.ge.s32.totalorder %v324, 56
    %vm373 = vcmp.ge.s32.totalorder %v325, 56
    %vm374 = vcmp.ge.s32.totalorder %v326, 56
    %vm375 = vcmp.ge.s32.totalorder %v327, 56
    %vm376 = vcmp.ge.s32.totalorder %v328, 56
    %vm377 = vcmp.ge.s32.totalorder %v329, 56
    %vm378 = vcmp.ge.s32.totalorder %v330, 56
    %vm379 = vcmp.ge.s32.totalorder %v331, 56
    %vm380 = vcmp.ge.s32.totalorder %v332, 56
    %vm381 = vcmp.ge.s32.totalorder %v333, 56
    %vm382 = vcmp.ge.s32.totalorder %v334, 56
    %vm383 = vcmp.ge.s32.totalorder %v335, 56
    %vm384 = vcmp.lt.s32.totalorder %v324, 89
    %vm385 = vcmp.lt.s32.totalorder %v325, 89
    %vm386 = vcmp.lt.s32.totalorder %v326, 89
    %vm387 = vcmp.lt.s32.totalorder %v327, 89
    %vm388 = vcmp.lt.s32.totalorder %v328, 89
    %vm389 = vcmp.lt.s32.totalorder %v329, 89
    %vm390 = vcmp.lt.s32.totalorder %v330, 89
    %vm391 = vcmp.lt.s32.totalorder %v331, 89
    %vm392 = vcmp.lt.s32.totalorder %v332, 89
    %vm393 = vcmp.lt.s32.totalorder %v333, 89
    %vm394 = vcmp.lt.s32.totalorder %v334, 89
    %vm395 = vcmp.lt.s32.totalorder %v335, 89
    %vm396 = vmand %vm372, %vm384
    %vm397 = vmand %vm373, %vm385
    %vm398 = vmand %vm374, %vm386
    %vm399 = vmand %vm375, %vm387
    %vm400 = vmand %vm376, %vm388
    %vm401 = vmand %vm377, %vm389
    %vm402 = vmand %vm378, %vm390
    %vm403 = vmand %vm379, %vm391
    %vm404 = vmand %vm380, %vm392
    %vm405 = vmand %vm381, %vm393
    %vm406 = vmand %vm382, %vm394
    %vm407 = vmand %vm383, %vm395
    %vm408 = vmor %vm360, %vm396
    %vm409 = vmor %vm361, %vm397
    %vm410 = vmor %vm362, %vm398
    %vm411 = vmor %vm363, %vm399
    %vm412 = vmor %vm364, %vm400
    %vm413 = vmor %vm365, %vm401
    %vm414 = vmor %vm366, %vm402
    %vm415 = vmor %vm367, %vm403
    %vm416 = vmor %vm368, %vm404
    %vm417 = vmor %vm369, %vm405
    %vm418 = vmor %vm370, %vm406
    %vm419 = vmor %vm371, %vm407
    %v432 = vunpack.c.l.b16 %v55
    %v433 = vunpack.c.l.b16 %v56
    %v434 = vunpack.c.l.b16 %v57
    %v435 = vunpack.c.l.b16 %v58
    %v436 = vunpack.c.l.b16 %v59
    %v437 = vunpack.c.l.b16 %v60
    %v438 = vunpack.c.l.b16 %v61
    %v439 = vunpack.c.l.b16 %v62
    %v440 = vunpack.c.l.b16 %v63
    %v441 = vunpack.c.l.b16 %v64
    %v442 = vunpack.c.l.b16 %v65
    %v443 = vunpack.c.l.b16 %v66
    %v444 = vpack.c.b16 %v433, %v432
    %v445 = vpack.c.b16 %v435, %v434
    %v446 = vpack.c.b16 %v437, %v436
    %v447 = vpack.c.b16 %v439, %v438
    %v448 = vpack.c.b16 %v441, %v440
    %v449 = vpack.c.b16 %v443, %v442
    %vm456 = vsmask.f32 7424
    %v458 = vshrl.u32 %v444, 16
    %v460 = vshll.u32 %v444, 16
    %v462 = vrot.slane %v460, 1
    %v463 = vor.u32 %v458, %v462
    %v465 = vshll.u32 %v445, 16
    %v467 = vrot.slane %v465, 1
    %v468 = vsel %vm456, %v463, %v467
    %v469 = vshrl.u32 %v445, 16
    %v471 = vor.u32 %v469, %v467
    %v473 = vshll.u32 %v446, 16
    %v475 = vrot.slane %v473, 1
    %v476 = vsel %vm456, %v471, %v475
    %v477 = vshrl.u32 %v446, 16
    %v479 = vor.u32 %v477, %v475
    %v481 = vshll.u32 %v447, 16
    %v483 = vrot.slane %v481, 1
    %v484 = vsel %vm456, %v479, %v483
    %v485 = vshrl.u32 %v447, 16
    %v487 = vor.u32 %v485, %v483
    %v489 = vshll.u32 %v448, 16
    %v491 = vrot.slane %v489, 1
    %v492 = vsel %vm456, %v487, %v491
    %v493 = vshrl.u32 %v448, 16
    %v495 = vor.u32 %v493, %v491
    %v497 = vshll.u32 %v449, 16
    %v499 = vrot.slane %v497, 1
    %v500 = vsel %vm456, %v495, %v499
    %v501 = vshrl.u32 %v449, 16
    %v503 = vor.u32 %v501, %v499
    %vm510 = vcmask 1046528
    %v511 = vrot.slane %v444, 1
    %v512 = vrot.slane %v445, 1
    %v513 = vsel %vm510, %v511, %v512
    %v514 = vrot.slane %v446, 1
    %v515 = vsel %vm510, %v512, %v514
    %v516 = vrot.slane %v447, 1
    %v517 = vsel %vm510, %v514, %v516
    %v518 = vrot.slane %v448, 1
    %v519 = vsel %vm510, %v516, %v518
    %v520 = vrot.slane %v449, 1
    %v521 = vsel %vm510, %v518, %v520
    %vm528 = vsmask.f32 6400
    %v529 = vrot.slane %v458, 1
    %v530 = vrot.slane %v460, 2
    %v531 = vor.u32 %v529, %v530
    %v532 = vrot.slane %v469, 1
    %v533 = vrot.slane %v465, 2
    %v534 = vor.u32 %v532, %v533
    %v535 = vsel %vm528, %v531, %v534
    %v536 = vrot.slane %v477, 1
    %v537 = vrot.slane %v473, 2
    %v538 = vor.u32 %v536, %v537
    %v539 = vsel %vm528, %v534, %v538
    %v540 = vrot.slane %v485, 1
    %v541 = vrot.slane %v481, 2
    %v542 = vor.u32 %v540, %v541
    %v543 = vsel %vm528, %v538, %v542
    %v544 = vrot.slane %v493, 1
    %v545 = vrot.slane %v489, 2
    %v546 = vor.u32 %v544, %v545
    %v547 = vsel %vm528, %v542, %v546
    %v548 = vrot.slane %v501, 1
    %v549 = vrot.slane %v497, 2
    %v550 = vor.u32 %v548, %v549
    %v551 = vsel %vm528, %v546, %v550
    %vm558 = vcmask 1045504
    %v559 = vrot.slane %v444, 2
    %v560 = vrot.slane %v445, 2
    %v561 = vsel %vm558, %v559, %v560
    %v562 = vrot.slane %v446, 2
    %v563 = vsel %vm558, %v560, %v562
    %v564 = vrot.slane %v447, 2
    %v565 = vsel %vm558, %v562, %v564
    %v566 = vrot.slane %v448, 2
    %v567 = vsel %vm558, %v564, %v566
    %v568 = vrot.slane %v449, 2
    %v569 = vsel %vm558, %v566, %v568
    %vm576 = vsmask.f32 5376
    %v577 = vrot.slane %v458, 2
    %v578 = vrot.slane %v460, 3
    %v579 = vor.u32 %v577, %v578
    %v580 = vrot.slane %v469, 2
    %v581 = vrot.slane %v465, 3
    %v582 = vor.u32 %v580, %v581
    %v583 = vsel %vm576, %v579, %v582
    %v584 = vrot.slane %v477, 2
    %v585 = vrot.slane %v473, 3
    %v586 = vor.u32 %v584, %v585
    %v587 = vsel %vm576, %v582, %v586
    %v588 = vrot.slane %v485, 2
    %v589 = vrot.slane %v481, 3
    %v590 = vor.u32 %v588, %v589
    %v591 = vsel %vm576, %v586, %v590
    %v592 = vrot.slane %v493, 2
    %v593 = vrot.slane %v489, 3
    %v594 = vor.u32 %v592, %v593
    %v595 = vsel %vm576, %v590, %v594
    %v596 = vrot.slane %v501, 2
    %v597 = vrot.slane %v497, 3
    %v598 = vor.u32 %v596, %v597
    %v599 = vsel %vm576, %v594, %v598
    %vm606 = vcmask 1044480
    %v607 = vrot.slane %v444, 3
    %v608 = vrot.slane %v445, 3
    %v609 = vsel %vm606, %v607, %v608
    %v610 = vrot.slane %v446, 3
    %v611 = vsel %vm606, %v608, %v610
    %v612 = vrot.slane %v447, 3
    %v613 = vsel %vm606, %v610, %v612
    %v614 = vrot.slane %v448, 3
    %v615 = vsel %vm606, %v612, %v614
    %v616 = vrot.slane %v449, 3
    %v617 = vsel %vm606, %v614, %v616
    %v625 = vlaneseq
    %v626 = vshrl.u32 %v625, 7
    %v627 = vsub.s32 0, %v626
    %v628 = vrot.slane %v179, %v627
    %v742 = vunpack.c.l.b16 %v67
    %v743 = vunpack.c.l.b16 %v68
    %v744 = vunpack.c.l.b16 %v69
    %v745 = vunpack.c.l.b16 %v70
    %v746 = vunpack.c.l.b16 %v71
    %v747 = vunpack.c.l.b16 %v72
    %v748 = vunpack.c.l.b16 %v73
    %v749 = vunpack.c.l.b16 %v74
    %v750 = vunpack.c.l.b16 %v75
    %v751 = vunpack.c.l.b16 %v76
    %v752 = vunpack.c.l.b16 %v77
    %v753 = vunpack.c.l.b16 %v78
    %v754 = vunpack.c.l.b16 %v79
    %v755 = vunpack.c.l.b16 %v80
    %v756 = vunpack.c.l.b16 %v81
    %v757 = vunpack.c.l.b16 %v82
    %v758 = vunpack.c.l.b16 %v83
    %v759 = vunpack.c.l.b16 %v84
    %v760 = vunpack.c.l.b16 %v85
    %v761 = vunpack.c.l.b16 %v86
    %v762 = vunpack.c.l.b16 %v87
    %v763 = vunpack.c.l.b16 %v88
    %v764 = vunpack.c.l.b16 %v89
    %v765 = vunpack.c.l.b16 %v90
    %v766 = vunpack.c.l.b16 %v91
    %v767 = vunpack.c.l.b16 %v92
    %v768 = vunpack.c.l.b16 %v93
    %v769 = vunpack.c.l.b16 %v94
    %v770 = vunpack.c.l.b16 %v95
    %v771 = vunpack.c.l.b16 %v96
    %v772 = vunpack.c.l.b16 %v97
    %v773 = vunpack.c.l.b16 %v98
    %v774 = vunpack.c.l.b16 %v99
    %v775 = vunpack.c.l.b16 %v100
    %v776 = vunpack.c.l.b16 %v101
    %v777 = vunpack.c.l.b16 %v102
    %v778 = vunpack.c.l.b16 %v103
    %v779 = vunpack.c.l.b16 %v104
    %v780 = vunpack.c.l.b16 %v105
    %v781 = vunpack.c.l.b16 %v106
    %v782 = vunpack.c.l.b16 %v107
    %v783 = vunpack.c.l.b16 %v108
    %v784 = vunpack.c.l.b16 %v109
    %v785 = vunpack.c.l.b16 %v110
    %v786 = vunpack.c.l.b16 %v111
    %v787 = vunpack.c.l.b16 %v112
    %v788 = vunpack.c.l.b16 %v113
    %v789 = vunpack.c.l.b16 %v114
    %v790 = vunpack.c.l.b16 %v115
    %v791 = vunpack.c.l.b16 %v116
    %v792 = vunpack.c.l.b16 %v117
    %v793 = vunpack.c.l.b16 %v118
    %v794 = vunpack.c.l.b16 %v119
    %v795 = vunpack.c.l.b16 %v120
    %v796 = vunpack.c.l.b16 %v121
    %v797 = vunpack.c.l.b16 %v122
    %v798 = vunpack.c.l.b16 %v123
    %v799 = vunpack.c.l.b16 %v124
    %v800 = vunpack.c.l.b16 %v125
    %v801 = vunpack.c.l.b16 %v126
    %v802 = vunpack.c.l.b16 %v127
    %v803 = vunpack.c.l.b16 %v128
    %v804 = vunpack.c.l.b16 %v129
    %v805 = vunpack.c.l.b16 %v130
    %v806 = vunpack.c.l.b16 %v131
    %v807 = vunpack.c.l.b16 %v132
    %v808 = vunpack.c.l.b16 %v133
    %v809 = vunpack.c.l.b16 %v134
    %v810 = vunpack.c.l.b16 %v135
    %v811 = vunpack.c.l.b16 %v136
    %v812 = vunpack.c.l.b16 %v137
    %v813 = vunpack.c.l.b16 %v138
    %v814 = vunpack.c.l.b16 %v139
    %v815 = vunpack.c.l.b16 %v140
    %v816 = vunpack.c.l.b16 %v141
    %v817 = vunpack.c.l.b16 %v142
    %v818 = vunpack.c.l.b16 %v143
    %v819 = vunpack.c.l.b16 %v144
    %v820 = vunpack.c.l.b16 %v145
    %v821 = vunpack.c.l.b16 %v146
    %v822 = vunpack.c.l.b16 %v147
    %v823 = vunpack.c.l.b16 %v148
    %v824 = vunpack.c.l.b16 %v149
    %v825 = vunpack.c.l.b16 %v150
    %v826 = vunpack.c.l.b16 %v151
    %v827 = vunpack.c.l.b16 %v152
    %v828 = vunpack.c.l.b16 %v153
    %v829 = vunpack.c.l.b16 %v154
    %v830 = vunpack.c.l.b16 %v155
    %v831 = vunpack.c.l.b16 %v156
    %v832 = vunpack.c.l.b16 %v157
    %v833 = vunpack.c.l.b16 %v158
    %v834 = vunpack.c.l.b16 %v159
    %v835 = vunpack.c.l.b16 %v160
    %v836 = vunpack.c.l.b16 %v161
    %v837 = vunpack.c.l.b16 %v162
    %v838 = vunpack.c.l.b16 %v163
    %v839 = vunpack.c.l.b16 %v164
    %v840 = vunpack.c.l.b16 %v165
    %v841 = vunpack.c.l.b16 %v166
    %v842 = vunpack.c.l.b16 %v167
    %v843 = vunpack.c.l.b16 %v168
    %v844 = vunpack.c.l.b16 %v169
    %v845 = vunpack.c.l.b16 %v170
    %v846 = vunpack.c.l.b16 %v171
    %v847 = vunpack.c.l.b16 %v172
    %v848 = vunpack.c.l.b16 %v173
    %v849 = vunpack.c.l.b16 %v174
    %v850 = vunpack.c.l.b16 %v175
    %v851 = vunpack.c.l.b16 %v176
    %v852 = vunpack.c.l.b16 %v177
    %v853 = vunpack.c.l.b16 %v178
    %v854 = vpack.c.b16 %v743, %v742
    %v855 = vpack.c.b16 %v745, %v744
    %v856 = vpack.c.b16 %v747, %v746
    %v857 = vpack.c.b16 %v749, %v748
    %v858 = vpack.c.b16 %v751, %v750
    %v859 = vpack.c.b16 %v753, %v752
    %v860 = vpack.c.b16 %v755, %v754
    %v861 = vpack.c.b16 %v757, %v756
    %v862 = vpack.c.b16 %v759, %v758
    %v863 = vpack.c.b16 %v761, %v760
    %v864 = vpack.c.b16 %v763, %v762
    %v865 = vpack.c.b16 %v765, %v764
    %v866 = vpack.c.b16 %v767, %v766
    %v867 = vpack.c.b16 %v769, %v768
    %v868 = vpack.c.b16 %v771, %v770
    %v869 = vpack.c.b16 %v773, %v772
    %v870 = vpack.c.b16 %v775, %v774
    %v871 = vpack.c.b16 %v777, %v776
    %v872 = vpack.c.b16 %v779, %v778
    %v873 = vpack.c.b16 %v781, %v780
    %v874 = vpack.c.b16 %v783, %v782
    %v875 = vpack.c.b16 %v785, %v784
    %v876 = vpack.c.b16 %v787, %v786
    %v877 = vpack.c.b16 %v789, %v788
    %v878 = vpack.c.b16 %v791, %v790
    %v879 = vpack.c.b16 %v793, %v792
    %v880 = vpack.c.b16 %v795, %v794
    %v881 = vpack.c.b16 %v797, %v796
    %v882 = vpack.c.b16 %v799, %v798
    %v883 = vpack.c.b16 %v801, %v800
    %v884 = vpack.c.b16 %v803, %v802
    %v885 = vpack.c.b16 %v805, %v804
    %v886 = vpack.c.b16 %v807, %v806
    %v887 = vpack.c.b16 %v809, %v808
    %v888 = vpack.c.b16 %v811, %v810
    %v889 = vpack.c.b16 %v813, %v812
    %v890 = vpack.c.b16 %v815, %v814
    %v891 = vpack.c.b16 %v817, %v816
    %v892 = vpack.c.b16 %v819, %v818
    %v893 = vpack.c.b16 %v821, %v820
    %v894 = vpack.c.b16 %v823, %v822
    %v895 = vpack.c.b16 %v825, %v824
    %v896 = vpack.c.b16 %v827, %v826
    %v897 = vpack.c.b16 %v829, %v828
    %v898 = vpack.c.b16 %v831, %v830
    %v899 = vpack.c.b16 %v833, %v832
    %v900 = vpack.c.b16 %v835, %v834
    %v901 = vpack.c.b16 %v837, %v836
    %v902 = vpack.c.b16 %v839, %v838
    %v903 = vpack.c.b16 %v841, %v840
    %v904 = vpack.c.b16 %v843, %v842
    %v905 = vpack.c.b16 %v845, %v844
    %v906 = vpack.c.b16 %v847, %v846
    %v907 = vpack.c.b16 %v849, %v848
    %v908 = vpack.c.b16 %v851, %v850
    %v909 = vpack.c.b16 %v853, %v852
    %966 = vmatprep.subr.bf16.mxu0 0
    %967 = vmatpush1.bf16.msra.mxu0 %v854
    %968 = vmatprep.subr.bf16.mxu0 0
    %969 = vmatpush1.bf16.msra.mxu0 %v855
    %970 = vmatprep.subr.bf16.mxu0 0
    %971 = vmatpush1.bf16.msra.mxu0 %v856
    %972 = vmatprep.subr.bf16.mxu0 0
    %973 = vmatpush1.bf16.msra.mxu0 %v857
    %974 = vmatprep.subr.bf16.mxu0 0
    %975 = vmatpush1.bf16.msra.mxu0 %v858
    %976 = vmatprep.subr.bf16.mxu0 0
    %977 = vmatpush1.bf16.msra.mxu0 %v859
    %978 = vmatprep.subr.bf16.mxu0 0
    %979 = vmatpush1.bf16.msra.mxu0 %v860
    %980 = vmatprep.subr.bf16.mxu0 0
    %981 = vmatpush1.bf16.msra.mxu0 %v861
    %982 = vmatprep.subr.bf16.mxu0 0
    %983 = vmatpush1.bf16.msra.mxu0 %v862
    %984 = vmatprep.subr.bf16.mxu0 0
    %985 = vmatpush1.bf16.msra.mxu0 %v863
    %986 = vmatprep.subr.bf16.mxu0 0
    %987 = vmatpush1.bf16.msra.mxu0 %v864
    %988 = vmatprep.subr.bf16.mxu0 0
    %989 = vmatpush1.bf16.msra.mxu0 %v865
    %990 = vmatprep.subr.bf16.mxu0 0
    %991 = vmatpush1.bf16.msra.mxu0 %v866
    %992 = vmatprep.subr.bf16.mxu0 0
    %993 = vmatpush1.bf16.msra.mxu0 %v867
    %994 = vmatprep.subr.bf16.mxu0 0
    %995 = vmatpush1.bf16.msra.mxu0 %v868
    %996 = vmatprep.subr.bf16.mxu0 0
    %997 = vmatpush1.bf16.msra.mxu0 %v869
    %998 = vmatprep.mubr.bf16.mxu0 %v468
    %999 = vmatmul.mubr.bf16.gmra.mrb[0].mxu0 %v444
    %v1000 = vpop.f32.mrb[0].mxu0
    %v1001 = vadd.f32 %v628, %v1000
    %v1002 = vpop.f32.mrb[0].mxu0
    %v1003 = vpop.f32.mrb[0].mxu0
    %v1004 = vadd.f32 %v628, %v1003
    %v1005 = vpop.f32.mrb[0].mxu0
    %1006 = vmatprep.mubr.bf16.mxu0 %v476
    %1007 = vmatmul.mubr.bf16.gmra.mrb[0].mxu0 %v445
    %v1008 = vpop.f32.mrb[0].mxu0
    %v1009 = vadd.f32 %v628, %v1008
    %v1010 = vpop.f32.mrb[0].mxu0
    %v1011 = vpop.f32.mrb[0].mxu0
    %v1012 = vadd.f32 %v628, %v1011
    %v1013 = vpop.f32.mrb[0].mxu0
    %1014 = vmatprep.mubr.bf16.mxu0 %v484
    %1015 = vmatmul.mubr.bf16.gmra.mrb[0].mxu0 %v446
    %v1016 = vpop.f32.mrb[0].mxu0
    %v1017 = vadd.f32 %v628, %v1016
    %v1018 = vpop.f32.mrb[0].mxu0
    %v1019 = vpop.f32.mrb[0].mxu0
    %v1020 = vadd.f32 %v628, %v1019
    %v1021 = vpop.f32.mrb[0].mxu0
    %1022 = vmatprep.mubr.bf16.mxu0 %v492
    %1023 = vmatmul.mubr.bf16.gmra.mrb[0].mxu0 %v447
    %v1024 = vpop.f32.mrb[0].mxu0
    %v1025 = vadd.f32 %v628, %v1024
    %v1026 = vpop.f32.mrb[0].mxu0
    %v1027 = vpop.f32.mrb[0].mxu0
    %v1028 = vadd.f32 %v628, %v1027
    %v1029 = vpop.f32.mrb[0].mxu0
    %1030 = vmatprep.mubr.bf16.mxu0 %v500
    %1031 = vmatmul.mubr.bf16.gmra.mrb[0].mxu0 %v448
    %v1032 = vpop.f32.mrb[0].mxu0
    %v1033 = vadd.f32 %v628, %v1032
    %v1034 = vpop.f32.mrb[0].mxu0
    %v1035 = vpop.f32.mrb[0].mxu0
    %v1036 = vadd.f32 %v628, %v1035
    %v1037 = vpop.f32.mrb[0].mxu0
    %1038 = vmatprep.mubr.bf16.mxu0 %v503
    %1039 = vmatmul.mubr.bf16.gmra.mrb[0].mxu0 %v449
    %v1040 = vpop.f32.mrb[0].mxu0
    %v1041 = vadd.f32 %v628, %v1040
    %v1042 = vpop.f32.mrb[0].mxu0
    %v1043 = vpop.f32.mrb[0].mxu0
    %v1044 = vadd.f32 %v628, %v1043
    %v1045 = vpop.f32.mrb[0].mxu0
    %1046 = vdwg.mxu0
    %1047 = vmatprep.subr.bf16.mxu0 0
    %1048 = vmatpush1.bf16.msra.mxu0 %v870
    %1049 = vmatprep.subr.bf16.mxu0 0
    %1050 = vmatpush1.bf16.msra.mxu0 %v871
    %1051 = vmatprep.subr.bf16.mxu0 0
    %1052 = vmatpush1.bf16.msra.mxu0 %v872
    %1053 = vmatprep.subr.bf16.mxu0 0
    %1054 = vmatpush1.bf16.msra.mxu0 %v873
    %1055 = vmatprep.subr.bf16.mxu0 0
    %1056 = vmatpush1.bf16.msra.mxu0 %v874
    %1057 = vmatprep.subr.bf16.mxu0 0
    %1058 = vmatpush1.bf16.msra.mxu0 %v875
    %1059 = vmatprep.subr.bf16.mxu0 0
    %1060 = vmatpush1.bf16.msra.mxu0 %v876
    %1061 = vmatprep.subr.bf16.mxu0 0
    %1062 = vmatpush1.bf16.msra.mxu0 %v877
    %1063 = vmatprep.subr.bf16.mxu0 0
    %1064 = vmatpush1.bf16.msra.mxu0 %v878
    %1065 = vmatprep.subr.bf16.mxu0 0
    %1066 = vmatpush1.bf16.msra.mxu0 %v879
    %1067 = vmatprep.subr.bf16.mxu0 0
    %1068 = vmatpush1.bf16.msra.mxu0 %v880
    %1069 = vmatprep.subr.bf16.mxu0 0
    %1070 = vmatpush1.bf16.msra.mxu0 %v881
    %1071 = vmatprep.subr.bf16.mxu0 0
    %1072 = vmatpush1.bf16.msra.mxu0 %v882
    %1073 = vmatprep.subr.bf16.mxu0 0
    %1074 = vmatpush1.bf16.msra.mxu0 %v883
    %1075 = vmatprep.subr.bf16.mxu0 0
    %1076 = vmatpush1.bf16.msra.mxu0 %v884
    %1077 = vmatprep.subr.bf16.mxu0 0
    %1078 = vmatpush1.bf16.msra.mxu0 %v885
    %1079 = vmatprep.mubr.bf16.mxu0 %v535
    %1080 = vmatmul.mubr.bf16.gmra.mrb[0].mxu0 %v513
    %v1081 = vpop.f32.mrb[0].mxu0
    %v1082 = vadd.f32 %v1001, %v1081
    %v1083 = vpop.f32.mrb[0].mxu0
    %v1084 = vpop.f32.mrb[0].mxu0
    %v1085 = vadd.f32 %v1004, %v1084
    %v1086 = vpop.f32.mrb[0].mxu0
    %1087 = vmatprep.mubr.bf16.mxu0 %v539
    %1088 = vmatmul.mubr.bf16.gmra.mrb[0].mxu0 %v515
    %v1089 = vpop.f32.mrb[0].mxu0
    %v1090 = vadd.f32 %v1009, %v1089
    %v1091 = vpop.f32.mrb[0].mxu0
    %v1092 = vpop.f32.mrb[0].mxu0
    %v1093 = vadd.f32 %v1012, %v1092
    %v1094 = vpop.f32.mrb[0].mxu0
    %1095 = vmatprep.mubr.bf16.mxu0 %v543
    %1096 = vmatmul.mubr.bf16.gmra.mrb[0].mxu0 %v517
    %v1097 = vpop.f32.mrb[0].mxu0
    %v1098 = vadd.f32 %v1017, %v1097
    %v1099 = vpop.f32.mrb[0].mxu0
    %v1100 = vpop.f32.mrb[0].mxu0
    %v1101 = vadd.f32 %v1020, %v1100
    %v1102 = vpop.f32.mrb[0].mxu0
    %1103 = vmatprep.mubr.bf16.mxu0 %v547
    %1104 = vmatmul.mubr.bf16.gmra.mrb[0].mxu0 %v519
    %v1105 = vpop.f32.mrb[0].mxu0
    %v1106 = vadd.f32 %v1025, %v1105
    %v1107 = vpop.f32.mrb[0].mxu0
    %v1108 = vpop.f32.mrb[0].mxu0
    %v1109 = vadd.f32 %v1028, %v1108
    %v1110 = vpop.f32.mrb[0].mxu0
    %1111 = vmatprep.mubr.bf16.mxu0 %v551
    %1112 = vmatmul.mubr.bf16.gmra.mrb[0].mxu0 %v521
    %v1113 = vpop.f32.mrb[0].mxu0
    %v1114 = vadd.f32 %v1033, %v1113
    %v1115 = vpop.f32.mrb[0].mxu0
    %v1116 = vpop.f32.mrb[0].mxu0
    %v1117 = vadd.f32 %v1036, %v1116
    %v1118 = vpop.f32.mrb[0].mxu0
    %1119 = vmatprep.mubr.bf16.mxu0 %v550
    %1120 = vmatmul.mubr.bf16.gmra.mrb[0].mxu0 %v520
    %v1121 = vpop.f32.mrb[0].mxu0
    %v1122 = vadd.f32 %v1041, %v1121
    %v1123 = vpop.f32.mrb[0].mxu0
    %v1124 = vpop.f32.mrb[0].mxu0
    %v1125 = vadd.f32 %v1044, %v1124
    %v1126 = vpop.f32.mrb[0].mxu0
    %1127 = vdwg.mxu0
    %1128 = vmatprep.subr.bf16.mxu0 0
    %1129 = vmatpush1.bf16.msra.mxu0 %v886
    %1130 = vmatprep.subr.bf16.mxu0 0
    %1131 = vmatpush1.bf16.msra.mxu0 %v887
    %1132 = vmatprep.subr.bf16.mxu0 0
    %1133 = vmatpush1.bf16.msra.mxu0 %v888
    %1134 = vmatprep.subr.bf16.mxu0 0
    %1135 = vmatpush1.bf16.msra.mxu0 %v889
    %1136 = vmatprep.subr.bf16.mxu0 0
    %1137 = vmatpush1.bf16.msra.mxu0 %v890
    %1138 = vmatprep.subr.bf16.mxu0 0
    %1139 = vmatpush1.bf16.msra.mxu0 %v891
    %1140 = vmatprep.subr.bf16.mxu0 0
    %1141 = vmatpush1.bf16.msra.mxu0 %v892
    %1142 = vmatprep.subr.bf16.mxu0 0
    %1143 = vmatpush1.bf16.msra.mxu0 %v893
    %1144 = vmatprep.subr.bf16.mxu0 0
    %1145 = vmatpush1.bf16.msra.mxu0 %v894
    %1146 = vmatprep.subr.bf16.mxu0 0
    %1147 = vmatpush1.bf16.msra.mxu0 %v895
    %1148 = vmatprep.subr.bf16.mxu0 0
    %1149 = vmatpush1.bf16.msra.mxu0 %v896
    %1150 = vmatprep.subr.bf16.mxu0 0
    %1151 = vmatpush1.bf16.msra.mxu0 %v897
    %1152 = vmatprep.subr.bf16.mxu0 0
    %1153 = vmatpush1.bf16.msra.mxu0 %v898
    %1154 = vmatprep.subr.bf16.mxu0 0
    %1155 = vmatpush1.bf16.msra.mxu0 %v899
    %1156 = vmatprep.subr.bf16.mxu0 0
    %1157 = vmatpush1.bf16.msra.mxu0 %v900
    %1158 = vmatprep.subr.bf16.mxu0 0
    %1159 = vmatpush1.bf16.msra.mxu0 %v901
    %1160 = vmatprep.mubr.bf16.mxu0 %v583
    %1161 = vmatmul.mubr.bf16.gmra.mrb[0].mxu0 %v561
    %v1162 = vpop.f32.mrb[0].mxu0
    %v1163 = vadd.f32 %v1082, %v1162
    %v1164 = vpop.f32.mrb[0].mxu0
    %v1165 = vpop.f32.mrb[0].mxu0
    %v1166 = vadd.f32 %v1085, %v1165
    %v1167 = vpop.f32.mrb[0].mxu0
    %1168 = vmatprep.mubr.bf16.mxu0 %v587
    %1169 = vmatmul.mubr.bf16.gmra.mrb[0].mxu0 %v563
    %v1170 = vpop.f32.mrb[0].mxu0
    %v1171 = vadd.f32 %v1090, %v1170
    %v1172 = vpop.f32.mrb[0].mxu0
    %v1173 = vpop.f32.mrb[0].mxu0
    %v1174 = vadd.f32 %v1093, %v1173
    %v1175 = vpop.f32.mrb[0].mxu0
    %1176 = vmatprep.mubr.bf16.mxu0 %v591
    %1177 = vmatmul.mubr.bf16.gmra.mrb[0].mxu0 %v565
    %v1178 = vpop.f32.mrb[0].mxu0
    %v1179 = vadd.f32 %v1098, %v1178
    %v1180 = vpop.f32.mrb[0].mxu0
    %v1181 = vpop.f32.mrb[0].mxu0
    %v1182 = vadd.f32 %v1101, %v1181
    %v1183 = vpop.f32.mrb[0].mxu0
    %1184 = vmatprep.mubr.bf16.mxu0 %v595
    %1185 = vmatmul.mubr.bf16.gmra.mrb[0].mxu0 %v567
    %v1186 = vpop.f32.mrb[0].mxu0
    %v1187 = vadd.f32 %v1106, %v1186
    %v1188 = vpop.f32.mrb[0].mxu0
    %v1189 = vpop.f32.mrb[0].mxu0
    %v1190 = vadd.f32 %v1109, %v1189
    %v1191 = vpop.f32.mrb[0].mxu0
    %1192 = vmatprep.mubr.bf16.mxu0 %v599
    %1193 = vmatmul.mubr.bf16.gmra.mrb[0].mxu0 %v569
    %v1194 = vpop.f32.mrb[0].mxu0
    %v1195 = vadd.f32 %v1114, %v1194
    %v1196 = vpop.f32.mrb[0].mxu0
    %v1197 = vpop.f32.mrb[0].mxu0
    %v1198 = vadd.f32 %v1117, %v1197
    %v1199 = vpop.f32.mrb[0].mxu0
    %1200 = vmatprep.mubr.bf16.mxu0 %v598
    %1201 = vmatmul.mubr.bf16.gmra.mrb[0].mxu0 %v568
    %v1202 = vpop.f32.mrb[0].mxu0
    %v1203 = vadd.f32 %v1122, %v1202
    %v1204 = vpop.f32.mrb[0].mxu0
    %v1205 = vpop.f32.mrb[0].mxu0
    %v1206 = vadd.f32 %v1125, %v1205
    %v1207 = vpop.f32.mrb[0].mxu0
    %1208 = vdwg.mxu0
    %1209 = vmatprep.subr.bf16.mxu0 0
    %1210 = vmatpush1.bf16.msra.mxu0 %v902
    %1211 = vmatprep.subr.bf16.mxu0 0
    %1212 = vmatpush1.bf16.msra.mxu0 %v903
    %1213 = vmatprep.subr.bf16.mxu0 0
    %1214 = vmatpush1.bf16.msra.mxu0 %v904
    %1215 = vmatprep.subr.bf16.mxu0 0
    %1216 = vmatpush1.bf16.msra.mxu0 %v905
    %1217 = vmatprep.subr.bf16.mxu0 0
    %1218 = vmatpush1.bf16.msra.mxu0 %v906
    %1219 = vmatprep.subr.bf16.mxu0 0
    %1220 = vmatpush1.bf16.msra.mxu0 %v907
    %1221 = vmatprep.subr.bf16.mxu0 0
    %1222 = vmatpush1.bf16.msra.mxu0 %v908
    %1223 = vmatprep.subr.bf16.mxu0 0
    %1224 = vmatpush1.bf16.msra.mxu0 %v909
    %1225 = vmatprep.subr.bf16.mxu0 0
    %1226 = vmatpush1.bf16.msra.mxu0 0
    %1227 = vmatprep.subr.bf16.mxu0 0
    %1228 = vmatpush1.bf16.msra.mxu0 0
    %1229 = vmatprep.subr.bf16.mxu0 0
    %1230 = vmatpush1.bf16.msra.mxu0 0
    %1231 = vmatprep.subr.bf16.mxu0 0
    %1232 = vmatpush1.bf16.msra.mxu0 0
    %1233 = vmatprep.subr.bf16.mxu0 0
    %1234 = vmatpush1.bf16.msra.mxu0 0
    %1235 = vmatprep.subr.bf16.mxu0 0
    %1236 = vmatpush1.bf16.msra.mxu0 0
    %1237 = vmatprep.subr.bf16.mxu0 0
    %1238 = vmatpush1.bf16.msra.mxu0 0
    %1239 = vmatprep.subr.bf16.mxu0 0
    %1240 = vmatpush1.bf16.msra.mxu0 0
    %1241 = vmatprep.mubr.bf16.mxu0 0
    %1242 = vmatmul.mubr.bf16.gmra.mrb[0].mxu0 %v609
    %v1243 = vpop.f32.mrb[0].mxu0
    %v1244 = vadd.f32 %v1163, %v1243
    %v1245 = vpop.f32.mrb[0].mxu0
    %v1246 = vpop.f32.mrb[0].mxu0
    %v1247 = vadd.f32 %v1166, %v1246
    %v1248 = vpop.f32.mrb[0].mxu0
    %1249 = vmatprep.mubr.bf16.mxu0 0
    %1250 = vmatmul.mubr.bf16.gmra.mrb[0].mxu0 %v611
    %v1251 = vpop.f32.mrb[0].mxu0
    %v1252 = vadd.f32 %v1171, %v1251
    %v1253 = vpop.f32.mrb[0].mxu0
    %v1254 = vpop.f32.mrb[0].mxu0
    %v1255 = vadd.f32 %v1174, %v1254
    %v1256 = vpop.f32.mrb[0].mxu0
    %1257 = vmatprep.mubr.bf16.mxu0 0
    %1258 = vmatmul.mubr.bf16.gmra.mrb[0].mxu0 %v613
    %v1259 = vpop.f32.mrb[0].mxu0
    %v1260 = vadd.f32 %v1179, %v1259
    %v1261 = vpop.f32.mrb[0].mxu0
    %v1262 = vpop.f32.mrb[0].mxu0
    %v1263 = vadd.f32 %v1182, %v1262
    %v1264 = vpop.f32.mrb[0].mxu0
    %1265 = vmatprep.mubr.bf16.mxu0 0
    %1266 = vmatmul.mubr.bf16.gmra.mrb[0].mxu0 %v615
    %v1267 = vpop.f32.mrb[0].mxu0
    %v1268 = vadd.f32 %v1187, %v1267
    %v1269 = vpop.f32.mrb[0].mxu0
    %v1270 = vpop.f32.mrb[0].mxu0
    %v1271 = vadd.f32 %v1190, %v1270
    %v1272 = vpop.f32.mrb[0].mxu0
    %1273 = vmatprep.mubr.bf16.mxu0 0
    %1274 = vmatmul.mubr.bf16.gmra.mrb[0].mxu0 %v617
    %v1275 = vpop.f32.mrb[0].mxu0
    %v1276 = vadd.f32 %v1195, %v1275
    %v1277 = vpop.f32.mrb[0].mxu0
    %v1278 = vpop.f32.mrb[0].mxu0
    %v1279 = vadd.f32 %v1198, %v1278
    %v1280 = vpop.f32.mrb[0].mxu0
    %1281 = vmatprep.mubr.bf16.mxu0 0
    %1282 = vmatmul.mubr.bf16.gmra.mrb[0].mxu0 %v616
    %v1283 = vpop.f32.mrb[0].mxu0
    %v1284 = vadd.f32 %v1203, %v1283
    %v1285 = vpop.f32.mrb[0].mxu0
    %v1286 = vpop.f32.mrb[0].mxu0
    %v1287 = vadd.f32 %v1206, %v1286
    %v1288 = vpop.f32.mrb[0].mxu0
    %1289 = vdwg.mxu0
    %vm1290 = vcmp.ge.f32.partialorder %v1244, 0.0
    %vm1291 = vcmp.ge.f32.partialorder %v1247, 0.0
    %vm1292 = vcmp.ge.f32.partialorder %v1252, 0.0
    %vm1293 = vcmp.ge.f32.partialorder %v1255, 0.0
    %vm1294 = vcmp.ge.f32.partialorder %v1260, 0.0
    %vm1295 = vcmp.ge.f32.partialorder %v1263, 0.0
    %vm1296 = vcmp.ge.f32.partialorder %v1268, 0.0
    %vm1297 = vcmp.ge.f32.partialorder %v1271, 0.0
    %vm1298 = vcmp.ge.f32.partialorder %v1276, 0.0
    %vm1299 = vcmp.ge.f32.partialorder %v1279, 0.0
    %vm1300 = vcmp.ge.f32.partialorder %v1284, 0.0
    %vm1301 = vcmp.ge.f32.partialorder %v1287, 0.0
    %v1303 = vlaneseq
    %v1304 = vshrl.u32 %v1303, 7
    %v1305 = vsub.s32 0, %v1304
    %v1306 = vrot.slane %v180, %v1305
    %1307 = vset.pattern.permute.xlu0 0
    %1308 = vperm.xlu0 %1307, %v1306
    %v1309 = vpop.permute.xlu0 %1308
    %v1311 = vmul.f32 %v1309, %v1244
    %v1312 = vmul.f32 %v1309, %v1247
    %v1313 = vmul.f32 %v1309, %v1252
    %v1314 = vmul.f32 %v1309, %v1255
    %v1315 = vmul.f32 %v1309, %v1260
    %v1316 = vmul.f32 %v1309, %v1263
    %v1317 = vmul.f32 %v1309, %v1268
    %v1318 = vmul.f32 %v1309, %v1271
    %v1319 = vmul.f32 %v1309, %v1276
    %v1320 = vmul.f32 %v1309, %v1279
    %v1321 = vmul.f32 %v1309, %v1284
    %v1322 = vmul.f32 %v1309, %v1287
    %v1323 = vsel %vm1290, %v1244, %v1311
    %v1324 = vsel %vm1291, %v1247, %v1312
    %v1325 = vsel %vm1292, %v1252, %v1313
    %v1326 = vsel %vm1293, %v1255, %v1314
    %v1327 = vsel %vm1294, %v1260, %v1315
    %v1328 = vsel %vm1295, %v1263, %v1316
    %v1329 = vsel %vm1296, %v1268, %v1317
    %v1330 = vsel %vm1297, %v1271, %v1318
    %v1331 = vsel %vm1298, %v1276, %v1319
    %v1332 = vsel %vm1299, %v1279, %v1320
    %v1333 = vsel %vm1300, %v1284, %v1321
    %v1334 = vsel %vm1301, %v1287, %v1322
    %v1335 = vsel %vm408, 1, 0
    %v1336 = vsel %vm409, 1, 0
    %v1337 = vsel %vm410, 1, 0
    %v1338 = vsel %vm411, 1, 0
    %v1339 = vsel %vm412, 1, 0
    %v1340 = vsel %vm413, 1, 0
    %v1341 = vsel %vm414, 1, 0
    %v1342 = vsel %vm415, 1, 0
    %v1343 = vsel %vm416, 1, 0
    %v1344 = vsel %vm417, 1, 0
    %v1345 = vsel %vm418, 1, 0
    %v1346 = vsel %vm419, 1, 0
    %vm1347 = vcmp.eq.s32.totalorder %v1335, 1
    %vm1348 = vcmp.eq.s32.totalorder %v1336, 1
    %vm1349 = vcmp.eq.s32.totalorder %v1337, 1
    %vm1350 = vcmp.eq.s32.totalorder %v1338, 1
    %vm1351 = vcmp.eq.s32.totalorder %v1339, 1
    %vm1352 = vcmp.eq.s32.totalorder %v1340, 1
    %vm1353 = vcmp.eq.s32.totalorder %v1341, 1
    %vm1354 = vcmp.eq.s32.totalorder %v1342, 1
    %vm1355 = vcmp.eq.s32.totalorder %v1343, 1
    %vm1356 = vcmp.eq.s32.totalorder %v1344, 1
    %vm1357 = vcmp.eq.s32.totalorder %v1345, 1
    %vm1358 = vcmp.eq.s32.totalorder %v1346, 1
    %v1359 = vsel %vm1347, %v1323, 0.0
    %v1360 = vsel %vm1348, %v1324, 0.0
    %v1361 = vsel %vm1349, %v1325, 0.0
    %v1362 = vsel %vm1350, %v1326, 0.0
    %v1363 = vsel %vm1351, %v1327, 0.0
    %v1364 = vsel %vm1352, %v1328, 0.0
    %v1365 = vsel %vm1353, %v1329, 0.0
    %v1366 = vsel %vm1354, %v1330, 0.0
    %v1367 = vsel %vm1355, %v1331, 0.0
    %v1368 = vsel %vm1356, %v1332, 0.0
    %v1369 = vsel %vm1357, %v1333, 0.0
    %v1370 = vsel %vm1358, %v1334, 0.0
    %v1371 = vpack.c.bf16 %v1360, %v1359
    %v1372 = vpack.c.bf16 %v1362, %v1361
    %v1373 = vpack.c.bf16 %v1364, %v1363
    %v1374 = vpack.c.bf16 %v1366, %v1365
    %v1375 = vpack.c.bf16 %v1368, %v1367
    %v1376 = vpack.c.bf16 %v1370, %v1369
    %vm1377 = vsmask.f32 1280
    %v1379 = vshrl.u32 %v1371, 16
    %v1381 = vrot.slane %v1379, 6
    %v1382 = vshll.u32 %v1371, 16
    %v1384 = vrot.slane %v1382, 7
    %v1385 = vor.u32 %v1381, %v1384
    %v1387 = vshrl.u32 %v1372, 16
    %v1389 = vrot.slane %v1387, 6
    %v1390 = vshll.u32 %v1372, 16
    %v1392 = vrot.slane %v1390, 7
    %v1393 = vor.u32 %v1389, %v1392
    %v1394 = vsel %vm1377, %v1385, %v1393
    %v1396 = vshrl.u32 %v1373, 16
    %v1398 = vrot.slane %v1396, 6
    %v1399 = vshll.u32 %v1373, 16
    %v1401 = vrot.slane %v1399, 7
    %v1402 = vor.u32 %v1398, %v1401
    %v1403 = vsel %vm1377, %v1393, %v1402
    %v1405 = vshrl.u32 %v1374, 16
    %v1407 = vrot.slane %v1405, 6
    %v1408 = vshll.u32 %v1374, 16
    %v1410 = vrot.slane %v1408, 7
    %v1411 = vor.u32 %v1407, %v1410
    %v1412 = vsel %vm1377, %v1402, %v1411
    %v1414 = vshrl.u32 %v1375, 16
    %v1416 = vrot.slane %v1414, 6
    %v1417 = vshll.u32 %v1375, 16
    %v1419 = vrot.slane %v1417, 7
    %v1420 = vor.u32 %v1416, %v1419
    %v1421 = vsel %vm1377, %v1411, %v1420
    %v1423 = vshrl.u32 %v1376, 16
    %v1425 = vrot.slane %v1423, 6
    %v1426 = vshll.u32 %v1376, 16
    %v1428 = vrot.slane %v1426, 7
    %v1429 = vor.u32 %v1425, %v1428
    %v1430 = vsel %vm1377, %v1420, %v1429
    %vm1437 = vcmask 1041408
    %vm1438 = vmand %vm1437, %vm1377
    %v1439 = vsel %vm1438, 0, %v1385
    %vm1440 = vmand %vm510, %vm528
    %v1441 = vsel %vm1440, %v1430, 0
    %v1443 = vshrl.u32 %v1439, 16
    %v1445 = vshll.u32 %v1439, 16
    %v1447 = vrot.slane %v1445, 1
    %v1448 = vor.u32 %v1443, %v1447
    %v1450 = vshll.u32 %v1394, 16
    %v1452 = vrot.slane %v1450, 1
    %v1453 = vsel %vm456, %v1448, %v1452
    %v1454 = vshrl.u32 %v1394, 16
    %v1456 = vor.u32 %v1454, %v1452
    %v1458 = vshll.u32 %v1403, 16
    %v1460 = vrot.slane %v1458, 1
    %v1461 = vsel %vm456, %v1456, %v1460
    %v1462 = vshrl.u32 %v1403, 16
    %v1464 = vor.u32 %v1462, %v1460
    %v1466 = vshll.u32 %v1412, 16
    %v1468 = vrot.slane %v1466, 1
    %v1469 = vsel %vm456, %v1464, %v1468
    %v1470 = vshrl.u32 %v1412, 16
    %v1472 = vor.u32 %v1470, %v1468
    %v1474 = vshll.u32 %v1421, 16
    %v1476 = vrot.slane %v1474, 1
    %v1477 = vsel %vm456, %v1472, %v1476
    %v1478 = vshrl.u32 %v1421, 16
    %v1480 = vor.u32 %v1478, %v1476
    %v1482 = vshll.u32 %v1441, 16
    %v1484 = vrot.slane %v1482, 1
    %v1485 = vsel %vm456, %v1480, %v1484
    %v1486 = vshrl.u32 %v1441, 16
    %v1488 = vor.u32 %v1486, %v1484
    %v1497 = vrot.slane %v1439, 1
    %v1498 = vrot.slane %v1394, 1
    %v1499 = vsel %vm510, %v1497, %v1498
    %v1500 = vrot.slane %v1403, 1
    %v1501 = vsel %vm510, %v1498, %v1500
    %v1502 = vrot.slane %v1412, 1
    %v1503 = vsel %vm510, %v1500, %v1502
    %v1504 = vrot.slane %v1421, 1
    %v1505 = vsel %vm510, %v1502, %v1504
    %v1506 = vrot.slane %v1441, 1
    %v1507 = vsel %vm510, %v1504, %v1506
    %v1514 = vrot.slane %v1443, 1
    %v1515 = vrot.slane %v1445, 2
    %v1516 = vor.u32 %v1514, %v1515
    %v1517 = vrot.slane %v1454, 1
    %v1518 = vrot.slane %v1450, 2
    %v1519 = vor.u32 %v1517, %v1518
    %v1520 = vsel %vm528, %v1516, %v1519
    %v1521 = vrot.slane %v1462, 1
    %v1522 = vrot.slane %v1458, 2
    %v1523 = vor.u32 %v1521, %v1522
    %v1524 = vsel %vm528, %v1519, %v1523
    %v1525 = vrot.slane %v1470, 1
    %v1526 = vrot.slane %v1466, 2
    %v1527 = vor.u32 %v1525, %v1526
    %v1528 = vsel %vm528, %v1523, %v1527
    %v1529 = vrot.slane %v1478, 1
    %v1530 = vrot.slane %v1474, 2
    %v1531 = vor.u32 %v1529, %v1530
    %v1532 = vsel %vm528, %v1527, %v1531
    %v1533 = vrot.slane %v1486, 1
    %v1534 = vrot.slane %v1482, 2
    %v1535 = vor.u32 %v1533, %v1534
    %v1536 = vsel %vm528, %v1531, %v1535
    %v1543 = vrot.slane %v1439, 2
    %v1544 = vrot.slane %v1394, 2
    %v1545 = vsel %vm558, %v1543, %v1544
    %v1546 = vrot.slane %v1403, 2
    %v1547 = vsel %vm558, %v1544, %v1546
    %v1548 = vrot.slane %v1412, 2
    %v1549 = vsel %vm558, %v1546, %v1548
    %v1550 = vrot.slane %v1421, 2
    %v1551 = vsel %vm558, %v1548, %v1550
    %v1552 = vrot.slane %v1441, 2
    %v1553 = vsel %vm558, %v1550, %v1552
    %v1560 = vrot.slane %v1443, 2
    %v1561 = vrot.slane %v1445, 3
    %v1562 = vor.u32 %v1560, %v1561
    %v1563 = vrot.slane %v1454, 2
    %v1564 = vrot.slane %v1450, 3
    %v1565 = vor.u32 %v1563, %v1564
    %v1566 = vsel %vm576, %v1562, %v1565
    %v1567 = vrot.slane %v1462, 2
    %v1568 = vrot.slane %v1458, 3
    %v1569 = vor.u32 %v1567, %v1568
    %v1570 = vsel %vm576, %v1565, %v1569
    %v1571 = vrot.slane %v1470, 2
    %v1572 = vrot.slane %v1466, 3
    %v1573 = vor.u32 %v1571, %v1572
    %v1574 = vsel %vm576, %v1569, %v1573
    %v1575 = vrot.slane %v1478, 2
    %v1576 = vrot.slane %v1474, 3
    %v1577 = vor.u32 %v1575, %v1576
    %v1578 = vsel %vm576, %v1573, %v1577
    %v1579 = vrot.slane %v1486, 2
    %v1580 = vrot.slane %v1482, 3
    %v1581 = vor.u32 %v1579, %v1580
    %v1582 = vsel %vm576, %v1577, %v1581
    %v1589 = vrot.slane %v1439, 3
    %v1590 = vrot.slane %v1394, 3
    %v1591 = vsel %vm606, %v1589, %v1590
    %v1592 = vrot.slane %v1403, 3
    %v1593 = vsel %vm606, %v1590, %v1592
    %v1594 = vrot.slane %v1412, 3
    %v1595 = vsel %vm606, %v1592, %v1594
    %v1596 = vrot.slane %v1421, 3
    %v1597 = vsel %vm606, %v1594, %v1596
    %v1598 = vrot.slane %v1441, 3
    %v1599 = vsel %vm606, %v1596, %v1598
    %v1622 = vunpack.c.l.b16 %v293
    %v1623 = vunpack.c.l.b16 %v294
    %v1624 = vunpack.c.l.b16 %v295
    %v1625 = vunpack.c.l.b16 %v296
    %v1626 = vunpack.c.l.b16 %v297
    %v1627 = vunpack.c.l.b16 %v298
    %v1628 = vunpack.c.l.b16 %v299
    %v1629 = vunpack.c.l.b16 %v300
    %v1630 = vunpack.c.l.b16 %v301
    %v1631 = vunpack.c.l.b16 %v302
    %v1632 = vunpack.c.l.b16 %v303
    %v1633 = vunpack.c.l.b16 %v304
    %v1634 = vunpack.c.l.b16 %v305
    %v1635 = vunpack.c.l.b16 %v306
    %v1636 = vunpack.c.l.b16 %v307
    %v1637 = vunpack.c.l.b16 %v308
    %v1638 = vpack.c.b16 %v1623, %v1622
    %v1639 = vpack.c.b16 %v1625, %v1624
    %v1640 = vpack.c.b16 %v1627, %v1626
    %v1641 = vpack.c.b16 %v1629, %v1628
    %v1642 = vpack.c.b16 %v1631, %v1630
    %v1643 = vpack.c.b16 %v1633, %v1632
    %v1644 = vpack.c.b16 %v1635, %v1634
    %v1645 = vpack.c.b16 %v1637, %v1636
    %1654 = vmatprep.subr.bf16.mxu0 0
    %1655 = vmatpush1.bf16.msra.mxu0 %v1638
    %1656 = vmatprep.subr.bf16.mxu0 0
    %1657 = vmatpush1.bf16.msra.mxu0 %v1639
    %1658 = vmatprep.subr.bf16.mxu0 0
    %1659 = vmatpush1.bf16.msra.mxu0 %v1640
    %1660 = vmatprep.subr.bf16.mxu0 0
    %1661 = vmatpush1.bf16.msra.mxu0 %v1641
    %1662 = vmatprep.subr.bf16.mxu0 0
    %1663 = vmatpush1.bf16.msra.mxu0 %v1642
    %1664 = vmatprep.subr.bf16.mxu0 0
    %1665 = vmatpush1.bf16.msra.mxu0 %v1643
    %1666 = vmatprep.subr.bf16.mxu0 0
    %1667 = vmatpush1.bf16.msra.mxu0 %v1644
    %1668 = vmatprep.subr.bf16.mxu0 0
    %1669 = vmatpush1.bf16.msra.mxu0 %v1645
    %1670 = vmatprep.subr.bf16.mxu0 0
    %1671 = vmatpush1.bf16.msra.mxu0 0
    %1672 = vmatprep.subr.bf16.mxu0 0
    %1673 = vmatpush1.bf16.msra.mxu0 0
    %1674 = vmatprep.subr.bf16.mxu0 0
    %1675 = vmatpush1.bf16.msra.mxu0 0
    %1676 = vmatprep.subr.bf16.mxu0 0
    %1677 = vmatpush1.bf16.msra.mxu0 0
    %1678 = vmatprep.subr.bf16.mxu0 0
    %1679 = vmatpush1.bf16.msra.mxu0 0
    %1680 = vmatprep.subr.bf16.mxu0 0
    %1681 = vmatpush1.bf16.msra.mxu0 0
    %1682 = vmatprep.subr.bf16.mxu0 0
    %1683 = vmatpush1.bf16.msra.mxu0 0
    %1684 = vmatprep.subr.bf16.mxu0 0
    %1685 = vmatpush1.bf16.msra.mxu0 0
    %1686 = vmatprep.mubr.bf16.mxu0 0
    %1687 = vmatmul.mubr.bf16.gmra.mrb[0].mxu0 %v535
    %v1688 = vpop.f32.mrb[0].mxu0
    %v1689 = vadd.f32 0.0, %v1688
    %v1690 = vpop.f32.mrb[0].mxu0
    %v1691 = vpop.f32.mrb[0].mxu0
    %v1692 = vadd.f32 0.0, %v1691
    %v1693 = vpop.f32.mrb[0].mxu0
    %1694 = vmatprep.mubr.bf16.mxu0 0
    %1695 = vmatmul.mubr.bf16.gmra.mrb[0].mxu0 %v539
    %v1696 = vpop.f32.mrb[0].mxu0
    %v1697 = vadd.f32 0.0, %v1696
    %v1698 = vpop.f32.mrb[0].mxu0
    %v1699 = vpop.f32.mrb[0].mxu0
    %v1700 = vadd.f32 0.0, %v1699
    %v1701 = vpop.f32.mrb[0].mxu0
    %1702 = vmatprep.mubr.bf16.mxu0 0
    %1703 = vmatmul.mubr.bf16.gmra.mrb[0].mxu0 %v543
    %v1704 = vpop.f32.mrb[0].mxu0
    %v1705 = vadd.f32 0.0, %v1704
    %v1706 = vpop.f32.mrb[0].mxu0
    %v1707 = vpop.f32.mrb[0].mxu0
    %v1708 = vadd.f32 0.0, %v1707
    %v1709 = vpop.f32.mrb[0].mxu0
    %1710 = vmatprep.mubr.bf16.mxu0 0
    %1711 = vmatmul.mubr.bf16.gmra.mrb[0].mxu0 %v547
    %v1712 = vpop.f32.mrb[0].mxu0
    %v1713 = vadd.f32 0.0, %v1712
    %v1714 = vpop.f32.mrb[0].mxu0
    %v1715 = vpop.f32.mrb[0].mxu0
    %v1716 = vadd.f32 0.0, %v1715
    %v1717 = vpop.f32.mrb[0].mxu0
    %1718 = vmatprep.mubr.bf16.mxu0 0
    %1719 = vmatmul.mubr.bf16.gmra.mrb[0].mxu0 %v551
    %v1720 = vpop.f32.mrb[0].mxu0
    %v1721 = vadd.f32 0.0, %v1720
    %v1722 = vpop.f32.mrb[0].mxu0
    %v1723 = vpop.f32.mrb[0].mxu0
    %v1724 = vadd.f32 0.0, %v1723
    %v1725 = vpop.f32.mrb[0].mxu0
    %1726 = vmatprep.mubr.bf16.mxu0 0
    %1727 = vmatmul.mubr.bf16.gmra.mrb[0].mxu0 %v550
    %v1728 = vpop.f32.mrb[0].mxu0
    %v1729 = vadd.f32 0.0, %v1728
    %v1730 = vpop.f32.mrb[0].mxu0
    %v1731 = vpop.f32.mrb[0].mxu0
    %v1732 = vadd.f32 0.0, %v1731
    %v1733 = vpop.f32.mrb[0].mxu0
    %1734 = vdwg.mxu0
    %v1847 = vunpack.c.l.b16 %v181
    %v1848 = vunpack.c.l.b16 %v182
    %v1849 = vunpack.c.l.b16 %v183
    %v1850 = vunpack.c.l.b16 %v184
    %v1851 = vunpack.c.l.b16 %v185
    %v1852 = vunpack.c.l.b16 %v186
    %v1853 = vunpack.c.l.b16 %v187
    %v1854 = vunpack.c.l.b16 %v188
    %v1855 = vunpack.c.l.b16 %v189
    %v1856 = vunpack.c.l.b16 %v190
    %v1857 = vunpack.c.l.b16 %v191
    %v1858 = vunpack.c.l.b16 %v192
    %v1859 = vunpack.c.l.b16 %v193
    %v1860 = vunpack.c.l.b16 %v194
    %v1861 = vunpack.c.l.b16 %v195
    %v1862 = vunpack.c.l.b16 %v196
    %v1863 = vunpack.c.l.b16 %v197
    %v1864 = vunpack.c.l.b16 %v198
    %v1865 = vunpack.c.l.b16 %v199
    %v1866 = vunpack.c.l.b16 %v200
    %v1867 = vunpack.c.l.b16 %v201
    %v1868 = vunpack.c.l.b16 %v202
    %v1869 = vunpack.c.l.b16 %v203
    %v1870 = vunpack.c.l.b16 %v204
    %v1871 = vunpack.c.l.b16 %v205
    %v1872 = vunpack.c.l.b16 %v206
    %v1873 = vunpack.c.l.b16 %v207
    %v1874 = vunpack.c.l.b16 %v208
    %v1875 = vunpack.c.l.b16 %v209
    %v1876 = vunpack.c.l.b16 %v210
    %v1877 = vunpack.c.l.b16 %v211
    %v1878 = vunpack.c.l.b16 %v212
    %v1879 = vunpack.c.l.b16 %v213
    %v1880 = vunpack.c.l.b16 %v214
    %v1881 = vunpack.c.l.b16 %v215
    %v1882 = vunpack.c.l.b16 %v216
    %v1883 = vunpack.c.l.b16 %v217
    %v1884 = vunpack.c.l.b16 %v218
    %v1885 = vunpack.c.l.b16 %v219
    %v1886 = vunpack.c.l.b16 %v220
    %v1887 = vunpack.c.l.b16 %v221
    %v1888 = vunpack.c.l.b16 %v222
    %v1889 = vunpack.c.l.b16 %v223
    %v1890 = vunpack.c.l.b16 %v224
    %v1891 = vunpack.c.l.b16 %v225
    %v1892 = vunpack.c.l.b16 %v226
    %v1893 = vunpack.c.l.b16 %v227
    %v1894 = vunpack.c.l.b16 %v228
    %v1895 = vunpack.c.l.b16 %v229
    %v1896 = vunpack.c.l.b16 %v230
    %v1897 = vunpack.c.l.b16 %v231
    %v1898 = vunpack.c.l.b16 %v232
    %v1899 = vunpack.c.l.b16 %v233
    %v1900 = vunpack.c.l.b16 %v234
    %v1901 = vunpack.c.l.b16 %v235
    %v1902 = vunpack.c.l.b16 %v236
    %v1903 = vunpack.c.l.b16 %v237
    %v1904 = vunpack.c.l.b16 %v238
    %v1905 = vunpack.c.l.b16 %v239
    %v1906 = vunpack.c.l.b16 %v240
    %v1907 = vunpack.c.l.b16 %v241
    %v1908 = vunpack.c.l.b16 %v242
    %v1909 = vunpack.c.l.b16 %v243
    %v1910 = vunpack.c.l.b16 %v244
    %v1911 = vunpack.c.l.b16 %v245
    %v1912 = vunpack.c.l.b16 %v246
    %v1913 = vunpack.c.l.b16 %v247
    %v1914 = vunpack.c.l.b16 %v248
    %v1915 = vunpack.c.l.b16 %v249
    %v1916 = vunpack.c.l.b16 %v250
    %v1917 = vunpack.c.l.b16 %v251
    %v1918 = vunpack.c.l.b16 %v252
    %v1919 = vunpack.c.l.b16 %v253
    %v1920 = vunpack.c.l.b16 %v254
    %v1921 = vunpack.c.l.b16 %v255
    %v1922 = vunpack.c.l.b16 %v256
    %v1923 = vunpack.c.l.b16 %v257
    %v1924 = vunpack.c.l.b16 %v258
    %v1925 = vunpack.c.l.b16 %v259
    %v1926 = vunpack.c.l.b16 %v260
    %v1927 = vunpack.c.l.b16 %v261
    %v1928 = vunpack.c.l.b16 %v262
    %v1929 = vunpack.c.l.b16 %v263
    %v1930 = vunpack.c.l.b16 %v264
    %v1931 = vunpack.c.l.b16 %v265
    %v1932 = vunpack.c.l.b16 %v266
    %v1933 = vunpack.c.l.b16 %v267
    %v1934 = vunpack.c.l.b16 %v268
    %v1935 = vunpack.c.l.b16 %v269
    %v1936 = vunpack.c.l.b16 %v270
    %v1937 = vunpack.c.l.b16 %v271
    %v1938 = vunpack.c.l.b16 %v272
    %v1939 = vunpack.c.l.b16 %v273
    %v1940 = vunpack.c.l.b16 %v274
    %v1941 = vunpack.c.l.b16 %v275
    %v1942 = vunpack.c.l.b16 %v276
    %v1943 = vunpack.c.l.b16 %v277
    %v1944 = vunpack.c.l.b16 %v278
    %v1945 = vunpack.c.l.b16 %v279
    %v1946 = vunpack.c.l.b16 %v280
    %v1947 = vunpack.c.l.b16 %v281
    %v1948 = vunpack.c.l.b16 %v282
    %v1949 = vunpack.c.l.b16 %v283
    %v1950 = vunpack.c.l.b16 %v284
    %v1951 = vunpack.c.l.b16 %v285
    %v1952 = vunpack.c.l.b16 %v286
    %v1953 = vunpack.c.l.b16 %v287
    %v1954 = vunpack.c.l.b16 %v288
    %v1955 = vunpack.c.l.b16 %v289
    %v1956 = vunpack.c.l.b16 %v290
    %v1957 = vunpack.c.l.b16 %v291
    %v1958 = vunpack.c.l.b16 %v292
    %v1959 = vpack.c.b16 %v1848, %v1847
    %v1960 = vpack.c.b16 %v1850, %v1849
    %v1961 = vpack.c.b16 %v1852, %v1851
    %v1962 = vpack.c.b16 %v1854, %v1853
    %v1963 = vpack.c.b16 %v1856, %v1855
    %v1964 = vpack.c.b16 %v1858, %v1857
    %v1965 = vpack.c.b16 %v1860, %v1859
    %v1966 = vpack.c.b16 %v1862, %v1861
    %v1967 = vpack.c.b16 %v1864, %v1863
    %v1968 = vpack.c.b16 %v1866, %v1865
    %v1969 = vpack.c.b16 %v1868, %v1867
    %v1970 = vpack.c.b16 %v1870, %v1869
    %v1971 = vpack.c.b16 %v1872, %v1871
    %v1972 = vpack.c.b16 %v1874, %v1873
    %v1973 = vpack.c.b16 %v1876, %v1875
    %v1974 = vpack.c.b16 %v1878, %v1877
    %v1975 = vpack.c.b16 %v1880, %v1879
    %v1976 = vpack.c.b16 %v1882, %v1881
    %v1977 = vpack.c.b16 %v1884, %v1883
    %v1978 = vpack.c.b16 %v1886, %v1885
    %v1979 = vpack.c.b16 %v1888, %v1887
    %v1980 = vpack.c.b16 %v1890, %v1889
    %v1981 = vpack.c.b16 %v1892, %v1891
    %v1982 = vpack.c.b16 %v1894, %v1893
    %v1983 = vpack.c.b16 %v1896, %v1895
    %v1984 = vpack.c.b16 %v1898, %v1897
    %v1985 = vpack.c.b16 %v1900, %v1899
    %v1986 = vpack.c.b16 %v1902, %v1901
    %v1987 = vpack.c.b16 %v1904, %v1903
    %v1988 = vpack.c.b16 %v1906, %v1905
    %v1989 = vpack.c.b16 %v1908, %v1907
    %v1990 = vpack.c.b16 %v1910, %v1909
    %v1991 = vpack.c.b16 %v1912, %v1911
    %v1992 = vpack.c.b16 %v1914, %v1913
    %v1993 = vpack.c.b16 %v1916, %v1915
    %v1994 = vpack.c.b16 %v1918, %v1917
    %v1995 = vpack.c.b16 %v1920, %v1919
    %v1996 = vpack.c.b16 %v1922, %v1921
    %v1997 = vpack.c.b16 %v1924, %v1923
    %v1998 = vpack.c.b16 %v1926, %v1925
    %v1999 = vpack.c.b16 %v1928, %v1927
    %v2000 = vpack.c.b16 %v1930, %v1929
    %v2001 = vpack.c.b16 %v1932, %v1931
    %v2002 = vpack.c.b16 %v1934, %v1933
    %v2003 = vpack.c.b16 %v1936, %v1935
    %v2004 = vpack.c.b16 %v1938, %v1937
    %v2005 = vpack.c.b16 %v1940, %v1939
    %v2006 = vpack.c.b16 %v1942, %v1941
    %v2007 = vpack.c.b16 %v1944, %v1943
    %v2008 = vpack.c.b16 %v1946, %v1945
    %v2009 = vpack.c.b16 %v1948, %v1947
    %v2010 = vpack.c.b16 %v1950, %v1949
    %v2011 = vpack.c.b16 %v1952, %v1951
    %v2012 = vpack.c.b16 %v1954, %v1953
    %v2013 = vpack.c.b16 %v1956, %v1955
    %v2014 = vpack.c.b16 %v1958, %v1957
    %2071 = vmatprep.subr.bf16.mxu0 0
    %2072 = vmatpush1.bf16.msra.mxu0 %v1959
    %2073 = vmatprep.subr.bf16.mxu0 0
    %2074 = vmatpush1.bf16.msra.mxu0 %v1960
    %2075 = vmatprep.subr.bf16.mxu0 0
    %2076 = vmatpush1.bf16.msra.mxu0 %v1961
    %2077 = vmatprep.subr.bf16.mxu0 0
    %2078 = vmatpush1.bf16.msra.mxu0 %v1962
    %2079 = vmatprep.subr.bf16.mxu0 0
    %2080 = vmatpush1.bf16.msra.mxu0 %v1963
    %2081 = vmatprep.subr.bf16.mxu0 0
    %2082 = vmatpush1.bf16.msra.mxu0 %v1964
    %2083 = vmatprep.subr.bf16.mxu0 0
    %2084 = vmatpush1.bf16.msra.mxu0 %v1965
    %2085 = vmatprep.subr.bf16.mxu0 0
    %2086 = vmatpush1.bf16.msra.mxu0 %v1966
    %2087 = vmatprep.subr.bf16.mxu0 0
    %2088 = vmatpush1.bf16.msra.mxu0 %v1967
    %2089 = vmatprep.subr.bf16.mxu0 0
    %2090 = vmatpush1.bf16.msra.mxu0 %v1968
    %2091 = vmatprep.subr.bf16.mxu0 0
    %2092 = vmatpush1.bf16.msra.mxu0 %v1969
    %2093 = vmatprep.subr.bf16.mxu0 0
    %2094 = vmatpush1.bf16.msra.mxu0 %v1970
    %2095 = vmatprep.subr.bf16.mxu0 0
    %2096 = vmatpush1.bf16.msra.mxu0 %v1971
    %2097 = vmatprep.subr.bf16.mxu0 0
    %2098 = vmatpush1.bf16.msra.mxu0 %v1972
    %2099 = vmatprep.subr.bf16.mxu0 0
    %2100 = vmatpush1.bf16.msra.mxu0 %v1973
    %2101 = vmatprep.subr.bf16.mxu0 0
    %2102 = vmatpush1.bf16.msra.mxu0 %v1974
    %2103 = vmatprep.mubr.bf16.mxu0 %v1453
    %2104 = vmatmul.mubr.bf16.gmra.mrb[0].mxu0 %v1439
    %v2105 = vpop.f32.mrb[0].mxu0
    %v2106 = vadd.f32 %v1689, %v2105
    %v2107 = vpop.f32.mrb[0].mxu0
    %v2108 = vpop.f32.mrb[0].mxu0
    %v2109 = vadd.f32 %v1692, %v2108
    %v2110 = vpop.f32.mrb[0].mxu0
    %2111 = vmatprep.mubr.bf16.mxu0 %v1461
    %2112 = vmatmul.mubr.bf16.gmra.mrb[0].mxu0 %v1394
    %v2113 = vpop.f32.mrb[0].mxu0
    %v2114 = vadd.f32 %v1697, %v2113
    %v2115 = vpop.f32.mrb[0].mxu0
    %v2116 = vpop.f32.mrb[0].mxu0
    %v2117 = vadd.f32 %v1700, %v2116
    %v2118 = vpop.f32.mrb[0].mxu0
    %2119 = vmatprep.mubr.bf16.mxu0 %v1469
    %2120 = vmatmul.mubr.bf16.gmra.mrb[0].mxu0 %v1403
    %v2121 = vpop.f32.mrb[0].mxu0
    %v2122 = vadd.f32 %v1705, %v2121
    %v2123 = vpop.f32.mrb[0].mxu0
    %v2124 = vpop.f32.mrb[0].mxu0
    %v2125 = vadd.f32 %v1708, %v2124
    %v2126 = vpop.f32.mrb[0].mxu0
    %2127 = vmatprep.mubr.bf16.mxu0 %v1477
    %2128 = vmatmul.mubr.bf16.gmra.mrb[0].mxu0 %v1412
    %v2129 = vpop.f32.mrb[0].mxu0
    %v2130 = vadd.f32 %v1713, %v2129
    %v2131 = vpop.f32.mrb[0].mxu0
    %v2132 = vpop.f32.mrb[0].mxu0
    %v2133 = vadd.f32 %v1716, %v2132
    %v2134 = vpop.f32.mrb[0].mxu0
    %2135 = vmatprep.mubr.bf16.mxu0 %v1485
    %2136 = vmatmul.mubr.bf16.gmra.mrb[0].mxu0 %v1421
    %v2137 = vpop.f32.mrb[0].mxu0
    %v2138 = vadd.f32 %v1721, %v2137
    %v2139 = vpop.f32.mrb[0].mxu0
    %v2140 = vpop.f32.mrb[0].mxu0
    %v2141 = vadd.f32 %v1724, %v2140
    %v2142 = vpop.f32.mrb[0].mxu0
    %2143 = vmatprep.mubr.bf16.mxu0 %v1488
    %2144 = vmatmul.mubr.bf16.gmra.mrb[0].mxu0 %v1441
    %v2145 = vpop.f32.mrb[0].mxu0
    %v2146 = vadd.f32 %v1729, %v2145
    %v2147 = vpop.f32.mrb[0].mxu0
    %v2148 = vpop.f32.mrb[0].mxu0
    %v2149 = vadd.f32 %v1732, %v2148
    %v2150 = vpop.f32.mrb[0].mxu0
    %2151 = vdwg.mxu0
    %2152 = vmatprep.subr.bf16.mxu0 0
    %2153 = vmatpush1.bf16.msra.mxu0 %v1975
    %2154 = vmatprep.subr.bf16.mxu0 0
    %2155 = vmatpush1.bf16.msra.mxu0 %v1976
    %2156 = vmatprep.subr.bf16.mxu0 0
    %2157 = vmatpush1.bf16.msra.mxu0 %v1977
    %2158 = vmatprep.subr.bf16.mxu0 0
    %2159 = vmatpush1.bf16.msra.mxu0 %v1978
    %2160 = vmatprep.subr.bf16.mxu0 0
    %2161 = vmatpush1.bf16.msra.mxu0 %v1979
    %2162 = vmatprep.subr.bf16.mxu0 0
    %2163 = vmatpush1.bf16.msra.mxu0 %v1980
    %2164 = vmatprep.subr.bf16.mxu0 0
    %2165 = vmatpush1.bf16.msra.mxu0 %v1981
    %2166 = vmatprep.subr.bf16.mxu0 0
    %2167 = vmatpush1.bf16.msra.mxu0 %v1982
    %2168 = vmatprep.subr.bf16.mxu0 0
    %2169 = vmatpush1.bf16.msra.mxu0 %v1983
    %2170 = vmatprep.subr.bf16.mxu0 0
    %2171 = vmatpush1.bf16.msra.mxu0 %v1984
    %2172 = vmatprep.subr.bf16.mxu0 0
    %2173 = vmatpush1.bf16.msra.mxu0 %v1985
    %2174 = vmatprep.subr.bf16.mxu0 0
    %2175 = vmatpush1.bf16.msra.mxu0 %v1986
    %2176 = vmatprep.subr.bf16.mxu0 0
    %2177 = vmatpush1.bf16.msra.mxu0 %v1987
    %2178 = vmatprep.subr.bf16.mxu0 0
    %2179 = vmatpush1.bf16.msra.mxu0 %v1988
    %2180 = vmatprep.subr.bf16.mxu0 0
    %2181 = vmatpush1.bf16.msra.mxu0 %v1989
    %2182 = vmatprep.subr.bf16.mxu0 0
    %2183 = vmatpush1.bf16.msra.mxu0 %v1990
    %2184 = vmatprep.mubr.bf16.mxu0 %v1520
    %2185 = vmatmul.mubr.bf16.gmra.mrb[0].mxu0 %v1499
    %v2186 = vpop.f32.mrb[0].mxu0
    %v2187 = vadd.f32 %v2106, %v2186
    %v2188 = vpop.f32.mrb[0].mxu0
    %v2189 = vpop.f32.mrb[0].mxu0
    %v2190 = vadd.f32 %v2109, %v2189
    %v2191 = vpop.f32.mrb[0].mxu0
    %2192 = vmatprep.mubr.bf16.mxu0 %v1524
    %2193 = vmatmul.mubr.bf16.gmra.mrb[0].mxu0 %v1501
    %v2194 = vpop.f32.mrb[0].mxu0
    %v2195 = vadd.f32 %v2114, %v2194
    %v2196 = vpop.f32.mrb[0].mxu0
    %v2197 = vpop.f32.mrb[0].mxu0
    %v2198 = vadd.f32 %v2117, %v2197
    %v2199 = vpop.f32.mrb[0].mxu0
    %2200 = vmatprep.mubr.bf16.mxu0 %v1528
    %2201 = vmatmul.mubr.bf16.gmra.mrb[0].mxu0 %v1503
    %v2202 = vpop.f32.mrb[0].mxu0
    %v2203 = vadd.f32 %v2122, %v2202
    %v2204 = vpop.f32.mrb[0].mxu0
    %v2205 = vpop.f32.mrb[0].mxu0
    %v2206 = vadd.f32 %v2125, %v2205
    %v2207 = vpop.f32.mrb[0].mxu0
    %2208 = vmatprep.mubr.bf16.mxu0 %v1532
    %2209 = vmatmul.mubr.bf16.gmra.mrb[0].mxu0 %v1505
    %v2210 = vpop.f32.mrb[0].mxu0
    %v2211 = vadd.f32 %v2130, %v2210
    %v2212 = vpop.f32.mrb[0].mxu0
    %v2213 = vpop.f32.mrb[0].mxu0
    %v2214 = vadd.f32 %v2133, %v2213
    %v2215 = vpop.f32.mrb[0].mxu0
    %2216 = vmatprep.mubr.bf16.mxu0 %v1536
    %2217 = vmatmul.mubr.bf16.gmra.mrb[0].mxu0 %v1507
    %v2218 = vpop.f32.mrb[0].mxu0
    %v2219 = vadd.f32 %v2138, %v2218
    %v2220 = vpop.f32.mrb[0].mxu0
    %v2221 = vpop.f32.mrb[0].mxu0
    %v2222 = vadd.f32 %v2141, %v2221
    %v2223 = vpop.f32.mrb[0].mxu0
    %2224 = vmatprep.mubr.bf16.mxu0 %v1535
    %2225 = vmatmul.mubr.bf16.gmra.mrb[0].mxu0 %v1506
    %v2226 = vpop.f32.mrb[0].mxu0
    %v2227 = vadd.f32 %v2146, %v2226
    %v2228 = vpop.f32.mrb[0].mxu0
    %v2229 = vpop.f32.mrb[0].mxu0
    %v2230 = vadd.f32 %v2149, %v2229
    %v2231 = vpop.f32.mrb[0].mxu0
    %2232 = vdwg.mxu0
    %2233 = vmatprep.subr.bf16.mxu0 0
    %2234 = vmatpush1.bf16.msra.mxu0 %v1991
    %2235 = vmatprep.subr.bf16.mxu0 0
    %2236 = vmatpush1.bf16.msra.mxu0 %v1992
    %2237 = vmatprep.subr.bf16.mxu0 0
    %2238 = vmatpush1.bf16.msra.mxu0 %v1993
    %2239 = vmatprep.subr.bf16.mxu0 0
    %2240 = vmatpush1.bf16.msra.mxu0 %v1994
    %2241 = vmatprep.subr.bf16.mxu0 0
    %2242 = vmatpush1.bf16.msra.mxu0 %v1995
    %2243 = vmatprep.subr.bf16.mxu0 0
    %2244 = vmatpush1.bf16.msra.mxu0 %v1996
    %2245 = vmatprep.subr.bf16.mxu0 0
    %2246 = vmatpush1.bf16.msra.mxu0 %v1997
    %2247 = vmatprep.subr.bf16.mxu0 0
    %2248 = vmatpush1.bf16.msra.mxu0 %v1998
    %2249 = vmatprep.subr.bf16.mxu0 0
    %2250 = vmatpush1.bf16.msra.mxu0 %v1999
    %2251 = vmatprep.subr.bf16.mxu0 0
    %2252 = vmatpush1.bf16.msra.mxu0 %v2000
    %2253 = vmatprep.subr.bf16.mxu0 0
    %2254 = vmatpush1.bf16.msra.mxu0 %v2001
    %2255 = vmatprep.subr.bf16.mxu0 0
    %2256 = vmatpush1.bf16.msra.mxu0 %v2002
    %2257 = vmatprep.subr.bf16.mxu0 0
    %2258 = vmatpush1.bf16.msra.mxu0 %v2003
    %2259 = vmatprep.subr.bf16.mxu0 0
    %2260 = vmatpush1.bf16.msra.mxu0 %v2004
    %2261 = vmatprep.subr.bf16.mxu0 0
    %2262 = vmatpush1.bf16.msra.mxu0 %v2005
    %2263 = vmatprep.subr.bf16.mxu0 0
    %2264 = vmatpush1.bf16.msra.mxu0 %v2006
    %2265 = vmatprep.mubr.bf16.mxu0 %v1566
    %2266 = vmatmul.mubr.bf16.gmra.mrb[0].mxu0 %v1545
    %v2267 = vpop.f32.mrb[0].mxu0
    %v2268 = vadd.f32 %v2187, %v2267
    %v2269 = vpop.f32.mrb[0].mxu0
    %v2270 = vpop.f32.mrb[0].mxu0
    %v2271 = vadd.f32 %v2190, %v2270
    %v2272 = vpop.f32.mrb[0].mxu0
    %2273 = vmatprep.mubr.bf16.mxu0 %v1570
    %2274 = vmatmul.mubr.bf16.gmra.mrb[0].mxu0 %v1547
    %v2275 = vpop.f32.mrb[0].mxu0
    %v2276 = vadd.f32 %v2195, %v2275
    %v2277 = vpop.f32.mrb[0].mxu0
    %v2278 = vpop.f32.mrb[0].mxu0
    %v2279 = vadd.f32 %v2198, %v2278
    %v2280 = vpop.f32.mrb[0].mxu0
    %2281 = vmatprep.mubr.bf16.mxu0 %v1574
    %2282 = vmatmul.mubr.bf16.gmra.mrb[0].mxu0 %v1549
    %v2283 = vpop.f32.mrb[0].mxu0
    %v2284 = vadd.f32 %v2203, %v2283
    %v2285 = vpop.f32.mrb[0].mxu0
    %v2286 = vpop.f32.mrb[0].mxu0
    %v2287 = vadd.f32 %v2206, %v2286
    %v2288 = vpop.f32.mrb[0].mxu0
    %2289 = vmatprep.mubr.bf16.mxu0 %v1578
    %2290 = vmatmul.mubr.bf16.gmra.mrb[0].mxu0 %v1551
    %v2291 = vpop.f32.mrb[0].mxu0
    %v2292 = vadd.f32 %v2211, %v2291
    %v2293 = vpop.f32.mrb[0].mxu0
    %v2294 = vpop.f32.mrb[0].mxu0
    %v2295 = vadd.f32 %v2214, %v2294
    %v2296 = vpop.f32.mrb[0].mxu0
    %2297 = vmatprep.mubr.bf16.mxu0 %v1582
    %2298 = vmatmul.mubr.bf16.gmra.mrb[0].mxu0 %v1553
    %v2299 = vpop.f32.mrb[0].mxu0
    %v2300 = vadd.f32 %v2219, %v2299
    %v2301 = vpop.f32.mrb[0].mxu0
    %v2302 = vpop.f32.mrb[0].mxu0
    %v2303 = vadd.f32 %v2222, %v2302
    %v2304 = vpop.f32.mrb[0].mxu0
    %2305 = vmatprep.mubr.bf16.mxu0 %v1581
    %2306 = vmatmul.mubr.bf16.gmra.mrb[0].mxu0 %v1552
    %v2307 = vpop.f32.mrb[0].mxu0
    %v2308 = vadd.f32 %v2227, %v2307
    %v2309 = vpop.f32.mrb[0].mxu0
    %v2310 = vpop.f32.mrb[0].mxu0
    %v2311 = vadd.f32 %v2230, %v2310
    %v2312 = vpop.f32.mrb[0].mxu0
    %2313 = vdwg.mxu0
    %2314 = vmatprep.subr.bf16.mxu0 0
    %2315 = vmatpush1.bf16.msra.mxu0 %v2007
    %2316 = vmatprep.subr.bf16.mxu0 0
    %2317 = vmatpush1.bf16.msra.mxu0 %v2008
    %2318 = vmatprep.subr.bf16.mxu0 0
    %2319 = vmatpush1.bf16.msra.mxu0 %v2009
    %2320 = vmatprep.subr.bf16.mxu0 0
    %2321 = vmatpush1.bf16.msra.mxu0 %v2010
    %2322 = vmatprep.subr.bf16.mxu0 0
    %2323 = vmatpush1.bf16.msra.mxu0 %v2011
    %2324 = vmatprep.subr.bf16.mxu0 0
    %2325 = vmatpush1.bf16.msra.mxu0 %v2012
    %2326 = vmatprep.subr.bf16.mxu0 0
    %2327 = vmatpush1.bf16.msra.mxu0 %v2013
    %2328 = vmatprep.subr.bf16.mxu0 0
    %2329 = vmatpush1.bf16.msra.mxu0 %v2014
    %2330 = vmatprep.subr.bf16.mxu0 0
    %2331 = vmatpush1.bf16.msra.mxu0 0
    %2332 = vmatprep.subr.bf16.mxu0 0
    %2333 = vmatpush1.bf16.msra.mxu0 0
    %2334 = vmatprep.subr.bf16.mxu0 0
    %2335 = vmatpush1.bf16.msra.mxu0 0
    %2336 = vmatprep.subr.bf16.mxu0 0
    %2337 = vmatpush1.bf16.msra.mxu0 0
    %2338 = vmatprep.subr.bf16.mxu0 0
    %2339 = vmatpush1.bf16.msra.mxu0 0
    %2340 = vmatprep.subr.bf16.mxu0 0
    %2341 = vmatpush1.bf16.msra.mxu0 0
    %2342 = vmatprep.subr.bf16.mxu0 0
    %2343 = vmatpush1.bf16.msra.mxu0 0
    %2344 = vmatprep.subr.bf16.mxu0 0
    %2345 = vmatpush1.bf16.msra.mxu0 0
    %2346 = vmatprep.mubr.bf16.mxu0 0
    %2347 = vmatmul.mubr.bf16.gmra.mrb[0].mxu0 %v1591
    %v2348 = vpop.f32.mrb[0].mxu0
    %v2349 = vadd.f32 %v2268, %v2348
    %v2350 = vpop.f32.mrb[0].mxu0
    %v2351 = vpop.f32.mrb[0].mxu0
    %v2352 = vadd.f32 %v2271, %v2351
    %v2353 = vpop.f32.mrb[0].mxu0
    %2354 = vmatprep.mubr.bf16.mxu0 0
    %2355 = vmatmul.mubr.bf16.gmra.mrb[0].mxu0 %v1593
    %v2356 = vpop.f32.mrb[0].mxu0
    %v2357 = vadd.f32 %v2276, %v2356
    %v2358 = vpop.f32.mrb[0].mxu0
    %v2359 = vpop.f32.mrb[0].mxu0
    %v2360 = vadd.f32 %v2279, %v2359
    %v2361 = vpop.f32.mrb[0].mxu0
    %2362 = vmatprep.mubr.bf16.mxu0 0
    %2363 = vmatmul.mubr.bf16.gmra.mrb[0].mxu0 %v1595
    %v2364 = vpop.f32.mrb[0].mxu0
    %v2365 = vadd.f32 %v2284, %v2364
    %v2366 = vpop.f32.mrb[0].mxu0
    %v2367 = vpop.f32.mrb[0].mxu0
    %v2368 = vadd.f32 %v2287, %v2367
    %v2369 = vpop.f32.mrb[0].mxu0
    %2370 = vmatprep.mubr.bf16.mxu0 0
    %2371 = vmatmul.mubr.bf16.gmra.mrb[0].mxu0 %v1597
    %v2372 = vpop.f32.mrb[0].mxu0
    %v2373 = vadd.f32 %v2292, %v2372
    %v2374 = vpop.f32.mrb[0].mxu0
    %v2375 = vpop.f32.mrb[0].mxu0
    %v2376 = vadd.f32 %v2295, %v2375
    %v2377 = vpop.f32.mrb[0].mxu0
    %2378 = vmatprep.mubr.bf16.mxu0 0
    %2379 = vmatmul.mubr.bf16.gmra.mrb[0].mxu0 %v1599
    %v2380 = vpop.f32.mrb[0].mxu0
    %v2381 = vadd.f32 %v2300, %v2380
    %v2382 = vpop.f32.mrb[0].mxu0
    %v2383 = vpop.f32.mrb[0].mxu0
    %v2384 = vadd.f32 %v2303, %v2383
    %v2385 = vpop.f32.mrb[0].mxu0
    %2386 = vmatprep.mubr.bf16.mxu0 0
    %2387 = vmatmul.mubr.bf16.gmra.mrb[0].mxu0 %v1598
    %v2388 = vpop.f32.mrb[0].mxu0
    %v2389 = vadd.f32 %v2308, %v2388
    %v2390 = vpop.f32.mrb[0].mxu0
    %v2391 = vpop.f32.mrb[0].mxu0
    %v2392 = vadd.f32 %v2311, %v2391
    %v2393 = vpop.f32.mrb[0].mxu0
    %2394 = vdwg.mxu0
    %v2396 = vlaneseq
    %v2397 = vshrl.u32 %v2396, 7
    %v2398 = vsub.s32 0, %v2397
    %v2399 = vrot.slane %v309, %v2398
    %v2401 = vadd.f32 %v2349, %v2399
    %v2402 = vadd.f32 %v2352, %v2399
    %v2403 = vadd.f32 %v2357, %v2399
    %v2404 = vadd.f32 %v2360, %v2399
    %v2405 = vadd.f32 %v2365, %v2399
    %v2406 = vadd.f32 %v2368, %v2399
    %v2407 = vadd.f32 %v2373, %v2399
    %v2408 = vadd.f32 %v2376, %v2399
    %v2409 = vadd.f32 %v2381, %v2399
    %v2410 = vadd.f32 %v2384, %v2399
    %v2411 = vadd.f32 %v2389, %v2399
    %v2412 = vadd.f32 %v2392, %v2399
    %vm2413 = vcmp.ge.f32.partialorder %v2401, 0.0
    %vm2414 = vcmp.ge.f32.partialorder %v2402, 0.0
    %vm2415 = vcmp.ge.f32.partialorder %v2403, 0.0
    %vm2416 = vcmp.ge.f32.partialorder %v2404, 0.0
    %vm2417 = vcmp.ge.f32.partialorder %v2405, 0.0
    %vm2418 = vcmp.ge.f32.partialorder %v2406, 0.0
    %vm2419 = vcmp.ge.f32.partialorder %v2407, 0.0
    %vm2420 = vcmp.ge.f32.partialorder %v2408, 0.0
    %vm2421 = vcmp.ge.f32.partialorder %v2409, 0.0
    %vm2422 = vcmp.ge.f32.partialorder %v2410, 0.0
    %vm2423 = vcmp.ge.f32.partialorder %v2411, 0.0
    %vm2424 = vcmp.ge.f32.partialorder %v2412, 0.0
    %v2426 = vlaneseq
    %v2427 = vshrl.u32 %v2426, 7
    %v2428 = vsub.s32 0, %v2427
    %v2429 = vrot.slane %v310, %v2428
    %2430 = vset.pattern.permute.xlu0 0
    %2431 = vperm.xlu0 %2430, %v2429
    %v2432 = vpop.permute.xlu0 %2431
    %v2434 = vmul.f32 %v2432, %v2401
    %v2435 = vmul.f32 %v2432, %v2402
    %v2436 = vmul.f32 %v2432, %v2403
    %v2437 = vmul.f32 %v2432, %v2404
    %v2438 = vmul.f32 %v2432, %v2405
    %v2439 = vmul.f32 %v2432, %v2406
    %v2440 = vmul.f32 %v2432, %v2407
    %v2441 = vmul.f32 %v2432, %v2408
    %v2442 = vmul.f32 %v2432, %v2409
    %v2443 = vmul.f32 %v2432, %v2410
    %v2444 = vmul.f32 %v2432, %v2411
    %v2445 = vmul.f32 %v2432, %v2412
    %v2446 = vsel %vm2413, %v2401, %v2434
    %v2447 = vsel %vm2414, %v2402, %v2435
    %v2448 = vsel %vm2415, %v2403, %v2436
    %v2449 = vsel %vm2416, %v2404, %v2437
    %v2450 = vsel %vm2417, %v2405, %v2438
    %v2451 = vsel %vm2418, %v2406, %v2439
    %v2452 = vsel %vm2419, %v2407, %v2440
    %v2453 = vsel %vm2420, %v2408, %v2441
    %v2454 = vsel %vm2421, %v2409, %v2442
    %v2455 = vsel %vm2422, %v2410, %v2443
    %v2456 = vsel %vm2423, %v2411, %v2444
    %v2457 = vsel %vm2424, %v2412, %v2445
    %v2458 = vpack.c.bf16 %v2447, %v2446
    %v2459 = vpack.c.bf16 %v2449, %v2448
    %v2460 = vpack.c.bf16 %v2451, %v2450
    %v2461 = vpack.c.bf16 %v2453, %v2452
    %v2462 = vpack.c.bf16 %v2455, %v2454
    %v2463 = vpack.c.bf16 %v2457, %v2456
    %v2465 = vshrl.u32 %v2458, 16
    %v2467 = vrot.slane %v2465, 6
    %v2468 = vshll.u32 %v2458, 16
    %v2470 = vrot.slane %v2468, 7
    %v2471 = vor.u32 %v2467, %v2470
    %v2473 = vshrl.u32 %v2459, 16
    %v2475 = vrot.slane %v2473, 6
    %v2476 = vshll.u32 %v2459, 16
    %v2478 = vrot.slane %v2476, 7
    %v2479 = vor.u32 %v2475, %v2478
    %v2480 = vsel %vm1377, %v2471, %v2479
    %v2482 = vshrl.u32 %v2460, 16
    %v2484 = vrot.slane %v2482, 6
    %v2485 = vshll.u32 %v2460, 16
    %v2487 = vrot.slane %v2485, 7
    %v2488 = vor.u32 %v2484, %v2487
    %v2489 = vsel %vm1377, %v2479, %v2488
    %v2491 = vshrl.u32 %v2461, 16
    %v2493 = vrot.slane %v2491, 6
    %v2494 = vshll.u32 %v2461, 16
    %v2496 = vrot.slane %v2494, 7
    %v2497 = vor.u32 %v2493, %v2496
    %v2498 = vsel %vm1377, %v2488, %v2497
    %v2500 = vshrl.u32 %v2462, 16
    %v2502 = vrot.slane %v2500, 6
    %v2503 = vshll.u32 %v2462, 16
    %v2505 = vrot.slane %v2503, 7
    %v2506 = vor.u32 %v2502, %v2505
    %v2507 = vsel %vm1377, %v2497, %v2506
    %v2509 = vshrl.u32 %v2463, 16
    %v2511 = vrot.slane %v2509, 6
    %v2512 = vshll.u32 %v2463, 16
    %v2514 = vrot.slane %v2512, 7
    %v2515 = vor.u32 %v2511, %v2514
    %v2516 = vsel %vm1377, %v2506, %v2515
    %v2523 = vsel %vm1438, 0, %v2471
    %v2524 = vsel %vm1440, %v2516, 0
    %v2529 = vunpack.c.l.b16 %v51
    %v2530 = vunpack.c.l.b16 %v52
    %v2531 = vunpack.c.l.b16 %v53
    %v2532 = vunpack.c.l.b16 %v54
    %v2533 = vpack.c.b16 %v2530, %v2529
    %v2534 = vpack.c.b16 %v2532, %v2531
    %vm2535 = vcmask 392192
    %v2537 = vsel %vm2535, %v2533, 0
    %v2540 = vsel %vm2535, %v2534, 0
    %2542 = vmatprep.subr.bf16.mxu0 0
    %2543 = vmatpush1.bf16.msra.mxu0 %v2523
    %2544 = vmatprep.subr.bf16.mxu0 0
    %2545 = vmatpush1.bf16.msra.mxu0 %v2480
    %2546 = vmatprep.subr.bf16.mxu0 0
    %2547 = vmatpush1.bf16.msra.mxu0 %v2489
    %2548 = vmatprep.subr.bf16.mxu0 0
    %2549 = vmatpush1.bf16.msra.mxu0 0
    %2550 = vmatprep.subr.bf16.mxu0 0
    %2551 = vmatpush1.bf16.msra.mxu0 0
    %2552 = vmatprep.subr.bf16.mxu0 0
    %2553 = vmatpush1.bf16.msra.mxu0 0
    %2554 = vmatprep.subr.bf16.mxu0 0
    %2555 = vmatpush1.bf16.msra.mxu0 0
    %2556 = vmatprep.subr.bf16.mxu0 0
    %2557 = vmatpush1.bf16.msra.mxu0 0
    %2558 = vmatprep.subr.bf16.mxu0 0
    %2559 = vmatpush1.bf16.msra.mxu0 0
    %2560 = vmatprep.subr.bf16.mxu0 0
    %2561 = vmatpush1.bf16.msra.mxu0 0
    %2562 = vmatprep.subr.bf16.mxu0 0
    %2563 = vmatpush1.bf16.msra.mxu0 0
    %2564 = vmatprep.subr.bf16.mxu0 0
    %2565 = vmatpush1.bf16.msra.mxu0 0
    %2566 = vmatprep.subr.bf16.mxu0 0
    %2567 = vmatpush1.bf16.msra.mxu0 0
    %2568 = vmatprep.subr.bf16.mxu0 0
    %2569 = vmatpush1.bf16.msra.mxu0 0
    %2570 = vmatprep.subr.bf16.mxu0 0
    %2571 = vmatpush1.bf16.msra.mxu0 0
    %2572 = vmatprep.subr.bf16.mxu0 0
    %2573 = vmatpush1.bf16.msra.mxu0 0
    %2574 = vmatprep.mubr.bf16.mxu0 0
    %2575 = vmatmul.mubr.bf16.gmra.mrb[0].mxu0 %v2537
    %v2576 = vpop.f32.mrb[0].mxu0
    %v2577 = vadd.f32 0.0, %v2576
    %v2578 = vpop.f32.mrb[0].mxu0
    %v2579 = vpop.f32.mrb[0].mxu0
    %v2580 = vadd.f32 0.0, %v2579
    %v2581 = vpop.f32.mrb[0].mxu0
    %2582 = vmatprep.mubr.bf16.mxu0 0
    %2583 = vmatmul.mubr.bf16.gmra.mrb[0].mxu0 %v2540
    %v2584 = vpop.f32.mrb[0].mxu0
    %v2585 = vadd.f32 0.0, %v2584
    %v2586 = vpop.f32.mrb[0].mxu0
    %v2587 = vpop.f32.mrb[0].mxu0
    %v2588 = vadd.f32 0.0, %v2587
    %v2589 = vpop.f32.mrb[0].mxu0
    %2590 = vdwg.mxu0
    %2591 = vmatprep.subr.bf16.mxu0 0
    %2592 = vmatpush1.bf16.msra.mxu0 %v2498
    %2593 = vmatprep.subr.bf16.mxu0 0
    %2594 = vmatpush1.bf16.msra.mxu0 %v2507
    %2595 = vmatprep.subr.bf16.mxu0 0
    %2596 = vmatpush1.bf16.msra.mxu0 %v2524
    %2597 = vmatprep.subr.bf16.mxu0 0
    %2598 = vmatpush1.bf16.msra.mxu0 0
    %2599 = vmatprep.subr.bf16.mxu0 0
    %2600 = vmatpush1.bf16.msra.mxu0 0
    %2601 = vmatprep.subr.bf16.mxu0 0
    %2602 = vmatpush1.bf16.msra.mxu0 0
    %2603 = vmatprep.subr.bf16.mxu0 0
    %2604 = vmatpush1.bf16.msra.mxu0 0
    %2605 = vmatprep.subr.bf16.mxu0 0
    %2606 = vmatpush1.bf16.msra.mxu0 0
    %2607 = vmatprep.subr.bf16.mxu0 0
    %2608 = vmatpush1.bf16.msra.mxu0 0
    %2609 = vmatprep.subr.bf16.mxu0 0
    %2610 = vmatpush1.bf16.msra.mxu0 0
    %2611 = vmatprep.subr.bf16.mxu0 0
    %2612 = vmatpush1.bf16.msra.mxu0 0
    %2613 = vmatprep.subr.bf16.mxu0 0
    %2614 = vmatpush1.bf16.msra.mxu0 0
    %2615 = vmatprep.subr.bf16.mxu0 0
    %2616 = vmatpush1.bf16.msra.mxu0 0
    %2617 = vmatprep.subr.bf16.mxu0 0
    %2618 = vmatpush1.bf16.msra.mxu0 0
    %2619 = vmatprep.subr.bf16.mxu0 0
    %2620 = vmatpush1.bf16.msra.mxu0 0
    %2621 = vmatprep.subr.bf16.mxu0 0
    %2622 = vmatpush1.bf16.msra.mxu0 0
    %2623 = vmatprep.mubr.bf16.mxu0 0
    %2624 = vmatmul.mubr.bf16.gmra.mrb[0].mxu0 %v2537
    %v2625 = vpop.f32.mrb[0].mxu0
    %v2626 = vadd.f32 0.0, %v2625
    %v2627 = vpop.f32.mrb[0].mxu0
    %v2628 = vpop.f32.mrb[0].mxu0
    %v2629 = vadd.f32 0.0, %v2628
    %v2630 = vpop.f32.mrb[0].mxu0
    %2631 = vmatprep.mubr.bf16.mxu0 0
    %2632 = vmatmul.mubr.bf16.gmra.mrb[0].mxu0 %v2540
    %v2633 = vpop.f32.mrb[0].mxu0
    %v2634 = vadd.f32 0.0, %v2633
    %v2635 = vpop.f32.mrb[0].mxu0
    %v2636 = vpop.f32.mrb[0].mxu0
    %v2637 = vadd.f32 0.0, %v2636
    %v2638 = vpop.f32.mrb[0].mxu0
    %2639 = vdwg.mxu0
    %v2640 = vpack.c.bf16 %v2580, %v2577
    %v2641 = vpack.c.bf16 %v2588, %v2585
    %v2642 = vpack.c.bf16 %v2629, %v2626
    %v2643 = vpack.c.bf16 %v2637, %v2634
    %v2648 = vunpack.c.l.b16 %v2640
    %v2649 = vunpack.c.h.b16 %v2640
    %v2650 = vunpack.c.l.b16 %v2641
    %v2651 = vunpack.c.h.b16 %v2641
    %v2652 = vunpack.c.l.b16 %v2642
    %v2653 = vunpack.c.h.b16 %v2642
    %v2654 = vunpack.c.l.b16 %v2643
    %v2655 = vunpack.c.h.b16 %v2643
    %v2656 = vpack.c.b16 %v2648, %v2648
    %v2657 = vpack.c.b16 %v2649, %v2649
    %v2658 = vpack.c.b16 %v2650, %v2650
    %v2659 = vpack.c.b16 %v2651, %v2651
    %v2660 = vpack.c.b16 %v2652, %v2652
    %v2661 = vpack.c.b16 %v2653, %v2653
    %v2662 = vpack.c.b16 %v2654, %v2654
    %v2663 = vpack.c.b16 %v2655, %v2655
    %2672 = vst [vmem:[%s9] sm:$0xf] %v2656
    %2673 = vst [vmem:[%s9 + $0x4] sm:$0xf] %v2657
    %2674 = vst [vmem:[%s9 + $0x8] sm:$0xf] %v2658
    %2675 = vst [vmem:[%s9 + $0xc] sm:$0xf] %v2659
    %2676 = vst [vmem:[%s9 + $0x10] sm:$0xf] %v2660
    %2677 = vst [vmem:[%s9 + $0x14] sm:$0xf] %v2661
    %2678 = vst [vmem:[%s9 + $0x18] sm:$0xf] %v2662
    %2679 = vst [vmem:[%s9 + $0x1c] sm:$0xf] %v2663
    // Predicated region
    $region42: #{_lambda_.8} parent=1 // pred_check
      _
    $region43: #{_lambda_.8} parent=1 // pred_check_branch
      %2681 = sbr.rel (0) target = $region45
    $region44: #{_lambda_.8} parent=1 // pred_region
      _
    $region45: #{_lambda_.8} parent=1 // pred_fallthru
      _
    // Predicated region
    $region46: #{_lambda_.8} parent=1 // pred_check
      _
    $region47: #{_lambda_.8} parent=1 // pred_check_branch
      %2683 = sbr.rel (0) target = $region49
    $region48: #{_lambda_.8} parent=1 // pred_region
      _
    $region49: #{_lambda_.8} parent=1 // pred_fallthru
      _
    %2684 = vsyncpa [#allocation5], 1

// kernel: _lambda_.13
$region0: #{_lambda_.13}
  #allocation0 [shape = 'u32[]', space=smem, size = 0x4, offset = 0x4, fixed_abs, tag = 'smem constant byte address 0x4 - core index']
  #allocation1 [shape = 'u32[144,128]{1,0:T(1,128)}', space=vmem, size = 0x12000, scoped, tag = 'internal scratch']
  #allocation2 [shape = 'f32[1,1]{1,0:T(1,128)S(1)}', space=vmem, size = 0x200, scoped, tag = 'scoped memory for _lambda_.13']
  %s0 = inlined_call_operand.vmem [shape: bf16[32,128], index: 0, kind: input, shape index: {}]
  %s1 = inlined_call_operand.vmem [shape: f32[128,128], index: 1, kind: input, shape index: {}]
  %s2 = inlined_call_operand.vmem [shape: f32[1,128], index: 2, kind: input, shape index: {}]
  %s3 = inlined_call_operand.<no memory space> [shape: f32[1,1], index: 3, kind: input, shape index: {}]
  %s4 = inlined_call_operand.vmem [shape: f32[128,7], index: 4, kind: input, shape index: {}]
  %s5 = inlined_call_operand.vmem [shape: f32[1,7], index: 5, kind: input, shape index: {}]
  %s6 = inlined_call_operand.hbm [shape: f32[2,7], index: 6, kind: output, shape index: {}]
  %s7 = sld [smem:[#allocation0]]
  $region34: #{_lambda_.13} parent=0
    _
  %s9 = ssub.s32 1, %s7
  %s10 = scalar_select 0, %s9, %s7
  %v11 = vstv %s3
  %12 = vst [vmem:[#allocation2] sm:$0x1] %v11
  $region1: #{_lambda_.13} parent=0
    #allocation3 [shape = 'u8[1024]{0}', space=vmem, size = 0x400, scoped, tag = 'output window, operand 0, single buffered']
    #allocation4 [shape = 's32[1]{0}', space=sflag, size = 0x4, scoped, tag = 'scoped memory for _lambda_.13']
    %13 = vsyncpa [#allocation4], 0
    // Predicated region
    $region2: #{_lambda_.13} parent=1 // pred_check
      _
    $region3: #{_lambda_.13} parent=1 // pred_check_branch
      %15 = sbr.rel (0) target = $region5
    $region4: #{_lambda_.13} parent=1 // pred_region
      _
    $region5: #{_lambda_.13} parent=1 // pred_fallthru
      _
    // Predicated region
    $region6: #{_lambda_.13} parent=1 // pred_check
      _
    $region7: #{_lambda_.13} parent=1 // pred_check_branch
      %17 = sbr.rel (0) target = $region9
    $region8: #{_lambda_.13} parent=1 // pred_region
      _
    $region9: #{_lambda_.13} parent=1 // pred_fallthru
      _
    // Predicated region
    $region10: #{_lambda_.13} parent=1 // pred_check
      _
    $region11: #{_lambda_.13} parent=1 // pred_check_branch
      %19 = sbr.rel (0) target = $region13
    $region12: #{_lambda_.13} parent=1 // pred_region
      _
    $region13: #{_lambda_.13} parent=1 // pred_fallthru
      _
    // Predicated region
    $region14: #{_lambda_.13} parent=1 // pred_check
      _
    $region15: #{_lambda_.13} parent=1 // pred_check_branch
      %21 = sbr.rel (0) target = $region17
    $region16: #{_lambda_.13} parent=1 // pred_region
      _
    $region17: #{_lambda_.13} parent=1 // pred_fallthru
      _
    // Predicated region
    $region18: #{_lambda_.13} parent=1 // pred_check
      _
    $region19: #{_lambda_.13} parent=1 // pred_check_branch
      %23 = sbr.rel (0) target = $region21
    $region20: #{_lambda_.13} parent=1 // pred_region
      _
    $region21: #{_lambda_.13} parent=1 // pred_fallthru
      _
    // Predicated region
    $region22: #{_lambda_.13} parent=1 // pred_check
      _
    $region23: #{_lambda_.13} parent=1 // pred_check_branch
      %25 = sbr.rel (0) target = $region25
    $region24: #{_lambda_.13} parent=1 // pred_region
      _
    $region25: #{_lambda_.13} parent=1 // pred_fallthru
      _
    %v26 = vld [vmem:[%s0] sm:$0xf]
    %v27 = vld [vmem:[%s0 + $0x4] sm:$0xf]
    %v28 = vld [vmem:[%s0 + $0x8] sm:$0xf]
    %v29 = vld [vmem:[%s0 + $0xc] sm:$0xf]
    %v30 = vld [vmem:[%s1] sm:$0xff]
    %v31 = vld [vmem:[%s1 + $0x8] sm:$0xff]
    %v32 = vld [vmem:[%s1 + $0x10] sm:$0xff]
    %v33 = vld [vmem:[%s1 + $0x18] sm:$0xff]
    %v34 = vld [vmem:[%s1 + $0x20] sm:$0xff]
    %v35 = vld [vmem:[%s1 + $0x28] sm:$0xff]
    %v36 = vld [vmem:[%s1 + $0x30] sm:$0xff]
    %v37 = vld [vmem:[%s1 + $0x38] sm:$0xff]
    %v38 = vld [vmem:[%s1 + $0x40] sm:$0xff]
    %v39 = vld [vmem:[%s1 + $0x48] sm:$0xff]
    %v40 = vld [vmem:[%s1 + $0x50] sm:$0xff]
    %v41 = vld [vmem:[%s1 + $0x58] sm:$0xff]
    %v42 = vld [vmem:[%s1 + $0x60] sm:$0xff]
    %v43 = vld [vmem:[%s1 + $0x68] sm:$0xff]
    %v44 = vld [vmem:[%s1 + $0x70] sm:$0xff]
    %v45 = vld [vmem:[%s1 + $0x78] sm:$0xff]
    %v46 = vld [vmem:[%s2] sm:$0x1]
    %v47 = vld [vmem:[#allocation2] sm:$0x1]
    %v48 = vld [vmem:[%s4] sm:$0xff]
    %v49 = vld [vmem:[%s4 + $0x8] sm:$0xff]
    %v50 = vld [vmem:[%s4 + $0x10] sm:$0xff]
    %v51 = vld [vmem:[%s4 + $0x18] sm:$0xff]
    %v52 = vld [vmem:[%s4 + $0x20] sm:$0xff]
    %v53 = vld [vmem:[%s4 + $0x28] sm:$0xff]
    %v54 = vld [vmem:[%s4 + $0x30] sm:$0xff]
    %v55 = vld [vmem:[%s4 + $0x38] sm:$0xff]
    %v56 = vld [vmem:[%s4 + $0x40] sm:$0xff]
    %v57 = vld [vmem:[%s4 + $0x48] sm:$0xff]
    %v58 = vld [vmem:[%s4 + $0x50] sm:$0xff]
    %v59 = vld [vmem:[%s4 + $0x58] sm:$0xff]
    %v60 = vld [vmem:[%s4 + $0x60] sm:$0xff]
    %v61 = vld [vmem:[%s4 + $0x68] sm:$0xff]
    %v62 = vld [vmem:[%s4 + $0x70] sm:$0xff]
    %v63 = vld [vmem:[%s4 + $0x78] sm:$0xff]
    %v64 = vld [vmem:[%s5] sm:$0x1]
    %v65 = vunpack.c.l.bf16 %v26
    %v66 = vunpack.c.l.bf16 %v27
    %v67 = vunpack.c.l.bf16 %v28
    %v68 = vunpack.c.l.bf16 %v29
    %v69 = vadd.f32 %v65, %v66
    %v70 = vrot.slane %v69, 4
    %v71 = vadd.f32 %v69, %v70
    %v72 = vrot.slane %v71, 2
    %v73 = vadd.f32 %v71, %v72
    %v74 = vrot.slane %v73, 1
    %v75 = vadd.f32 %v73, %v74
    %v76 = vadd.f32 %v67, %v68
    %v77 = vrot.slane %v76, 4
    %v78 = vadd.f32 %v76, %v77
    %v79 = vrot.slane %v78, 2
    %v80 = vadd.f32 %v78, %v79
    %v81 = vrot.slane %v80, 1
    %v82 = vadd.f32 %v80, %v81
    %vm83 = vcmask 1040384
    %v84 = vsel %vm83, %v75, %v82
    %v86 = vlaneseq
    %v87 = vshrl.u32 %v86, 7
    %v88 = vsub.s32 0, %v87
    %v89 = vrot.slane %v46, %v88
    %91 = vmatprep.subr.mxu0 0.0
    %92 = vmatpush1.msra.mxu0 %v30
    %93 = vmatprep.subr.mxu0 0.0
    %94 = vmatpush1.msra.mxu0 %v31
    %95 = vmatprep.subr.mxu0 0.0
    %96 = vmatpush1.msra.mxu0 %v32
    %97 = vmatprep.subr.mxu0 0.0
    %98 = vmatpush1.msra.mxu0 %v33
    %99 = vmatprep.subr.mxu0 0.0
    %100 = vmatpush1.msra.mxu0 %v34
    %101 = vmatprep.subr.mxu0 0.0
    %102 = vmatpush1.msra.mxu0 %v35
    %103 = vmatprep.subr.mxu0 0.0
    %104 = vmatpush1.msra.mxu0 %v36
    %105 = vmatprep.subr.mxu0 0.0
    %106 = vmatpush1.msra.mxu0 %v37
    %107 = vmatprep.subr.mxu0 0.0
    %108 = vmatpush1.msra.mxu0 %v38
    %109 = vmatprep.subr.mxu0 0.0
    %110 = vmatpush1.msra.mxu0 %v39
    %111 = vmatprep.subr.mxu0 0.0
    %112 = vmatpush1.msra.mxu0 %v40
    %113 = vmatprep.subr.mxu0 0.0
    %114 = vmatpush1.msra.mxu0 %v41
    %115 = vmatprep.subr.mxu0 0.0
    %116 = vmatpush1.msra.mxu0 %v42
    %117 = vmatprep.subr.mxu0 0.0
    %118 = vmatpush1.msra.mxu0 %v43
    %119 = vmatprep.subr.mxu0 0.0
    %120 = vmatpush1.msra.mxu0 %v44
    %121 = vmatprep.subr.mxu0 0.0
    %122 = vmatpush1.msra.mxu0 %v45
    %123 = vmatprep.subr.mxu0 0.0
    %124 = vmatpush1.msra.mxu0 0.0
    %125 = vmatprep.subr.mxu0 0.0
    %126 = vmatpush1.msra.mxu0 0.0
    %127 = vmatprep.subr.mxu0 0.0
    %128 = vmatpush1.msra.mxu0 0.0
    %129 = vmatprep.subr.mxu0 0.0
    %130 = vmatpush1.msra.mxu0 0.0
    %131 = vmatprep.subr.mxu0 0.0
    %132 = vmatpush1.msra.mxu0 0.0
    %133 = vmatprep.subr.mxu0 0.0
    %134 = vmatpush1.msra.mxu0 0.0
    %135 = vmatprep.subr.mxu0 0.0
    %136 = vmatpush1.msra.mxu0 0.0
    %137 = vmatprep.subr.mxu0 0.0
    %138 = vmatpush1.msra.mxu0 0.0
    %139 = vmatprep.subr.mxu0 0.0
    %140 = vmatpush1.msra.mxu0 0.0
    %141 = vmatprep.subr.mxu0 0.0
    %142 = vmatpush1.msra.mxu0 0.0
    %143 = vmatprep.subr.mxu0 0.0
    %144 = vmatpush1.msra.mxu0 0.0
    %145 = vmatprep.subr.mxu0 0.0
    %146 = vmatpush1.msra.mxu0 0.0
    %147 = vmatprep.subr.mxu0 0.0
    %148 = vmatpush1.msra.mxu0 0.0
    %149 = vmatprep.subr.mxu0 0.0
    %150 = vmatpush1.msra.mxu0 0.0
    %151 = vmatprep.subr.mxu0 0.0
    %152 = vmatpush1.msra.mxu0 0.0
    %153 = vmatprep.subr.mxu0 0.0
    %154 = vmatpush1.msra.mxu0 0.0
    %155 = vmatprep.mubr.f32.mxu0 0.0
    %156 = vmatmul.mubr.f32.gmra.mrb[0].mxu0 %v84
    %v157 = vpop.f32.mrb[0].mxu0
    %v158 = vadd.f32 %v89, %v157
    %v159 = vpop.f32.mrb[0].mxu0
    %160 = vdwg.mxu0
    %vm161 = vcmp.ge.f32.partialorder %v158, 0.0
    %v163 = vlaneseq
    %v164 = vshrl.u32 %v163, 7
    %v165 = vsub.s32 0, %v164
    %v166 = vrot.slane %v47, %v165
    %167 = vset.pattern.permute.xlu0 0
    %168 = vperm.xlu0 %167, %v166
    %v169 = vpop.permute.xlu0 %168
    %v171 = vmul.f32 %v169, %v158
    %v172 = vsel %vm161, %v158, %v171
    %v174 = vlaneseq
    %v175 = vshrl.u32 %v174, 7
    %v176 = vsub.s32 0, %v175
    %v177 = vrot.slane %v64, %v176
    %179 = vmatprep.subr.mxu0 0.0
    %180 = vmatpush1.msra.mxu0 %v48
    %181 = vmatprep.subr.mxu0 0.0
    %182 = vmatpush1.msra.mxu0 %v49
    %183 = vmatprep.subr.mxu0 0.0
    %184 = vmatpush1.msra.mxu0 %v50
    %185 = vmatprep.subr.mxu0 0.0
    %186 = vmatpush1.msra.mxu0 %v51
    %187 = vmatprep.subr.mxu0 0.0
    %188 = vmatpush1.msra.mxu0 %v52
    %189 = vmatprep.subr.mxu0 0.0
    %190 = vmatpush1.msra.mxu0 %v53
    %191 = vmatprep.subr.mxu0 0.0
    %192 = vmatpush1.msra.mxu0 %v54
    %193 = vmatprep.subr.mxu0 0.0
    %194 = vmatpush1.msra.mxu0 %v55
    %195 = vmatprep.subr.mxu0 0.0
    %196 = vmatpush1.msra.mxu0 %v56
    %197 = vmatprep.subr.mxu0 0.0
    %198 = vmatpush1.msra.mxu0 %v57
    %199 = vmatprep.subr.mxu0 0.0
    %200 = vmatpush1.msra.mxu0 %v58
    %201 = vmatprep.subr.mxu0 0.0
    %202 = vmatpush1.msra.mxu0 %v59
    %203 = vmatprep.subr.mxu0 0.0
    %204 = vmatpush1.msra.mxu0 %v60
    %205 = vmatprep.subr.mxu0 0.0
    %206 = vmatpush1.msra.mxu0 %v61
    %207 = vmatprep.subr.mxu0 0.0
    %208 = vmatpush1.msra.mxu0 %v62
    %209 = vmatprep.subr.mxu0 0.0
    %210 = vmatpush1.msra.mxu0 %v63
    %211 = vmatprep.subr.mxu0 0.0
    %212 = vmatpush1.msra.mxu0 0.0
    %213 = vmatprep.subr.mxu0 0.0
    %214 = vmatpush1.msra.mxu0 0.0
    %215 = vmatprep.subr.mxu0 0.0
    %216 = vmatpush1.msra.mxu0 0.0
    %217 = vmatprep.subr.mxu0 0.0
    %218 = vmatpush1.msra.mxu0 0.0
    %219 = vmatprep.subr.mxu0 0.0
    %220 = vmatpush1.msra.mxu0 0.0
    %221 = vmatprep.subr.mxu0 0.0
    %222 = vmatpush1.msra.mxu0 0.0
    %223 = vmatprep.subr.mxu0 0.0
    %224 = vmatpush1.msra.mxu0 0.0
    %225 = vmatprep.subr.mxu0 0.0
    %226 = vmatpush1.msra.mxu0 0.0
    %227 = vmatprep.subr.mxu0 0.0
    %228 = vmatpush1.msra.mxu0 0.0
    %229 = vmatprep.subr.mxu0 0.0
    %230 = vmatpush1.msra.mxu0 0.0
    %231 = vmatprep.subr.mxu0 0.0
    %232 = vmatpush1.msra.mxu0 0.0
    %233 = vmatprep.subr.mxu0 0.0
    %234 = vmatpush1.msra.mxu0 0.0
    %235 = vmatprep.subr.mxu0 0.0
    %236 = vmatpush1.msra.mxu0 0.0
    %237 = vmatprep.subr.mxu0 0.0
    %238 = vmatpush1.msra.mxu0 0.0
    %239 = vmatprep.subr.mxu0 0.0
    %240 = vmatpush1.msra.mxu0 0.0
    %241 = vmatprep.subr.mxu0 0.0
    %242 = vmatpush1.msra.mxu0 0.0
    %243 = vmatprep.mubr.f32.mxu0 0.0
    %244 = vmatmul.mubr.f32.gmra.mrb[0].mxu0 %v172
    %v245 = vpop.f32.mrb[0].mxu0
    %v246 = vadd.f32 %v177, %v245
    %v247 = vpop.f32.mrb[0].mxu0
    %248 = vdwg.mxu0
    %v249 = vmul.f32 %v246, %v246
    %251 = vrot.lane.b32.xlu0 %v249, 125
    %v252 = vpop.permute.xlu0 %251
    %vm254 = vcmask 25600
    %v255 = vsel %vm254, %v252, 0.0
    %256 = vadd.xlane.f32.xlu0 %v255
    %v257 = vpop.xlane.xlu0 %256
    %v258 = vrsqrt.pop %v257
    %v259 = vmul.f32 %v257, %v258
    %vm260 = vcmp.eq.f32.partialorder %v257, inf
    %v261 = vsel %vm260, %v257, %v259
    %vm262 = vcmp.eq.f32.partialorder %v257, 0.0
    %v263 = vand.u32 %v257, 2147483648
    %v264 = vsel %vm262, %v263, %v261
    %v265 = vmax.f32 %v264, 1e-12
    %v266 = vrcp.pop %v265
    %v267 = vmul.f32 1.0, %v266
    %v268 = vlaneseq
    %v269 = vand.u32 %v268, 127
    %vm270 = vcmp.ge.s32.totalorder %v269, 3
    %v271 = vmul.f32 %v246, %v267
    %v272 = vsel %vm270, %v271, %v246
    %vm273 = vcmask 50176
    %274 = vst.msk [vmem:[#allocation3] sm:$0x3] %vm273, %v272
    // Predicated region
    $region26: #{_lambda_.13} parent=1 // pred_check
      _
    $region27: #{_lambda_.13} parent=1 // pred_check_branch
      %276 = sbr.rel (0) target = $region29
    $region28: #{_lambda_.13} parent=1 // pred_region
      %s278 = ssub.s32 32, 32
      %279 = vsyncadd [#allocation4], %s278
      %s281 = sshll.u32 [#allocation3], 4
      %s282 = int_to_ptr.vmem [resolvable:$true] %s281
      %284 = dma.vmem_to_hbm [thread:$0]  %s282, 32, %s6, [#allocation4]
    $region29: #{_lambda_.13} parent=1 // pred_fallthru
      _
    // Predicated region
    $region30: #{_lambda_.13} parent=1 // pred_check
      _
    $region31: #{_lambda_.13} parent=1 // pred_check_branch
      %286 = sbr.rel (0) target = $region33
    $region32: #{_lambda_.13} parent=1 // pred_region
      %287 = dma.done [#allocation4], 32
    $region33: #{_lambda_.13} parent=1 // pred_fallthru
      _
    %288 = vsyncpa [#allocation4], 1

// kernel: _lambda_.12
$region0: #{_lambda_.12}
  #allocation0 [shape = 'u32[]', space=smem, size = 0x4, offset = 0x4, fixed_abs, tag = 'smem constant byte address 0x4 - core index']
  #allocation1 [shape = 'u32[144,128]{1,0:T(1,128)}', space=vmem, size = 0x12000, scoped, tag = 'internal scratch']
  #allocation2 [shape = 'f32[1,1]{1,0:T(1,128)S(1)}', space=vmem, size = 0x200, scoped, tag = 'scoped memory for _lambda_.12']
  #allocation3 [shape = 'f32[1,1]{1,0:T(1,128)S(1)}', space=vmem, size = 0x200, scoped, tag = 'scoped memory for _lambda_.12']
  %s0 = inlined_call_operand.vmem [shape: bf16[32,128], index: 0, kind: input, shape index: {}]
  %s1 = inlined_call_operand.vmem [shape: bf16[896,128], index: 1, kind: input, shape index: {}]
  %s2 = inlined_call_operand.vmem [shape: f32[1,128], index: 2, kind: input, shape index: {}]
  %s3 = inlined_call_operand.<no memory space> [shape: f32[1,1], index: 3, kind: input, shape index: {}]
  %s4 = inlined_call_operand.vmem [shape: bf16[896,128], index: 4, kind: input, shape index: {}]
  %s5 = inlined_call_operand.vmem [shape: bf16[128,128], index: 5, kind: input, shape index: {}]
  %s6 = inlined_call_operand.vmem [shape: f32[1,128], index: 6, kind: input, shape index: {}]
  %s7 = inlined_call_operand.<no memory space> [shape: f32[1,1], index: 7, kind: input, shape index: {}]
  %s8 = inlined_call_operand.vmem [shape: bf16[32,128], index: 8, kind: output, shape index: {}]
  %s9 = sld [smem:[#allocation0]]
  $region42: #{_lambda_.12} parent=0
    _
  %s11 = ssub.s32 1, %s9
  %s12 = scalar_select 0, %s11, %s9
  %v13 = vstv %s3
  %14 = vst [vmem:[#allocation2] sm:$0x1] %v13
  %v15 = vstv %s7
  %16 = vst [vmem:[#allocation3] sm:$0x1] %v15
  // Predicated region
  $region2: #{_lambda_.12} parent=0 // pred_check
    _
  $region3: #{_lambda_.12} parent=0 // pred_check_branch
    %18 = sbr.rel (0) target = $region5
  $region4: #{_lambda_.12} parent=0 // pred_region
    _
  $region5: #{_lambda_.12} parent=0 // pred_fallthru
    _
  // Predicated region
  $region6: #{_lambda_.12} parent=0 // pred_check
    _
  $region7: #{_lambda_.12} parent=0 // pred_check_branch
    %20 = sbr.rel (0) target = $region9
  $region8: #{_lambda_.12} parent=0 // pred_region
    _
  $region9: #{_lambda_.12} parent=0 // pred_fallthru
    _
  // Predicated region
  $region10: #{_lambda_.12} parent=0 // pred_check
    _
  $region11: #{_lambda_.12} parent=0 // pred_check_branch
    %22 = sbr.rel (0) target = $region13
  $region12: #{_lambda_.12} parent=0 // pred_region
    _
  $region13: #{_lambda_.12} parent=0 // pred_fallthru
    _
  // Predicated region
  $region14: #{_lambda_.12} parent=0 // pred_check
    _
  $region15: #{_lambda_.12} parent=0 // pred_check_branch
    %24 = sbr.rel (0) target = $region17
  $region16: #{_lambda_.12} parent=0 // pred_region
    _
  $region17: #{_lambda_.12} parent=0 // pred_fallthru
    _
  // Predicated region
  $region18: #{_lambda_.12} parent=0 // pred_check
    _
  $region19: #{_lambda_.12} parent=0 // pred_check_branch
    %26 = sbr.rel (0) target = $region21
  $region20: #{_lambda_.12} parent=0 // pred_region
    _
  $region21: #{_lambda_.12} parent=0 // pred_fallthru
    _
  // Predicated region
  $region22: #{_lambda_.12} parent=0 // pred_check
    _
  $region23: #{_lambda_.12} parent=0 // pred_check_branch
    %28 = sbr.rel (0) target = $region25
  $region24: #{_lambda_.12} parent=0 // pred_region
    _
  $region25: #{_lambda_.12} parent=0 // pred_fallthru
    _
  // Predicated region
  $region26: #{_lambda_.12} parent=0 // pred_check
    _
  $region27: #{_lambda_.12} parent=0 // pred_check_branch
    %30 = sbr.rel (0) target = $region29
  $region28: #{_lambda_.12} parent=0 // pred_region
    _
  $region29: #{_lambda_.12} parent=0 // pred_fallthru
    _
  // Predicated region
  $region30: #{_lambda_.12} parent=0 // pred_check
    _
  $region31: #{_lambda_.12} parent=0 // pred_check_branch
    %32 = sbr.rel (0) target = $region33
  $region32: #{_lambda_.12} parent=0 // pred_region
    _
  $region33: #{_lambda_.12} parent=0 // pred_fallthru
    _
  %v34 = vld [vmem:[%s0] sm:$0xf]
  %v35 = vld [vmem:[%s0 + $0x4] sm:$0xf]
  %v36 = vld [vmem:[%s0 + $0x8] sm:$0xf]
  %v37 = vld [vmem:[%s0 + $0xc] sm:$0xf]
  %v38 = vld [vmem:[%s1] sm:$0xf]
  %v39 = vld [vmem:[%s1 + $0x4] sm:$0xf]
  %v40 = vld [vmem:[%s1 + $0x8] sm:$0xf]
  %v41 = vld [vmem:[%s1 + $0xc] sm:$0xf]
  %v42 = vld [vmem:[%s1 + $0x10] sm:$0xf]
  %v43 = vld [vmem:[%s1 + $0x14] sm:$0xf]
  %v44 = vld [vmem:[%s1 + $0x18] sm:$0xf]
  %v45 = vld [vmem:[%s1 + $0x1c] sm:$0xf]
  %v46 = vld [vmem:[%s1 + $0x20] sm:$0xf]
  %v47 = vld [vmem:[%s1 + $0x24] sm:$0xf]
  %v48 = vld [vmem:[%s1 + $0x28] sm:$0xf]
  %v49 = vld [vmem:[%s1 + $0x2c] sm:$0xf]
  %v50 = vld [vmem:[%s1 + $0x30] sm:$0xf]
  %v51 = vld [vmem:[%s1 + $0x34] sm:$0xf]
  %v52 = vld [vmem:[%s1 + $0x38] sm:$0xf]
  %v53 = vld [vmem:[%s1 + $0x3c] sm:$0xf]
  %v54 = vld [vmem:[%s1 + $0x40] sm:$0xf]
  %v55 = vld [vmem:[%s1 + $0x44] sm:$0xf]
  %v56 = vld [vmem:[%s1 + $0x48] sm:$0xf]
  %v57 = vld [vmem:[%s1 + $0x4c] sm:$0xf]
  %v58 = vld [vmem:[%s1 + $0x50] sm:$0xf]
  %v59 = vld [vmem:[%s1 + $0x54] sm:$0xf]
  %v60 = vld [vmem:[%s1 + $0x58] sm:$0xf]
  %v61 = vld [vmem:[%s1 + $0x5c] sm:$0xf]
  %v62 = vld [vmem:[%s1 + $0x60] sm:$0xf]
  %v63 = vld [vmem:[%s1 + $0x64] sm:$0xf]
  %v64 = vld [vmem:[%s1 + $0x68] sm:$0xf]
  %v65 = vld [vmem:[%s1 + $0x6c] sm:$0xf]
  %v66 = vld [vmem:[%s1 + $0x70] sm:$0xf]
  %v67 = vld [vmem:[%s1 + $0x74] sm:$0xf]
  %v68 = vld [vmem:[%s1 + $0x78] sm:$0xf]
  %v69 = vld [vmem:[%s1 + $0x7c] sm:$0xf]
  %v70 = vld [vmem:[%s1 + $0x80] sm:$0xf]
  %v71 = vld [vmem:[%s1 + $0x84] sm:$0xf]
  %v72 = vld [vmem:[%s1 + $0x88] sm:$0xf]
  %v73 = vld [vmem:[%s1 + $0x8c] sm:$0xf]
  %v74 = vld [vmem:[%s1 + $0x90] sm:$0xf]
  %v75 = vld [vmem:[%s1 + $0x94] sm:$0xf]
  %v76 = vld [vmem:[%s1 + $0x98] sm:$0xf]
  %v77 = vld [vmem:[%s1 + $0x9c] sm:$0xf]
  %v78 = vld [vmem:[%s1 + $0xa0] sm:$0xf]
  %v79 = vld [vmem:[%s1 + $0xa4] sm:$0xf]
  %v80 = vld [vmem:[%s1 + $0xa8] sm:$0xf]
  %v81 = vld [vmem:[%s1 + $0xac] sm:$0xf]
  %v82 = vld [vmem:[%s1 + $0xb0] sm:$0xf]
  %v83 = vld [vmem:[%s1 + $0xb4] sm:$0xf]
  %v84 = vld [vmem:[%s1 + $0xb8] sm:$0xf]
  %v85 = vld [vmem:[%s1 + $0xbc] sm:$0xf]
  %v86 = vld [vmem:[%s1 + $0xc0] sm:$0xf]
  %v87 = vld [vmem:[%s1 + $0xc4] sm:$0xf]
  %v88 = vld [vmem:[%s1 + $0xc8] sm:$0xf]
  %v89 = vld [vmem:[%s1 + $0xcc] sm:$0xf]
  %v90 = vld [vmem:[%s1 + $0xd0] sm:$0xf]
  %v91 = vld [vmem:[%s1 + $0xd4] sm:$0xf]
  %v92 = vld [vmem:[%s1 + $0xd8] sm:$0xf]
  %v93 = vld [vmem:[%s1 + $0xdc] sm:$0xf]
  %v94 = vld [vmem:[%s1 + $0xe0] sm:$0xf]
  %v95 = vld [vmem:[%s1 + $0xe4] sm:$0xf]
  %v96 = vld [vmem:[%s1 + $0xe8] sm:$0xf]
  %v97 = vld [vmem:[%s1 + $0xec] sm:$0xf]
  %v98 = vld [vmem:[%s1 + $0xf0] sm:$0xf]
  %v99 = vld [vmem:[%s1 + $0xf4] sm:$0xf]
  %v100 = vld [vmem:[%s1 + $0xf8] sm:$0xf]
  %v101 = vld [vmem:[%s1 + $0xfc] sm:$0xf]
  %v102 = vld [vmem:[%s1 + $0x100] sm:$0xf]
  %v103 = vld [vmem:[%s1 + $0x104] sm:$0xf]
  %v104 = vld [vmem:[%s1 + $0x108] sm:$0xf]
  %v105 = vld [vmem:[%s1 + $0x10c] sm:$0xf]
  %v106 = vld [vmem:[%s1 + $0x110] sm:$0xf]
  %v107 = vld [vmem:[%s1 + $0x114] sm:$0xf]
  %v108 = vld [vmem:[%s1 + $0x118] sm:$0xf]
  %v109 = vld [vmem:[%s1 + $0x11c] sm:$0xf]
  %v110 = vld [vmem:[%s1 + $0x120] sm:$0xf]
  %v111 = vld [vmem:[%s1 + $0x124] sm:$0xf]
  %v112 = vld [vmem:[%s1 + $0x128] sm:$0xf]
  %v113 = vld [vmem:[%s1 + $0x12c] sm:$0xf]
  %v114 = vld [vmem:[%s1 + $0x130] sm:$0xf]
  %v115 = vld [vmem:[%s1 + $0x134] sm:$0xf]
  %v116 = vld [vmem:[%s1 + $0x138] sm:$0xf]
  %v117 = vld [vmem:[%s1 + $0x13c] sm:$0xf]
  %v118 = vld [vmem:[%s1 + $0x140] sm:$0xf]
  %v119 = vld [vmem:[%s1 + $0x144] sm:$0xf]
  %v120 = vld [vmem:[%s1 + $0x148] sm:$0xf]
  %v121 = vld [vmem:[%s1 + $0x14c] sm:$0xf]
  %v122 = vld [vmem:[%s1 + $0x150] sm:$0xf]
  %v123 = vld [vmem:[%s1 + $0x154] sm:$0xf]
  %v124 = vld [vmem:[%s1 + $0x158] sm:$0xf]
  %v125 = vld [vmem:[%s1 + $0x15c] sm:$0xf]
  %v126 = vld [vmem:[%s1 + $0x160] sm:$0xf]
  %v127 = vld [vmem:[%s1 + $0x164] sm:$0xf]
  %v128 = vld [vmem:[%s1 + $0x168] sm:$0xf]
  %v129 = vld [vmem:[%s1 + $0x16c] sm:$0xf]
  %v130 = vld [vmem:[%s1 + $0x170] sm:$0xf]
  %v131 = vld [vmem:[%s1 + $0x174] sm:$0xf]
  %v132 = vld [vmem:[%s1 + $0x178] sm:$0xf]
  %v133 = vld [vmem:[%s1 + $0x17c] sm:$0xf]
  %v134 = vld [vmem:[%s1 + $0x180] sm:$0xf]
  %v135 = vld [vmem:[%s1 + $0x184] sm:$0xf]
  %v136 = vld [vmem:[%s1 + $0x188] sm:$0xf]
  %v137 = vld [vmem:[%s1 + $0x18c] sm:$0xf]
  %v138 = vld [vmem:[%s1 + $0x190] sm:$0xf]
  %v139 = vld [vmem:[%s1 + $0x194] sm:$0xf]
  %v140 = vld [vmem:[%s1 + $0x198] sm:$0xf]
  %v141 = vld [vmem:[%s1 + $0x19c] sm:$0xf]
  %v142 = vld [vmem:[%s1 + $0x1a0] sm:$0xf]
  %v143 = vld [vmem:[%s1 + $0x1a4] sm:$0xf]
  %v144 = vld [vmem:[%s1 + $0x1a8] sm:$0xf]
  %v145 = vld [vmem:[%s1 + $0x1ac] sm:$0xf]
  %v146 = vld [vmem:[%s1 + $0x1b0] sm:$0xf]
  %v147 = vld [vmem:[%s1 + $0x1b4] sm:$0xf]
  %v148 = vld [vmem:[%s1 + $0x1b8] sm:$0xf]
  %v149 = vld [vmem:[%s1 + $0x1bc] sm:$0xf]
  %v150 = vld [vmem:[%s2] sm:$0x1]
  %v151 = vld [vmem:[#allocation2] sm:$0x1]
  %v152 = vld [vmem:[%s4] sm:$0xf]
  %v153 = vld [vmem:[%s4 + $0x4] sm:$0xf]
  %v154 = vld [vmem:[%s4 + $0x8] sm:$0xf]
  %v155 = vld [vmem:[%s4 + $0xc] sm:$0xf]
  %v156 = vld [vmem:[%s4 + $0x10] sm:$0xf]
  %v157 = vld [vmem:[%s4 + $0x14] sm:$0xf]
  %v158 = vld [vmem:[%s4 + $0x18] sm:$0xf]
  %v159 = vld [vmem:[%s4 + $0x1c] sm:$0xf]
  %v160 = vld [vmem:[%s4 + $0x20] sm:$0xf]
  %v161 = vld [vmem:[%s4 + $0x24] sm:$0xf]
  %v162 = vld [vmem:[%s4 + $0x28] sm:$0xf]
  %v163 = vld [vmem:[%s4 + $0x2c] sm:$0xf]
  %v164 = vld [vmem:[%s4 + $0x30] sm:$0xf]
  %v165 = vld [vmem:[%s4 + $0x34] sm:$0xf]
  %v166 = vld [vmem:[%s4 + $0x38] sm:$0xf]
  %v167 = vld [vmem:[%s4 + $0x3c] sm:$0xf]
  %v168 = vld [vmem:[%s4 + $0x40] sm:$0xf]
  %v169 = vld [vmem:[%s4 + $0x44] sm:$0xf]
  %v170 = vld [vmem:[%s4 + $0x48] sm:$0xf]
  %v171 = vld [vmem:[%s4 + $0x4c] sm:$0xf]
  %v172 = vld [vmem:[%s4 + $0x50] sm:$0xf]
  %v173 = vld [vmem:[%s4 + $0x54] sm:$0xf]
  %v174 = vld [vmem:[%s4 + $0x58] sm:$0xf]
  %v175 = vld [vmem:[%s4 + $0x5c] sm:$0xf]
  %v176 = vld [vmem:[%s4 + $0x60] sm:$0xf]
  %v177 = vld [vmem:[%s4 + $0x64] sm:$0xf]
  %v178 = vld [vmem:[%s4 + $0x68] sm:$0xf]
  %v179 = vld [vmem:[%s4 + $0x6c] sm:$0xf]
  %v180 = vld [vmem:[%s4 + $0x70] sm:$0xf]
  %v181 = vld [vmem:[%s4 + $0x74] sm:$0xf]
  %v182 = vld [vmem:[%s4 + $0x78] sm:$0xf]
  %v183 = vld [vmem:[%s4 + $0x7c] sm:$0xf]
  %v184 = vld [vmem:[%s4 + $0x80] sm:$0xf]
  %v185 = vld [vmem:[%s4 + $0x84] sm:$0xf]
  %v186 = vld [vmem:[%s4 + $0x88] sm:$0xf]
  %v187 = vld [vmem:[%s4 + $0x8c] sm:$0xf]
  %v188 = vld [vmem:[%s4 + $0x90] sm:$0xf]
  %v189 = vld [vmem:[%s4 + $0x94] sm:$0xf]
  %v190 = vld [vmem:[%s4 + $0x98] sm:$0xf]
  %v191 = vld [vmem:[%s4 + $0x9c] sm:$0xf]
  %v192 = vld [vmem:[%s4 + $0xa0] sm:$0xf]
  %v193 = vld [vmem:[%s4 + $0xa4] sm:$0xf]
  %v194 = vld [vmem:[%s4 + $0xa8] sm:$0xf]
  %v195 = vld [vmem:[%s4 + $0xac] sm:$0xf]
  %v196 = vld [vmem:[%s4 + $0xb0] sm:$0xf]
  %v197 = vld [vmem:[%s4 + $0xb4] sm:$0xf]
  %v198 = vld [vmem:[%s4 + $0xb8] sm:$0xf]
  %v199 = vld [vmem:[%s4 + $0xbc] sm:$0xf]
  %v200 = vld [vmem:[%s4 + $0xc0] sm:$0xf]
  %v201 = vld [vmem:[%s4 + $0xc4] sm:$0xf]
  %v202 = vld [vmem:[%s4 + $0xc8] sm:$0xf]
  %v203 = vld [vmem:[%s4 + $0xcc] sm:$0xf]
  %v204 = vld [vmem:[%s4 + $0xd0] sm:$0xf]
  %v205 = vld [vmem:[%s4 + $0xd4] sm:$0xf]
  %v206 = vld [vmem:[%s4 + $0xd8] sm:$0xf]
  %v207 = vld [vmem:[%s4 + $0xdc] sm:$0xf]
  %v208 = vld [vmem:[%s4 + $0xe0] sm:$0xf]
  %v209 = vld [vmem:[%s4 + $0xe4] sm:$0xf]
  %v210 = vld [vmem:[%s4 + $0xe8] sm:$0xf]
  %v211 = vld [vmem:[%s4 + $0xec] sm:$0xf]
  %v212 = vld [vmem:[%s4 + $0xf0] sm:$0xf]
  %v213 = vld [vmem:[%s4 + $0xf4] sm:$0xf]
  %v214 = vld [vmem:[%s4 + $0xf8] sm:$0xf]
  %v215 = vld [vmem:[%s4 + $0xfc] sm:$0xf]
  %v216 = vld [vmem:[%s4 + $0x100] sm:$0xf]
  %v217 = vld [vmem:[%s4 + $0x104] sm:$0xf]
  %v218 = vld [vmem:[%s4 + $0x108] sm:$0xf]
  %v219 = vld [vmem:[%s4 + $0x10c] sm:$0xf]
  %v220 = vld [vmem:[%s4 + $0x110] sm:$0xf]
  %v221 = vld [vmem:[%s4 + $0x114] sm:$0xf]
  %v222 = vld [vmem:[%s4 + $0x118] sm:$0xf]
  %v223 = vld [vmem:[%s4 + $0x11c] sm:$0xf]
  %v224 = vld [vmem:[%s4 + $0x120] sm:$0xf]
  %v225 = vld [vmem:[%s4 + $0x124] sm:$0xf]
  %v226 = vld [vmem:[%s4 + $0x128] sm:$0xf]
  %v227 = vld [vmem:[%s4 + $0x12c] sm:$0xf]
  %v228 = vld [vmem:[%s4 + $0x130] sm:$0xf]
  %v229 = vld [vmem:[%s4 + $0x134] sm:$0xf]
  %v230 = vld [vmem:[%s4 + $0x138] sm:$0xf]
  %v231 = vld [vmem:[%s4 + $0x13c] sm:$0xf]
  %v232 = vld [vmem:[%s4 + $0x140] sm:$0xf]
  %v233 = vld [vmem:[%s4 + $0x144] sm:$0xf]
  %v234 = vld [vmem:[%s4 + $0x148] sm:$0xf]
  %v235 = vld [vmem:[%s4 + $0x14c] sm:$0xf]
  %v236 = vld [vmem:[%s4 + $0x150] sm:$0xf]
  %v237 = vld [vmem:[%s4 + $0x154] sm:$0xf]
  %v238 = vld [vmem:[%s4 + $0x158] sm:$0xf]
  %v239 = vld [vmem:[%s4 + $0x15c] sm:$0xf]
  %v240 = vld [vmem:[%s4 + $0x160] sm:$0xf]
  %v241 = vld [vmem:[%s4 + $0x164] sm:$0xf]
  %v242 = vld [vmem:[%s4 + $0x168] sm:$0xf]
  %v243 = vld [vmem:[%s4 + $0x16c] sm:$0xf]
  %v244 = vld [vmem:[%s4 + $0x170] sm:$0xf]
  %v245 = vld [vmem:[%s4 + $0x174] sm:$0xf]
  %v246 = vld [vmem:[%s4 + $0x178] sm:$0xf]
  %v247 = vld [vmem:[%s4 + $0x17c] sm:$0xf]
  %v248 = vld [vmem:[%s4 + $0x180] sm:$0xf]
  %v249 = vld [vmem:[%s4 + $0x184] sm:$0xf]
  %v250 = vld [vmem:[%s4 + $0x188] sm:$0xf]
  %v251 = vld [vmem:[%s4 + $0x18c] sm:$0xf]
  %v252 = vld [vmem:[%s4 + $0x190] sm:$0xf]
  %v253 = vld [vmem:[%s4 + $0x194] sm:$0xf]
  %v254 = vld [vmem:[%s4 + $0x198] sm:$0xf]
  %v255 = vld [vmem:[%s4 + $0x19c] sm:$0xf]
  %v256 = vld [vmem:[%s4 + $0x1a0] sm:$0xf]
  %v257 = vld [vmem:[%s4 + $0x1a4] sm:$0xf]
  %v258 = vld [vmem:[%s4 + $0x1a8] sm:$0xf]
  %v259 = vld [vmem:[%s4 + $0x1ac] sm:$0xf]
  %v260 = vld [vmem:[%s4 + $0x1b0] sm:$0xf]
  %v261 = vld [vmem:[%s4 + $0x1b4] sm:$0xf]
  %v262 = vld [vmem:[%s4 + $0x1b8] sm:$0xf]
  %v263 = vld [vmem:[%s4 + $0x1bc] sm:$0xf]
  %v264 = vld [vmem:[%s5] sm:$0xf]
  %v265 = vld [vmem:[%s5 + $0x4] sm:$0xf]
  %v266 = vld [vmem:[%s5 + $0x8] sm:$0xf]
  %v267 = vld [vmem:[%s5 + $0xc] sm:$0xf]
  %v268 = vld [vmem:[%s5 + $0x10] sm:$0xf]
  %v269 = vld [vmem:[%s5 + $0x14] sm:$0xf]
  %v270 = vld [vmem:[%s5 + $0x18] sm:$0xf]
  %v271 = vld [vmem:[%s5 + $0x1c] sm:$0xf]
  %v272 = vld [vmem:[%s5 + $0x20] sm:$0xf]
  %v273 = vld [vmem:[%s5 + $0x24] sm:$0xf]
  %v274 = vld [vmem:[%s5 + $0x28] sm:$0xf]
  %v275 = vld [vmem:[%s5 + $0x2c] sm:$0xf]
  %v276 = vld [vmem:[%s5 + $0x30] sm:$0xf]
  %v277 = vld [vmem:[%s5 + $0x34] sm:$0xf]
  %v278 = vld [vmem:[%s5 + $0x38] sm:$0xf]
  %v279 = vld [vmem:[%s5 + $0x3c] sm:$0xf]
  %v280 = vld [vmem:[%s6] sm:$0x1]
  %v281 = vld [vmem:[#allocation3] sm:$0x1]
  %v282 = vlaneseq
  %v283 = vshrl.u32 %v282, 7
  %v284 = vadd.s32 %v283, 8
  %v285 = vadd.s32 %v283, 16
  %v286 = vadd.s32 %v283, 24
  %v287 = vadd.s32 %v283, 3
  %v288 = vadd.s32 %v284, 3
  %v289 = vadd.s32 %v285, 3
  %v290 = vadd.s32 %v286, 3
  %vm291 = vcmp.ge.s32.totalorder %v287, 8
  %vm292 = vcmp.ge.s32.totalorder %v288, 8
  %vm293 = vcmp.ge.s32.totalorder %v289, 8
  %vm294 = vcmp.ge.s32.totalorder %v290, 8
  %vm295 = vcmp.lt.s32.totalorder %v287, 10
  %vm296 = vcmp.lt.s32.totalorder %v288, 10
  %vm297 = vcmp.lt.s32.totalorder %v289, 10
  %vm298 = vcmp.lt.s32.totalorder %v290, 10
  %vm299 = vmand %vm291, %vm295
  %vm300 = vmand %vm292, %vm296
  %vm301 = vmand %vm293, %vm297
  %vm302 = vmand %vm294, %vm298
  %vm303 = vcmp.ge.s32.totalorder %v287, 24
  %vm304 = vcmp.ge.s32.totalorder %v288, 24
  %vm305 = vcmp.ge.s32.totalorder %v289, 24
  %vm306 = vcmp.ge.s32.totalorder %v290, 24
  %vm307 = vcmp.lt.s32.totalorder %v287, 26
  %vm308 = vcmp.lt.s32.totalorder %v288, 26
  %vm309 = vcmp.lt.s32.totalorder %v289, 26
  %vm310 = vcmp.lt.s32.totalorder %v290, 26
  %vm311 = vmand %vm303, %vm307
  %vm312 = vmand %vm304, %vm308
  %vm313 = vmand %vm305, %vm309
  %vm314 = vmand %vm306, %vm310
  %vm315 = vmor %vm299, %vm311
  %vm316 = vmor %vm300, %vm312
  %vm317 = vmor %vm301, %vm313
  %vm318 = vmor %vm302, %vm314
  %v323 = vunpack.c.l.b16 %v34
  %v324 = vunpack.c.l.b16 %v35
  %v325 = vunpack.c.l.b16 %v36
  %v326 = vunpack.c.l.b16 %v37
  %v327 = vpack.c.b16 %v324, %v323
  %v328 = vpack.c.b16 %v326, %v325
  %vm331 = vsmask.f32 7424
  %v333 = vshrl.u32 %v327, 16
  %v335 = vshll.u32 %v327, 16
  %v337 = vrot.slane %v335, 1
  %v338 = vor.u32 %v333, %v337
  %v340 = vshll.u32 %v328, 16
  %v342 = vrot.slane %v340, 1
  %v343 = vsel %vm331, %v338, %v342
  %v344 = vshrl.u32 %v328, 16
  %v346 = vor.u32 %v344, %v342
  %vm349 = vcmask 1046528
  %v350 = vrot.slane %v327, 1
  %v351 = vrot.slane %v328, 1
  %v352 = vsel %vm349, %v350, %v351
  %vm355 = vsmask.f32 6400
  %v356 = vrot.slane %v333, 1
  %v357 = vrot.slane %v335, 2
  %v358 = vor.u32 %v356, %v357
  %v359 = vrot.slane %v344, 1
  %v360 = vrot.slane %v340, 2
  %v361 = vor.u32 %v359, %v360
  %v362 = vsel %vm355, %v358, %v361
  %vm365 = vcmask 1045504
  %v366 = vrot.slane %v327, 2
  %v367 = vrot.slane %v328, 2
  %v368 = vsel %vm365, %v366, %v367
  %vm371 = vsmask.f32 5376
  %v372 = vrot.slane %v333, 2
  %v373 = vrot.slane %v335, 3
  %v374 = vor.u32 %v372, %v373
  %v375 = vrot.slane %v344, 2
  %v376 = vrot.slane %v340, 3
  %v377 = vor.u32 %v375, %v376
  %v378 = vsel %vm371, %v374, %v377
  %vm381 = vcmask 1044480
  %v382 = vrot.slane %v327, 3
  %v383 = vrot.slane %v328, 3
  %v384 = vsel %vm381, %v382, %v383
  %v388 = vlaneseq
  %v389 = vshrl.u32 %v388, 7
  %v390 = vsub.s32 0, %v389
  %v391 = vrot.slane %v150, %v390
  %v505 = vunpack.c.l.b16 %v38
  %v506 = vunpack.c.l.b16 %v39
  %v507 = vunpack.c.l.b16 %v40
  %v508 = vunpack.c.l.b16 %v41
  %v509 = vunpack.c.l.b16 %v42
  %v510 = vunpack.c.l.b16 %v43
  %v511 = vunpack.c.l.b16 %v44
  %v512 = vunpack.c.l.b16 %v45
  %v513 = vunpack.c.l.b16 %v46
  %v514 = vunpack.c.l.b16 %v47
  %v515 = vunpack.c.l.b16 %v48
  %v516 = vunpack.c.l.b16 %v49
  %v517 = vunpack.c.l.b16 %v50
  %v518 = vunpack.c.l.b16 %v51
  %v519 = vunpack.c.l.b16 %v52
  %v520 = vunpack.c.l.b16 %v53
  %v521 = vunpack.c.l.b16 %v54
  %v522 = vunpack.c.l.b16 %v55
  %v523 = vunpack.c.l.b16 %v56
  %v524 = vunpack.c.l.b16 %v57
  %v525 = vunpack.c.l.b16 %v58
  %v526 = vunpack.c.l.b16 %v59
  %v527 = vunpack.c.l.b16 %v60
  %v528 = vunpack.c.l.b16 %v61
  %v529 = vunpack.c.l.b16 %v62
  %v530 = vunpack.c.l.b16 %v63
  %v531 = vunpack.c.l.b16 %v64
  %v532 = vunpack.c.l.b16 %v65
  %v533 = vunpack.c.l.b16 %v66
  %v534 = vunpack.c.l.b16 %v67
  %v535 = vunpack.c.l.b16 %v68
  %v536 = vunpack.c.l.b16 %v69
  %v537 = vunpack.c.l.b16 %v70
  %v538 = vunpack.c.l.b16 %v71
  %v539 = vunpack.c.l.b16 %v72
  %v540 = vunpack.c.l.b16 %v73
  %v541 = vunpack.c.l.b16 %v74
  %v542 = vunpack.c.l.b16 %v75
  %v543 = vunpack.c.l.b16 %v76
  %v544 = vunpack.c.l.b16 %v77
  %v545 = vunpack.c.l.b16 %v78
  %v546 = vunpack.c.l.b16 %v79
  %v547 = vunpack.c.l.b16 %v80
  %v548 = vunpack.c.l.b16 %v81
  %v549 = vunpack.c.l.b16 %v82
  %v550 = vunpack.c.l.b16 %v83
  %v551 = vunpack.c.l.b16 %v84
  %v552 = vunpack.c.l.b16 %v85
  %v553 = vunpack.c.l.b16 %v86
  %v554 = vunpack.c.l.b16 %v87
  %v555 = vunpack.c.l.b16 %v88
  %v556 = vunpack.c.l.b16 %v89
  %v557 = vunpack.c.l.b16 %v90
  %v558 = vunpack.c.l.b16 %v91
  %v559 = vunpack.c.l.b16 %v92
  %v560 = vunpack.c.l.b16 %v93
  %v561 = vunpack.c.l.b16 %v94
  %v562 = vunpack.c.l.b16 %v95
  %v563 = vunpack.c.l.b16 %v96
  %v564 = vunpack.c.l.b16 %v97
  %v565 = vunpack.c.l.b16 %v98
  %v566 = vunpack.c.l.b16 %v99
  %v567 = vunpack.c.l.b16 %v100
  %v568 = vunpack.c.l.b16 %v101
  %v569 = vunpack.c.l.b16 %v102
  %v570 = vunpack.c.l.b16 %v103
  %v571 = vunpack.c.l.b16 %v104
  %v572 = vunpack.c.l.b16 %v105
  %v573 = vunpack.c.l.b16 %v106
  %v574 = vunpack.c.l.b16 %v107
  %v575 = vunpack.c.l.b16 %v108
  %v576 = vunpack.c.l.b16 %v109
  %v577 = vunpack.c.l.b16 %v110
  %v578 = vunpack.c.l.b16 %v111
  %v579 = vunpack.c.l.b16 %v112
  %v580 = vunpack.c.l.b16 %v113
  %v581 = vunpack.c.l.b16 %v114
  %v582 = vunpack.c.l.b16 %v115
  %v583 = vunpack.c.l.b16 %v116
  %v584 = vunpack.c.l.b16 %v117
  %v585 = vunpack.c.l.b16 %v118
  %v586 = vunpack.c.l.b16 %v119
  %v587 = vunpack.c.l.b16 %v120
  %v588 = vunpack.c.l.b16 %v121
  %v589 = vunpack.c.l.b16 %v122
  %v590 = vunpack.c.l.b16 %v123
  %v591 = vunpack.c.l.b16 %v124
  %v592 = vunpack.c.l.b16 %v125
  %v593 = vunpack.c.l.b16 %v126
  %v594 = vunpack.c.l.b16 %v127
  %v595 = vunpack.c.l.b16 %v128
  %v596 = vunpack.c.l.b16 %v129
  %v597 = vunpack.c.l.b16 %v130
  %v598 = vunpack.c.l.b16 %v131
  %v599 = vunpack.c.l.b16 %v132
  %v600 = vunpack.c.l.b16 %v133
  %v601 = vunpack.c.l.b16 %v134
  %v602 = vunpack.c.l.b16 %v135
  %v603 = vunpack.c.l.b16 %v136
  %v604 = vunpack.c.l.b16 %v137
  %v605 = vunpack.c.l.b16 %v138
  %v606 = vunpack.c.l.b16 %v139
  %v607 = vunpack.c.l.b16 %v140
  %v608 = vunpack.c.l.b16 %v141
  %v609 = vunpack.c.l.b16 %v142
  %v610 = vunpack.c.l.b16 %v143
  %v611 = vunpack.c.l.b16 %v144
  %v612 = vunpack.c.l.b16 %v145
  %v613 = vunpack.c.l.b16 %v146
  %v614 = vunpack.c.l.b16 %v147
  %v615 = vunpack.c.l.b16 %v148
  %v616 = vunpack.c.l.b16 %v149
  %v617 = vpack.c.b16 %v506, %v505
  %v618 = vpack.c.b16 %v508, %v507
  %v619 = vpack.c.b16 %v510, %v509
  %v620 = vpack.c.b16 %v512, %v511
  %v621 = vpack.c.b16 %v514, %v513
  %v622 = vpack.c.b16 %v516, %v515
  %v623 = vpack.c.b16 %v518, %v517
  %v624 = vpack.c.b16 %v520, %v519
  %v625 = vpack.c.b16 %v522, %v521
  %v626 = vpack.c.b16 %v524, %v523
  %v627 = vpack.c.b16 %v526, %v525
  %v628 = vpack.c.b16 %v528, %v527
  %v629 = vpack.c.b16 %v530, %v529
  %v630 = vpack.c.b16 %v532, %v531
  %v631 = vpack.c.b16 %v534, %v533
  %v632 = vpack.c.b16 %v536, %v535
  %v633 = vpack.c.b16 %v538, %v537
  %v634 = vpack.c.b16 %v540, %v539
  %v635 = vpack.c.b16 %v542, %v541
  %v636 = vpack.c.b16 %v544, %v543
  %v637 = vpack.c.b16 %v546, %v545
  %v638 = vpack.c.b16 %v548, %v547
  %v639 = vpack.c.b16 %v550, %v549
  %v640 = vpack.c.b16 %v552, %v551
  %v641 = vpack.c.b16 %v554, %v553
  %v642 = vpack.c.b16 %v556, %v555
  %v643 = vpack.c.b16 %v558, %v557
  %v644 = vpack.c.b16 %v560, %v559
  %v645 = vpack.c.b16 %v562, %v561
  %v646 = vpack.c.b16 %v564, %v563
  %v647 = vpack.c.b16 %v566, %v565
  %v648 = vpack.c.b16 %v568, %v567
  %v649 = vpack.c.b16 %v570, %v569
  %v650 = vpack.c.b16 %v572, %v571
  %v651 = vpack.c.b16 %v574, %v573
  %v652 = vpack.c.b16 %v576, %v575
  %v653 = vpack.c.b16 %v578, %v577
  %v654 = vpack.c.b16 %v580, %v579
  %v655 = vpack.c.b16 %v582, %v581
  %v656 = vpack.c.b16 %v584, %v583
  %v657 = vpack.c.b16 %v586, %v585
  %v658 = vpack.c.b16 %v588, %v587
  %v659 = vpack.c.b16 %v590, %v589
  %v660 = vpack.c.b16 %v592, %v591
  %v661 = vpack.c.b16 %v594, %v593
  %v662 = vpack.c.b16 %v596, %v595
  %v663 = vpack.c.b16 %v598, %v597
  %v664 = vpack.c.b16 %v600, %v599
  %v665 = vpack.c.b16 %v602, %v601
  %v666 = vpack.c.b16 %v604, %v603
  %v667 = vpack.c.b16 %v606, %v605
  %v668 = vpack.c.b16 %v608, %v607
  %v669 = vpack.c.b16 %v610, %v609
  %v670 = vpack.c.b16 %v612, %v611
  %v671 = vpack.c.b16 %v614, %v613
  %v672 = vpack.c.b16 %v616, %v615
  %729 = vmatprep.subr.bf16.mxu0 0
  %730 = vmatpush1.bf16.msra.mxu0 %v617
  %731 = vmatprep.subr.bf16.mxu0 0
  %732 = vmatpush1.bf16.msra.mxu0 %v618
  %733 = vmatprep.subr.bf16.mxu0 0
  %734 = vmatpush1.bf16.msra.mxu0 %v619
  %735 = vmatprep.subr.bf16.mxu0 0
  %736 = vmatpush1.bf16.msra.mxu0 %v620
  %737 = vmatprep.subr.bf16.mxu0 0
  %738 = vmatpush1.bf16.msra.mxu0 %v621
  %739 = vmatprep.subr.bf16.mxu0 0
  %740 = vmatpush1.bf16.msra.mxu0 %v622
  %741 = vmatprep.subr.bf16.mxu0 0
  %742 = vmatpush1.bf16.msra.mxu0 %v623
  %743 = vmatprep.subr.bf16.mxu0 0
  %744 = vmatpush1.bf16.msra.mxu0 %v624
  %745 = vmatprep.subr.bf16.mxu0 0
  %746 = vmatpush1.bf16.msra.mxu0 %v625
  %747 = vmatprep.subr.bf16.mxu0 0
  %748 = vmatpush1.bf16.msra.mxu0 %v626
  %749 = vmatprep.subr.bf16.mxu0 0
  %750 = vmatpush1.bf16.msra.mxu0 %v627
  %751 = vmatprep.subr.bf16.mxu0 0
  %752 = vmatpush1.bf16.msra.mxu0 %v628
  %753 = vmatprep.subr.bf16.mxu0 0
  %754 = vmatpush1.bf16.msra.mxu0 %v629
  %755 = vmatprep.subr.bf16.mxu0 0
  %756 = vmatpush1.bf16.msra.mxu0 %v630
  %757 = vmatprep.subr.bf16.mxu0 0
  %758 = vmatpush1.bf16.msra.mxu0 %v631
  %759 = vmatprep.subr.bf16.mxu0 0
  %760 = vmatpush1.bf16.msra.mxu0 %v632
  %761 = vmatprep.mubr.bf16.mxu0 %v343
  %762 = vmatmul.mubr.bf16.gmra.mrb[0].mxu0 %v327
  %v763 = vpop.f32.mrb[0].mxu0
  %v764 = vadd.f32 %v391, %v763
  %v765 = vpop.f32.mrb[0].mxu0
  %v766 = vpop.f32.mrb[0].mxu0
  %v767 = vadd.f32 %v391, %v766
  %v768 = vpop.f32.mrb[0].mxu0
  %769 = vmatprep.mubr.bf16.mxu0 %v346
  %770 = vmatmul.mubr.bf16.gmra.mrb[0].mxu0 %v328
  %v771 = vpop.f32.mrb[0].mxu0
  %v772 = vadd.f32 %v391, %v771
  %v773 = vpop.f32.mrb[0].mxu0
  %v774 = vpop.f32.mrb[0].mxu0
  %v775 = vadd.f32 %v391, %v774
  %v776 = vpop.f32.mrb[0].mxu0
  %777 = vdwg.mxu0
  %778 = vmatprep.subr.bf16.mxu0 0
  %779 = vmatpush1.bf16.msra.mxu0 %v633
  %780 = vmatprep.subr.bf16.mxu0 0
  %781 = vmatpush1.bf16.msra.mxu0 %v634
  %782 = vmatprep.subr.bf16.mxu0 0
  %783 = vmatpush1.bf16.msra.mxu0 %v635
  %784 = vmatprep.subr.bf16.mxu0 0
  %785 = vmatpush1.bf16.msra.mxu0 %v636
  %786 = vmatprep.subr.bf16.mxu0 0
  %787 = vmatpush1.bf16.msra.mxu0 %v637
  %788 = vmatprep.subr.bf16.mxu0 0
  %789 = vmatpush1.bf16.msra.mxu0 %v638
  %790 = vmatprep.subr.bf16.mxu0 0
  %791 = vmatpush1.bf16.msra.mxu0 %v639
  %792 = vmatprep.subr.bf16.mxu0 0
  %793 = vmatpush1.bf16.msra.mxu0 %v640
  %794 = vmatprep.subr.bf16.mxu0 0
  %795 = vmatpush1.bf16.msra.mxu0 %v641
  %796 = vmatprep.subr.bf16.mxu0 0
  %797 = vmatpush1.bf16.msra.mxu0 %v642
  %798 = vmatprep.subr.bf16.mxu0 0
  %799 = vmatpush1.bf16.msra.mxu0 %v643
  %800 = vmatprep.subr.bf16.mxu0 0
  %801 = vmatpush1.bf16.msra.mxu0 %v644
  %802 = vmatprep.subr.bf16.mxu0 0
  %803 = vmatpush1.bf16.msra.mxu0 %v645
  %804 = vmatprep.subr.bf16.mxu0 0
  %805 = vmatpush1.bf16.msra.mxu0 %v646
  %806 = vmatprep.subr.bf16.mxu0 0
  %807 = vmatpush1.bf16.msra.mxu0 %v647
  %808 = vmatprep.subr.bf16.mxu0 0
  %809 = vmatpush1.bf16.msra.mxu0 %v648
  %810 = vmatprep.mubr.bf16.mxu0 %v362
  %811 = vmatmul.mubr.bf16.gmra.mrb[0].mxu0 %v352
  %v812 = vpop.f32.mrb[0].mxu0
  %v813 = vadd.f32 %v764, %v812
  %v814 = vpop.f32.mrb[0].mxu0
  %v815 = vpop.f32.mrb[0].mxu0
  %v816 = vadd.f32 %v767, %v815
  %v817 = vpop.f32.mrb[0].mxu0
  %818 = vmatprep.mubr.bf16.mxu0 %v361
  %819 = vmatmul.mubr.bf16.gmra.mrb[0].mxu0 %v351
  %v820 = vpop.f32.mrb[0].mxu0
  %v821 = vadd.f32 %v772, %v820
  %v822 = vpop.f32.mrb[0].mxu0
  %v823 = vpop.f32.mrb[0].mxu0
  %v824 = vadd.f32 %v775, %v823
  %v825 = vpop.f32.mrb[0].mxu0
  %826 = vdwg.mxu0
  %827 = vmatprep.subr.bf16.mxu0 0
  %828 = vmatpush1.bf16.msra.mxu0 %v649
  %829 = vmatprep.subr.bf16.mxu0 0
  %830 = vmatpush1.bf16.msra.mxu0 %v650
  %831 = vmatprep.subr.bf16.mxu0 0
  %832 = vmatpush1.bf16.msra.mxu0 %v651
  %833 = vmatprep.subr.bf16.mxu0 0
  %834 = vmatpush1.bf16.msra.mxu0 %v652
  %835 = vmatprep.subr.bf16.mxu0 0
  %836 = vmatpush1.bf16.msra.mxu0 %v653
  %837 = vmatprep.subr.bf16.mxu0 0
  %838 = vmatpush1.bf16.msra.mxu0 %v654
  %839 = vmatprep.subr.bf16.mxu0 0
  %840 = vmatpush1.bf16.msra.mxu0 %v655
  %841 = vmatprep.subr.bf16.mxu0 0
  %842 = vmatpush1.bf16.msra.mxu0 %v656
  %843 = vmatprep.subr.bf16.mxu0 0
  %844 = vmatpush1.bf16.msra.mxu0 %v657
  %845 = vmatprep.subr.bf16.mxu0 0
  %846 = vmatpush1.bf16.msra.mxu0 %v658
  %847 = vmatprep.subr.bf16.mxu0 0
  %848 = vmatpush1.bf16.msra.mxu0 %v659
  %849 = vmatprep.subr.bf16.mxu0 0
  %850 = vmatpush1.bf16.msra.mxu0 %v660
  %851 = vmatprep.subr.bf16.mxu0 0
  %852 = vmatpush1.bf16.msra.mxu0 %v661
  %853 = vmatprep.subr.bf16.mxu0 0
  %854 = vmatpush1.bf16.msra.mxu0 %v662
  %855 = vmatprep.subr.bf16.mxu0 0
  %856 = vmatpush1.bf16.msra.mxu0 %v663
  %857 = vmatprep.subr.bf16.mxu0 0
  %858 = vmatpush1.bf16.msra.mxu0 %v664
  %859 = vmatprep.mubr.bf16.mxu0 %v378
  %860 = vmatmul.mubr.bf16.gmra.mrb[0].mxu0 %v368
  %v861 = vpop.f32.mrb[0].mxu0
  %v862 = vadd.f32 %v813, %v861
  %v863 = vpop.f32.mrb[0].mxu0
  %v864 = vpop.f32.mrb[0].mxu0
  %v865 = vadd.f32 %v816, %v864
  %v866 = vpop.f32.mrb[0].mxu0
  %867 = vmatprep.mubr.bf16.mxu0 %v377
  %868 = vmatmul.mubr.bf16.gmra.mrb[0].mxu0 %v367
  %v869 = vpop.f32.mrb[0].mxu0
  %v870 = vadd.f32 %v821, %v869
  %v871 = vpop.f32.mrb[0].mxu0
  %v872 = vpop.f32.mrb[0].mxu0
  %v873 = vadd.f32 %v824, %v872
  %v874 = vpop.f32.mrb[0].mxu0
  %875 = vdwg.mxu0
  %876 = vmatprep.subr.bf16.mxu0 0
  %877 = vmatpush1.bf16.msra.mxu0 %v665
  %878 = vmatprep.subr.bf16.mxu0 0
  %879 = vmatpush1.bf16.msra.mxu0 %v666
  %880 = vmatprep.subr.bf16.mxu0 0
  %881 = vmatpush1.bf16.msra.mxu0 %v667
  %882 = vmatprep.subr.bf16.mxu0 0
  %883 = vmatpush1.bf16.msra.mxu0 %v668
  %884 = vmatprep.subr.bf16.mxu0 0
  %885 = vmatpush1.bf16.msra.mxu0 %v669
  %886 = vmatprep.subr.bf16.mxu0 0
  %887 = vmatpush1.bf16.msra.mxu0 %v670
  %888 = vmatprep.subr.bf16.mxu0 0
  %889 = vmatpush1.bf16.msra.mxu0 %v671
  %890 = vmatprep.subr.bf16.mxu0 0
  %891 = vmatpush1.bf16.msra.mxu0 %v672
  %892 = vmatprep.subr.bf16.mxu0 0
  %893 = vmatpush1.bf16.msra.mxu0 0
  %894 = vmatprep.subr.bf16.mxu0 0
  %895 = vmatpush1.bf16.msra.mxu0 0
  %896 = vmatprep.subr.bf16.mxu0 0
  %897 = vmatpush1.bf16.msra.mxu0 0
  %898 = vmatprep.subr.bf16.mxu0 0
  %899 = vmatpush1.bf16.msra.mxu0 0
  %900 = vmatprep.subr.bf16.mxu0 0
  %901 = vmatpush1.bf16.msra.mxu0 0
  %902 = vmatprep.subr.bf16.mxu0 0
  %903 = vmatpush1.bf16.msra.mxu0 0
  %904 = vmatprep.subr.bf16.mxu0 0
  %905 = vmatpush1.bf16.msra.mxu0 0
  %906 = vmatprep.subr.bf16.mxu0 0
  %907 = vmatpush1.bf16.msra.mxu0 0
  %908 = vmatprep.mubr.bf16.mxu0 0
  %909 = vmatmul.mubr.bf16.gmra.mrb[0].mxu0 %v384
  %v910 = vpop.f32.mrb[0].mxu0
  %v911 = vadd.f32 %v862, %v910
  %v912 = vpop.f32.mrb[0].mxu0
  %v913 = vpop.f32.mrb[0].mxu0
  %v914 = vadd.f32 %v865, %v913
  %v915 = vpop.f32.mrb[0].mxu0
  %916 = vmatprep.mubr.bf16.mxu0 0
  %917 = vmatmul.mubr.bf16.gmra.mrb[0].mxu0 %v383
  %v918 = vpop.f32.mrb[0].mxu0
  %v919 = vadd.f32 %v870, %v918
  %v920 = vpop.f32.mrb[0].mxu0
  %v921 = vpop.f32.mrb[0].mxu0
  %v922 = vadd.f32 %v873, %v921
  %v923 = vpop.f32.mrb[0].mxu0
  %924 = vdwg.mxu0
  %vm925 = vcmp.ge.f32.partialorder %v911, 0.0
  %vm926 = vcmp.ge.f32.partialorder %v914, 0.0
  %vm927 = vcmp.ge.f32.partialorder %v919, 0.0
  %vm928 = vcmp.ge.f32.partialorder %v922, 0.0
  %v930 = vlaneseq
  %v931 = vshrl.u32 %v930, 7
  %v932 = vsub.s32 0, %v931
  %v933 = vrot.slane %v151, %v932
  %934 = vset.pattern.permute.xlu0 0
  %935 = vperm.xlu0 %934, %v933
  %v936 = vpop.permute.xlu0 %935
  %v938 = vmul.f32 %v936, %v911
  %v939 = vmul.f32 %v936, %v914
  %v940 = vmul.f32 %v936, %v919
  %v941 = vmul.f32 %v936, %v922
  %v942 = vsel %vm925, %v911, %v938
  %v943 = vsel %vm926, %v914, %v939
  %v944 = vsel %vm927, %v919, %v940
  %v945 = vsel %vm928, %v922, %v941
  %v946 = vsel %vm315, 1, 0
  %v947 = vsel %vm316, 1, 0
  %v948 = vsel %vm317, 1, 0
  %v949 = vsel %vm318, 1, 0
  %vm950 = vcmp.eq.s32.totalorder %v946, 1
  %vm951 = vcmp.eq.s32.totalorder %v947, 1
  %vm952 = vcmp.eq.s32.totalorder %v948, 1
  %vm953 = vcmp.eq.s32.totalorder %v949, 1
  %v954 = vsel %vm950, %v942, 0.0
  %v955 = vsel %vm951, %v943, 0.0
  %v956 = vsel %vm952, %v944, 0.0
  %v957 = vsel %vm953, %v945, 0.0
  %v958 = vpack.c.bf16 %v955, %v954
  %v959 = vpack.c.bf16 %v957, %v956
  %vm960 = vsmask.f32 1280
  %v962 = vshrl.u32 %v958, 16
  %v964 = vrot.slane %v962, 6
  %v965 = vshll.u32 %v958, 16
  %v967 = vrot.slane %v965, 7
  %v968 = vor.u32 %v964, %v967
  %v970 = vshrl.u32 %v959, 16
  %v972 = vrot.slane %v970, 6
  %v973 = vshll.u32 %v959, 16
  %v975 = vrot.slane %v973, 7
  %v976 = vor.u32 %v972, %v975
  %v977 = vsel %vm960, %v968, %v976
  %vm980 = vcmask 1041408
  %vm981 = vmand %vm980, %vm960
  %v982 = vsel %vm981, 0, %v968
  %vm983 = vmand %vm349, %vm355
  %v984 = vsel %vm983, %v977, 0
  %v986 = vshrl.u32 %v982, 16
  %v988 = vshll.u32 %v982, 16
  %v990 = vrot.slane %v988, 1
  %v991 = vor.u32 %v986, %v990
  %v993 = vshll.u32 %v984, 16
  %v995 = vrot.slane %v993, 1
  %v996 = vsel %vm331, %v991, %v995
  %v997 = vshrl.u32 %v984, 16
  %v999 = vor.u32 %v997, %v995
  %v1004 = vrot.slane %v982, 1
  %v1005 = vrot.slane %v984, 1
  %v1006 = vsel %vm349, %v1004, %v1005
  %v1009 = vrot.slane %v986, 1
  %v1010 = vrot.slane %v988, 2
  %v1011 = vor.u32 %v1009, %v1010
  %v1012 = vrot.slane %v997, 1
  %v1013 = vrot.slane %v993, 2
  %v1014 = vor.u32 %v1012, %v1013
  %v1015 = vsel %vm355, %v1011, %v1014
  %v1018 = vrot.slane %v982, 2
  %v1019 = vrot.slane %v984, 2
  %v1020 = vsel %vm365, %v1018, %v1019
  %v1023 = vrot.slane %v986, 2
  %v1024 = vrot.slane %v988, 3
  %v1025 = vor.u32 %v1023, %v1024
  %v1026 = vrot.slane %v997, 2
  %v1027 = vrot.slane %v993, 3
  %v1028 = vor.u32 %v1026, %v1027
  %v1029 = vsel %vm371, %v1025, %v1028
  %v1032 = vrot.slane %v982, 3
  %v1033 = vrot.slane %v984, 3
  %v1034 = vsel %vm381, %v1032, %v1033
  %v1053 = vunpack.c.l.b16 %v264
  %v1054 = vunpack.c.l.b16 %v265
  %v1055 = vunpack.c.l.b16 %v266
  %v1056 = vunpack.c.l.b16 %v267
  %v1057 = vunpack.c.l.b16 %v268
  %v1058 = vunpack.c.l.b16 %v269
  %v1059 = vunpack.c.l.b16 %v270
  %v1060 = vunpack.c.l.b16 %v271
  %v1061 = vunpack.c.l.b16 %v272
  %v1062 = vunpack.c.l.b16 %v273
  %v1063 = vunpack.c.l.b16 %v274
  %v1064 = vunpack.c.l.b16 %v275
  %v1065 = vunpack.c.l.b16 %v276
  %v1066 = vunpack.c.l.b16 %v277
  %v1067 = vunpack.c.l.b16 %v278
  %v1068 = vunpack.c.l.b16 %v279
  %v1069 = vpack.c.b16 %v1054, %v1053
  %v1070 = vpack.c.b16 %v1056, %v1055
  %v1071 = vpack.c.b16 %v1058, %v1057
  %v1072 = vpack.c.b16 %v1060, %v1059
  %v1073 = vpack.c.b16 %v1062, %v1061
  %v1074 = vpack.c.b16 %v1064, %v1063
  %v1075 = vpack.c.b16 %v1066, %v1065
  %v1076 = vpack.c.b16 %v1068, %v1067
  %1085 = vmatprep.subr.bf16.mxu0 0
  %1086 = vmatpush1.bf16.msra.mxu0 %v1069
  %1087 = vmatprep.subr.bf16.mxu0 0
  %1088 = vmatpush1.bf16.msra.mxu0 %v1070
  %1089 = vmatprep.subr.bf16.mxu0 0
  %1090 = vmatpush1.bf16.msra.mxu0 %v1071
  %1091 = vmatprep.subr.bf16.mxu0 0
  %1092 = vmatpush1.bf16.msra.mxu0 %v1072
  %1093 = vmatprep.subr.bf16.mxu0 0
  %1094 = vmatpush1.bf16.msra.mxu0 %v1073
  %1095 = vmatprep.subr.bf16.mxu0 0
  %1096 = vmatpush1.bf16.msra.mxu0 %v1074
  %1097 = vmatprep.subr.bf16.mxu0 0
  %1098 = vmatpush1.bf16.msra.mxu0 %v1075
  %1099 = vmatprep.subr.bf16.mxu0 0
  %1100 = vmatpush1.bf16.msra.mxu0 %v1076
  %1101 = vmatprep.subr.bf16.mxu0 0
  %1102 = vmatpush1.bf16.msra.mxu0 0
  %1103 = vmatprep.subr.bf16.mxu0 0
  %1104 = vmatpush1.bf16.msra.mxu0 0
  %1105 = vmatprep.subr.bf16.mxu0 0
  %1106 = vmatpush1.bf16.msra.mxu0 0
  %1107 = vmatprep.subr.bf16.mxu0 0
  %1108 = vmatpush1.bf16.msra.mxu0 0
  %1109 = vmatprep.subr.bf16.mxu0 0
  %1110 = vmatpush1.bf16.msra.mxu0 0
  %1111 = vmatprep.subr.bf16.mxu0 0
  %1112 = vmatpush1.bf16.msra.mxu0 0
  %1113 = vmatprep.subr.bf16.mxu0 0
  %1114 = vmatpush1.bf16.msra.mxu0 0
  %1115 = vmatprep.subr.bf16.mxu0 0
  %1116 = vmatpush1.bf16.msra.mxu0 0
  %1117 = vmatprep.mubr.bf16.mxu0 0
  %1118 = vmatmul.mubr.bf16.gmra.mrb[0].mxu0 %v362
  %v1119 = vpop.f32.mrb[0].mxu0
  %v1120 = vadd.f32 0.0, %v1119
  %v1121 = vpop.f32.mrb[0].mxu0
  %v1122 = vpop.f32.mrb[0].mxu0
  %v1123 = vadd.f32 0.0, %v1122
  %v1124 = vpop.f32.mrb[0].mxu0
  %1125 = vmatprep.mubr.bf16.mxu0 0
  %1126 = vmatmul.mubr.bf16.gmra.mrb[0].mxu0 %v361
  %v1127 = vpop.f32.mrb[0].mxu0
  %v1128 = vadd.f32 0.0, %v1127
  %v1129 = vpop.f32.mrb[0].mxu0
  %v1130 = vpop.f32.mrb[0].mxu0
  %v1131 = vadd.f32 0.0, %v1130
  %v1132 = vpop.f32.mrb[0].mxu0
  %1133 = vdwg.mxu0
  %v1246 = vunpack.c.l.b16 %v152
  %v1247 = vunpack.c.l.b16 %v153
  %v1248 = vunpack.c.l.b16 %v154
  %v1249 = vunpack.c.l.b16 %v155
  %v1250 = vunpack.c.l.b16 %v156
  %v1251 = vunpack.c.l.b16 %v157
  %v1252 = vunpack.c.l.b16 %v158
  %v1253 = vunpack.c.l.b16 %v159
  %v1254 = vunpack.c.l.b16 %v160
  %v1255 = vunpack.c.l.b16 %v161
  %v1256 = vunpack.c.l.b16 %v162
  %v1257 = vunpack.c.l.b16 %v163
  %v1258 = vunpack.c.l.b16 %v164
  %v1259 = vunpack.c.l.b16 %v165
  %v1260 = vunpack.c.l.b16 %v166
  %v1261 = vunpack.c.l.b16 %v167
  %v1262 = vunpack.c.l.b16 %v168
  %v1263 = vunpack.c.l.b16 %v169
  %v1264 = vunpack.c.l.b16 %v170
  %v1265 = vunpack.c.l.b16 %v171
  %v1266 = vunpack.c.l.b16 %v172
  %v1267 = vunpack.c.l.b16 %v173
  %v1268 = vunpack.c.l.b16 %v174
  %v1269 = vunpack.c.l.b16 %v175
  %v1270 = vunpack.c.l.b16 %v176
  %v1271 = vunpack.c.l.b16 %v177
  %v1272 = vunpack.c.l.b16 %v178
  %v1273 = vunpack.c.l.b16 %v179
  %v1274 = vunpack.c.l.b16 %v180
  %v1275 = vunpack.c.l.b16 %v181
  %v1276 = vunpack.c.l.b16 %v182
  %v1277 = vunpack.c.l.b16 %v183
  %v1278 = vunpack.c.l.b16 %v184
  %v1279 = vunpack.c.l.b16 %v185
  %v1280 = vunpack.c.l.b16 %v186
  %v1281 = vunpack.c.l.b16 %v187
  %v1282 = vunpack.c.l.b16 %v188
  %v1283 = vunpack.c.l.b16 %v189
  %v1284 = vunpack.c.l.b16 %v190
  %v1285 = vunpack.c.l.b16 %v191
  %v1286 = vunpack.c.l.b16 %v192
  %v1287 = vunpack.c.l.b16 %v193
  %v1288 = vunpack.c.l.b16 %v194
  %v1289 = vunpack.c.l.b16 %v195
  %v1290 = vunpack.c.l.b16 %v196
  %v1291 = vunpack.c.l.b16 %v197
  %v1292 = vunpack.c.l.b16 %v198
  %v1293 = vunpack.c.l.b16 %v199
  %v1294 = vunpack.c.l.b16 %v200
  %v1295 = vunpack.c.l.b16 %v201
  %v1296 = vunpack.c.l.b16 %v202
  %v1297 = vunpack.c.l.b16 %v203
  %v1298 = vunpack.c.l.b16 %v204
  %v1299 = vunpack.c.l.b16 %v205
  %v1300 = vunpack.c.l.b16 %v206
  %v1301 = vunpack.c.l.b16 %v207
  %v1302 = vunpack.c.l.b16 %v208
  %v1303 = vunpack.c.l.b16 %v209
  %v1304 = vunpack.c.l.b16 %v210
  %v1305 = vunpack.c.l.b16 %v211
  %v1306 = vunpack.c.l.b16 %v212
  %v1307 = vunpack.c.l.b16 %v213
  %v1308 = vunpack.c.l.b16 %v214
  %v1309 = vunpack.c.l.b16 %v215
  %v1310 = vunpack.c.l.b16 %v216
  %v1311 = vunpack.c.l.b16 %v217
  %v1312 = vunpack.c.l.b16 %v218
  %v1313 = vunpack.c.l.b16 %v219
  %v1314 = vunpack.c.l.b16 %v220
  %v1315 = vunpack.c.l.b16 %v221
  %v1316 = vunpack.c.l.b16 %v222
  %v1317 = vunpack.c.l.b16 %v223
  %v1318 = vunpack.c.l.b16 %v224
  %v1319 = vunpack.c.l.b16 %v225
  %v1320 = vunpack.c.l.b16 %v226
  %v1321 = vunpack.c.l.b16 %v227
  %v1322 = vunpack.c.l.b16 %v228
  %v1323 = vunpack.c.l.b16 %v229
  %v1324 = vunpack.c.l.b16 %v230
  %v1325 = vunpack.c.l.b16 %v231
  %v1326 = vunpack.c.l.b16 %v232
  %v1327 = vunpack.c.l.b16 %v233
  %v1328 = vunpack.c.l.b16 %v234
  %v1329 = vunpack.c.l.b16 %v235
  %v1330 = vunpack.c.l.b16 %v236
  %v1331 = vunpack.c.l.b16 %v237
  %v1332 = vunpack.c.l.b16 %v238
  %v1333 = vunpack.c.l.b16 %v239
  %v1334 = vunpack.c.l.b16 %v240
  %v1335 = vunpack.c.l.b16 %v241
  %v1336 = vunpack.c.l.b16 %v242
  %v1337 = vunpack.c.l.b16 %v243
  %v1338 = vunpack.c.l.b16 %v244
  %v1339 = vunpack.c.l.b16 %v245
  %v1340 = vunpack.c.l.b16 %v246
  %v1341 = vunpack.c.l.b16 %v247
  %v1342 = vunpack.c.l.b16 %v248
  %v1343 = vunpack.c.l.b16 %v249
  %v1344 = vunpack.c.l.b16 %v250
  %v1345 = vunpack.c.l.b16 %v251
  %v1346 = vunpack.c.l.b16 %v252
  %v1347 = vunpack.c.l.b16 %v253
  %v1348 = vunpack.c.l.b16 %v254
  %v1349 = vunpack.c.l.b16 %v255
  %v1350 = vunpack.c.l.b16 %v256
  %v1351 = vunpack.c.l.b16 %v257
  %v1352 = vunpack.c.l.b16 %v258
  %v1353 = vunpack.c.l.b16 %v259
  %v1354 = vunpack.c.l.b16 %v260
  %v1355 = vunpack.c.l.b16 %v261
  %v1356 = vunpack.c.l.b16 %v262
  %v1357 = vunpack.c.l.b16 %v263
  %v1358 = vpack.c.b16 %v1247, %v1246
  %v1359 = vpack.c.b16 %v1249, %v1248
  %v1360 = vpack.c.b16 %v1251, %v1250
  %v1361 = vpack.c.b16 %v1253, %v1252
  %v1362 = vpack.c.b16 %v1255, %v1254
  %v1363 = vpack.c.b16 %v1257, %v1256
  %v1364 = vpack.c.b16 %v1259, %v1258
  %v1365 = vpack.c.b16 %v1261, %v1260
  %v1366 = vpack.c.b16 %v1263, %v1262
  %v1367 = vpack.c.b16 %v1265, %v1264
  %v1368 = vpack.c.b16 %v1267, %v1266
  %v1369 = vpack.c.b16 %v1269, %v1268
  %v1370 = vpack.c.b16 %v1271, %v1270
  %v1371 = vpack.c.b16 %v1273, %v1272
  %v1372 = vpack.c.b16 %v1275, %v1274
  %v1373 = vpack.c.b16 %v1277, %v1276
  %v1374 = vpack.c.b16 %v1279, %v1278
  %v1375 = vpack.c.b16 %v1281, %v1280
  %v1376 = vpack.c.b16 %v1283, %v1282
  %v1377 = vpack.c.b16 %v1285, %v1284
  %v1378 = vpack.c.b16 %v1287, %v1286
  %v1379 = vpack.c.b16 %v1289, %v1288
  %v1380 = vpack.c.b16 %v1291, %v1290
  %v1381 = vpack.c.b16 %v1293, %v1292
  %v1382 = vpack.c.b16 %v1295, %v1294
  %v1383 = vpack.c.b16 %v1297, %v1296
  %v1384 = vpack.c.b16 %v1299, %v1298
  %v1385 = vpack.c.b16 %v1301, %v1300
  %v1386 = vpack.c.b16 %v1303, %v1302
  %v1387 = vpack.c.b16 %v1305, %v1304
  %v1388 = vpack.c.b16 %v1307, %v1306
  %v1389 = vpack.c.b16 %v1309, %v1308
  %v1390 = vpack.c.b16 %v1311, %v1310
  %v1391 = vpack.c.b16 %v1313, %v1312
  %v1392 = vpack.c.b16 %v1315, %v1314
  %v1393 = vpack.c.b16 %v1317, %v1316
  %v1394 = vpack.c.b16 %v1319, %v1318
  %v1395 = vpack.c.b16 %v1321, %v1320
  %v1396 = vpack.c.b16 %v1323, %v1322
  %v1397 = vpack.c.b16 %v1325, %v1324
  %v1398 = vpack.c.b16 %v1327, %v1326
  %v1399 = vpack.c.b16 %v1329, %v1328
  %v1400 = vpack.c.b16 %v1331, %v1330
  %v1401 = vpack.c.b16 %v1333, %v1332
  %v1402 = vpack.c.b16 %v1335, %v1334
  %v1403 = vpack.c.b16 %v1337, %v1336
  %v1404 = vpack.c.b16 %v1339, %v1338
  %v1405 = vpack.c.b16 %v1341, %v1340
  %v1406 = vpack.c.b16 %v1343, %v1342
  %v1407 = vpack.c.b16 %v1345, %v1344
  %v1408 = vpack.c.b16 %v1347, %v1346
  %v1409 = vpack.c.b16 %v1349, %v1348
  %v1410 = vpack.c.b16 %v1351, %v1350
  %v1411 = vpack.c.b16 %v1353, %v1352
  %v1412 = vpack.c.b16 %v1355, %v1354
  %v1413 = vpack.c.b16 %v1357, %v1356
  %1470 = vmatprep.subr.bf16.mxu0 0
  %1471 = vmatpush1.bf16.msra.mxu0 %v1358
  %1472 = vmatprep.subr.bf16.mxu0 0
  %1473 = vmatpush1.bf16.msra.mxu0 %v1359
  %1474 = vmatprep.subr.bf16.mxu0 0
  %1475 = vmatpush1.bf16.msra.mxu0 %v1360
  %1476 = vmatprep.subr.bf16.mxu0 0
  %1477 = vmatpush1.bf16.msra.mxu0 %v1361
  %1478 = vmatprep.subr.bf16.mxu0 0
  %1479 = vmatpush1.bf16.msra.mxu0 %v1362
  %1480 = vmatprep.subr.bf16.mxu0 0
  %1481 = vmatpush1.bf16.msra.mxu0 %v1363
  %1482 = vmatprep.subr.bf16.mxu0 0
  %1483 = vmatpush1.bf16.msra.mxu0 %v1364
  %1484 = vmatprep.subr.bf16.mxu0 0
  %1485 = vmatpush1.bf16.msra.mxu0 %v1365
  %1486 = vmatprep.subr.bf16.mxu0 0
  %1487 = vmatpush1.bf16.msra.mxu0 %v1366
  %1488 = vmatprep.subr.bf16.mxu0 0
  %1489 = vmatpush1.bf16.msra.mxu0 %v1367
  %1490 = vmatprep.subr.bf16.mxu0 0
  %1491 = vmatpush1.bf16.msra.mxu0 %v1368
  %1492 = vmatprep.subr.bf16.mxu0 0
  %1493 = vmatpush1.bf16.msra.mxu0 %v1369
  %1494 = vmatprep.subr.bf16.mxu0 0
  %1495 = vmatpush1.bf16.msra.mxu0 %v1370
  %1496 = vmatprep.subr.bf16.mxu0 0
  %1497 = vmatpush1.bf16.msra.mxu0 %v1371
  %1498 = vmatprep.subr.bf16.mxu0 0
  %1499 = vmatpush1.bf16.msra.mxu0 %v1372
  %1500 = vmatprep.subr.bf16.mxu0 0
  %1501 = vmatpush1.bf16.msra.mxu0 %v1373
  %1502 = vmatprep.mubr.bf16.mxu0 %v996
  %1503 = vmatmul.mubr.bf16.gmra.mrb[0].mxu0 %v982
  %v1504 = vpop.f32.mrb[0].mxu0
  %v1505 = vadd.f32 %v1120, %v1504
  %v1506 = vpop.f32.mrb[0].mxu0
  %v1507 = vpop.f32.mrb[0].mxu0
  %v1508 = vadd.f32 %v1123, %v1507
  %v1509 = vpop.f32.mrb[0].mxu0
  %1510 = vmatprep.mubr.bf16.mxu0 %v999
  %1511 = vmatmul.mubr.bf16.gmra.mrb[0].mxu0 %v984
  %v1512 = vpop.f32.mrb[0].mxu0
  %v1513 = vadd.f32 %v1128, %v1512
  %v1514 = vpop.f32.mrb[0].mxu0
  %v1515 = vpop.f32.mrb[0].mxu0
  %v1516 = vadd.f32 %v1131, %v1515
  %v1517 = vpop.f32.mrb[0].mxu0
  %1518 = vdwg.mxu0
  %1519 = vmatprep.subr.bf16.mxu0 0
  %1520 = vmatpush1.bf16.msra.mxu0 %v1374
  %1521 = vmatprep.subr.bf16.mxu0 0
  %1522 = vmatpush1.bf16.msra.mxu0 %v1375
  %1523 = vmatprep.subr.bf16.mxu0 0
  %1524 = vmatpush1.bf16.msra.mxu0 %v1376
  %1525 = vmatprep.subr.bf16.mxu0 0
  %1526 = vmatpush1.bf16.msra.mxu0 %v1377
  %1527 = vmatprep.subr.bf16.mxu0 0
  %1528 = vmatpush1.bf16.msra.mxu0 %v1378
  %1529 = vmatprep.subr.bf16.mxu0 0
  %1530 = vmatpush1.bf16.msra.mxu0 %v1379
  %1531 = vmatprep.subr.bf16.mxu0 0
  %1532 = vmatpush1.bf16.msra.mxu0 %v1380
  %1533 = vmatprep.subr.bf16.mxu0 0
  %1534 = vmatpush1.bf16.msra.mxu0 %v1381
  %1535 = vmatprep.subr.bf16.mxu0 0
  %1536 = vmatpush1.bf16.msra.mxu0 %v1382
  %1537 = vmatprep.subr.bf16.mxu0 0
  %1538 = vmatpush1.bf16.msra.mxu0 %v1383
  %1539 = vmatprep.subr.bf16.mxu0 0
  %1540 = vmatpush1.bf16.msra.mxu0 %v1384
  %1541 = vmatprep.subr.bf16.mxu0 0
  %1542 = vmatpush1.bf16.msra.mxu0 %v1385
  %1543 = vmatprep.subr.bf16.mxu0 0
  %1544 = vmatpush1.bf16.msra.mxu0 %v1386
  %1545 = vmatprep.subr.bf16.mxu0 0
  %1546 = vmatpush1.bf16.msra.mxu0 %v1387
  %1547 = vmatprep.subr.bf16.mxu0 0
  %1548 = vmatpush1.bf16.msra.mxu0 %v1388
  %1549 = vmatprep.subr.bf16.mxu0 0
  %1550 = vmatpush1.bf16.msra.mxu0 %v1389
  %1551 = vmatprep.mubr.bf16.mxu0 %v1015
  %1552 = vmatmul.mubr.bf16.gmra.mrb[0].mxu0 %v1006
  %v1553 = vpop.f32.mrb[0].mxu0
  %v1554 = vadd.f32 %v1505, %v1553
  %v1555 = vpop.f32.mrb[0].mxu0
  %v1556 = vpop.f32.mrb[0].mxu0
  %v1557 = vadd.f32 %v1508, %v1556
  %v1558 = vpop.f32.mrb[0].mxu0
  %1559 = vmatprep.mubr.bf16.mxu0 %v1014
  %1560 = vmatmul.mubr.bf16.gmra.mrb[0].mxu0 %v1005
  %v1561 = vpop.f32.mrb[0].mxu0
  %v1562 = vadd.f32 %v1513, %v1561
  %v1563 = vpop.f32.mrb[0].mxu0
  %v1564 = vpop.f32.mrb[0].mxu0
  %v1565 = vadd.f32 %v1516, %v1564
  %v1566 = vpop.f32.mrb[0].mxu0
  %1567 = vdwg.mxu0
  %1568 = vmatprep.subr.bf16.mxu0 0
  %1569 = vmatpush1.bf16.msra.mxu0 %v1390
  %1570 = vmatprep.subr.bf16.mxu0 0
  %1571 = vmatpush1.bf16.msra.mxu0 %v1391
  %1572 = vmatprep.subr.bf16.mxu0 0
  %1573 = vmatpush1.bf16.msra.mxu0 %v1392
  %1574 = vmatprep.subr.bf16.mxu0 0
  %1575 = vmatpush1.bf16.msra.mxu0 %v1393
  %1576 = vmatprep.subr.bf16.mxu0 0
  %1577 = vmatpush1.bf16.msra.mxu0 %v1394
  %1578 = vmatprep.subr.bf16.mxu0 0
  %1579 = vmatpush1.bf16.msra.mxu0 %v1395
  %1580 = vmatprep.subr.bf16.mxu0 0
  %1581 = vmatpush1.bf16.msra.mxu0 %v1396
  %1582 = vmatprep.subr.bf16.mxu0 0
  %1583 = vmatpush1.bf16.msra.mxu0 %v1397
  %1584 = vmatprep.subr.bf16.mxu0 0
  %1585 = vmatpush1.bf16.msra.mxu0 %v1398
  %1586 = vmatprep.subr.bf16.mxu0 0
  %1587 = vmatpush1.bf16.msra.mxu0 %v1399
  %1588 = vmatprep.subr.bf16.mxu0 0
  %1589 = vmatpush1.bf16.msra.mxu0 %v1400
  %1590 = vmatprep.subr.bf16.mxu0 0
  %1591 = vmatpush1.bf16.msra.mxu0 %v1401
  %1592 = vmatprep.subr.bf16.mxu0 0
  %1593 = vmatpush1.bf16.msra.mxu0 %v1402
  %1594 = vmatprep.subr.bf16.mxu0 0
  %1595 = vmatpush1.bf16.msra.mxu0 %v1403
  %1596 = vmatprep.subr.bf16.mxu0 0
  %1597 = vmatpush1.bf16.msra.mxu0 %v1404
  %1598 = vmatprep.subr.bf16.mxu0 0
  %1599 = vmatpush1.bf16.msra.mxu0 %v1405
  %1600 = vmatprep.mubr.bf16.mxu0 %v1029
  %1601 = vmatmul.mubr.bf16.gmra.mrb[0].mxu0 %v1020
  %v1602 = vpop.f32.mrb[0].mxu0
  %v1603 = vadd.f32 %v1554, %v1602
  %v1604 = vpop.f32.mrb[0].mxu0
  %v1605 = vpop.f32.mrb[0].mxu0
  %v1606 = vadd.f32 %v1557, %v1605
  %v1607 = vpop.f32.mrb[0].mxu0
  %1608 = vmatprep.mubr.bf16.mxu0 %v1028
  %1609 = vmatmul.mubr.bf16.gmra.mrb[0].mxu0 %v1019
  %v1610 = vpop.f32.mrb[0].mxu0
  %v1611 = vadd.f32 %v1562, %v1610
  %v1612 = vpop.f32.mrb[0].mxu0
  %v1613 = vpop.f32.mrb[0].mxu0
  %v1614 = vadd.f32 %v1565, %v1613
  %v1615 = vpop.f32.mrb[0].mxu0
  %1616 = vdwg.mxu0
  %1617 = vmatprep.subr.bf16.mxu0 0
  %1618 = vmatpush1.bf16.msra.mxu0 %v1406
  %1619 = vmatprep.subr.bf16.mxu0 0
  %1620 = vmatpush1.bf16.msra.mxu0 %v1407
  %1621 = vmatprep.subr.bf16.mxu0 0
  %1622 = vmatpush1.bf16.msra.mxu0 %v1408
  %1623 = vmatprep.subr.bf16.mxu0 0
  %1624 = vmatpush1.bf16.msra.mxu0 %v1409
  %1625 = vmatprep.subr.bf16.mxu0 0
  %1626 = vmatpush1.bf16.msra.mxu0 %v1410
  %1627 = vmatprep.subr.bf16.mxu0 0
  %1628 = vmatpush1.bf16.msra.mxu0 %v1411
  %1629 = vmatprep.subr.bf16.mxu0 0
  %1630 = vmatpush1.bf16.msra.mxu0 %v1412
  %1631 = vmatprep.subr.bf16.mxu0 0
  %1632 = vmatpush1.bf16.msra.mxu0 %v1413
  %1633 = vmatprep.subr.bf16.mxu0 0
  %1634 = vmatpush1.bf16.msra.mxu0 0
  %1635 = vmatprep.subr.bf16.mxu0 0
  %1636 = vmatpush1.bf16.msra.mxu0 0
  %1637 = vmatprep.subr.bf16.mxu0 0
  %1638 = vmatpush1.bf16.msra.mxu0 0
  %1639 = vmatprep.subr.bf16.mxu0 0
  %1640 = vmatpush1.bf16.msra.mxu0 0
  %1641 = vmatprep.subr.bf16.mxu0 0
  %1642 = vmatpush1.bf16.msra.mxu0 0
  %1643 = vmatprep.subr.bf16.mxu0 0
  %1644 = vmatpush1.bf16.msra.mxu0 0
  %1645 = vmatprep.subr.bf16.mxu0 0
  %1646 = vmatpush1.bf16.msra.mxu0 0
  %1647 = vmatprep.subr.bf16.mxu0 0
  %1648 = vmatpush1.bf16.msra.mxu0 0
  %1649 = vmatprep.mubr.bf16.mxu0 0
  %1650 = vmatmul.mubr.bf16.gmra.mrb[0].mxu0 %v1034
  %v1651 = vpop.f32.mrb[0].mxu0
  %v1652 = vadd.f32 %v1603, %v1651
  %v1653 = vpop.f32.mrb[0].mxu0
  %v1654 = vpop.f32.mrb[0].mxu0
  %v1655 = vadd.f32 %v1606, %v1654
  %v1656 = vpop.f32.mrb[0].mxu0
  %1657 = vmatprep.mubr.bf16.mxu0 0
  %1658 = vmatmul.mubr.bf16.gmra.mrb[0].mxu0 %v1033
  %v1659 = vpop.f32.mrb[0].mxu0
  %v1660 = vadd.f32 %v1611, %v1659
  %v1661 = vpop.f32.mrb[0].mxu0
  %v1662 = vpop.f32.mrb[0].mxu0
  %v1663 = vadd.f32 %v1614, %v1662
  %v1664 = vpop.f32.mrb[0].mxu0
  %1665 = vdwg.mxu0
  %v1667 = vlaneseq
  %v1668 = vshrl.u32 %v1667, 7
  %v1669 = vsub.s32 0, %v1668
  %v1670 = vrot.slane %v280, %v1669
  %v1672 = vadd.f32 %v1652, %v1670
  %v1673 = vadd.f32 %v1655, %v1670
  %v1674 = vadd.f32 %v1660, %v1670
  %v1675 = vadd.f32 %v1663, %v1670
  %vm1676 = vcmp.ge.f32.partialorder %v1672, 0.0
  %vm1677 = vcmp.ge.f32.partialorder %v1673, 0.0
  %vm1678 = vcmp.ge.f32.partialorder %v1674, 0.0
  %vm1679 = vcmp.ge.f32.partialorder %v1675, 0.0
  %v1681 = vlaneseq
  %v1682 = vshrl.u32 %v1681, 7
  %v1683 = vsub.s32 0, %v1682
  %v1684 = vrot.slane %v281, %v1683
  %1685 = vset.pattern.permute.xlu0 0
  %1686 = vperm.xlu0 %1685, %v1684
  %v1687 = vpop.permute.xlu0 %1686
  %v1689 = vmul.f32 %v1687, %v1672
  %v1690 = vmul.f32 %v1687, %v1673
  %v1691 = vmul.f32 %v1687, %v1674
  %v1692 = vmul.f32 %v1687, %v1675
  %v1693 = vsel %vm1676, %v1672, %v1689
  %v1694 = vsel %vm1677, %v1673, %v1690
  %v1695 = vsel %vm1678, %v1674, %v1691
  %v1696 = vsel %vm1679, %v1675, %v1692
  %v1697 = vsel %vm950, %v1693, 0.0
  %v1698 = vsel %vm951, %v1694, 0.0
  %v1699 = vsel %vm952, %v1695, 0.0
  %v1700 = vsel %vm953, %v1696, 0.0
  %v1701 = vpack.c.bf16 %v1698, %v1697
  %v1702 = vpack.c.bf16 %v1700, %v1699
  %v1704 = vshrl.u32 %v1701, 16
  %v1706 = vrot.slane %v1704, 6
  %v1707 = vshll.u32 %v1701, 16
  %v1709 = vrot.slane %v1707, 7
  %v1710 = vor.u32 %v1706, %v1709
  %v1712 = vshrl.u32 %v1702, 16
  %v1714 = vrot.slane %v1712, 6
  %v1715 = vshll.u32 %v1702, 16
  %v1717 = vrot.slane %v1715, 7
  %v1718 = vor.u32 %v1714, %v1717
  %v1719 = vsel %vm960, %v1710, %v1718
  %v1722 = vsel %vm981, 0, %v1710
  %v1723 = vsel %vm983, %v1719, 0
  %v1726 = vunpack.c.l.b16 %v1722
  %v1727 = vunpack.c.h.b16 %v1722
  %v1728 = vunpack.c.l.b16 %v1723
  %v1729 = vunpack.c.h.b16 %v1723
  %v1730 = vpack.c.b16 %v1726, %v1726
  %v1731 = vpack.c.b16 %v1727, %v1727
  %v1732 = vpack.c.b16 %v1728, %v1728
  %v1733 = vpack.c.b16 %v1729, %v1729
  %1738 = vst [vmem:[%s8] sm:$0xf] %v1730
  %1739 = vst [vmem:[%s8 + $0x4] sm:$0xf] %v1731
  %1740 = vst [vmem:[%s8 + $0x8] sm:$0xf] %v1732
  %1741 = vst [vmem:[%s8 + $0xc] sm:$0xf] %v1733
  // Predicated region
  $region34: #{_lambda_.12} parent=0 // pred_check
    _
  $region35: #{_lambda_.12} parent=0 // pred_check_branch
    %1743 = sbr.rel (0) target = $region37
  $region36: #{_lambda_.12} parent=0 // pred_region
    _
  $region37: #{_lambda_.12} parent=0 // pred_fallthru
    _
  // Predicated region
  $region38: #{_lambda_.12} parent=0 // pred_check
    _
  $region39: #{_lambda_.12} parent=0 // pred_check_branch
    %1745 = sbr.rel (0) target = $region41
  $region40: #{_lambda_.12} parent=0 // pred_region
    _
  $region41: #{_lambda_.12} parent=0 // pred_fallthru
    _

</llo_original>
